<compile_context>
chip_gen: v6e
topology: v6e:2x2x1
jax: 0.10.0
libtpu: 0.0.40
codegen_flags: <defaults>
</compile_context>

<pallas_src>
import jax
import jax.numpy as jnp
from jax.experimental import pallas as pl
from jax.experimental.pallas import tpu as pltpu

BN_EPS = 1e-5


# ------------------------------ Pallas kernel -------------------------------

def _decoder_block_kernel(up_ref, skip_ref, wt_ref, g_ref, b_ref, o_ref, col_ref):
    """Fused 3x3 conv (replicate-padded inputs) + BatchNorm2d (batch stats) + ReLU.

    up_ref   : (N, Ho+2, Wo+2, C1) bf16  padded upsampled feature map (NHWC)
    skip_ref : (N, Ho+2, Wo+2, C2) bf16  padded skip feature map (NHWC)
    wt_ref   : (Cout, Kpad)        bf16  merged conv weight, K = [9*C1 | 9*C2], zero padded
    g_ref    : (Cout, 1)           f32   BN gamma
    b_ref    : (Cout, 1)           f32   BN beta
    o_ref    : (N, Cout, HW)       f32   output, already NCHW order (HW lane-dense)
    col_ref  : (N*HW, Kpad)        bf16  VMEM im2col scratch
    """
    n_batch, hp, wp, c1 = up_ref.shape
    c2 = skip_ref.shape[3]
    ctot = c1 + c2
    ho, wo = hp - 2, wp - 2
    hw = ho * wo
    k_total = wt_ref.shape[1]
    k_used = 9 * ctot

    # Zero the K padding columns once so the padded contraction is exact.
    if k_used < k_total:
        col_ref[:, k_used:k_total] = jnp.zeros(
            (n_batch * hw, k_total - k_used), jnp.bfloat16)

    # ---- im2col into VMEM scratch (windows copied exactly once) ------------
    # col[n*HW + p, k*C1 + c]          = up_p [n, y+dy, x+dx, c]
    # col[n*HW + p, 9*C1 + k*C2 + c']  = skip_p[n, y+dy, x+dx, c']
    # (Ho, Wo, C)->(HW, C) only merges leading dims into sublanes: cheap/safe.
    for n in range(n_batch):
        row0 = n * hw
        for dy in range(3):
            for dx in range(3):
                k = dy * 3 + dx
                u = up_ref[n, dy:dy + ho, dx:dx + wo, :].reshape(hw, c1)
                col_ref[row0:row0 + hw, k * c1:(k + 1) * c1] = u
                s = skip_ref[n, dy:dy + ho, dx:dx + wo, :].reshape(hw, c2)
                off = 9 * c1 + k * c2
                col_ref[row0:row0 + hw, off:off + c2] = s

    # ---- one lane-dense MXU matmul: (Cout, K) x (N*HW, K)^T -> (Cout, N*HW) -
    y = jax.lax.dot_general(
        wt_ref[...], col_ref[...],
        dimension_numbers=(((1,), (1,)), ((), ())),
        preferred_element_type=jnp.float32)

    # ---- BatchNorm2d training-mode stats over (N, H, W) + ReLU, all in f32 --
    inv_count = 1.0 / float(n_batch * hw)
    mean = jnp.sum(y, axis=1, keepdims=True) * inv_count            # (Cout, 1)
    centered = y - mean
    var = jnp.sum(centered * centered, axis=1, keepdims=True) * inv_count
    var = jnp.maximum(var, 0.0)                                     # safety clamp
    scale = g_ref[...] * jax.lax.rsqrt(var + BN_EPS)                # (Cout, 1)
    shift = b_ref[...] - mean * scale
    out = jnp.maximum(y * scale + shift, 0.0)                       # (Cout, N*HW)

    for n in range(n_batch):
        o_ref[n] = out[:, n * hw:(n + 1) * hw]                      # full-lane store


# ----------------------- bilinear upsample (XLA glue) -----------------------

def _upsample_matrix(in_size):
    """(2*in, in) interpolation matrix: bilinear, scale=2, align_corners=True."""
    out_size = 2 * in_size
    if in_size == 1:
        return jnp.ones((out_size, 1), jnp.float32)
    src = jnp.arange(out_size, dtype=jnp.float32) * (in_size - 1) / (out_size - 1)
    i0 = jnp.clip(jnp.floor(src).astype(jnp.int32), 0, in_size - 2)
    frac = src - i0.astype(jnp.float32)
    m = jnp.zeros((out_size, in_size), jnp.float32)
    rows = jnp.arange(out_size)
    m = m.at[rows, i0].add(1.0 - frac)
    m = m.at[rows, i0 + 1].add(frac)
    return m


def bilinear_upsample_2x(x_nhwc):
    N, H, W, C = x_nhwc.shape
    uh = _upsample_matrix(H)
    uw = _upsample_matrix(W)
    y = jnp.einsum("oh,nhwc->nowc", uh, x_nhwc)
    y = jnp.einsum("pw,nowc->nopc", uw, y)
    return y


# ------------------------------ DecoderBlock ---------------------------------

def decoder_block_forward(feature_map, skip_layer_feature_map, params):
    """DecoderBlock forward.  Inputs / output are NCHW like the PyTorch module."""
    w, gamma, beta = params["w"], params["gamma"], params["beta"]

    # NCHW -> NHWC for the inputs so the im2col windows are channel-minor.
    fm = jnp.transpose(feature_map, (0, 2, 3, 1))
    skip = jnp.transpose(skip_layer_feature_map, (0, 2, 3, 1))

    up = bilinear_upsample_2x(fm)                 # (N, Ho, Wo, C1)
    N, Ho, Wo, C1 = up.shape
    C2 = skip.shape[-1]
    Cin = C1 + C2
    Cout = w.shape[-1]
    HW = Ho * Wo
    assert skip.shape[1] == Ho and skip.shape[2] == Wo

    # Replicate ('edge') padding; pad(concat) == concat(pad, pad) (purely spatial).
    up_p = jnp.pad(up, ((0, 0), (1, 1), (1, 1), (0, 0)), mode="edge").astype(jnp.bfloat16)
    skip_p = jnp.pad(skip, ((0, 0), (1, 1), (1, 1), (0, 0)), mode="edge").astype(jnp.bfloat16)

    # Merged, pre-transposed weight (Cout, Kpad): K ordered [9 up-taps | 9 skip-taps],
    # zero-padded to a multiple of 128 so the contraction dim is tile-aligned.
    k_used = 9 * Cin
    k_pad = ((k_used + 127) // 128) * 128
    w_up = w[:, :, :C1, :].reshape(9 * C1, Cout)
    w_sk = w[:, :, C1:, :].reshape(9 * C2, Cout)
    wt = jnp.concatenate([w_up, w_sk], axis=0).T                     # (Cout, 9*Cin)
    wt = jnp.pad(wt, ((0, 0), (0, k_pad - k_used))).astype(jnp.bfloat16)

    out_flat = pl.pallas_call(
        _decoder_block_kernel,
        out_shape=jax.ShapeDtypeStruct((N, Cout, HW), jnp.float32),
        grid=(1,),                                  # whole batch fused in one step
        in_specs=[
            pl.BlockSpec((N, Ho + 2, Wo + 2, C1), lambda i: (0, 0, 0, 0)),
            pl.BlockSpec((N, Ho + 2, Wo + 2, C2), lambda i: (0, 0, 0, 0)),
            pl.BlockSpec((Cout, k_pad), lambda i: (0, 0)),
            pl.BlockSpec((Cout, 1), lambda i: (0, 0)),
            pl.BlockSpec((Cout, 1), lambda i: (0, 0)),
        ],
        out_specs=pl.BlockSpec((N, Cout, HW), lambda i: (0, 0, 0)),
        scratch_shapes=[pltpu.VMEM((N * HW, k_pad), jnp.bfloat16)],
        compiler_params=pltpu.CompilerParams(
            dimension_semantics=("arbitrary",)),
    )(up_p, skip_p, wt,
      gamma.reshape(Cout, 1).astype(jnp.float32),
      beta.reshape(Cout, 1).astype(jnp.float32))

    # (N, Cout, HW) is already NCHW order: splitting HW -> (Ho, Wo) is free.
    return out_flat.reshape(N, Cout, Ho, Wo)


# ------------------------------ JAX reference --------------------------------

def reference_forward(feature_map, skip_layer_feature_map, params):
    fm = jnp.transpose(feature_map, (0, 2, 3, 1))
    skip = jnp.transpose(skip_layer_feature_map, (0, 2, 3, 1))
    up = bilinear_upsample_2x(fm)
    x = jnp.concatenate([up, skip], axis=-1)
    xp = jnp.pad(x, ((0, 0), (1, 1), (1, 1), (0, 0)), mode="edge")
    y = jax.lax.conv_general_dilated(
        xp, params["w"], (1, 1), "VALID",
        dimension_numbers=("NHWC", "HWIO", "NHWC"),
        precision=jax.lax.Precision.HIGHEST)
    mean = jnp.mean(y, axis=(0, 1, 2))
    var = jnp.mean((y - mean) ** 2, axis=(0, 1, 2))
    yhat = (y - mean) * jax.lax.rsqrt(var + BN_EPS) * params["gamma"] + params["beta"]
    out = jnp.maximum(yhat, 0.0)
    return jnp.transpose(out, (0, 3, 1, 2))


# ----------------------------------- main ------------------------------------

if __name__ == "__main__":
    key = jax.random.PRNGKey(0)

    N = 2
    C_feat, H, W = 32, 8, 8         # deep feature map to be upsampled
    C_skip = 16                     # skip connection at 2H x 2W
    C_out = 16
    C_in = C_feat + C_skip

    k1, k2, k3, k4, k5 = jax.random.split(key, 5)
    feature_map = jax.random.normal(k1, (N, C_feat, H, W), jnp.float32)
    skip_map = jax.random.normal(k2, (N, C_skip, 2 * H, 2 * W), jnp.float32)
    params = {
        "w": jax.random.normal(k3, (3, 3, C_in, C_out), jnp.float32)
             / jnp.sqrt(9.0 * C_in),                                   # HWIO
        "gamma": 1.0 + 0.1 * jax.random.normal(k4, (C_out,), jnp.float32),
        "beta": 0.1 * jax.random.normal(k5, (C_out,), jnp.float32),
    }

    fwd = jax.jit(decoder_block_forward)
    out = jax.block_until_ready(fwd(feature_map, skip_map, params))

    ref = reference_forward(feature_map, skip_map, params)
    assert out.shape == ref.shape == (N, C_out, 2 * H, 2 * W), (out.shape, ref.shape)
    max_err = float(jnp.max(jnp.abs(out - ref)))
    assert jnp.allclose(out, ref, atol=1e-2, rtol=1e-2), max_err

    print("KERNEL_OK")
</pallas_src>

<mosaic_0001>
module attributes {stable_mosaic.version = 11 : i64} {
  func.func private @main(%arg0: i32) attributes {dimension_semantics = [#tpu.dimension_semantics<core_parallel>], iteration_bounds = array<i64: 2>, tpu.core_type = #tpu.core_type<sc_scalar_subcore>, window_params = []} {
    return
  }
}

module attributes {stable_mosaic.version = 11 : i64} {
  func.func private @main(%arg0: i32) attributes {dimension_semantics = [#tpu.dimension_semantics<core_parallel>], iteration_bounds = array<i64: 2>, tpu.core_type = #tpu.core_type<sc_scalar_subcore>, window_params = []} {
    return
  }
}

module attributes {stable_mosaic.version = 11 : i64} {
  func.func @_decoder_block_kernel(%arg0: i32, %arg1: memref<2x18x18x32xbf16, #tpu.memory_space<vmem>>, %arg2: memref<2x18x18x16xbf16, #tpu.memory_space<vmem>>, %arg3: memref<16x512xbf16, #tpu.memory_space<vmem>>, %arg4: memref<16x1xf32, #tpu.memory_space<vmem>>, %arg5: memref<16x1xf32, #tpu.memory_space<vmem>>, %arg6: memref<2x16x256xf32, #tpu.memory_space<vmem>>, %arg7: memref<512x512xbf16, #tpu.memory_space<vmem>>) attributes {dimension_semantics = [#tpu.dimension_semantics<arbitrary>], iteration_bounds = array<i64: 1>, scalar_prefetch = 0 : i64, scratch_operands = 1 : i64, tpu.core_type = #tpu.core_type<tc>, window_params = [{pipeline_mode = #tpu.pipeline_mode<synchronous>, transform_indices = @transform_0, window_bounds = array<i64: 2, 18, 18, 32>}, {pipeline_mode = #tpu.pipeline_mode<synchronous>, transform_indices = @transform_1, window_bounds = array<i64: 2, 18, 18, 16>}, {pipeline_mode = #tpu.pipeline_mode<synchronous>, transform_indices = @transform_2, window_bounds = array<i64: 16, 512>}, {pipeline_mode = #tpu.pipeline_mode<synchronous>, transform_indices = @transform_3, window_bounds = array<i64: 16, 1>}, {pipeline_mode = #tpu.pipeline_mode<synchronous>, transform_indices = @transform_4, window_bounds = array<i64: 16, 1>}, {pipeline_mode = #tpu.pipeline_mode<synchronous>, transform_indices = @transform_5, window_bounds = array<i64: 2, 16, 256>}]} {
    %cst = arith.constant 0.000000e+00 : bf16
    %0 = vector.broadcast %cst : bf16 to vector<512x80xbf16>
    %c0 = arith.constant 0 : index
    %c432 = arith.constant 432 : index
    %1 = vector.load %arg7[%c0, %c432] : memref<512x512xbf16, #tpu.memory_space<vmem>>, vector<512x80xbf16>
    tpu.vector_store %arg7[%c0, %c432], %0 {strides = array<i32>} : memref<512x512xbf16, #tpu.memory_space<vmem>>, vector<512x80xbf16>,
    %c0_0 = arith.constant 0 : index
    %c0_1 = arith.constant 0 : index
    %c0_2 = arith.constant 0 : index
    %c0_3 = arith.constant 0 : index
    %2 = vector.load %arg1[%c0_0, %c0_1, %c0_2, %c0_3] : memref<2x18x18x32xbf16, #tpu.memory_space<vmem>>, vector<1x16x16x32xbf16>
    %3 = vector.shape_cast %2 : vector<1x16x16x32xbf16> to vector<16x16x32xbf16>
    %4 = vector.shape_cast %3 : vector<16x16x32xbf16> to vector<256x32xbf16>
    %c0_4 = arith.constant 0 : index
    %c0_5 = arith.constant 0 : index
    %5 = vector.load %arg7[%c0_4, %c0_5] : memref<512x512xbf16, #tpu.memory_space<vmem>>, vector<256x32xbf16>
    tpu.vector_store %arg7[%c0_4, %c0_5], %4 {strides = array<i32>} : memref<512x512xbf16, #tpu.memory_space<vmem>>, vector<256x32xbf16>,
    %c0_6 = arith.constant 0 : index
    %c0_7 = arith.constant 0 : index
    %c0_8 = arith.constant 0 : index
    %c0_9 = arith.constant 0 : index
    %6 = vector.load %arg2[%c0_6, %c0_7, %c0_8, %c0_9] : memref<2x18x18x16xbf16, #tpu.memory_space<vmem>>, vector<1x16x16x16xbf16>
    %7 = vector.shape_cast %6 : vector<1x16x16x16xbf16> to vector<16x16x16xbf16>
    %8 = vector.shape_cast %7 : vector<16x16x16xbf16> to vector<256x16xbf16>
    %c0_10 = arith.constant 0 : index
    %c288 = arith.constant 288 : index
    %9 = vector.load %arg7[%c0_10, %c288] : memref<512x512xbf16, #tpu.memory_space<vmem>>, vector<256x16xbf16>
    tpu.vector_store %arg7[%c0_10, %c288], %8 {strides = array<i32>} : memref<512x512xbf16, #tpu.memory_space<vmem>>, vector<256x16xbf16>,
    %c0_11 = arith.constant 0 : index
    %c0_12 = arith.constant 0 : index
    %c1 = arith.constant 1 : index
    %c0_13 = arith.constant 0 : index
    %10 = vector.load %arg1[%c0_11, %c0_12, %c1, %c0_13] : memref<2x18x18x32xbf16, #tpu.memory_space<vmem>>, vector<1x16x16x32xbf16>
    %11 = vector.shape_cast %10 : vector<1x16x16x32xbf16> to vector<16x16x32xbf16>
    %12 = vector.shape_cast %11 : vector<16x16x32xbf16> to vector<256x32xbf16>
    %c0_14 = arith.constant 0 : index
    %c32 = arith.constant 32 : index
    %13 = vector.load %arg7[%c0_14, %c32] : memref<512x512xbf16, #tpu.memory_space<vmem>>, vector<256x32xbf16>
    tpu.vector_store %arg7[%c0_14, %c32], %12 {strides = array<i32>} : memref<512x512xbf16, #tpu.memory_space<vmem>>, vector<256x32xbf16>,
    %c0_15 = arith.constant 0 : index
    %c0_16 = arith.constant 0 : index
    %c1_17 = arith.constant 1 : index
    %c0_18 = arith.constant 0 : index
    %14 = vector.load %arg2[%c0_15, %c0_16, %c1_17, %c0_18] : memref<2x18x18x16xbf16, #tpu.memory_space<vmem>>, vector<1x16x16x16xbf16>
    %15 = vector.shape_cast %14 : vector<1x16x16x16xbf16> to vector<16x16x16xbf16>
    %16 = vector.shape_cast %15 : vector<16x16x16xbf16> to vector<256x16xbf16>
    %c0_19 = arith.constant 0 : index
    %c304 = arith.constant 304 : index
    %17 = vector.load %arg7[%c0_19, %c304] : memref<512x512xbf16, #tpu.memory_space<vmem>>, vector<256x16xbf16>
    tpu.vector_store %arg7[%c0_19, %c304], %16 {strides = array<i32>} : memref<512x512xbf16, #tpu.memory_space<vmem>>, vector<256x16xbf16>,
    %c0_20 = arith.constant 0 : index
    %c0_21 = arith.constant 0 : index
    %c2 = arith.constant 2 : index
    %c0_22 = arith.constant 0 : index
    %18 = vector.load %arg1[%c0_20, %c0_21, %c2, %c0_22] : memref<2x18x18x32xbf16, #tpu.memory_space<vmem>>, vector<1x16x16x32xbf16>
    %19 = vector.shape_cast %18 : vector<1x16x16x32xbf16> to vector<16x16x32xbf16>
    %20 = vector.shape_cast %19 : vector<16x16x32xbf16> to vector<256x32xbf16>
    %c0_23 = arith.constant 0 : index
    %c64 = arith.constant 64 : index
    %21 = vector.load %arg7[%c0_23, %c64] : memref<512x512xbf16, #tpu.memory_space<vmem>>, vector<256x32xbf16>
    tpu.vector_store %arg7[%c0_23, %c64], %20 {strides = array<i32>} : memref<512x512xbf16, #tpu.memory_space<vmem>>, vector<256x32xbf16>,
    %c0_24 = arith.constant 0 : index
    %c0_25 = arith.constant 0 : index
    %c2_26 = arith.constant 2 : index
    %c0_27 = arith.constant 0 : index
    %22 = vector.load %arg2[%c0_24, %c0_25, %c2_26, %c0_27] : memref<2x18x18x16xbf16, #tpu.memory_space<vmem>>, vector<1x16x16x16xbf16>
    %23 = vector.shape_cast %22 : vector<1x16x16x16xbf16> to vector<16x16x16xbf16>
    %24 = vector.shape_cast %23 : vector<16x16x16xbf16> to vector<256x16xbf16>
    %c0_28 = arith.constant 0 : index
    %c320 = arith.constant 320 : index
    %25 = vector.load %arg7[%c0_28, %c320] : memref<512x512xbf16, #tpu.memory_space<vmem>>, vector<256x16xbf16>
    tpu.vector_store %arg7[%c0_28, %c320], %24 {strides = array<i32>} : memref<512x512xbf16, #tpu.memory_space<vmem>>, vector<256x16xbf16>,
    %c0_29 = arith.constant 0 : index
    %c1_30 = arith.constant 1 : index
    %c0_31 = arith.constant 0 : index
    %c0_32 = arith.constant 0 : index
    %26 = vector.load %arg1[%c0_29, %c1_30, %c0_31, %c0_32] : memref<2x18x18x32xbf16, #tpu.memory_space<vmem>>, vector<1x16x16x32xbf16>
    %27 = vector.shape_cast %26 : vector<1x16x16x32xbf16> to vector<16x16x32xbf16>
    %28 = vector.shape_cast %27 : vector<16x16x32xbf16> to vector<256x32xbf16>
    %c0_33 = arith.constant 0 : index
    %c96 = arith.constant 96 : index
    %29 = vector.load %arg7[%c0_33, %c96] : memref<512x512xbf16, #tpu.memory_space<vmem>>, vector<256x32xbf16>
    tpu.vector_store %arg7[%c0_33, %c96], %28 {strides = array<i32>} : memref<512x512xbf16, #tpu.memory_space<vmem>>, vector<256x32xbf16>,
    %c0_34 = arith.constant 0 : index
    %c1_35 = arith.constant 1 : index
    %c0_36 = arith.constant 0 : index
    %c0_37 = arith.constant 0 : index
    %30 = vector.load %arg2[%c0_34, %c1_35, %c0_36, %c0_37] : memref<2x18x18x16xbf16, #tpu.memory_space<vmem>>, vector<1x16x16x16xbf16>
    %31 = vector.shape_cast %30 : vector<1x16x16x16xbf16> to vector<16x16x16xbf16>
    %32 = vector.shape_cast %31 : vector<16x16x16xbf16> to vector<256x16xbf16>
    %c0_38 = arith.constant 0 : index
    %c336 = arith.constant 336 : index
    %33 = vector.load %arg7[%c0_38, %c336] : memref<512x512xbf16, #tpu.memory_space<vmem>>, vector<256x16xbf16>
    tpu.vector_store %arg7[%c0_38, %c336], %32 {strides = array<i32>} : memref<512x512xbf16, #tpu.memory_space<vmem>>, vector<256x16xbf16>,
    %c0_39 = arith.constant 0 : index
    %c1_40 = arith.constant 1 : index
    %c1_41 = arith.constant 1 : index
    %c0_42 = arith.constant 0 : index
    %34 = vector.load %arg1[%c0_39, %c1_40, %c1_41, %c0_42] : memref<2x18x18x32xbf16, #tpu.memory_space<vmem>>, vector<1x16x16x32xbf16>
    %35 = vector.shape_cast %34 : vector<1x16x16x32xbf16> to vector<16x16x32xbf16>
    %36 = vector.shape_cast %35 : vector<16x16x32xbf16> to vector<256x32xbf16>
    %c0_43 = arith.constant 0 : index
    %c128 = arith.constant 128 : index
    %37 = vector.load %arg7[%c0_43, %c128] : memref<512x512xbf16, #tpu.memory_space<vmem>>, vector<256x32xbf16>
    tpu.vector_store %arg7[%c0_43, %c128], %36 {strides = array<i32>} : memref<512x512xbf16, #tpu.memory_space<vmem>>, vector<256x32xbf16>,
    %c0_44 = arith.constant 0 : index
    %c1_45 = arith.constant 1 : index
    %c1_46 = arith.constant 1 : index
    %c0_47 = arith.constant 0 : index
    %38 = vector.load %arg2[%c0_44, %c1_45, %c1_46, %c0_47] : memref<2x18x18x16xbf16, #tpu.memory_space<vmem>>, vector<1x16x16x16xbf16>
    %39 = vector.shape_cast %38 : vector<1x16x16x16xbf16> to vector<16x16x16xbf16>
    %40 = vector.shape_cast %39 : vector<16x16x16xbf16> to vector<256x16xbf16>
    %c0_48 = arith.constant 0 : index
    %c352 = arith.constant 352 : index
    %41 = vector.load %arg7[%c0_48, %c352] : memref<512x512xbf16, #tpu.memory_space<vmem>>, vector<256x16xbf16>
    tpu.vector_store %arg7[%c0_48, %c352], %40 {strides = array<i32>} : memref<512x512xbf16, #tpu.memory_space<vmem>>, vector<256x16xbf16>,
    %c0_49 = arith.constant 0 : index
    %c1_50 = arith.constant 1 : index
    %c2_51 = arith.constant 2 : index
    %c0_52 = arith.constant 0 : index
    %42 = vector.load %arg1[%c0_49, %c1_50, %c2_51, %c0_52] : memref<2x18x18x32xbf16, #tpu.memory_space<vmem>>, vector<1x16x16x32xbf16>
    %43 = vector.shape_cast %42 : vector<1x16x16x32xbf16> to vector<16x16x32xbf16>
    %44 = vector.shape_cast %43 : vector<16x16x32xbf16> to vector<256x32xbf16>
    %c0_53 = arith.constant 0 : index
    %c160 = arith.constant 160 : index
    %45 = vector.load %arg7[%c0_53, %c160] : memref<512x512xbf16, #tpu.memory_space<vmem>>, vector<256x32xbf16>
    tpu.vector_store %arg7[%c0_53, %c160], %44 {strides = array<i32>} : memref<512x512xbf16, #tpu.memory_space<vmem>>, vector<256x32xbf16>,
    %c0_54 = arith.constant 0 : index
    %c1_55 = arith.constant 1 : index
    %c2_56 = arith.constant 2 : index
    %c0_57 = arith.constant 0 : index
    %46 = vector.load %arg2[%c0_54, %c1_55, %c2_56, %c0_57] : memref<2x18x18x16xbf16, #tpu.memory_space<vmem>>, vector<1x16x16x16xbf16>
    %47 = vector.shape_cast %46 : vector<1x16x16x16xbf16> to vector<16x16x16xbf16>
    %48 = vector.shape_cast %47 : vector<16x16x16xbf16> to vector<256x16xbf16>
    %c0_58 = arith.constant 0 : index
    %c368 = arith.constant 368 : index
    %49 = vector.load %arg7[%c0_58, %c368] : memref<512x512xbf16, #tpu.memory_space<vmem>>, vector<256x16xbf16>
    tpu.vector_store %arg7[%c0_58, %c368], %48 {strides = array<i32>} : memref<512x512xbf16, #tpu.memory_space<vmem>>, vector<256x16xbf16>,
    %c0_59 = arith.constant 0 : index
    %c2_60 = arith.constant 2 : index
    %c0_61 = arith.constant 0 : index
    %c0_62 = arith.constant 0 : index
    %50 = vector.load %arg1[%c0_59, %c2_60, %c0_61, %c0_62] : memref<2x18x18x32xbf16, #tpu.memory_space<vmem>>, vector<1x16x16x32xbf16>
    %51 = vector.shape_cast %50 : vector<1x16x16x32xbf16> to vector<16x16x32xbf16>
    %52 = vector.shape_cast %51 : vector<16x16x32xbf16> to vector<256x32xbf16>
    %c0_63 = arith.constant 0 : index
    %c192 = arith.constant 192 : index
    %53 = vector.load %arg7[%c0_63, %c192] : memref<512x512xbf16, #tpu.memory_space<vmem>>, vector<256x32xbf16>
    tpu.vector_store %arg7[%c0_63, %c192], %52 {strides = array<i32>} : memref<512x512xbf16, #tpu.memory_space<vmem>>, vector<256x32xbf16>,
    %c0_64 = arith.constant 0 : index
    %c2_65 = arith.constant 2 : index
    %c0_66 = arith.constant 0 : index
    %c0_67 = arith.constant 0 : index
    %54 = vector.load %arg2[%c0_64, %c2_65, %c0_66, %c0_67] : memref<2x18x18x16xbf16, #tpu.memory_space<vmem>>, vector<1x16x16x16xbf16>
    %55 = vector.shape_cast %54 : vector<1x16x16x16xbf16> to vector<16x16x16xbf16>
    %56 = vector.shape_cast %55 : vector<16x16x16xbf16> to vector<256x16xbf16>
    %c0_68 = arith.constant 0 : index
    %c384 = arith.constant 384 : index
    %57 = vector.load %arg7[%c0_68, %c384] : memref<512x512xbf16, #tpu.memory_space<vmem>>, vector<256x16xbf16>
    tpu.vector_store %arg7[%c0_68, %c384], %56 {strides = array<i32>} : memref<512x512xbf16, #tpu.memory_space<vmem>>, vector<256x16xbf16>,
    %c0_69 = arith.constant 0 : index
    %c2_70 = arith.constant 2 : index
    %c1_71 = arith.constant 1 : index
    %c0_72 = arith.constant 0 : index
    %58 = vector.load %arg1[%c0_69, %c2_70, %c1_71, %c0_72] : memref<2x18x18x32xbf16, #tpu.memory_space<vmem>>, vector<1x16x16x32xbf16>
    %59 = vector.shape_cast %58 : vector<1x16x16x32xbf16> to vector<16x16x32xbf16>
    %60 = vector.shape_cast %59 : vector<16x16x32xbf16> to vector<256x32xbf16>
    %c0_73 = arith.constant 0 : index
    %c224 = arith.constant 224 : index
    %61 = vector.load %arg7[%c0_73, %c224] : memref<512x512xbf16, #tpu.memory_space<vmem>>, vector<256x32xbf16>
    tpu.vector_store %arg7[%c0_73, %c224], %60 {strides = array<i32>} : memref<512x512xbf16, #tpu.memory_space<vmem>>, vector<256x32xbf16>,
    %c0_74 = arith.constant 0 : index
    %c2_75 = arith.constant 2 : index
    %c1_76 = arith.constant 1 : index
    %c0_77 = arith.constant 0 : index
    %62 = vector.load %arg2[%c0_74, %c2_75, %c1_76, %c0_77] : memref<2x18x18x16xbf16, #tpu.memory_space<vmem>>, vector<1x16x16x16xbf16>
    %63 = vector.shape_cast %62 : vector<1x16x16x16xbf16> to vector<16x16x16xbf16>
    %64 = vector.shape_cast %63 : vector<16x16x16xbf16> to vector<256x16xbf16>
    %c0_78 = arith.constant 0 : index
    %c400 = arith.constant 400 : index
    %65 = vector.load %arg7[%c0_78, %c400] : memref<512x512xbf16, #tpu.memory_space<vmem>>, vector<256x16xbf16>
    tpu.vector_store %arg7[%c0_78, %c400], %64 {strides = array<i32>} : memref<512x512xbf16, #tpu.memory_space<vmem>>, vector<256x16xbf16>,
    %c0_79 = arith.constant 0 : index
    %c2_80 = arith.constant 2 : index
    %c2_81 = arith.constant 2 : index
    %c0_82 = arith.constant 0 : index
    %66 = vector.load %arg1[%c0_79, %c2_80, %c2_81, %c0_82] : memref<2x18x18x32xbf16, #tpu.memory_space<vmem>>, vector<1x16x16x32xbf16>
    %67 = vector.shape_cast %66 : vector<1x16x16x32xbf16> to vector<16x16x32xbf16>
    %68 = vector.shape_cast %67 : vector<16x16x32xbf16> to vector<256x32xbf16>
    %c0_83 = arith.constant 0 : index
    %c256 = arith.constant 256 : index
    %69 = vector.load %arg7[%c0_83, %c256] : memref<512x512xbf16, #tpu.memory_space<vmem>>, vector<256x32xbf16>
    tpu.vector_store %arg7[%c0_83, %c256], %68 {strides = array<i32>} : memref<512x512xbf16, #tpu.memory_space<vmem>>, vector<256x32xbf16>,
    %c0_84 = arith.constant 0 : index
    %c2_85 = arith.constant 2 : index
    %c2_86 = arith.constant 2 : index
    %c0_87 = arith.constant 0 : index
    %70 = vector.load %arg2[%c0_84, %c2_85, %c2_86, %c0_87] : memref<2x18x18x16xbf16, #tpu.memory_space<vmem>>, vector<1x16x16x16xbf16>
    %71 = vector.shape_cast %70 : vector<1x16x16x16xbf16> to vector<16x16x16xbf16>
    %72 = vector.shape_cast %71 : vector<16x16x16xbf16> to vector<256x16xbf16>
    %c0_88 = arith.constant 0 : index
    %c416 = arith.constant 416 : index
    %73 = vector.load %arg7[%c0_88, %c416] : memref<512x512xbf16, #tpu.memory_space<vmem>>, vector<256x16xbf16>
    tpu.vector_store %arg7[%c0_88, %c416], %72 {strides = array<i32>} : memref<512x512xbf16, #tpu.memory_space<vmem>>, vector<256x16xbf16>,
    %c1_89 = arith.constant 1 : index
    %c0_90 = arith.constant 0 : index
    %c0_91 = arith.constant 0 : index
    %c0_92 = arith.constant 0 : index
    %74 = vector.load %arg1[%c1_89, %c0_90, %c0_91, %c0_92] : memref<2x18x18x32xbf16, #tpu.memory_space<vmem>>, vector<1x16x16x32xbf16>
    %75 = vector.shape_cast %74 : vector<1x16x16x32xbf16> to vector<16x16x32xbf16>
    %76 = vector.shape_cast %75 : vector<16x16x32xbf16> to vector<256x32xbf16>
    %c256_93 = arith.constant 256 : index
    %c0_94 = arith.constant 0 : index
    %77 = vector.load %arg7[%c256_93, %c0_94] : memref<512x512xbf16, #tpu.memory_space<vmem>>, vector<256x32xbf16>
    tpu.vector_store %arg7[%c256_93, %c0_94], %76 {strides = array<i32>} : memref<512x512xbf16, #tpu.memory_space<vmem>>, vector<256x32xbf16>,
    %c1_95 = arith.constant 1 : index
    %c0_96 = arith.constant 0 : index
    %c0_97 = arith.constant 0 : index
    %c0_98 = arith.constant 0 : index
    %78 = vector.load %arg2[%c1_95, %c0_96, %c0_97, %c0_98] : memref<2x18x18x16xbf16, #tpu.memory_space<vmem>>, vector<1x16x16x16xbf16>
    %79 = vector.shape_cast %78 : vector<1x16x16x16xbf16> to vector<16x16x16xbf16>
    %80 = vector.shape_cast %79 : vector<16x16x16xbf16> to vector<256x16xbf16>
    %c256_99 = arith.constant 256 : index
    %c288_100 = arith.constant 288 : index
    %81 = vector.load %arg7[%c256_99, %c288_100] : memref<512x512xbf16, #tpu.memory_space<vmem>>, vector<256x16xbf16>
    tpu.vector_store %arg7[%c256_99, %c288_100], %80 {strides = array<i32>} : memref<512x512xbf16, #tpu.memory_space<vmem>>, vector<256x16xbf16>,
    %c1_101 = arith.constant 1 : index
    %c0_102 = arith.constant 0 : index
    %c1_103 = arith.constant 1 : index
    %c0_104 = arith.constant 0 : index
    %82 = vector.load %arg1[%c1_101, %c0_102, %c1_103, %c0_104] : memref<2x18x18x32xbf16, #tpu.memory_space<vmem>>, vector<1x16x16x32xbf16>
    %83 = vector.shape_cast %82 : vector<1x16x16x32xbf16> to vector<16x16x32xbf16>
    %84 = vector.shape_cast %83 : vector<16x16x32xbf16> to vector<256x32xbf16>
    %c256_105 = arith.constant 256 : index
    %c32_106 = arith.constant 32 : index
    %85 = vector.load %arg7[%c256_105, %c32_106] : memref<512x512xbf16, #tpu.memory_space<vmem>>, vector<256x32xbf16>
    tpu.vector_store %arg7[%c256_105, %c32_106], %84 {strides = array<i32>} : memref<512x512xbf16, #tpu.memory_space<vmem>>, vector<256x32xbf16>,
    %c1_107 = arith.constant 1 : index
    %c0_108 = arith.constant 0 : index
    %c1_109 = arith.constant 1 : index
    %c0_110 = arith.constant 0 : index
    %86 = vector.load %arg2[%c1_107, %c0_108, %c1_109, %c0_110] : memref<2x18x18x16xbf16, #tpu.memory_space<vmem>>, vector<1x16x16x16xbf16>
    %87 = vector.shape_cast %86 : vector<1x16x16x16xbf16> to vector<16x16x16xbf16>
    %88 = vector.shape_cast %87 : vector<16x16x16xbf16> to vector<256x16xbf16>
    %c256_111 = arith.constant 256 : index
    %c304_112 = arith.constant 304 : index
    %89 = vector.load %arg7[%c256_111, %c304_112] : memref<512x512xbf16, #tpu.memory_space<vmem>>, vector<256x16xbf16>
    tpu.vector_store %arg7[%c256_111, %c304_112], %88 {strides = array<i32>} : memref<512x512xbf16, #tpu.memory_space<vmem>>, vector<256x16xbf16>,
    %c1_113 = arith.constant 1 : index
    %c0_114 = arith.constant 0 : index
    %c2_115 = arith.constant 2 : index
    %c0_116 = arith.constant 0 : index
    %90 = vector.load %arg1[%c1_113, %c0_114, %c2_115, %c0_116] : memref<2x18x18x32xbf16, #tpu.memory_space<vmem>>, vector<1x16x16x32xbf16>
    %91 = vector.shape_cast %90 : vector<1x16x16x32xbf16> to vector<16x16x32xbf16>
    %92 = vector.shape_cast %91 : vector<16x16x32xbf16> to vector<256x32xbf16>
    %c256_117 = arith.constant 256 : index
    %c64_118 = arith.constant 64 : index
    %93 = vector.load %arg7[%c256_117, %c64_118] : memref<512x512xbf16, #tpu.memory_space<vmem>>, vector<256x32xbf16>
    tpu.vector_store %arg7[%c256_117, %c64_118], %92 {strides = array<i32>} : memref<512x512xbf16, #tpu.memory_space<vmem>>, vector<256x32xbf16>,
    %c1_119 = arith.constant 1 : index
    %c0_120 = arith.constant 0 : index
    %c2_121 = arith.constant 2 : index
    %c0_122 = arith.constant 0 : index
    %94 = vector.load %arg2[%c1_119, %c0_120, %c2_121, %c0_122] : memref<2x18x18x16xbf16, #tpu.memory_space<vmem>>, vector<1x16x16x16xbf16>
    %95 = vector.shape_cast %94 : vector<1x16x16x16xbf16> to vector<16x16x16xbf16>
    %96 = vector.shape_cast %95 : vector<16x16x16xbf16> to vector<256x16xbf16>
    %c256_123 = arith.constant 256 : index
    %c320_124 = arith.constant 320 : index
    %97 = vector.load %arg7[%c256_123, %c320_124] : memref<512x512xbf16, #tpu.memory_space<vmem>>, vector<256x16xbf16>
    tpu.vector_store %arg7[%c256_123, %c320_124], %96 {strides = array<i32>} : memref<512x512xbf16, #tpu.memory_space<vmem>>, vector<256x16xbf16>,
    %c1_125 = arith.constant 1 : index
    %c1_126 = arith.constant 1 : index
    %c0_127 = arith.constant 0 : index
    %c0_128 = arith.constant 0 : index
    %98 = vector.load %arg1[%c1_125, %c1_126, %c0_127, %c0_128] : memref<2x18x18x32xbf16, #tpu.memory_space<vmem>>, vector<1x16x16x32xbf16>
    %99 = vector.shape_cast %98 : vector<1x16x16x32xbf16> to vector<16x16x32xbf16>
    %100 = vector.shape_cast %99 : vector<16x16x32xbf16> to vector<256x32xbf16>
    %c256_129 = arith.constant 256 : index
    %c96_130 = arith.constant 96 : index
    %101 = vector.load %arg7[%c256_129, %c96_130] : memref<512x512xbf16, #tpu.memory_space<vmem>>, vector<256x32xbf16>
    tpu.vector_store %arg7[%c256_129, %c96_130], %100 {strides = array<i32>} : memref<512x512xbf16, #tpu.memory_space<vmem>>, vector<256x32xbf16>,
    %c1_131 = arith.constant 1 : index
    %c1_132 = arith.constant 1 : index
    %c0_133 = arith.constant 0 : index
    %c0_134 = arith.constant 0 : index
    %102 = vector.load %arg2[%c1_131, %c1_132, %c0_133, %c0_134] : memref<2x18x18x16xbf16, #tpu.memory_space<vmem>>, vector<1x16x16x16xbf16>
    %103 = vector.shape_cast %102 : vector<1x16x16x16xbf16> to vector<16x16x16xbf16>
    %104 = vector.shape_cast %103 : vector<16x16x16xbf16> to vector<256x16xbf16>
    %c256_135 = arith.constant 256 : index
    %c336_136 = arith.constant 336 : index
    %105 = vector.load %arg7[%c256_135, %c336_136] : memref<512x512xbf16, #tpu.memory_space<vmem>>, vector<256x16xbf16>
    tpu.vector_store %arg7[%c256_135, %c336_136], %104 {strides = array<i32>} : memref<512x512xbf16, #tpu.memory_space<vmem>>, vector<256x16xbf16>,
    %c1_137 = arith.constant 1 : index
    %c1_138 = arith.constant 1 : index
    %c1_139 = arith.constant 1 : index
    %c0_140 = arith.constant 0 : index
    %106 = vector.load %arg1[%c1_137, %c1_138, %c1_139, %c0_140] : memref<2x18x18x32xbf16, #tpu.memory_space<vmem>>, vector<1x16x16x32xbf16>
    %107 = vector.shape_cast %106 : vector<1x16x16x32xbf16> to vector<16x16x32xbf16>
    %108 = vector.shape_cast %107 : vector<16x16x32xbf16> to vector<256x32xbf16>
    %c256_141 = arith.constant 256 : index
    %c128_142 = arith.constant 128 : index
    %109 = vector.load %arg7[%c256_141, %c128_142] : memref<512x512xbf16, #tpu.memory_space<vmem>>, vector<256x32xbf16>
    tpu.vector_store %arg7[%c256_141, %c128_142], %108 {strides = array<i32>} : memref<512x512xbf16, #tpu.memory_space<vmem>>, vector<256x32xbf16>,
    %c1_143 = arith.constant 1 : index
    %c1_144 = arith.constant 1 : index
    %c1_145 = arith.constant 1 : index
    %c0_146 = arith.constant 0 : index
    %110 = vector.load %arg2[%c1_143, %c1_144, %c1_145, %c0_146] : memref<2x18x18x16xbf16, #tpu.memory_space<vmem>>, vector<1x16x16x16xbf16>
    %111 = vector.shape_cast %110 : vector<1x16x16x16xbf16> to vector<16x16x16xbf16>
    %112 = vector.shape_cast %111 : vector<16x16x16xbf16> to vector<256x16xbf16>
    %c256_147 = arith.constant 256 : index
    %c352_148 = arith.constant 352 : index
    %113 = vector.load %arg7[%c256_147, %c352_148] : memref<512x512xbf16, #tpu.memory_space<vmem>>, vector<256x16xbf16>
    tpu.vector_store %arg7[%c256_147, %c352_148], %112 {strides = array<i32>} : memref<512x512xbf16, #tpu.memory_space<vmem>>, vector<256x16xbf16>,
    %c1_149 = arith.constant 1 : index
    %c1_150 = arith.constant 1 : index
    %c2_151 = arith.constant 2 : index
    %c0_152 = arith.constant 0 : index
    %114 = vector.load %arg1[%c1_149, %c1_150, %c2_151, %c0_152] : memref<2x18x18x32xbf16, #tpu.memory_space<vmem>>, vector<1x16x16x32xbf16>
    %115 = vector.shape_cast %114 : vector<1x16x16x32xbf16> to vector<16x16x32xbf16>
    %116 = vector.shape_cast %115 : vector<16x16x32xbf16> to vector<256x32xbf16>
    %c256_153 = arith.constant 256 : index
    %c160_154 = arith.constant 160 : index
    %117 = vector.load %arg7[%c256_153, %c160_154] : memref<512x512xbf16, #tpu.memory_space<vmem>>, vector<256x32xbf16>
    tpu.vector_store %arg7[%c256_153, %c160_154], %116 {strides = array<i32>} : memref<512x512xbf16, #tpu.memory_space<vmem>>, vector<256x32xbf16>,
    %c1_155 = arith.constant 1 : index
    %c1_156 = arith.constant 1 : index
    %c2_157 = arith.constant 2 : index
    %c0_158 = arith.constant 0 : index
    %118 = vector.load %arg2[%c1_155, %c1_156, %c2_157, %c0_158] : memref<2x18x18x16xbf16, #tpu.memory_space<vmem>>, vector<1x16x16x16xbf16>
    %119 = vector.shape_cast %118 : vector<1x16x16x16xbf16> to vector<16x16x16xbf16>
    %120 = vector.shape_cast %119 : vector<16x16x16xbf16> to vector<256x16xbf16>
    %c256_159 = arith.constant 256 : index
    %c368_160 = arith.constant 368 : index
    %121 = vector.load %arg7[%c256_159, %c368_160] : memref<512x512xbf16, #tpu.memory_space<vmem>>, vector<256x16xbf16>
    tpu.vector_store %arg7[%c256_159, %c368_160], %120 {strides = array<i32>} : memref<512x512xbf16, #tpu.memory_space<vmem>>, vector<256x16xbf16>,
    %c1_161 = arith.constant 1 : index
    %c2_162 = arith.constant 2 : index
    %c0_163 = arith.constant 0 : index
    %c0_164 = arith.constant 0 : index
    %122 = vector.load %arg1[%c1_161, %c2_162, %c0_163, %c0_164] : memref<2x18x18x32xbf16, #tpu.memory_space<vmem>>, vector<1x16x16x32xbf16>
    %123 = vector.shape_cast %122 : vector<1x16x16x32xbf16> to vector<16x16x32xbf16>
    %124 = vector.shape_cast %123 : vector<16x16x32xbf16> to vector<256x32xbf16>
    %c256_165 = arith.constant 256 : index
    %c192_166 = arith.constant 192 : index
    %125 = vector.load %arg7[%c256_165, %c192_166] : memref<512x512xbf16, #tpu.memory_space<vmem>>, vector<256x32xbf16>
    tpu.vector_store %arg7[%c256_165, %c192_166], %124 {strides = array<i32>} : memref<512x512xbf16, #tpu.memory_space<vmem>>, vector<256x32xbf16>,
    %c1_167 = arith.constant 1 : index
    %c2_168 = arith.constant 2 : index
    %c0_169 = arith.constant 0 : index
    %c0_170 = arith.constant 0 : index
    %126 = vector.load %arg2[%c1_167, %c2_168, %c0_169, %c0_170] : memref<2x18x18x16xbf16, #tpu.memory_space<vmem>>, vector<1x16x16x16xbf16>
    %127 = vector.shape_cast %126 : vector<1x16x16x16xbf16> to vector<16x16x16xbf16>
    %128 = vector.shape_cast %127 : vector<16x16x16xbf16> to vector<256x16xbf16>
    %c256_171 = arith.constant 256 : index
    %c384_172 = arith.constant 384 : index
    %129 = vector.load %arg7[%c256_171, %c384_172] : memref<512x512xbf16, #tpu.memory_space<vmem>>, vector<256x16xbf16>
    tpu.vector_store %arg7[%c256_171, %c384_172], %128 {strides = array<i32>} : memref<512x512xbf16, #tpu.memory_space<vmem>>, vector<256x16xbf16>,
    %c1_173 = arith.constant 1 : index
    %c2_174 = arith.constant 2 : index
    %c1_175 = arith.constant 1 : index
    %c0_176 = arith.constant 0 : index
    %130 = vector.load %arg1[%c1_173, %c2_174, %c1_175, %c0_176] : memref<2x18x18x32xbf16, #tpu.memory_space<vmem>>, vector<1x16x16x32xbf16>
    %131 = vector.shape_cast %130 : vector<1x16x16x32xbf16> to vector<16x16x32xbf16>
    %132 = vector.shape_cast %131 : vector<16x16x32xbf16> to vector<256x32xbf16>
    %c256_177 = arith.constant 256 : index
    %c224_178 = arith.constant 224 : index
    %133 = vector.load %arg7[%c256_177, %c224_178] : memref<512x512xbf16, #tpu.memory_space<vmem>>, vector<256x32xbf16>
    tpu.vector_store %arg7[%c256_177, %c224_178], %132 {strides = array<i32>} : memref<512x512xbf16, #tpu.memory_space<vmem>>, vector<256x32xbf16>,
    %c1_179 = arith.constant 1 : index
    %c2_180 = arith.constant 2 : index
    %c1_181 = arith.constant 1 : index
    %c0_182 = arith.constant 0 : index
    %134 = vector.load %arg2[%c1_179, %c2_180, %c1_181, %c0_182] : memref<2x18x18x16xbf16, #tpu.memory_space<vmem>>, vector<1x16x16x16xbf16>
    %135 = vector.shape_cast %134 : vector<1x16x16x16xbf16> to vector<16x16x16xbf16>
    %136 = vector.shape_cast %135 : vector<16x16x16xbf16> to vector<256x16xbf16>
    %c256_183 = arith.constant 256 : index
    %c400_184 = arith.constant 400 : index
    %137 = vector.load %arg7[%c256_183, %c400_184] : memref<512x512xbf16, #tpu.memory_space<vmem>>, vector<256x16xbf16>
    tpu.vector_store %arg7[%c256_183, %c400_184], %136 {strides = array<i32>} : memref<512x512xbf16, #tpu.memory_space<vmem>>, vector<256x16xbf16>,
    %c1_185 = arith.constant 1 : index
    %c2_186 = arith.constant 2 : index
    %c2_187 = arith.constant 2 : index
    %c0_188 = arith.constant 0 : index
    %138 = vector.load %arg1[%c1_185, %c2_186, %c2_187, %c0_188] : memref<2x18x18x32xbf16, #tpu.memory_space<vmem>>, vector<1x16x16x32xbf16>
    %139 = vector.shape_cast %138 : vector<1x16x16x32xbf16> to vector<16x16x32xbf16>
    %140 = vector.shape_cast %139 : vector<16x16x32xbf16> to vector<256x32xbf16>
    %c256_189 = arith.constant 256 : index
    %c256_190 = arith.constant 256 : index
    %141 = vector.load %arg7[%c256_189, %c256_190] : memref<512x512xbf16, #tpu.memory_space<vmem>>, vector<256x32xbf16>
    tpu.vector_store %arg7[%c256_189, %c256_190], %140 {strides = array<i32>} : memref<512x512xbf16, #tpu.memory_space<vmem>>, vector<256x32xbf16>,
    %c1_191 = arith.constant 1 : index
    %c2_192 = arith.constant 2 : index
    %c2_193 = arith.constant 2 : index
    %c0_194 = arith.constant 0 : index
    %142 = vector.load %arg2[%c1_191, %c2_192, %c2_193, %c0_194] : memref<2x18x18x16xbf16, #tpu.memory_space<vmem>>, vector<1x16x16x16xbf16>
    %143 = vector.shape_cast %142 : vector<1x16x16x16xbf16> to vector<16x16x16xbf16>
    %144 = vector.shape_cast %143 : vector<16x16x16xbf16> to vector<256x16xbf16>
    %c256_195 = arith.constant 256 : index
    %c416_196 = arith.constant 416 : index
    %145 = vector.load %arg7[%c256_195, %c416_196] : memref<512x512xbf16, #tpu.memory_space<vmem>>, vector<256x16xbf16>
    tpu.vector_store %arg7[%c256_195, %c416_196], %144 {strides = array<i32>} : memref<512x512xbf16, #tpu.memory_space<vmem>>, vector<256x16xbf16>,
    %c0_197 = arith.constant 0 : index
    %c0_198 = arith.constant 0 : index
    %146 = vector.load %arg3[%c0_197, %c0_198] : memref<16x512xbf16, #tpu.memory_space<vmem>>, vector<16x512xbf16>
    %c0_199 = arith.constant 0 : index
    %c0_200 = arith.constant 0 : index
    %147 = vector.load %arg7[%c0_199, %c0_200] : memref<512x512xbf16, #tpu.memory_space<vmem>>, vector<512x512xbf16>
    %cst_201 = arith.constant dense<0.000000e+00> : vector<16x512xf32>
    %148 = tpu.matmul %146, %147, %cst_201 {dimension_numbers = #tpu.dot_dimension_numbers<[1], [1], [0], [0], [0, 0, 1, 0], [], []>} : vector<16x512xbf16>, vector<512x512xbf16>, vector<16x512xf32> -> vector<16x512xf32>
    %cst_202 = arith.constant dense<0.000000e+00> : vector<16xf32>
    %149 = vector.multi_reduction <add>, %148, %cst_202 [1] : vector<16x512xf32> to vector<16xf32>
    %150 = vector.shape_cast %149 : vector<16xf32> to vector<16x1xf32>
    %cst_203 = arith.constant 0.001953125 : f32
    %151 = vector.broadcast %cst_203 : f32 to vector<16x1xf32>
    %152 = arith.mulf %150, %151 : vector<16x1xf32>
    %153 = vector.broadcast %152 : vector<16x1xf32> to vector<16x512xf32>
    %154 = arith.subf %148, %153 : vector<16x512xf32>
    %155 = arith.mulf %154, %154 : vector<16x512xf32>
    %cst_204 = arith.constant dense<0.000000e+00> : vector<16xf32>
    %156 = vector.multi_reduction <add>, %155, %cst_204 [1] : vector<16x512xf32> to vector<16xf32>
    %157 = vector.shape_cast %156 : vector<16xf32> to vector<16x1xf32>
    %cst_205 = arith.constant 0.001953125 : f32
    %158 = vector.broadcast %cst_205 : f32 to vector<16x1xf32>
    %159 = arith.mulf %157, %158 : vector<16x1xf32>
    %cst_206 = arith.constant 0.000000e+00 : f32
    %160 = vector.broadcast %cst_206 : f32 to vector<16x1xf32>
    %161 = arith.maximumf %159, %160 : vector<16x1xf32>
    %c0_207 = arith.constant 0 : index
    %c0_208 = arith.constant 0 : index
    %162 = vector.load %arg4[%c0_207, %c0_208] : memref<16x1xf32, #tpu.memory_space<vmem>>, vector<16x1xf32>
    %cst_209 = arith.constant 9.99999974E-6 : f32
    %163 = vector.broadcast %cst_209 : f32 to vector<16x1xf32>
    %164 = arith.addf %161, %163 : vector<16x1xf32>
    %165 = math.rsqrt %164 : vector<16x1xf32>
    %166 = arith.mulf %162, %165 : vector<16x1xf32>
    %c0_210 = arith.constant 0 : index
    %c0_211 = arith.constant 0 : index
    %167 = vector.load %arg5[%c0_210, %c0_211] : memref<16x1xf32, #tpu.memory_space<vmem>>, vector<16x1xf32>
    %168 = arith.mulf %152, %166 : vector<16x1xf32>
    %169 = arith.subf %167, %168 : vector<16x1xf32>
    %170 = vector.broadcast %166 : vector<16x1xf32> to vector<16x512xf32>
    %171 = arith.mulf %148, %170 : vector<16x512xf32>
    %172 = vector.broadcast %169 : vector<16x1xf32> to vector<16x512xf32>
    %173 = arith.addf %171, %172 : vector<16x512xf32>
    %cst_212 = arith.constant 0.000000e+00 : f32
    %174 = vector.broadcast %cst_212 : f32 to vector<16x512xf32>
    %175 = arith.maximumf %173, %174 : vector<16x512xf32>
    %176 = vector.extract_strided_slice %175 {offsets = [0, 0], sizes = [16, 256], strides = [1, 1]} : vector<16x512xf32> to vector<16x256xf32>
    %c0_213 = arith.constant 0 : index
    %c0_214 = arith.constant 0 : index
    %c0_215 = arith.constant 0 : index
    %177 = vector.load %arg6[%c0_213, %c0_214, %c0_215] : memref<2x16x256xf32, #tpu.memory_space<vmem>>, vector<1x16x256xf32>
    %178 = vector.shape_cast %177 : vector<1x16x256xf32> to vector<16x256xf32>
    %179 = vector.shape_cast %176 : vector<16x256xf32> to vector<1x16x256xf32>
    tpu.vector_store %arg6[%c0_213, %c0_214, %c0_215], %179 {strides = array<i32>} : memref<2x16x256xf32, #tpu.memory_space<vmem>>, vector<1x16x256xf32>,
    %180 = vector.extract_strided_slice %175 {offsets = [0, 256], sizes = [16, 256], strides = [1, 1]} : vector<16x512xf32> to vector<16x256xf32>
    %c1_216 = arith.constant 1 : index
    %c0_217 = arith.constant 0 : index
    %c0_218 = arith.constant 0 : index
    %181 = vector.load %arg6[%c1_216, %c0_217, %c0_218] : memref<2x16x256xf32, #tpu.memory_space<vmem>>, vector<1x16x256xf32>
    %182 = vector.shape_cast %181 : vector<1x16x256xf32> to vector<16x256xf32>
    %183 = vector.shape_cast %180 : vector<16x256xf32> to vector<1x16x256xf32>
    tpu.vector_store %arg6[%c1_216, %c0_217, %c0_218], %183 {strides = array<i32>} : memref<2x16x256xf32, #tpu.memory_space<vmem>>, vector<1x16x256xf32>,
    return
  }
  func.func @transform_0(%arg0: i32) -> (i32, i32, i32, i32) {
    %c0_i32 = arith.constant 0 : i32
    %c0_i32_0 = arith.constant 0 : i32
    %c0_i32_1 = arith.constant 0 : i32
    %c0_i32_2 = arith.constant 0 : i32
    %c0_i32_3 = arith.constant 0 : i32
    return %c0_i32, %c0_i32_0, %c0_i32_1, %c0_i32_2 : i32, i32, i32, i32
  }
  func.func @transform_1(%arg0: i32) -> (i32, i32, i32, i32) {
    %c0_i32 = arith.constant 0 : i32
    %c0_i32_0 = arith.constant 0 : i32
    %c0_i32_1 = arith.constant 0 : i32
    %c0_i32_2 = arith.constant 0 : i32
    %c0_i32_3 = arith.constant 0 : i32
    return %c0_i32, %c0_i32_0, %c0_i32_1, %c0_i32_2 : i32, i32, i32, i32
  }
  func.func @transform_2(%arg0: i32) -> (i32, i32) {
    %c0_i32 = arith.constant 0 : i32
    %c0_i32_0 = arith.constant 0 : i32
    %c0_i32_1 = arith.constant 0 : i32
    return %c0_i32, %c0_i32_0 : i32, i32
  }
  func.func @transform_3(%arg0: i32) -> (i32, i32) {
    %c0_i32 = arith.constant 0 : i32
    %c0_i32_0 = arith.constant 0 : i32
    %c0_i32_1 = arith.constant 0 : i32
    return %c0_i32, %c0_i32_0 : i32, i32
  }
  func.func @transform_4(%arg0: i32) -> (i32, i32) {
    %c0_i32 = arith.constant 0 : i32
    %c0_i32_0 = arith.constant 0 : i32
    %c0_i32_1 = arith.constant 0 : i32
    return %c0_i32, %c0_i32_0 : i32, i32
  }
  func.func @transform_5(%arg0: i32) -> (i32, i32, i32) {
    %c0_i32 = arith.constant 0 : i32
    %c0_i32_0 = arith.constant 0 : i32
    %c0_i32_1 = arith.constant 0 : i32
    %c0_i32_2 = arith.constant 0 : i32
    return %c0_i32, %c0_i32_0, %c0_i32_1 : i32, i32, i32
  }
}

</mosaic_0001>

<llo_original>
// kernel: decoder_block_forward.1
$region0: #{decoder_block_forward.1}
  #allocation0 [shape = 'u32[]', space=smem, size = 0x4, offset = 0x4, fixed_abs, tag = 'smem constant byte address 0x4 - core index']
  #allocation1 [shape = 'u32[144,128]{1,0:T(1,128)}', space=vmem, size = 0x12000, scoped, tag = 'internal scratch']
  #allocation2 [shape = 'bf16[512,512]{1,0:T(8,128)(2,1)}', space=vmem, size = 0x80000, scoped, tag = 'scratch operand']
  %s0 = inlined_call_operand.vmem [shape: bf16[2,18,18,32], index: 0, kind: input, shape index: {}]
  %s1 = inlined_call_operand.vmem [shape: bf16[2,18,18,16], index: 1, kind: input, shape index: {}]
  %s2 = inlined_call_operand.vmem [shape: bf16[16,512], index: 2, kind: input, shape index: {}]
  %s3 = inlined_call_operand.vmem [shape: f32[16,1], index: 3, kind: input, shape index: {}]
  %s4 = inlined_call_operand.vmem [shape: f32[16,1], index: 4, kind: input, shape index: {}]
  %s5 = inlined_call_operand.vmem [shape: f32[2,16,256], index: 5, kind: output, shape index: {}]
  %s6 = sld [smem:[#allocation0]]
  $region30: #{decoder_block_forward.1} parent=0
    _
  %s8 = ssub.s32 1, %s6
  %s9 = scalar_select 0, %s8, %s6
  // Predicated region
  $region2: #{decoder_block_forward.1} parent=0 // pred_check
    _
  $region3: #{decoder_block_forward.1} parent=0 // pred_check_branch
    %11 = sbr.rel (0) target = $region5
  $region4: #{decoder_block_forward.1} parent=0 // pred_region
    _
  $region5: #{decoder_block_forward.1} parent=0 // pred_fallthru
    _
  // Predicated region
  $region6: #{decoder_block_forward.1} parent=0 // pred_check
    _
  $region7: #{decoder_block_forward.1} parent=0 // pred_check_branch
    %13 = sbr.rel (0) target = $region9
  $region8: #{decoder_block_forward.1} parent=0 // pred_region
    _
  $region9: #{decoder_block_forward.1} parent=0 // pred_fallthru
    _
  // Predicated region
  $region10: #{decoder_block_forward.1} parent=0 // pred_check
    _
  $region11: #{decoder_block_forward.1} parent=0 // pred_check_branch
    %15 = sbr.rel (0) target = $region13
  $region12: #{decoder_block_forward.1} parent=0 // pred_region
    _
  $region13: #{decoder_block_forward.1} parent=0 // pred_fallthru
    _
  // Predicated region
  $region14: #{decoder_block_forward.1} parent=0 // pred_check
    _
  $region15: #{decoder_block_forward.1} parent=0 // pred_check_branch
    %17 = sbr.rel (0) target = $region17
  $region16: #{decoder_block_forward.1} parent=0 // pred_region
    _
  $region17: #{decoder_block_forward.1} parent=0 // pred_fallthru
    _
  // Predicated region
  $region18: #{decoder_block_forward.1} parent=0 // pred_check
    _
  $region19: #{decoder_block_forward.1} parent=0 // pred_check_branch
    %19 = sbr.rel (0) target = $region21
  $region20: #{decoder_block_forward.1} parent=0 // pred_region
    _
  $region21: #{decoder_block_forward.1} parent=0 // pred_fallthru
    _
  %vm21 = vcmask 1043840
  %22 = vst.msk [vmem:[#allocation2 + $0xc] sm:$0xf] %vm21, 0
  %23 = vst.msk [vmem:[#allocation2 + $0x1c] sm:$0xf] %vm21, 0
  %24 = vst.msk [vmem:[#allocation2 + $0x2c] sm:$0xf] %vm21, 0
  %25 = vst.msk [vmem:[#allocation2 + $0x3c] sm:$0xf] %vm21, 0
  %26 = vst.msk [vmem:[#allocation2 + $0x4c] sm:$0xf] %vm21, 0
  %27 = vst.msk [vmem:[#allocation2 + $0x5c] sm:$0xf] %vm21, 0
  %28 = vst.msk [vmem:[#allocation2 + $0x6c] sm:$0xf] %vm21, 0
  %29 = vst.msk [vmem:[#allocation2 + $0x7c] sm:$0xf] %vm21, 0
  %30 = vst.msk [vmem:[#allocation2 + $0x8c] sm:$0xf] %vm21, 0
  %31 = vst.msk [vmem:[#allocation2 + $0x9c] sm:$0xf] %vm21, 0
  %32 = vst.msk [vmem:[#allocation2 + $0xac] sm:$0xf] %vm21, 0
  %33 = vst.msk [vmem:[#allocation2 + $0xbc] sm:$0xf] %vm21, 0
  %34 = vst.msk [vmem:[#allocation2 + $0xcc] sm:$0xf] %vm21, 0
  %35 = vst.msk [vmem:[#allocation2 + $0xdc] sm:$0xf] %vm21, 0
  %36 = vst.msk [vmem:[#allocation2 + $0xec] sm:$0xf] %vm21, 0
  %37 = vst.msk [vmem:[#allocation2 + $0xfc] sm:$0xf] %vm21, 0
  %38 = vst.msk [vmem:[#allocation2 + $0x10c] sm:$0xf] %vm21, 0
  %39 = vst.msk [vmem:[#allocation2 + $0x11c] sm:$0xf] %vm21, 0
  %40 = vst.msk [vmem:[#allocation2 + $0x12c] sm:$0xf] %vm21, 0
  %41 = vst.msk [vmem:[#allocation2 + $0x13c] sm:$0xf] %vm21, 0
  %42 = vst.msk [vmem:[#allocation2 + $0x14c] sm:$0xf] %vm21, 0
  %43 = vst.msk [vmem:[#allocation2 + $0x15c] sm:$0xf] %vm21, 0
  %44 = vst.msk [vmem:[#allocation2 + $0x16c] sm:$0xf] %vm21, 0
  %45 = vst.msk [vmem:[#allocation2 + $0x17c] sm:$0xf] %vm21, 0
  %46 = vst.msk [vmem:[#allocation2 + $0x18c] sm:$0xf] %vm21, 0
  %47 = vst.msk [vmem:[#allocation2 + $0x19c] sm:$0xf] %vm21, 0
  %48 = vst.msk [vmem:[#allocation2 + $0x1ac] sm:$0xf] %vm21, 0
  %49 = vst.msk [vmem:[#allocation2 + $0x1bc] sm:$0xf] %vm21, 0
  %50 = vst.msk [vmem:[#allocation2 + $0x1cc] sm:$0xf] %vm21, 0
  %51 = vst.msk [vmem:[#allocation2 + $0x1dc] sm:$0xf] %vm21, 0
  %52 = vst.msk [vmem:[#allocation2 + $0x1ec] sm:$0xf] %vm21, 0
  %53 = vst.msk [vmem:[#allocation2 + $0x1fc] sm:$0xf] %vm21, 0
  %54 = vst.msk [vmem:[#allocation2 + $0x20c] sm:$0xf] %vm21, 0
  %55 = vst.msk [vmem:[#allocation2 + $0x21c] sm:$0xf] %vm21, 0
  %56 = vst.msk [vmem:[#allocation2 + $0x22c] sm:$0xf] %vm21, 0
  %57 = vst.msk [vmem:[#allocation2 + $0x23c] sm:$0xf] %vm21, 0
  %58 = vst.msk [vmem:[#allocation2 + $0x24c] sm:$0xf] %vm21, 0
  %59 = vst.msk [vmem:[#allocation2 + $0x25c] sm:$0xf] %vm21, 0
  %60 = vst.msk [vmem:[#allocation2 + $0x26c] sm:$0xf] %vm21, 0
  %61 = vst.msk [vmem:[#allocation2 + $0x27c] sm:$0xf] %vm21, 0
  %62 = vst.msk [vmem:[#allocation2 + $0x28c] sm:$0xf] %vm21, 0
  %63 = vst.msk [vmem:[#allocation2 + $0x29c] sm:$0xf] %vm21, 0
  %64 = vst.msk [vmem:[#allocation2 + $0x2ac] sm:$0xf] %vm21, 0
  %65 = vst.msk [vmem:[#allocation2 + $0x2bc] sm:$0xf] %vm21, 0
  %66 = vst.msk [vmem:[#allocation2 + $0x2cc] sm:$0xf] %vm21, 0
  %67 = vst.msk [vmem:[#allocation2 + $0x2dc] sm:$0xf] %vm21, 0
  %68 = vst.msk [vmem:[#allocation2 + $0x2ec] sm:$0xf] %vm21, 0
  %69 = vst.msk [vmem:[#allocation2 + $0x2fc] sm:$0xf] %vm21, 0
  %70 = vst.msk [vmem:[#allocation2 + $0x30c] sm:$0xf] %vm21, 0
  %71 = vst.msk [vmem:[#allocation2 + $0x31c] sm:$0xf] %vm21, 0
  %72 = vst.msk [vmem:[#allocation2 + $0x32c] sm:$0xf] %vm21, 0
  %73 = vst.msk [vmem:[#allocation2 + $0x33c] sm:$0xf] %vm21, 0
  %74 = vst.msk [vmem:[#allocation2 + $0x34c] sm:$0xf] %vm21, 0
  %75 = vst.msk [vmem:[#allocation2 + $0x35c] sm:$0xf] %vm21, 0
  %76 = vst.msk [vmem:[#allocation2 + $0x36c] sm:$0xf] %vm21, 0
  %77 = vst.msk [vmem:[#allocation2 + $0x37c] sm:$0xf] %vm21, 0
  %78 = vst.msk [vmem:[#allocation2 + $0x38c] sm:$0xf] %vm21, 0
  %79 = vst.msk [vmem:[#allocation2 + $0x39c] sm:$0xf] %vm21, 0
  %80 = vst.msk [vmem:[#allocation2 + $0x3ac] sm:$0xf] %vm21, 0
  %81 = vst.msk [vmem:[#allocation2 + $0x3bc] sm:$0xf] %vm21, 0
  %82 = vst.msk [vmem:[#allocation2 + $0x3cc] sm:$0xf] %vm21, 0
  %83 = vst.msk [vmem:[#allocation2 + $0x3dc] sm:$0xf] %vm21, 0
  %84 = vst.msk [vmem:[#allocation2 + $0x3ec] sm:$0xf] %vm21, 0
  %85 = vst.msk [vmem:[#allocation2 + $0x3fc] sm:$0xf] %vm21, 0
  %v86 = vld [vmem:[%s0] sm:$0xf]
  %v87 = vld [vmem:[%s0 + $0x4] sm:$0xf]
  %v88 = vld [vmem:[%s0 + $0xc] sm:$0xf]
  %v89 = vld [vmem:[%s0 + $0x10] sm:$0xf]
  %v90 = vld [vmem:[%s0 + $0x18] sm:$0xf]
  %v91 = vld [vmem:[%s0 + $0x1c] sm:$0xf]
  %v92 = vld [vmem:[%s0 + $0x24] sm:$0xf]
  %v93 = vld [vmem:[%s0 + $0x28] sm:$0xf]
  %v94 = vld [vmem:[%s0 + $0x30] sm:$0xf]
  %v95 = vld [vmem:[%s0 + $0x34] sm:$0xf]
  %v96 = vld [vmem:[%s0 + $0x3c] sm:$0xf]
  %v97 = vld [vmem:[%s0 + $0x40] sm:$0xf]
  %v98 = vld [vmem:[%s0 + $0x48] sm:$0xf]
  %v99 = vld [vmem:[%s0 + $0x4c] sm:$0xf]
  %v100 = vld [vmem:[%s0 + $0x54] sm:$0xf]
  %v101 = vld [vmem:[%s0 + $0x58] sm:$0xf]
  %v102 = vld [vmem:[%s0 + $0x60] sm:$0xf]
  %v103 = vld [vmem:[%s0 + $0x64] sm:$0xf]
  %v104 = vld [vmem:[%s0 + $0x6c] sm:$0xf]
  %v105 = vld [vmem:[%s0 + $0x70] sm:$0xf]
  %v106 = vld [vmem:[%s0 + $0x78] sm:$0xf]
  %v107 = vld [vmem:[%s0 + $0x7c] sm:$0xf]
  %v108 = vld [vmem:[%s0 + $0x84] sm:$0xf]
  %v109 = vld [vmem:[%s0 + $0x88] sm:$0xf]
  %v110 = vld [vmem:[%s0 + $0x90] sm:$0xf]
  %v111 = vld [vmem:[%s0 + $0x94] sm:$0xf]
  %v112 = vld [vmem:[%s0 + $0x9c] sm:$0xf]
  %v113 = vld [vmem:[%s0 + $0xa0] sm:$0xf]
  %v114 = vld [vmem:[%s0 + $0xa8] sm:$0xf]
  %v115 = vld [vmem:[%s0 + $0xac] sm:$0xf]
  %v116 = vld [vmem:[%s0 + $0xb4] sm:$0xf]
  %v117 = vld [vmem:[%s0 + $0xb8] sm:$0xf]
  %vm118 = vcmask 257024
  %119 = vst.msk [vmem:[#allocation2] sm:$0xf] %vm118, %v86
  %120 = vst.msk [vmem:[#allocation2 + $0x10] sm:$0xf] %vm118, %v87
  %121 = vst.msk [vmem:[#allocation2 + $0x20] sm:$0xf] %vm118, %v88
  %122 = vst.msk [vmem:[#allocation2 + $0x30] sm:$0xf] %vm118, %v89
  %123 = vst.msk [vmem:[#allocation2 + $0x40] sm:$0xf] %vm118, %v90
  %124 = vst.msk [vmem:[#allocation2 + $0x50] sm:$0xf] %vm118, %v91
  %125 = vst.msk [vmem:[#allocation2 + $0x60] sm:$0xf] %vm118, %v92
  %126 = vst.msk [vmem:[#allocation2 + $0x70] sm:$0xf] %vm118, %v93
  %127 = vst.msk [vmem:[#allocation2 + $0x80] sm:$0xf] %vm118, %v94
  %128 = vst.msk [vmem:[#allocation2 + $0x90] sm:$0xf] %vm118, %v95
  %129 = vst.msk [vmem:[#allocation2 + $0xa0] sm:$0xf] %vm118, %v96
  %130 = vst.msk [vmem:[#allocation2 + $0xb0] sm:$0xf] %vm118, %v97
  %131 = vst.msk [vmem:[#allocation2 + $0xc0] sm:$0xf] %vm118, %v98
  %132 = vst.msk [vmem:[#allocation2 + $0xd0] sm:$0xf] %vm118, %v99
  %133 = vst.msk [vmem:[#allocation2 + $0xe0] sm:$0xf] %vm118, %v100
  %134 = vst.msk [vmem:[#allocation2 + $0xf0] sm:$0xf] %vm118, %v101
  %135 = vst.msk [vmem:[#allocation2 + $0x100] sm:$0xf] %vm118, %v102
  %136 = vst.msk [vmem:[#allocation2 + $0x110] sm:$0xf] %vm118, %v103
  %137 = vst.msk [vmem:[#allocation2 + $0x120] sm:$0xf] %vm118, %v104
  %138 = vst.msk [vmem:[#allocation2 + $0x130] sm:$0xf] %vm118, %v105
  %139 = vst.msk [vmem:[#allocation2 + $0x140] sm:$0xf] %vm118, %v106
  %140 = vst.msk [vmem:[#allocation2 + $0x150] sm:$0xf] %vm118, %v107
  %141 = vst.msk [vmem:[#allocation2 + $0x160] sm:$0xf] %vm118, %v108
  %142 = vst.msk [vmem:[#allocation2 + $0x170] sm:$0xf] %vm118, %v109
  %143 = vst.msk [vmem:[#allocation2 + $0x180] sm:$0xf] %vm118, %v110
  %144 = vst.msk [vmem:[#allocation2 + $0x190] sm:$0xf] %vm118, %v111
  %145 = vst.msk [vmem:[#allocation2 + $0x1a0] sm:$0xf] %vm118, %v112
  %146 = vst.msk [vmem:[#allocation2 + $0x1b0] sm:$0xf] %vm118, %v113
  %147 = vst.msk [vmem:[#allocation2 + $0x1c0] sm:$0xf] %vm118, %v114
  %148 = vst.msk [vmem:[#allocation2 + $0x1d0] sm:$0xf] %vm118, %v115
  %149 = vst.msk [vmem:[#allocation2 + $0x1e0] sm:$0xf] %vm118, %v116
  %150 = vst.msk [vmem:[#allocation2 + $0x1f0] sm:$0xf] %vm118, %v117
  %v151 = vld [vmem:[%s1] sm:$0xf]
  %v152 = vld [vmem:[%s1 + $0x4] sm:$0xf]
  %v153 = vld [vmem:[%s1 + $0xc] sm:$0xf]
  %v154 = vld [vmem:[%s1 + $0x10] sm:$0xf]
  %v155 = vld [vmem:[%s1 + $0x18] sm:$0xf]
  %v156 = vld [vmem:[%s1 + $0x1c] sm:$0xf]
  %v157 = vld [vmem:[%s1 + $0x24] sm:$0xf]
  %v158 = vld [vmem:[%s1 + $0x28] sm:$0xf]
  %v159 = vld [vmem:[%s1 + $0x30] sm:$0xf]
  %v160 = vld [vmem:[%s1 + $0x34] sm:$0xf]
  %v161 = vld [vmem:[%s1 + $0x3c] sm:$0xf]
  %v162 = vld [vmem:[%s1 + $0x40] sm:$0xf]
  %v163 = vld [vmem:[%s1 + $0x48] sm:$0xf]
  %v164 = vld [vmem:[%s1 + $0x4c] sm:$0xf]
  %v165 = vld [vmem:[%s1 + $0x54] sm:$0xf]
  %v166 = vld [vmem:[%s1 + $0x58] sm:$0xf]
  %v167 = vld [vmem:[%s1 + $0x60] sm:$0xf]
  %v168 = vld [vmem:[%s1 + $0x64] sm:$0xf]
  %v169 = vld [vmem:[%s1 + $0x6c] sm:$0xf]
  %v170 = vld [vmem:[%s1 + $0x70] sm:$0xf]
  %v171 = vld [vmem:[%s1 + $0x78] sm:$0xf]
  %v172 = vld [vmem:[%s1 + $0x7c] sm:$0xf]
  %v173 = vld [vmem:[%s1 + $0x84] sm:$0xf]
  %v174 = vld [vmem:[%s1 + $0x88] sm:$0xf]
  %v175 = vld [vmem:[%s1 + $0x90] sm:$0xf]
  %v176 = vld [vmem:[%s1 + $0x94] sm:$0xf]
  %v177 = vld [vmem:[%s1 + $0x9c] sm:$0xf]
  %v178 = vld [vmem:[%s1 + $0xa0] sm:$0xf]
  %v179 = vld [vmem:[%s1 + $0xa8] sm:$0xf]
  %v180 = vld [vmem:[%s1 + $0xac] sm:$0xf]
  %v181 = vld [vmem:[%s1 + $0xb4] sm:$0xf]
  %v182 = vld [vmem:[%s1 + $0xb8] sm:$0xf]
  %215 = vrot.lane.b32.xlu0 %v151, 32
  %v216 = vpop.permute.xlu0 %215
  %217 = vrot.lane.b32.xlu0 %v152, 32
  %v218 = vpop.permute.xlu0 %217
  %219 = vrot.lane.b32.xlu0 %v153, 32
  %v220 = vpop.permute.xlu0 %219
  %221 = vrot.lane.b32.xlu0 %v154, 32
  %v222 = vpop.permute.xlu0 %221
  %223 = vrot.lane.b32.xlu0 %v155, 32
  %v224 = vpop.permute.xlu0 %223
  %225 = vrot.lane.b32.xlu0 %v156, 32
  %v226 = vpop.permute.xlu0 %225
  %227 = vrot.lane.b32.xlu0 %v157, 32
  %v228 = vpop.permute.xlu0 %227
  %229 = vrot.lane.b32.xlu0 %v158, 32
  %v230 = vpop.permute.xlu0 %229
  %231 = vrot.lane.b32.xlu0 %v159, 32
  %v232 = vpop.permute.xlu0 %231
  %233 = vrot.lane.b32.xlu0 %v160, 32
  %v234 = vpop.permute.xlu0 %233
  %235 = vrot.lane.b32.xlu0 %v161, 32
  %v236 = vpop.permute.xlu0 %235
  %237 = vrot.lane.b32.xlu0 %v162, 32
  %v238 = vpop.permute.xlu0 %237
  %239 = vrot.lane.b32.xlu0 %v163, 32
  %v240 = vpop.permute.xlu0 %239
  %241 = vrot.lane.b32.xlu0 %v164, 32
  %v242 = vpop.permute.xlu0 %241
  %243 = vrot.lane.b32.xlu0 %v165, 32
  %v244 = vpop.permute.xlu0 %243
  %245 = vrot.lane.b32.xlu0 %v166, 32
  %v246 = vpop.permute.xlu0 %245
  %247 = vrot.lane.b32.xlu0 %v167, 32
  %v248 = vpop.permute.xlu0 %247
  %249 = vrot.lane.b32.xlu0 %v168, 32
  %v250 = vpop.permute.xlu0 %249
  %251 = vrot.lane.b32.xlu0 %v169, 32
  %v252 = vpop.permute.xlu0 %251
  %253 = vrot.lane.b32.xlu0 %v170, 32
  %v254 = vpop.permute.xlu0 %253
  %255 = vrot.lane.b32.xlu0 %v171, 32
  %v256 = vpop.permute.xlu0 %255
  %257 = vrot.lane.b32.xlu0 %v172, 32
  %v258 = vpop.permute.xlu0 %257
  %259 = vrot.lane.b32.xlu0 %v173, 32
  %v260 = vpop.permute.xlu0 %259
  %261 = vrot.lane.b32.xlu0 %v174, 32
  %v262 = vpop.permute.xlu0 %261
  %263 = vrot.lane.b32.xlu0 %v175, 32
  %v264 = vpop.permute.xlu0 %263
  %265 = vrot.lane.b32.xlu0 %v176, 32
  %v266 = vpop.permute.xlu0 %265
  %267 = vrot.lane.b32.xlu0 %v177, 32
  %v268 = vpop.permute.xlu0 %267
  %269 = vrot.lane.b32.xlu0 %v178, 32
  %v270 = vpop.permute.xlu0 %269
  %271 = vrot.lane.b32.xlu0 %v179, 32
  %v272 = vpop.permute.xlu0 %271
  %273 = vrot.lane.b32.xlu0 %v180, 32
  %v274 = vpop.permute.xlu0 %273
  %275 = vrot.lane.b32.xlu0 %v181, 32
  %v276 = vpop.permute.xlu0 %275
  %277 = vrot.lane.b32.xlu0 %v182, 32
  %v278 = vpop.permute.xlu0 %277
  %vm311 = vcmask 388352
  %312 = vst.msk [vmem:[#allocation2 + $0x8] sm:$0xf] %vm311, %v216
  %313 = vst.msk [vmem:[#allocation2 + $0x18] sm:$0xf] %vm311, %v218
  %314 = vst.msk [vmem:[#allocation2 + $0x28] sm:$0xf] %vm311, %v220
  %315 = vst.msk [vmem:[#allocation2 + $0x38] sm:$0xf] %vm311, %v222
  %316 = vst.msk [vmem:[#allocation2 + $0x48] sm:$0xf] %vm311, %v224
  %317 = vst.msk [vmem:[#allocation2 + $0x58] sm:$0xf] %vm311, %v226
  %318 = vst.msk [vmem:[#allocation2 + $0x68] sm:$0xf] %vm311, %v228
  %319 = vst.msk [vmem:[#allocation2 + $0x78] sm:$0xf] %vm311, %v230
  %320 = vst.msk [vmem:[#allocation2 + $0x88] sm:$0xf] %vm311, %v232
  %321 = vst.msk [vmem:[#allocation2 + $0x98] sm:$0xf] %vm311, %v234
  %322 = vst.msk [vmem:[#allocation2 + $0xa8] sm:$0xf] %vm311, %v236
  %323 = vst.msk [vmem:[#allocation2 + $0xb8] sm:$0xf] %vm311, %v238
  %324 = vst.msk [vmem:[#allocation2 + $0xc8] sm:$0xf] %vm311, %v240
  %325 = vst.msk [vmem:[#allocation2 + $0xd8] sm:$0xf] %vm311, %v242
  %326 = vst.msk [vmem:[#allocation2 + $0xe8] sm:$0xf] %vm311, %v244
  %327 = vst.msk [vmem:[#allocation2 + $0xf8] sm:$0xf] %vm311, %v246
  %328 = vst.msk [vmem:[#allocation2 + $0x108] sm:$0xf] %vm311, %v248
  %329 = vst.msk [vmem:[#allocation2 + $0x118] sm:$0xf] %vm311, %v250
  %330 = vst.msk [vmem:[#allocation2 + $0x128] sm:$0xf] %vm311, %v252
  %331 = vst.msk [vmem:[#allocation2 + $0x138] sm:$0xf] %vm311, %v254
  %332 = vst.msk [vmem:[#allocation2 + $0x148] sm:$0xf] %vm311, %v256
  %333 = vst.msk [vmem:[#allocation2 + $0x158] sm:$0xf] %vm311, %v258
  %334 = vst.msk [vmem:[#allocation2 + $0x168] sm:$0xf] %vm311, %v260
  %335 = vst.msk [vmem:[#allocation2 + $0x178] sm:$0xf] %vm311, %v262
  %336 = vst.msk [vmem:[#allocation2 + $0x188] sm:$0xf] %vm311, %v264
  %337 = vst.msk [vmem:[#allocation2 + $0x198] sm:$0xf] %vm311, %v266
  %338 = vst.msk [vmem:[#allocation2 + $0x1a8] sm:$0xf] %vm311, %v268
  %339 = vst.msk [vmem:[#allocation2 + $0x1b8] sm:$0xf] %vm311, %v270
  %340 = vst.msk [vmem:[#allocation2 + $0x1c8] sm:$0xf] %vm311, %v272
  %341 = vst.msk [vmem:[#allocation2 + $0x1d8] sm:$0xf] %vm311, %v274
  %342 = vst.msk [vmem:[#allocation2 + $0x1e8] sm:$0xf] %vm311, %v276
  %343 = vst.msk [vmem:[#allocation2 + $0x1f8] sm:$0xf] %vm311, %v278
  %v344 = vld [vmem:[%s0] sm:$0xf]
  %v345 = vld [vmem:[%s0 + $0x4] sm:$0xf]
  %v346 = vld [vmem:[%s0 + $0x8] sm:$0x1]
  %v347 = vld [vmem:[%s0 + $0xc] sm:$0xf]
  %v348 = vld [vmem:[%s0 + $0x10] sm:$0xf]
  %v349 = vld [vmem:[%s0 + $0x14] sm:$0x1]
  %v350 = vld [vmem:[%s0 + $0x18] sm:$0xf]
  %v351 = vld [vmem:[%s0 + $0x1c] sm:$0xf]
  %v352 = vld [vmem:[%s0 + $0x20] sm:$0x1]
  %v353 = vld [vmem:[%s0 + $0x24] sm:$0xf]
  %v354 = vld [vmem:[%s0 + $0x28] sm:$0xf]
  %v355 = vld [vmem:[%s0 + $0x2c] sm:$0x1]
  %v356 = vld [vmem:[%s0 + $0x30] sm:$0xf]
  %v357 = vld [vmem:[%s0 + $0x34] sm:$0xf]
  %v358 = vld [vmem:[%s0 + $0x38] sm:$0x1]
  %v359 = vld [vmem:[%s0 + $0x3c] sm:$0xf]
  %v360 = vld [vmem:[%s0 + $0x40] sm:$0xf]
  %v361 = vld [vmem:[%s0 + $0x44] sm:$0x1]
  %v362 = vld [vmem:[%s0 + $0x48] sm:$0xf]
  %v363 = vld [vmem:[%s0 + $0x4c] sm:$0xf]
  %v364 = vld [vmem:[%s0 + $0x50] sm:$0x1]
  %v365 = vld [vmem:[%s0 + $0x54] sm:$0xf]
  %v366 = vld [vmem:[%s0 + $0x58] sm:$0xf]
  %v367 = vld [vmem:[%s0 + $0x5c] sm:$0x1]
  %v368 = vld [vmem:[%s0 + $0x60] sm:$0xf]
  %v369 = vld [vmem:[%s0 + $0x64] sm:$0xf]
  %v370 = vld [vmem:[%s0 + $0x68] sm:$0x1]
  %v371 = vld [vmem:[%s0 + $0x6c] sm:$0xf]
  %v372 = vld [vmem:[%s0 + $0x70] sm:$0xf]
  %v373 = vld [vmem:[%s0 + $0x74] sm:$0x1]
  %v374 = vld [vmem:[%s0 + $0x78] sm:$0xf]
  %v375 = vld [vmem:[%s0 + $0x7c] sm:$0xf]
  %v376 = vld [vmem:[%s0 + $0x80] sm:$0x1]
  %v377 = vld [vmem:[%s0 + $0x84] sm:$0xf]
  %v378 = vld [vmem:[%s0 + $0x88] sm:$0xf]
  %v379 = vld [vmem:[%s0 + $0x8c] sm:$0x1]
  %v380 = vld [vmem:[%s0 + $0x90] sm:$0xf]
  %v381 = vld [vmem:[%s0 + $0x94] sm:$0xf]
  %v382 = vld [vmem:[%s0 + $0x98] sm:$0x1]
  %v383 = vld [vmem:[%s0 + $0x9c] sm:$0xf]
  %v384 = vld [vmem:[%s0 + $0xa0] sm:$0xf]
  %v385 = vld [vmem:[%s0 + $0xa4] sm:$0x1]
  %v386 = vld [vmem:[%s0 + $0xa8] sm:$0xf]
  %v387 = vld [vmem:[%s0 + $0xac] sm:$0xf]
  %v388 = vld [vmem:[%s0 + $0xb0] sm:$0x1]
  %v389 = vld [vmem:[%s0 + $0xb4] sm:$0xf]
  %v390 = vld [vmem:[%s0 + $0xb8] sm:$0xf]
  %v391 = vld [vmem:[%s0 + $0xbc] sm:$0x1]
  %vm392 = vsmask.f32 3328
  %vm393 = vsmask.f32 7440
  %vm394 = vmor %vm392, %vm393
  %v396 = vshrl.u32 %v344, 16
  %v398 = vrot.slane %v396, 4
  %v399 = vshll.u32 %v344, 16
  %v401 = vrot.slane %v399, 5
  %v402 = vor.u32 %v398, %v401
  %v403 = vrot.slane %v402, 4
  %v405 = vshll.u32 %v345, 16
  %v407 = vrot.slane %v405, 5
  %v408 = vsel %vm394, %v403, %v407
  %v409 = vshrl.u32 %v345, 16
  %v411 = vrot.slane %v409, 4
  %v412 = vor.u32 %v411, %v407
  %v413 = vrot.slane %v412, 4
  %v415 = vshll.u32 %v346, 16
  %v417 = vrot.slane %v415, 5
  %v418 = vsel %vm394, %v413, %v417
  %v420 = vshrl.u32 %v347, 16
  %v422 = vrot.slane %v420, 4
  %v423 = vshll.u32 %v347, 16
  %v425 = vrot.slane %v423, 5
  %v426 = vor.u32 %v422, %v425
  %v427 = vrot.slane %v426, 4
  %v429 = vshll.u32 %v348, 16
  %v431 = vrot.slane %v429, 5
  %v432 = vsel %vm394, %v427, %v431
  %v433 = vshrl.u32 %v348, 16
  %v435 = vrot.slane %v433, 4
  %v436 = vor.u32 %v435, %v431
  %v437 = vrot.slane %v436, 4
  %v439 = vshll.u32 %v349, 16
  %v441 = vrot.slane %v439, 5
  %v442 = vsel %vm394, %v437, %v441
  %v444 = vshrl.u32 %v350, 16
  %v446 = vrot.slane %v444, 4
  %v447 = vshll.u32 %v350, 16
  %v449 = vrot.slane %v447, 5
  %v450 = vor.u32 %v446, %v449
  %v451 = vrot.slane %v450, 4
  %v453 = vshll.u32 %v351, 16
  %v455 = vrot.slane %v453, 5
  %v456 = vsel %vm394, %v451, %v455
  %v457 = vshrl.u32 %v351, 16
  %v459 = vrot.slane %v457, 4
  %v460 = vor.u32 %v459, %v455
  %v461 = vrot.slane %v460, 4
  %v463 = vshll.u32 %v352, 16
  %v465 = vrot.slane %v463, 5
  %v466 = vsel %vm394, %v461, %v465
  %v468 = vshrl.u32 %v353, 16
  %v470 = vrot.slane %v468, 4
  %v471 = vshll.u32 %v353, 16
  %v473 = vrot.slane %v471, 5
  %v474 = vor.u32 %v470, %v473
  %v475 = vrot.slane %v474, 4
  %v477 = vshll.u32 %v354, 16
  %v479 = vrot.slane %v477, 5
  %v480 = vsel %vm394, %v475, %v479
  %v481 = vshrl.u32 %v354, 16
  %v483 = vrot.slane %v481, 4
  %v484 = vor.u32 %v483, %v479
  %v485 = vrot.slane %v484, 4
  %v487 = vshll.u32 %v355, 16
  %v489 = vrot.slane %v487, 5
  %v490 = vsel %vm394, %v485, %v489
  %v492 = vshrl.u32 %v356, 16
  %v494 = vrot.slane %v492, 4
  %v495 = vshll.u32 %v356, 16
  %v497 = vrot.slane %v495, 5
  %v498 = vor.u32 %v494, %v497
  %v499 = vrot.slane %v498, 4
  %v501 = vshll.u32 %v357, 16
  %v503 = vrot.slane %v501, 5
  %v504 = vsel %vm394, %v499, %v503
  %v505 = vshrl.u32 %v357, 16
  %v507 = vrot.slane %v505, 4
  %v508 = vor.u32 %v507, %v503
  %v509 = vrot.slane %v508, 4
  %v511 = vshll.u32 %v358, 16
  %v513 = vrot.slane %v511, 5
  %v514 = vsel %vm394, %v509, %v513
  %v516 = vshrl.u32 %v359, 16
  %v518 = vrot.slane %v516, 4
  %v519 = vshll.u32 %v359, 16
  %v521 = vrot.slane %v519, 5
  %v522 = vor.u32 %v518, %v521
  %v523 = vrot.slane %v522, 4
  %v525 = vshll.u32 %v360, 16
  %v527 = vrot.slane %v525, 5
  %v528 = vsel %vm394, %v523, %v527
  %v529 = vshrl.u32 %v360, 16
  %v531 = vrot.slane %v529, 4
  %v532 = vor.u32 %v531, %v527
  %v533 = vrot.slane %v532, 4
  %v535 = vshll.u32 %v361, 16
  %v537 = vrot.slane %v535, 5
  %v538 = vsel %vm394, %v533, %v537
  %v540 = vshrl.u32 %v362, 16
  %v542 = vrot.slane %v540, 4
  %v543 = vshll.u32 %v362, 16
  %v545 = vrot.slane %v543, 5
  %v546 = vor.u32 %v542, %v545
  %v547 = vrot.slane %v546, 4
  %v549 = vshll.u32 %v363, 16
  %v551 = vrot.slane %v549, 5
  %v552 = vsel %vm394, %v547, %v551
  %v553 = vshrl.u32 %v363, 16
  %v555 = vrot.slane %v553, 4
  %v556 = vor.u32 %v555, %v551
  %v557 = vrot.slane %v556, 4
  %v559 = vshll.u32 %v364, 16
  %v561 = vrot.slane %v559, 5
  %v562 = vsel %vm394, %v557, %v561
  %v564 = vshrl.u32 %v365, 16
  %v566 = vrot.slane %v564, 4
  %v567 = vshll.u32 %v365, 16
  %v569 = vrot.slane %v567, 5
  %v570 = vor.u32 %v566, %v569
  %v571 = vrot.slane %v570, 4
  %v573 = vshll.u32 %v366, 16
  %v575 = vrot.slane %v573, 5
  %v576 = vsel %vm394, %v571, %v575
  %v577 = vshrl.u32 %v366, 16
  %v579 = vrot.slane %v577, 4
  %v580 = vor.u32 %v579, %v575
  %v581 = vrot.slane %v580, 4
  %v583 = vshll.u32 %v367, 16
  %v585 = vrot.slane %v583, 5
  %v586 = vsel %vm394, %v581, %v585
  %v588 = vshrl.u32 %v368, 16
  %v590 = vrot.slane %v588, 4
  %v591 = vshll.u32 %v368, 16
  %v593 = vrot.slane %v591, 5
  %v594 = vor.u32 %v590, %v593
  %v595 = vrot.slane %v594, 4
  %v597 = vshll.u32 %v369, 16
  %v599 = vrot.slane %v597, 5
  %v600 = vsel %vm394, %v595, %v599
  %v601 = vshrl.u32 %v369, 16
  %v603 = vrot.slane %v601, 4
  %v604 = vor.u32 %v603, %v599
  %v605 = vrot.slane %v604, 4
  %v607 = vshll.u32 %v370, 16
  %v609 = vrot.slane %v607, 5
  %v610 = vsel %vm394, %v605, %v609
  %v612 = vshrl.u32 %v371, 16
  %v614 = vrot.slane %v612, 4
  %v615 = vshll.u32 %v371, 16
  %v617 = vrot.slane %v615, 5
  %v618 = vor.u32 %v614, %v617
  %v619 = vrot.slane %v618, 4
  %v621 = vshll.u32 %v372, 16
  %v623 = vrot.slane %v621, 5
  %v624 = vsel %vm394, %v619, %v623
  %v625 = vshrl.u32 %v372, 16
  %v627 = vrot.slane %v625, 4
  %v628 = vor.u32 %v627, %v623
  %v629 = vrot.slane %v628, 4
  %v631 = vshll.u32 %v373, 16
  %v633 = vrot.slane %v631, 5
  %v634 = vsel %vm394, %v629, %v633
  %v636 = vshrl.u32 %v374, 16
  %v638 = vrot.slane %v636, 4
  %v639 = vshll.u32 %v374, 16
  %v641 = vrot.slane %v639, 5
  %v642 = vor.u32 %v638, %v641
  %v643 = vrot.slane %v642, 4
  %v645 = vshll.u32 %v375, 16
  %v647 = vrot.slane %v645, 5
  %v648 = vsel %vm394, %v643, %v647
  %v649 = vshrl.u32 %v375, 16
  %v651 = vrot.slane %v649, 4
  %v652 = vor.u32 %v651, %v647
  %v653 = vrot.slane %v652, 4
  %v655 = vshll.u32 %v376, 16
  %v657 = vrot.slane %v655, 5
  %v658 = vsel %vm394, %v653, %v657
  %v660 = vshrl.u32 %v377, 16
  %v662 = vrot.slane %v660, 4
  %v663 = vshll.u32 %v377, 16
  %v665 = vrot.slane %v663, 5
  %v666 = vor.u32 %v662, %v665
  %v667 = vrot.slane %v666, 4
  %v669 = vshll.u32 %v378, 16
  %v671 = vrot.slane %v669, 5
  %v672 = vsel %vm394, %v667, %v671
  %v673 = vshrl.u32 %v378, 16
  %v675 = vrot.slane %v673, 4
  %v676 = vor.u32 %v675, %v671
  %v677 = vrot.slane %v676, 4
  %v679 = vshll.u32 %v379, 16
  %v681 = vrot.slane %v679, 5
  %v682 = vsel %vm394, %v677, %v681
  %v684 = vshrl.u32 %v380, 16
  %v686 = vrot.slane %v684, 4
  %v687 = vshll.u32 %v380, 16
  %v689 = vrot.slane %v687, 5
  %v690 = vor.u32 %v686, %v689
  %v691 = vrot.slane %v690, 4
  %v693 = vshll.u32 %v381, 16
  %v695 = vrot.slane %v693, 5
  %v696 = vsel %vm394, %v691, %v695
  %v697 = vshrl.u32 %v381, 16
  %v699 = vrot.slane %v697, 4
  %v700 = vor.u32 %v699, %v695
  %v701 = vrot.slane %v700, 4
  %v703 = vshll.u32 %v382, 16
  %v705 = vrot.slane %v703, 5
  %v706 = vsel %vm394, %v701, %v705
  %v708 = vshrl.u32 %v383, 16
  %v710 = vrot.slane %v708, 4
  %v711 = vshll.u32 %v383, 16
  %v713 = vrot.slane %v711, 5
  %v714 = vor.u32 %v710, %v713
  %v715 = vrot.slane %v714, 4
  %v717 = vshll.u32 %v384, 16
  %v719 = vrot.slane %v717, 5
  %v720 = vsel %vm394, %v715, %v719
  %v721 = vshrl.u32 %v384, 16
  %v723 = vrot.slane %v721, 4
  %v724 = vor.u32 %v723, %v719
  %v725 = vrot.slane %v724, 4
  %v727 = vshll.u32 %v385, 16
  %v729 = vrot.slane %v727, 5
  %v730 = vsel %vm394, %v725, %v729
  %v732 = vshrl.u32 %v386, 16
  %v734 = vrot.slane %v732, 4
  %v735 = vshll.u32 %v386, 16
  %v737 = vrot.slane %v735, 5
  %v738 = vor.u32 %v734, %v737
  %v739 = vrot.slane %v738, 4
  %v741 = vshll.u32 %v387, 16
  %v743 = vrot.slane %v741, 5
  %v744 = vsel %vm394, %v739, %v743
  %v745 = vshrl.u32 %v387, 16
  %v747 = vrot.slane %v745, 4
  %v748 = vor.u32 %v747, %v743
  %v749 = vrot.slane %v748, 4
  %v751 = vshll.u32 %v388, 16
  %v753 = vrot.slane %v751, 5
  %v754 = vsel %vm394, %v749, %v753
  %v756 = vshrl.u32 %v389, 16
  %v758 = vrot.slane %v756, 4
  %v759 = vshll.u32 %v389, 16
  %v761 = vrot.slane %v759, 5
  %v762 = vor.u32 %v758, %v761
  %v763 = vrot.slane %v762, 4
  %v765 = vshll.u32 %v390, 16
  %v767 = vrot.slane %v765, 5
  %v768 = vsel %vm394, %v763, %v767
  %v769 = vshrl.u32 %v390, 16
  %v771 = vrot.slane %v769, 4
  %v772 = vor.u32 %v771, %v767
  %v773 = vrot.slane %v772, 4
  %v775 = vshll.u32 %v391, 16
  %v777 = vrot.slane %v775, 5
  %v778 = vsel %vm394, %v773, %v777
  %779 = vrot.lane.b32.xlu0 %v408, 32
  %v780 = vpop.permute.xlu0 %779
  %781 = vrot.lane.b32.xlu0 %v418, 32
  %v782 = vpop.permute.xlu0 %781
  %783 = vrot.lane.b32.xlu0 %v432, 32
  %v784 = vpop.permute.xlu0 %783
  %785 = vrot.lane.b32.xlu0 %v442, 32
  %v786 = vpop.permute.xlu0 %785
  %787 = vrot.lane.b32.xlu0 %v456, 32
  %v788 = vpop.permute.xlu0 %787
  %789 = vrot.lane.b32.xlu0 %v466, 32
  %v790 = vpop.permute.xlu0 %789
  %791 = vrot.lane.b32.xlu0 %v480, 32
  %v792 = vpop.permute.xlu0 %791
  %793 = vrot.lane.b32.xlu0 %v490, 32
  %v794 = vpop.permute.xlu0 %793
  %795 = vrot.lane.b32.xlu0 %v504, 32
  %v796 = vpop.permute.xlu0 %795
  %797 = vrot.lane.b32.xlu0 %v514, 32
  %v798 = vpop.permute.xlu0 %797
  %799 = vrot.lane.b32.xlu0 %v528, 32
  %v800 = vpop.permute.xlu0 %799
  %801 = vrot.lane.b32.xlu0 %v538, 32
  %v802 = vpop.permute.xlu0 %801
  %803 = vrot.lane.b32.xlu0 %v552, 32
  %v804 = vpop.permute.xlu0 %803
  %805 = vrot.lane.b32.xlu0 %v562, 32
  %v806 = vpop.permute.xlu0 %805
  %807 = vrot.lane.b32.xlu0 %v576, 32
  %v808 = vpop.permute.xlu0 %807
  %809 = vrot.lane.b32.xlu0 %v586, 32
  %v810 = vpop.permute.xlu0 %809
  %811 = vrot.lane.b32.xlu0 %v600, 32
  %v812 = vpop.permute.xlu0 %811
  %813 = vrot.lane.b32.xlu0 %v610, 32
  %v814 = vpop.permute.xlu0 %813
  %815 = vrot.lane.b32.xlu0 %v624, 32
  %v816 = vpop.permute.xlu0 %815
  %817 = vrot.lane.b32.xlu0 %v634, 32
  %v818 = vpop.permute.xlu0 %817
  %819 = vrot.lane.b32.xlu0 %v648, 32
  %v820 = vpop.permute.xlu0 %819
  %821 = vrot.lane.b32.xlu0 %v658, 32
  %v822 = vpop.permute.xlu0 %821
  %823 = vrot.lane.b32.xlu0 %v672, 32
  %v824 = vpop.permute.xlu0 %823
  %825 = vrot.lane.b32.xlu0 %v682, 32
  %v826 = vpop.permute.xlu0 %825
  %827 = vrot.lane.b32.xlu0 %v696, 32
  %v828 = vpop.permute.xlu0 %827
  %829 = vrot.lane.b32.xlu0 %v706, 32
  %v830 = vpop.permute.xlu0 %829
  %831 = vrot.lane.b32.xlu0 %v720, 32
  %v832 = vpop.permute.xlu0 %831
  %833 = vrot.lane.b32.xlu0 %v730, 32
  %v834 = vpop.permute.xlu0 %833
  %835 = vrot.lane.b32.xlu0 %v744, 32
  %v836 = vpop.permute.xlu0 %835
  %837 = vrot.lane.b32.xlu0 %v754, 32
  %v838 = vpop.permute.xlu0 %837
  %839 = vrot.lane.b32.xlu0 %v768, 32
  %v840 = vpop.permute.xlu0 %839
  %841 = vrot.lane.b32.xlu0 %v778, 32
  %v842 = vpop.permute.xlu0 %841
  %vm875 = vcmask 519424
  %876 = vst.msk [vmem:[#allocation2] sm:$0xf] %vm875, %v780
  %877 = vst.msk [vmem:[#allocation2 + $0x10] sm:$0xf] %vm875, %v782
  %878 = vst.msk [vmem:[#allocation2 + $0x20] sm:$0xf] %vm875, %v784
  %879 = vst.msk [vmem:[#allocation2 + $0x30] sm:$0xf] %vm875, %v786
  %880 = vst.msk [vmem:[#allocation2 + $0x40] sm:$0xf] %vm875, %v788
  %881 = vst.msk [vmem:[#allocation2 + $0x50] sm:$0xf] %vm875, %v790
  %882 = vst.msk [vmem:[#allocation2 + $0x60] sm:$0xf] %vm875, %v792
  %883 = vst.msk [vmem:[#allocation2 + $0x70] sm:$0xf] %vm875, %v794
  %884 = vst.msk [vmem:[#allocation2 + $0x80] sm:$0xf] %vm875, %v796
  %885 = vst.msk [vmem:[#allocation2 + $0x90] sm:$0xf] %vm875, %v798
  %886 = vst.msk [vmem:[#allocation2 + $0xa0] sm:$0xf] %vm875, %v800
  %887 = vst.msk [vmem:[#allocation2 + $0xb0] sm:$0xf] %vm875, %v802
  %888 = vst.msk [vmem:[#allocation2 + $0xc0] sm:$0xf] %vm875, %v804
  %889 = vst.msk [vmem:[#allocation2 + $0xd0] sm:$0xf] %vm875, %v806
  %890 = vst.msk [vmem:[#allocation2 + $0xe0] sm:$0xf] %vm875, %v808
  %891 = vst.msk [vmem:[#allocation2 + $0xf0] sm:$0xf] %vm875, %v810
  %892 = vst.msk [vmem:[#allocation2 + $0x100] sm:$0xf] %vm875, %v812
  %893 = vst.msk [vmem:[#allocation2 + $0x110] sm:$0xf] %vm875, %v814
  %894 = vst.msk [vmem:[#allocation2 + $0x120] sm:$0xf] %vm875, %v816
  %895 = vst.msk [vmem:[#allocation2 + $0x130] sm:$0xf] %vm875, %v818
  %896 = vst.msk [vmem:[#allocation2 + $0x140] sm:$0xf] %vm875, %v820
  %897 = vst.msk [vmem:[#allocation2 + $0x150] sm:$0xf] %vm875, %v822
  %898 = vst.msk [vmem:[#allocation2 + $0x160] sm:$0xf] %vm875, %v824
  %899 = vst.msk [vmem:[#allocation2 + $0x170] sm:$0xf] %vm875, %v826
  %900 = vst.msk [vmem:[#allocation2 + $0x180] sm:$0xf] %vm875, %v828
  %901 = vst.msk [vmem:[#allocation2 + $0x190] sm:$0xf] %vm875, %v830
  %902 = vst.msk [vmem:[#allocation2 + $0x1a0] sm:$0xf] %vm875, %v832
  %903 = vst.msk [vmem:[#allocation2 + $0x1b0] sm:$0xf] %vm875, %v834
  %904 = vst.msk [vmem:[#allocation2 + $0x1c0] sm:$0xf] %vm875, %v836
  %905 = vst.msk [vmem:[#allocation2 + $0x1d0] sm:$0xf] %vm875, %v838
  %906 = vst.msk [vmem:[#allocation2 + $0x1e0] sm:$0xf] %vm875, %v840
  %907 = vst.msk [vmem:[#allocation2 + $0x1f0] sm:$0xf] %vm875, %v842
  %v908 = vld [vmem:[%s1] sm:$0xf]
  %v909 = vld [vmem:[%s1 + $0x4] sm:$0xf]
  %v910 = vld [vmem:[%s1 + $0x8] sm:$0x1]
  %v911 = vld [vmem:[%s1 + $0xc] sm:$0xf]
  %v912 = vld [vmem:[%s1 + $0x10] sm:$0xf]
  %v913 = vld [vmem:[%s1 + $0x14] sm:$0x1]
  %v914 = vld [vmem:[%s1 + $0x18] sm:$0xf]
  %v915 = vld [vmem:[%s1 + $0x1c] sm:$0xf]
  %v916 = vld [vmem:[%s1 + $0x20] sm:$0x1]
  %v917 = vld [vmem:[%s1 + $0x24] sm:$0xf]
  %v918 = vld [vmem:[%s1 + $0x28] sm:$0xf]
  %v919 = vld [vmem:[%s1 + $0x2c] sm:$0x1]
  %v920 = vld [vmem:[%s1 + $0x30] sm:$0xf]
  %v921 = vld [vmem:[%s1 + $0x34] sm:$0xf]
  %v922 = vld [vmem:[%s1 + $0x38] sm:$0x1]
  %v923 = vld [vmem:[%s1 + $0x3c] sm:$0xf]
  %v924 = vld [vmem:[%s1 + $0x40] sm:$0xf]
  %v925 = vld [vmem:[%s1 + $0x44] sm:$0x1]
  %v926 = vld [vmem:[%s1 + $0x48] sm:$0xf]
  %v927 = vld [vmem:[%s1 + $0x4c] sm:$0xf]
  %v928 = vld [vmem:[%s1 + $0x50] sm:$0x1]
  %v929 = vld [vmem:[%s1 + $0x54] sm:$0xf]
  %v930 = vld [vmem:[%s1 + $0x58] sm:$0xf]
  %v931 = vld [vmem:[%s1 + $0x5c] sm:$0x1]
  %v932 = vld [vmem:[%s1 + $0x60] sm:$0xf]
  %v933 = vld [vmem:[%s1 + $0x64] sm:$0xf]
  %v934 = vld [vmem:[%s1 + $0x68] sm:$0x1]
  %v935 = vld [vmem:[%s1 + $0x6c] sm:$0xf]
  %v936 = vld [vmem:[%s1 + $0x70] sm:$0xf]
  %v937 = vld [vmem:[%s1 + $0x74] sm:$0x1]
  %v938 = vld [vmem:[%s1 + $0x78] sm:$0xf]
  %v939 = vld [vmem:[%s1 + $0x7c] sm:$0xf]
  %v940 = vld [vmem:[%s1 + $0x80] sm:$0x1]
  %v941 = vld [vmem:[%s1 + $0x84] sm:$0xf]
  %v942 = vld [vmem:[%s1 + $0x88] sm:$0xf]
  %v943 = vld [vmem:[%s1 + $0x8c] sm:$0x1]
  %v944 = vld [vmem:[%s1 + $0x90] sm:$0xf]
  %v945 = vld [vmem:[%s1 + $0x94] sm:$0xf]
  %v946 = vld [vmem:[%s1 + $0x98] sm:$0x1]
  %v947 = vld [vmem:[%s1 + $0x9c] sm:$0xf]
  %v948 = vld [vmem:[%s1 + $0xa0] sm:$0xf]
  %v949 = vld [vmem:[%s1 + $0xa4] sm:$0x1]
  %v950 = vld [vmem:[%s1 + $0xa8] sm:$0xf]
  %v951 = vld [vmem:[%s1 + $0xac] sm:$0xf]
  %v952 = vld [vmem:[%s1 + $0xb0] sm:$0x1]
  %v953 = vld [vmem:[%s1 + $0xb4] sm:$0xf]
  %v954 = vld [vmem:[%s1 + $0xb8] sm:$0xf]
  %v955 = vld [vmem:[%s1 + $0xbc] sm:$0x1]
  %v957 = vshrl.u32 %v908, 16
  %v959 = vrot.slane %v957, 4
  %v960 = vshll.u32 %v908, 16
  %v962 = vrot.slane %v960, 5
  %v963 = vor.u32 %v959, %v962
  %v964 = vrot.slane %v963, 4
  %v966 = vshll.u32 %v909, 16
  %v968 = vrot.slane %v966, 5
  %v969 = vsel %vm394, %v964, %v968
  %v970 = vshrl.u32 %v909, 16
  %v972 = vrot.slane %v970, 4
  %v973 = vor.u32 %v972, %v968
  %v974 = vrot.slane %v973, 4
  %v976 = vshll.u32 %v910, 16
  %v978 = vrot.slane %v976, 5
  %v979 = vsel %vm394, %v974, %v978
  %v981 = vshrl.u32 %v911, 16
  %v983 = vrot.slane %v981, 4
  %v984 = vshll.u32 %v911, 16
  %v986 = vrot.slane %v984, 5
  %v987 = vor.u32 %v983, %v986
  %v988 = vrot.slane %v987, 4
  %v990 = vshll.u32 %v912, 16
  %v992 = vrot.slane %v990, 5
  %v993 = vsel %vm394, %v988, %v992
  %v994 = vshrl.u32 %v912, 16
  %v996 = vrot.slane %v994, 4
  %v997 = vor.u32 %v996, %v992
  %v998 = vrot.slane %v997, 4
  %v1000 = vshll.u32 %v913, 16
  %v1002 = vrot.slane %v1000, 5
  %v1003 = vsel %vm394, %v998, %v1002
  %v1005 = vshrl.u32 %v914, 16
  %v1007 = vrot.slane %v1005, 4
  %v1008 = vshll.u32 %v914, 16
  %v1010 = vrot.slane %v1008, 5
  %v1011 = vor.u32 %v1007, %v1010
  %v1012 = vrot.slane %v1011, 4
  %v1014 = vshll.u32 %v915, 16
  %v1016 = vrot.slane %v1014, 5
  %v1017 = vsel %vm394, %v1012, %v1016
  %v1018 = vshrl.u32 %v915, 16
  %v1020 = vrot.slane %v1018, 4
  %v1021 = vor.u32 %v1020, %v1016
  %v1022 = vrot.slane %v1021, 4
  %v1024 = vshll.u32 %v916, 16
  %v1026 = vrot.slane %v1024, 5
  %v1027 = vsel %vm394, %v1022, %v1026
  %v1029 = vshrl.u32 %v917, 16
  %v1031 = vrot.slane %v1029, 4
  %v1032 = vshll.u32 %v917, 16
  %v1034 = vrot.slane %v1032, 5
  %v1035 = vor.u32 %v1031, %v1034
  %v1036 = vrot.slane %v1035, 4
  %v1038 = vshll.u32 %v918, 16
  %v1040 = vrot.slane %v1038, 5
  %v1041 = vsel %vm394, %v1036, %v1040
  %v1042 = vshrl.u32 %v918, 16
  %v1044 = vrot.slane %v1042, 4
  %v1045 = vor.u32 %v1044, %v1040
  %v1046 = vrot.slane %v1045, 4
  %v1048 = vshll.u32 %v919, 16
  %v1050 = vrot.slane %v1048, 5
  %v1051 = vsel %vm394, %v1046, %v1050
  %v1053 = vshrl.u32 %v920, 16
  %v1055 = vrot.slane %v1053, 4
  %v1056 = vshll.u32 %v920, 16
  %v1058 = vrot.slane %v1056, 5
  %v1059 = vor.u32 %v1055, %v1058
  %v1060 = vrot.slane %v1059, 4
  %v1062 = vshll.u32 %v921, 16
  %v1064 = vrot.slane %v1062, 5
  %v1065 = vsel %vm394, %v1060, %v1064
  %v1066 = vshrl.u32 %v921, 16
  %v1068 = vrot.slane %v1066, 4
  %v1069 = vor.u32 %v1068, %v1064
  %v1070 = vrot.slane %v1069, 4
  %v1072 = vshll.u32 %v922, 16
  %v1074 = vrot.slane %v1072, 5
  %v1075 = vsel %vm394, %v1070, %v1074
  %v1077 = vshrl.u32 %v923, 16
  %v1079 = vrot.slane %v1077, 4
  %v1080 = vshll.u32 %v923, 16
  %v1082 = vrot.slane %v1080, 5
  %v1083 = vor.u32 %v1079, %v1082
  %v1084 = vrot.slane %v1083, 4
  %v1086 = vshll.u32 %v924, 16
  %v1088 = vrot.slane %v1086, 5
  %v1089 = vsel %vm394, %v1084, %v1088
  %v1090 = vshrl.u32 %v924, 16
  %v1092 = vrot.slane %v1090, 4
  %v1093 = vor.u32 %v1092, %v1088
  %v1094 = vrot.slane %v1093, 4
  %v1096 = vshll.u32 %v925, 16
  %v1098 = vrot.slane %v1096, 5
  %v1099 = vsel %vm394, %v1094, %v1098
  %v1101 = vshrl.u32 %v926, 16
  %v1103 = vrot.slane %v1101, 4
  %v1104 = vshll.u32 %v926, 16
  %v1106 = vrot.slane %v1104, 5
  %v1107 = vor.u32 %v1103, %v1106
  %v1108 = vrot.slane %v1107, 4
  %v1110 = vshll.u32 %v927, 16
  %v1112 = vrot.slane %v1110, 5
  %v1113 = vsel %vm394, %v1108, %v1112
  %v1114 = vshrl.u32 %v927, 16
  %v1116 = vrot.slane %v1114, 4
  %v1117 = vor.u32 %v1116, %v1112
  %v1118 = vrot.slane %v1117, 4
  %v1120 = vshll.u32 %v928, 16
  %v1122 = vrot.slane %v1120, 5
  %v1123 = vsel %vm394, %v1118, %v1122
  %v1125 = vshrl.u32 %v929, 16
  %v1127 = vrot.slane %v1125, 4
  %v1128 = vshll.u32 %v929, 16
  %v1130 = vrot.slane %v1128, 5
  %v1131 = vor.u32 %v1127, %v1130
  %v1132 = vrot.slane %v1131, 4
  %v1134 = vshll.u32 %v930, 16
  %v1136 = vrot.slane %v1134, 5
  %v1137 = vsel %vm394, %v1132, %v1136
  %v1138 = vshrl.u32 %v930, 16
  %v1140 = vrot.slane %v1138, 4
  %v1141 = vor.u32 %v1140, %v1136
  %v1142 = vrot.slane %v1141, 4
  %v1144 = vshll.u32 %v931, 16
  %v1146 = vrot.slane %v1144, 5
  %v1147 = vsel %vm394, %v1142, %v1146
  %v1149 = vshrl.u32 %v932, 16
  %v1151 = vrot.slane %v1149, 4
  %v1152 = vshll.u32 %v932, 16
  %v1154 = vrot.slane %v1152, 5
  %v1155 = vor.u32 %v1151, %v1154
  %v1156 = vrot.slane %v1155, 4
  %v1158 = vshll.u32 %v933, 16
  %v1160 = vrot.slane %v1158, 5
  %v1161 = vsel %vm394, %v1156, %v1160
  %v1162 = vshrl.u32 %v933, 16
  %v1164 = vrot.slane %v1162, 4
  %v1165 = vor.u32 %v1164, %v1160
  %v1166 = vrot.slane %v1165, 4
  %v1168 = vshll.u32 %v934, 16
  %v1170 = vrot.slane %v1168, 5
  %v1171 = vsel %vm394, %v1166, %v1170
  %v1173 = vshrl.u32 %v935, 16
  %v1175 = vrot.slane %v1173, 4
  %v1176 = vshll.u32 %v935, 16
  %v1178 = vrot.slane %v1176, 5
  %v1179 = vor.u32 %v1175, %v1178
  %v1180 = vrot.slane %v1179, 4
  %v1182 = vshll.u32 %v936, 16
  %v1184 = vrot.slane %v1182, 5
  %v1185 = vsel %vm394, %v1180, %v1184
  %v1186 = vshrl.u32 %v936, 16
  %v1188 = vrot.slane %v1186, 4
  %v1189 = vor.u32 %v1188, %v1184
  %v1190 = vrot.slane %v1189, 4
  %v1192 = vshll.u32 %v937, 16
  %v1194 = vrot.slane %v1192, 5
  %v1195 = vsel %vm394, %v1190, %v1194
  %v1197 = vshrl.u32 %v938, 16
  %v1199 = vrot.slane %v1197, 4
  %v1200 = vshll.u32 %v938, 16
  %v1202 = vrot.slane %v1200, 5
  %v1203 = vor.u32 %v1199, %v1202
  %v1204 = vrot.slane %v1203, 4
  %v1206 = vshll.u32 %v939, 16
  %v1208 = vrot.slane %v1206, 5
  %v1209 = vsel %vm394, %v1204, %v1208
  %v1210 = vshrl.u32 %v939, 16
  %v1212 = vrot.slane %v1210, 4
  %v1213 = vor.u32 %v1212, %v1208
  %v1214 = vrot.slane %v1213, 4
  %v1216 = vshll.u32 %v940, 16
  %v1218 = vrot.slane %v1216, 5
  %v1219 = vsel %vm394, %v1214, %v1218
  %v1221 = vshrl.u32 %v941, 16
  %v1223 = vrot.slane %v1221, 4
  %v1224 = vshll.u32 %v941, 16
  %v1226 = vrot.slane %v1224, 5
  %v1227 = vor.u32 %v1223, %v1226
  %v1228 = vrot.slane %v1227, 4
  %v1230 = vshll.u32 %v942, 16
  %v1232 = vrot.slane %v1230, 5
  %v1233 = vsel %vm394, %v1228, %v1232
  %v1234 = vshrl.u32 %v942, 16
  %v1236 = vrot.slane %v1234, 4
  %v1237 = vor.u32 %v1236, %v1232
  %v1238 = vrot.slane %v1237, 4
  %v1240 = vshll.u32 %v943, 16
  %v1242 = vrot.slane %v1240, 5
  %v1243 = vsel %vm394, %v1238, %v1242
  %v1245 = vshrl.u32 %v944, 16
  %v1247 = vrot.slane %v1245, 4
  %v1248 = vshll.u32 %v944, 16
  %v1250 = vrot.slane %v1248, 5
  %v1251 = vor.u32 %v1247, %v1250
  %v1252 = vrot.slane %v1251, 4
  %v1254 = vshll.u32 %v945, 16
  %v1256 = vrot.slane %v1254, 5
  %v1257 = vsel %vm394, %v1252, %v1256
  %v1258 = vshrl.u32 %v945, 16
  %v1260 = vrot.slane %v1258, 4
  %v1261 = vor.u32 %v1260, %v1256
  %v1262 = vrot.slane %v1261, 4
  %v1264 = vshll.u32 %v946, 16
  %v1266 = vrot.slane %v1264, 5
  %v1267 = vsel %vm394, %v1262, %v1266
  %v1269 = vshrl.u32 %v947, 16
  %v1271 = vrot.slane %v1269, 4
  %v1272 = vshll.u32 %v947, 16
  %v1274 = vrot.slane %v1272, 5
  %v1275 = vor.u32 %v1271, %v1274
  %v1276 = vrot.slane %v1275, 4
  %v1278 = vshll.u32 %v948, 16
  %v1280 = vrot.slane %v1278, 5
  %v1281 = vsel %vm394, %v1276, %v1280
  %v1282 = vshrl.u32 %v948, 16
  %v1284 = vrot.slane %v1282, 4
  %v1285 = vor.u32 %v1284, %v1280
  %v1286 = vrot.slane %v1285, 4
  %v1288 = vshll.u32 %v949, 16
  %v1290 = vrot.slane %v1288, 5
  %v1291 = vsel %vm394, %v1286, %v1290
  %v1293 = vshrl.u32 %v950, 16
  %v1295 = vrot.slane %v1293, 4
  %v1296 = vshll.u32 %v950, 16
  %v1298 = vrot.slane %v1296, 5
  %v1299 = vor.u32 %v1295, %v1298
  %v1300 = vrot.slane %v1299, 4
  %v1302 = vshll.u32 %v951, 16
  %v1304 = vrot.slane %v1302, 5
  %v1305 = vsel %vm394, %v1300, %v1304
  %v1306 = vshrl.u32 %v951, 16
  %v1308 = vrot.slane %v1306, 4
  %v1309 = vor.u32 %v1308, %v1304
  %v1310 = vrot.slane %v1309, 4
  %v1312 = vshll.u32 %v952, 16
  %v1314 = vrot.slane %v1312, 5
  %v1315 = vsel %vm394, %v1310, %v1314
  %v1317 = vshrl.u32 %v953, 16
  %v1319 = vrot.slane %v1317, 4
  %v1320 = vshll.u32 %v953, 16
  %v1322 = vrot.slane %v1320, 5
  %v1323 = vor.u32 %v1319, %v1322
  %v1324 = vrot.slane %v1323, 4
  %v1326 = vshll.u32 %v954, 16
  %v1328 = vrot.slane %v1326, 5
  %v1329 = vsel %vm394, %v1324, %v1328
  %v1330 = vshrl.u32 %v954, 16
  %v1332 = vrot.slane %v1330, 4
  %v1333 = vor.u32 %v1332, %v1328
  %v1334 = vrot.slane %v1333, 4
  %v1336 = vshll.u32 %v955, 16
  %v1338 = vrot.slane %v1336, 5
  %v1339 = vsel %vm394, %v1334, %v1338
  %1340 = vrot.lane.b32.xlu0 %v969, 48
  %v1341 = vpop.permute.xlu0 %1340
  %1342 = vrot.lane.b32.xlu0 %v979, 48
  %v1343 = vpop.permute.xlu0 %1342
  %1344 = vrot.lane.b32.xlu0 %v993, 48
  %v1345 = vpop.permute.xlu0 %1344
  %1346 = vrot.lane.b32.xlu0 %v1003, 48
  %v1347 = vpop.permute.xlu0 %1346
  %1348 = vrot.lane.b32.xlu0 %v1017, 48
  %v1349 = vpop.permute.xlu0 %1348
  %1350 = vrot.lane.b32.xlu0 %v1027, 48
  %v1351 = vpop.permute.xlu0 %1350
  %1352 = vrot.lane.b32.xlu0 %v1041, 48
  %v1353 = vpop.permute.xlu0 %1352
  %1354 = vrot.lane.b32.xlu0 %v1051, 48
  %v1355 = vpop.permute.xlu0 %1354
  %1356 = vrot.lane.b32.xlu0 %v1065, 48
  %v1357 = vpop.permute.xlu0 %1356
  %1358 = vrot.lane.b32.xlu0 %v1075, 48
  %v1359 = vpop.permute.xlu0 %1358
  %1360 = vrot.lane.b32.xlu0 %v1089, 48
  %v1361 = vpop.permute.xlu0 %1360
  %1362 = vrot.lane.b32.xlu0 %v1099, 48
  %v1363 = vpop.permute.xlu0 %1362
  %1364 = vrot.lane.b32.xlu0 %v1113, 48
  %v1365 = vpop.permute.xlu0 %1364
  %1366 = vrot.lane.b32.xlu0 %v1123, 48
  %v1367 = vpop.permute.xlu0 %1366
  %1368 = vrot.lane.b32.xlu0 %v1137, 48
  %v1369 = vpop.permute.xlu0 %1368
  %1370 = vrot.lane.b32.xlu0 %v1147, 48
  %v1371 = vpop.permute.xlu0 %1370
  %1372 = vrot.lane.b32.xlu0 %v1161, 48
  %v1373 = vpop.permute.xlu0 %1372
  %1374 = vrot.lane.b32.xlu0 %v1171, 48
  %v1375 = vpop.permute.xlu0 %1374
  %1376 = vrot.lane.b32.xlu0 %v1185, 48
  %v1377 = vpop.permute.xlu0 %1376
  %1378 = vrot.lane.b32.xlu0 %v1195, 48
  %v1379 = vpop.permute.xlu0 %1378
  %1380 = vrot.lane.b32.xlu0 %v1209, 48
  %v1381 = vpop.permute.xlu0 %1380
  %1382 = vrot.lane.b32.xlu0 %v1219, 48
  %v1383 = vpop.permute.xlu0 %1382
  %1384 = vrot.lane.b32.xlu0 %v1233, 48
  %v1385 = vpop.permute.xlu0 %1384
  %1386 = vrot.lane.b32.xlu0 %v1243, 48
  %v1387 = vpop.permute.xlu0 %1386
  %1388 = vrot.lane.b32.xlu0 %v1257, 48
  %v1389 = vpop.permute.xlu0 %1388
  %1390 = vrot.lane.b32.xlu0 %v1267, 48
  %v1391 = vpop.permute.xlu0 %1390
  %1392 = vrot.lane.b32.xlu0 %v1281, 48
  %v1393 = vpop.permute.xlu0 %1392
  %1394 = vrot.lane.b32.xlu0 %v1291, 48
  %v1395 = vpop.permute.xlu0 %1394
  %1396 = vrot.lane.b32.xlu0 %v1305, 48
  %v1397 = vpop.permute.xlu0 %1396
  %1398 = vrot.lane.b32.xlu0 %v1315, 48
  %v1399 = vpop.permute.xlu0 %1398
  %1400 = vrot.lane.b32.xlu0 %v1329, 48
  %v1401 = vpop.permute.xlu0 %1400
  %1402 = vrot.lane.b32.xlu0 %v1339, 48
  %v1403 = vpop.permute.xlu0 %1402
  %vm1436 = vcmask 519552
  %1437 = vst.msk [vmem:[#allocation2 + $0x8] sm:$0xf] %vm1436, %v1341
  %1438 = vst.msk [vmem:[#allocation2 + $0x18] sm:$0xf] %vm1436, %v1343
  %1439 = vst.msk [vmem:[#allocation2 + $0x28] sm:$0xf] %vm1436, %v1345
  %1440 = vst.msk [vmem:[#allocation2 + $0x38] sm:$0xf] %vm1436, %v1347
  %1441 = vst.msk [vmem:[#allocation2 + $0x48] sm:$0xf] %vm1436, %v1349
  %1442 = vst.msk [vmem:[#allocation2 + $0x58] sm:$0xf] %vm1436, %v1351
  %1443 = vst.msk [vmem:[#allocation2 + $0x68] sm:$0xf] %vm1436, %v1353
  %1444 = vst.msk [vmem:[#allocation2 + $0x78] sm:$0xf] %vm1436, %v1355
  %1445 = vst.msk [vmem:[#allocation2 + $0x88] sm:$0xf] %vm1436, %v1357
  %1446 = vst.msk [vmem:[#allocation2 + $0x98] sm:$0xf] %vm1436, %v1359
  %1447 = vst.msk [vmem:[#allocation2 + $0xa8] sm:$0xf] %vm1436, %v1361
  %1448 = vst.msk [vmem:[#allocation2 + $0xb8] sm:$0xf] %vm1436, %v1363
  %1449 = vst.msk [vmem:[#allocation2 + $0xc8] sm:$0xf] %vm1436, %v1365
  %1450 = vst.msk [vmem:[#allocation2 + $0xd8] sm:$0xf] %vm1436, %v1367
  %1451 = vst.msk [vmem:[#allocation2 + $0xe8] sm:$0xf] %vm1436, %v1369
  %1452 = vst.msk [vmem:[#allocation2 + $0xf8] sm:$0xf] %vm1436, %v1371
  %1453 = vst.msk [vmem:[#allocation2 + $0x108] sm:$0xf] %vm1436, %v1373
  %1454 = vst.msk [vmem:[#allocation2 + $0x118] sm:$0xf] %vm1436, %v1375
  %1455 = vst.msk [vmem:[#allocation2 + $0x128] sm:$0xf] %vm1436, %v1377
  %1456 = vst.msk [vmem:[#allocation2 + $0x138] sm:$0xf] %vm1436, %v1379
  %1457 = vst.msk [vmem:[#allocation2 + $0x148] sm:$0xf] %vm1436, %v1381
  %1458 = vst.msk [vmem:[#allocation2 + $0x158] sm:$0xf] %vm1436, %v1383
  %1459 = vst.msk [vmem:[#allocation2 + $0x168] sm:$0xf] %vm1436, %v1385
  %1460 = vst.msk [vmem:[#allocation2 + $0x178] sm:$0xf] %vm1436, %v1387
  %1461 = vst.msk [vmem:[#allocation2 + $0x188] sm:$0xf] %vm1436, %v1389
  %1462 = vst.msk [vmem:[#allocation2 + $0x198] sm:$0xf] %vm1436, %v1391
  %1463 = vst.msk [vmem:[#allocation2 + $0x1a8] sm:$0xf] %vm1436, %v1393
  %1464 = vst.msk [vmem:[#allocation2 + $0x1b8] sm:$0xf] %vm1436, %v1395
  %1465 = vst.msk [vmem:[#allocation2 + $0x1c8] sm:$0xf] %vm1436, %v1397
  %1466 = vst.msk [vmem:[#allocation2 + $0x1d8] sm:$0xf] %vm1436, %v1399
  %1467 = vst.msk [vmem:[#allocation2 + $0x1e8] sm:$0xf] %vm1436, %v1401
  %1468 = vst.msk [vmem:[#allocation2 + $0x1f8] sm:$0xf] %vm1436, %v1403
  %v1469 = vld [vmem:[%s0] sm:$0xe]
  %v1470 = vld [vmem:[%s0 + $0x4] sm:$0xf]
  %v1471 = vld [vmem:[%s0 + $0x8] sm:$0x1]
  %v1472 = vld [vmem:[%s0 + $0xc] sm:$0xe]
  %v1473 = vld [vmem:[%s0 + $0x10] sm:$0xf]
  %v1474 = vld [vmem:[%s0 + $0x14] sm:$0x1]
  %v1475 = vld [vmem:[%s0 + $0x18] sm:$0xe]
  %v1476 = vld [vmem:[%s0 + $0x1c] sm:$0xf]
  %v1477 = vld [vmem:[%s0 + $0x20] sm:$0x1]
  %v1478 = vld [vmem:[%s0 + $0x24] sm:$0xe]
  %v1479 = vld [vmem:[%s0 + $0x28] sm:$0xf]
  %v1480 = vld [vmem:[%s0 + $0x2c] sm:$0x1]
  %v1481 = vld [vmem:[%s0 + $0x30] sm:$0xe]
  %v1482 = vld [vmem:[%s0 + $0x34] sm:$0xf]
  %v1483 = vld [vmem:[%s0 + $0x38] sm:$0x1]
  %v1484 = vld [vmem:[%s0 + $0x3c] sm:$0xe]
  %v1485 = vld [vmem:[%s0 + $0x40] sm:$0xf]
  %v1486 = vld [vmem:[%s0 + $0x44] sm:$0x1]
  %v1487 = vld [vmem:[%s0 + $0x48] sm:$0xe]
  %v1488 = vld [vmem:[%s0 + $0x4c] sm:$0xf]
  %v1489 = vld [vmem:[%s0 + $0x50] sm:$0x1]
  %v1490 = vld [vmem:[%s0 + $0x54] sm:$0xe]
  %v1491 = vld [vmem:[%s0 + $0x58] sm:$0xf]
  %v1492 = vld [vmem:[%s0 + $0x5c] sm:$0x1]
  %v1493 = vld [vmem:[%s0 + $0x60] sm:$0xe]
  %v1494 = vld [vmem:[%s0 + $0x64] sm:$0xf]
  %v1495 = vld [vmem:[%s0 + $0x68] sm:$0x1]
  %v1496 = vld [vmem:[%s0 + $0x6c] sm:$0xe]
  %v1497 = vld [vmem:[%s0 + $0x70] sm:$0xf]
  %v1498 = vld [vmem:[%s0 + $0x74] sm:$0x1]
  %v1499 = vld [vmem:[%s0 + $0x78] sm:$0xe]
  %v1500 = vld [vmem:[%s0 + $0x7c] sm:$0xf]
  %v1501 = vld [vmem:[%s0 + $0x80] sm:$0x1]
  %v1502 = vld [vmem:[%s0 + $0x84] sm:$0xe]
  %v1503 = vld [vmem:[%s0 + $0x88] sm:$0xf]
  %v1504 = vld [vmem:[%s0 + $0x8c] sm:$0x1]
  %v1505 = vld [vmem:[%s0 + $0x90] sm:$0xe]
  %v1506 = vld [vmem:[%s0 + $0x94] sm:$0xf]
  %v1507 = vld [vmem:[%s0 + $0x98] sm:$0x1]
  %v1508 = vld [vmem:[%s0 + $0x9c] sm:$0xe]
  %v1509 = vld [vmem:[%s0 + $0xa0] sm:$0xf]
  %v1510 = vld [vmem:[%s0 + $0xa4] sm:$0x1]
  %v1511 = vld [vmem:[%s0 + $0xa8] sm:$0xe]
  %v1512 = vld [vmem:[%s0 + $0xac] sm:$0xf]
  %v1513 = vld [vmem:[%s0 + $0xb0] sm:$0x1]
  %v1514 = vld [vmem:[%s0 + $0xb4] sm:$0xe]
  %v1515 = vld [vmem:[%s0 + $0xb8] sm:$0xf]
  %v1516 = vld [vmem:[%s0 + $0xbc] sm:$0x1]
  %vm1565 = vcmask 1042432
  %vm1566 = vcmask 1046532
  %vm1567 = vmor %vm1565, %vm1566
  %v1568 = vrot.slane %v1469, 5
  %v1569 = vrot.slane %v1568, 4
  %v1570 = vrot.slane %v1470, 5
  %v1571 = vsel %vm1567, %v1569, %v1570
  %v1572 = vrot.slane %v1570, 4
  %v1573 = vrot.slane %v1471, 5
  %v1574 = vsel %vm1567, %v1572, %v1573
  %v1575 = vrot.slane %v1472, 5
  %v1576 = vrot.slane %v1575, 4
  %v1577 = vrot.slane %v1473, 5
  %v1578 = vsel %vm1567, %v1576, %v1577
  %v1579 = vrot.slane %v1577, 4
  %v1580 = vrot.slane %v1474, 5
  %v1581 = vsel %vm1567, %v1579, %v1580
  %v1582 = vrot.slane %v1475, 5
  %v1583 = vrot.slane %v1582, 4
  %v1584 = vrot.slane %v1476, 5
  %v1585 = vsel %vm1567, %v1583, %v1584
  %v1586 = vrot.slane %v1584, 4
  %v1587 = vrot.slane %v1477, 5
  %v1588 = vsel %vm1567, %v1586, %v1587
  %v1589 = vrot.slane %v1478, 5
  %v1590 = vrot.slane %v1589, 4
  %v1591 = vrot.slane %v1479, 5
  %v1592 = vsel %vm1567, %v1590, %v1591
  %v1593 = vrot.slane %v1591, 4
  %v1594 = vrot.slane %v1480, 5
  %v1595 = vsel %vm1567, %v1593, %v1594
  %v1596 = vrot.slane %v1481, 5
  %v1597 = vrot.slane %v1596, 4
  %v1598 = vrot.slane %v1482, 5
  %v1599 = vsel %vm1567, %v1597, %v1598
  %v1600 = vrot.slane %v1598, 4
  %v1601 = vrot.slane %v1483, 5
  %v1602 = vsel %vm1567, %v1600, %v1601
  %v1603 = vrot.slane %v1484, 5
  %v1604 = vrot.slane %v1603, 4
  %v1605 = vrot.slane %v1485, 5
  %v1606 = vsel %vm1567, %v1604, %v1605
  %v1607 = vrot.slane %v1605, 4
  %v1608 = vrot.slane %v1486, 5
  %v1609 = vsel %vm1567, %v1607, %v1608
  %v1610 = vrot.slane %v1487, 5
  %v1611 = vrot.slane %v1610, 4
  %v1612 = vrot.slane %v1488, 5
  %v1613 = vsel %vm1567, %v1611, %v1612
  %v1614 = vrot.slane %v1612, 4
  %v1615 = vrot.slane %v1489, 5
  %v1616 = vsel %vm1567, %v1614, %v1615
  %v1617 = vrot.slane %v1490, 5
  %v1618 = vrot.slane %v1617, 4
  %v1619 = vrot.slane %v1491, 5
  %v1620 = vsel %vm1567, %v1618, %v1619
  %v1621 = vrot.slane %v1619, 4
  %v1622 = vrot.slane %v1492, 5
  %v1623 = vsel %vm1567, %v1621, %v1622
  %v1624 = vrot.slane %v1493, 5
  %v1625 = vrot.slane %v1624, 4
  %v1626 = vrot.slane %v1494, 5
  %v1627 = vsel %vm1567, %v1625, %v1626
  %v1628 = vrot.slane %v1626, 4
  %v1629 = vrot.slane %v1495, 5
  %v1630 = vsel %vm1567, %v1628, %v1629
  %v1631 = vrot.slane %v1496, 5
  %v1632 = vrot.slane %v1631, 4
  %v1633 = vrot.slane %v1497, 5
  %v1634 = vsel %vm1567, %v1632, %v1633
  %v1635 = vrot.slane %v1633, 4
  %v1636 = vrot.slane %v1498, 5
  %v1637 = vsel %vm1567, %v1635, %v1636
  %v1638 = vrot.slane %v1499, 5
  %v1639 = vrot.slane %v1638, 4
  %v1640 = vrot.slane %v1500, 5
  %v1641 = vsel %vm1567, %v1639, %v1640
  %v1642 = vrot.slane %v1640, 4
  %v1643 = vrot.slane %v1501, 5
  %v1644 = vsel %vm1567, %v1642, %v1643
  %v1645 = vrot.slane %v1502, 5
  %v1646 = vrot.slane %v1645, 4
  %v1647 = vrot.slane %v1503, 5
  %v1648 = vsel %vm1567, %v1646, %v1647
  %v1649 = vrot.slane %v1647, 4
  %v1650 = vrot.slane %v1504, 5
  %v1651 = vsel %vm1567, %v1649, %v1650
  %v1652 = vrot.slane %v1505, 5
  %v1653 = vrot.slane %v1652, 4
  %v1654 = vrot.slane %v1506, 5
  %v1655 = vsel %vm1567, %v1653, %v1654
  %v1656 = vrot.slane %v1654, 4
  %v1657 = vrot.slane %v1507, 5
  %v1658 = vsel %vm1567, %v1656, %v1657
  %v1659 = vrot.slane %v1508, 5
  %v1660 = vrot.slane %v1659, 4
  %v1661 = vrot.slane %v1509, 5
  %v1662 = vsel %vm1567, %v1660, %v1661
  %v1663 = vrot.slane %v1661, 4
  %v1664 = vrot.slane %v1510, 5
  %v1665 = vsel %vm1567, %v1663, %v1664
  %v1666 = vrot.slane %v1511, 5
  %v1667 = vrot.slane %v1666, 4
  %v1668 = vrot.slane %v1512, 5
  %v1669 = vsel %vm1567, %v1667, %v1668
  %v1670 = vrot.slane %v1668, 4
  %v1671 = vrot.slane %v1513, 5
  %v1672 = vsel %vm1567, %v1670, %v1671
  %v1673 = vrot.slane %v1514, 5
  %v1674 = vrot.slane %v1673, 4
  %v1675 = vrot.slane %v1515, 5
  %v1676 = vsel %vm1567, %v1674, %v1675
  %v1677 = vrot.slane %v1675, 4
  %v1678 = vrot.slane %v1516, 5
  %v1679 = vsel %vm1567, %v1677, %v1678
  %1680 = vrot.lane.b32.xlu0 %v1571, 64
  %v1681 = vpop.permute.xlu0 %1680
  %1682 = vrot.lane.b32.xlu0 %v1574, 64
  %v1683 = vpop.permute.xlu0 %1682
  %1684 = vrot.lane.b32.xlu0 %v1578, 64
  %v1685 = vpop.permute.xlu0 %1684
  %1686 = vrot.lane.b32.xlu0 %v1581, 64
  %v1687 = vpop.permute.xlu0 %1686
  %1688 = vrot.lane.b32.xlu0 %v1585, 64
  %v1689 = vpop.permute.xlu0 %1688
  %1690 = vrot.lane.b32.xlu0 %v1588, 64
  %v1691 = vpop.permute.xlu0 %1690
  %1692 = vrot.lane.b32.xlu0 %v1592, 64
  %v1693 = vpop.permute.xlu0 %1692
  %1694 = vrot.lane.b32.xlu0 %v1595, 64
  %v1695 = vpop.permute.xlu0 %1694
  %1696 = vrot.lane.b32.xlu0 %v1599, 64
  %v1697 = vpop.permute.xlu0 %1696
  %1698 = vrot.lane.b32.xlu0 %v1602, 64
  %v1699 = vpop.permute.xlu0 %1698
  %1700 = vrot.lane.b32.xlu0 %v1606, 64
  %v1701 = vpop.permute.xlu0 %1700
  %1702 = vrot.lane.b32.xlu0 %v1609, 64
  %v1703 = vpop.permute.xlu0 %1702
  %1704 = vrot.lane.b32.xlu0 %v1613, 64
  %v1705 = vpop.permute.xlu0 %1704
  %1706 = vrot.lane.b32.xlu0 %v1616, 64
  %v1707 = vpop.permute.xlu0 %1706
  %1708 = vrot.lane.b32.xlu0 %v1620, 64
  %v1709 = vpop.permute.xlu0 %1708
  %1710 = vrot.lane.b32.xlu0 %v1623, 64
  %v1711 = vpop.permute.xlu0 %1710
  %1712 = vrot.lane.b32.xlu0 %v1627, 64
  %v1713 = vpop.permute.xlu0 %1712
  %1714 = vrot.lane.b32.xlu0 %v1630, 64
  %v1715 = vpop.permute.xlu0 %1714
  %1716 = vrot.lane.b32.xlu0 %v1634, 64
  %v1717 = vpop.permute.xlu0 %1716
  %1718 = vrot.lane.b32.xlu0 %v1637, 64
  %v1719 = vpop.permute.xlu0 %1718
  %1720 = vrot.lane.b32.xlu0 %v1641, 64
  %v1721 = vpop.permute.xlu0 %1720
  %1722 = vrot.lane.b32.xlu0 %v1644, 64
  %v1723 = vpop.permute.xlu0 %1722
  %1724 = vrot.lane.b32.xlu0 %v1648, 64
  %v1725 = vpop.permute.xlu0 %1724
  %1726 = vrot.lane.b32.xlu0 %v1651, 64
  %v1727 = vpop.permute.xlu0 %1726
  %1728 = vrot.lane.b32.xlu0 %v1655, 64
  %v1729 = vpop.permute.xlu0 %1728
  %1730 = vrot.lane.b32.xlu0 %v1658, 64
  %v1731 = vpop.permute.xlu0 %1730
  %1732 = vrot.lane.b32.xlu0 %v1662, 64
  %v1733 = vpop.permute.xlu0 %1732
  %1734 = vrot.lane.b32.xlu0 %v1665, 64
  %v1735 = vpop.permute.xlu0 %1734
  %1736 = vrot.lane.b32.xlu0 %v1669, 64
  %v1737 = vpop.permute.xlu0 %1736
  %1738 = vrot.lane.b32.xlu0 %v1672, 64
  %v1739 = vpop.permute.xlu0 %1738
  %1740 = vrot.lane.b32.xlu0 %v1676, 64
  %v1741 = vpop.permute.xlu0 %1740
  %1742 = vrot.lane.b32.xlu0 %v1679, 64
  %v1743 = vpop.permute.xlu0 %1742
  %vm1776 = vcmask 781824
  %1777 = vst.msk [vmem:[#allocation2] sm:$0xf] %vm1776, %v1681
  %1778 = vst.msk [vmem:[#allocation2 + $0x10] sm:$0xf] %vm1776, %v1683
  %1779 = vst.msk [vmem:[#allocation2 + $0x20] sm:$0xf] %vm1776, %v1685
  %1780 = vst.msk [vmem:[#allocation2 + $0x30] sm:$0xf] %vm1776, %v1687
  %1781 = vst.msk [vmem:[#allocation2 + $0x40] sm:$0xf] %vm1776, %v1689
  %1782 = vst.msk [vmem:[#allocation2 + $0x50] sm:$0xf] %vm1776, %v1691
  %1783 = vst.msk [vmem:[#allocation2 + $0x60] sm:$0xf] %vm1776, %v1693
  %1784 = vst.msk [vmem:[#allocation2 + $0x70] sm:$0xf] %vm1776, %v1695
  %1785 = vst.msk [vmem:[#allocation2 + $0x80] sm:$0xf] %vm1776, %v1697
  %1786 = vst.msk [vmem:[#allocation2 + $0x90] sm:$0xf] %vm1776, %v1699
  %1787 = vst.msk [vmem:[#allocation2 + $0xa0] sm:$0xf] %vm1776, %v1701
  %1788 = vst.msk [vmem:[#allocation2 + $0xb0] sm:$0xf] %vm1776, %v1703
  %1789 = vst.msk [vmem:[#allocation2 + $0xc0] sm:$0xf] %vm1776, %v1705
  %1790 = vst.msk [vmem:[#allocation2 + $0xd0] sm:$0xf] %vm1776, %v1707
  %1791 = vst.msk [vmem:[#allocation2 + $0xe0] sm:$0xf] %vm1776, %v1709
  %1792 = vst.msk [vmem:[#allocation2 + $0xf0] sm:$0xf] %vm1776, %v1711
  %1793 = vst.msk [vmem:[#allocation2 + $0x100] sm:$0xf] %vm1776, %v1713
  %1794 = vst.msk [vmem:[#allocation2 + $0x110] sm:$0xf] %vm1776, %v1715
  %1795 = vst.msk [vmem:[#allocation2 + $0x120] sm:$0xf] %vm1776, %v1717
  %1796 = vst.msk [vmem:[#allocation2 + $0x130] sm:$0xf] %vm1776, %v1719
  %1797 = vst.msk [vmem:[#allocation2 + $0x140] sm:$0xf] %vm1776, %v1721
  %1798 = vst.msk [vmem:[#allocation2 + $0x150] sm:$0xf] %vm1776, %v1723
  %1799 = vst.msk [vmem:[#allocation2 + $0x160] sm:$0xf] %vm1776, %v1725
  %1800 = vst.msk [vmem:[#allocation2 + $0x170] sm:$0xf] %vm1776, %v1727
  %1801 = vst.msk [vmem:[#allocation2 + $0x180] sm:$0xf] %vm1776, %v1729
  %1802 = vst.msk [vmem:[#allocation2 + $0x190] sm:$0xf] %vm1776, %v1731
  %1803 = vst.msk [vmem:[#allocation2 + $0x1a0] sm:$0xf] %vm1776, %v1733
  %1804 = vst.msk [vmem:[#allocation2 + $0x1b0] sm:$0xf] %vm1776, %v1735
  %1805 = vst.msk [vmem:[#allocation2 + $0x1c0] sm:$0xf] %vm1776, %v1737
  %1806 = vst.msk [vmem:[#allocation2 + $0x1d0] sm:$0xf] %vm1776, %v1739
  %1807 = vst.msk [vmem:[#allocation2 + $0x1e0] sm:$0xf] %vm1776, %v1741
  %1808 = vst.msk [vmem:[#allocation2 + $0x1f0] sm:$0xf] %vm1776, %v1743
  %v1809 = vld [vmem:[%s1] sm:$0xe]
  %v1810 = vld [vmem:[%s1 + $0x4] sm:$0xf]
  %v1811 = vld [vmem:[%s1 + $0x8] sm:$0x1]
  %v1812 = vld [vmem:[%s1 + $0xc] sm:$0xe]
  %v1813 = vld [vmem:[%s1 + $0x10] sm:$0xf]
  %v1814 = vld [vmem:[%s1 + $0x14] sm:$0x1]
  %v1815 = vld [vmem:[%s1 + $0x18] sm:$0xe]
  %v1816 = vld [vmem:[%s1 + $0x1c] sm:$0xf]
  %v1817 = vld [vmem:[%s1 + $0x20] sm:$0x1]
  %v1818 = vld [vmem:[%s1 + $0x24] sm:$0xe]
  %v1819 = vld [vmem:[%s1 + $0x28] sm:$0xf]
  %v1820 = vld [vmem:[%s1 + $0x2c] sm:$0x1]
  %v1821 = vld [vmem:[%s1 + $0x30] sm:$0xe]
  %v1822 = vld [vmem:[%s1 + $0x34] sm:$0xf]
  %v1823 = vld [vmem:[%s1 + $0x38] sm:$0x1]
  %v1824 = vld [vmem:[%s1 + $0x3c] sm:$0xe]
  %v1825 = vld [vmem:[%s1 + $0x40] sm:$0xf]
  %v1826 = vld [vmem:[%s1 + $0x44] sm:$0x1]
  %v1827 = vld [vmem:[%s1 + $0x48] sm:$0xe]
  %v1828 = vld [vmem:[%s1 + $0x4c] sm:$0xf]
  %v1829 = vld [vmem:[%s1 + $0x50] sm:$0x1]
  %v1830 = vld [vmem:[%s1 + $0x54] sm:$0xe]
  %v1831 = vld [vmem:[%s1 + $0x58] sm:$0xf]
  %v1832 = vld [vmem:[%s1 + $0x5c] sm:$0x1]
  %v1833 = vld [vmem:[%s1 + $0x60] sm:$0xe]
  %v1834 = vld [vmem:[%s1 + $0x64] sm:$0xf]
  %v1835 = vld [vmem:[%s1 + $0x68] sm:$0x1]
  %v1836 = vld [vmem:[%s1 + $0x6c] sm:$0xe]
  %v1837 = vld [vmem:[%s1 + $0x70] sm:$0xf]
  %v1838 = vld [vmem:[%s1 + $0x74] sm:$0x1]
  %v1839 = vld [vmem:[%s1 + $0x78] sm:$0xe]
  %v1840 = vld [vmem:[%s1 + $0x7c] sm:$0xf]
  %v1841 = vld [vmem:[%s1 + $0x80] sm:$0x1]
  %v1842 = vld [vmem:[%s1 + $0x84] sm:$0xe]
  %v1843 = vld [vmem:[%s1 + $0x88] sm:$0xf]
  %v1844 = vld [vmem:[%s1 + $0x8c] sm:$0x1]
  %v1845 = vld [vmem:[%s1 + $0x90] sm:$0xe]
  %v1846 = vld [vmem:[%s1 + $0x94] sm:$0xf]
  %v1847 = vld [vmem:[%s1 + $0x98] sm:$0x1]
  %v1848 = vld [vmem:[%s1 + $0x9c] sm:$0xe]
  %v1849 = vld [vmem:[%s1 + $0xa0] sm:$0xf]
  %v1850 = vld [vmem:[%s1 + $0xa4] sm:$0x1]
  %v1851 = vld [vmem:[%s1 + $0xa8] sm:$0xe]
  %v1852 = vld [vmem:[%s1 + $0xac] sm:$0xf]
  %v1853 = vld [vmem:[%s1 + $0xb0] sm:$0x1]
  %v1854 = vld [vmem:[%s1 + $0xb4] sm:$0xe]
  %v1855 = vld [vmem:[%s1 + $0xb8] sm:$0xf]
  %v1856 = vld [vmem:[%s1 + $0xbc] sm:$0x1]
  %v1905 = vrot.slane %v1809, 5
  %v1906 = vrot.slane %v1905, 4
  %v1907 = vrot.slane %v1810, 5
  %v1908 = vsel %vm1567, %v1906, %v1907
  %v1909 = vrot.slane %v1907, 4
  %v1910 = vrot.slane %v1811, 5
  %v1911 = vsel %vm1567, %v1909, %v1910
  %v1912 = vrot.slane %v1812, 5
  %v1913 = vrot.slane %v1912, 4
  %v1914 = vrot.slane %v1813, 5
  %v1915 = vsel %vm1567, %v1913, %v1914
  %v1916 = vrot.slane %v1914, 4
  %v1917 = vrot.slane %v1814, 5
  %v1918 = vsel %vm1567, %v1916, %v1917
  %v1919 = vrot.slane %v1815, 5
  %v1920 = vrot.slane %v1919, 4
  %v1921 = vrot.slane %v1816, 5
  %v1922 = vsel %vm1567, %v1920, %v1921
  %v1923 = vrot.slane %v1921, 4
  %v1924 = vrot.slane %v1817, 5
  %v1925 = vsel %vm1567, %v1923, %v1924
  %v1926 = vrot.slane %v1818, 5
  %v1927 = vrot.slane %v1926, 4
  %v1928 = vrot.slane %v1819, 5
  %v1929 = vsel %vm1567, %v1927, %v1928
  %v1930 = vrot.slane %v1928, 4
  %v1931 = vrot.slane %v1820, 5
  %v1932 = vsel %vm1567, %v1930, %v1931
  %v1933 = vrot.slane %v1821, 5
  %v1934 = vrot.slane %v1933, 4
  %v1935 = vrot.slane %v1822, 5
  %v1936 = vsel %vm1567, %v1934, %v1935
  %v1937 = vrot.slane %v1935, 4
  %v1938 = vrot.slane %v1823, 5
  %v1939 = vsel %vm1567, %v1937, %v1938
  %v1940 = vrot.slane %v1824, 5
  %v1941 = vrot.slane %v1940, 4
  %v1942 = vrot.slane %v1825, 5
  %v1943 = vsel %vm1567, %v1941, %v1942
  %v1944 = vrot.slane %v1942, 4
  %v1945 = vrot.slane %v1826, 5
  %v1946 = vsel %vm1567, %v1944, %v1945
  %v1947 = vrot.slane %v1827, 5
  %v1948 = vrot.slane %v1947, 4
  %v1949 = vrot.slane %v1828, 5
  %v1950 = vsel %vm1567, %v1948, %v1949
  %v1951 = vrot.slane %v1949, 4
  %v1952 = vrot.slane %v1829, 5
  %v1953 = vsel %vm1567, %v1951, %v1952
  %v1954 = vrot.slane %v1830, 5
  %v1955 = vrot.slane %v1954, 4
  %v1956 = vrot.slane %v1831, 5
  %v1957 = vsel %vm1567, %v1955, %v1956
  %v1958 = vrot.slane %v1956, 4
  %v1959 = vrot.slane %v1832, 5
  %v1960 = vsel %vm1567, %v1958, %v1959
  %v1961 = vrot.slane %v1833, 5
  %v1962 = vrot.slane %v1961, 4
  %v1963 = vrot.slane %v1834, 5
  %v1964 = vsel %vm1567, %v1962, %v1963
  %v1965 = vrot.slane %v1963, 4
  %v1966 = vrot.slane %v1835, 5
  %v1967 = vsel %vm1567, %v1965, %v1966
  %v1968 = vrot.slane %v1836, 5
  %v1969 = vrot.slane %v1968, 4
  %v1970 = vrot.slane %v1837, 5
  %v1971 = vsel %vm1567, %v1969, %v1970
  %v1972 = vrot.slane %v1970, 4
  %v1973 = vrot.slane %v1838, 5
  %v1974 = vsel %vm1567, %v1972, %v1973
  %v1975 = vrot.slane %v1839, 5
  %v1976 = vrot.slane %v1975, 4
  %v1977 = vrot.slane %v1840, 5
  %v1978 = vsel %vm1567, %v1976, %v1977
  %v1979 = vrot.slane %v1977, 4
  %v1980 = vrot.slane %v1841, 5
  %v1981 = vsel %vm1567, %v1979, %v1980
  %v1982 = vrot.slane %v1842, 5
  %v1983 = vrot.slane %v1982, 4
  %v1984 = vrot.slane %v1843, 5
  %v1985 = vsel %vm1567, %v1983, %v1984
  %v1986 = vrot.slane %v1984, 4
  %v1987 = vrot.slane %v1844, 5
  %v1988 = vsel %vm1567, %v1986, %v1987
  %v1989 = vrot.slane %v1845, 5
  %v1990 = vrot.slane %v1989, 4
  %v1991 = vrot.slane %v1846, 5
  %v1992 = vsel %vm1567, %v1990, %v1991
  %v1993 = vrot.slane %v1991, 4
  %v1994 = vrot.slane %v1847, 5
  %v1995 = vsel %vm1567, %v1993, %v1994
  %v1996 = vrot.slane %v1848, 5
  %v1997 = vrot.slane %v1996, 4
  %v1998 = vrot.slane %v1849, 5
  %v1999 = vsel %vm1567, %v1997, %v1998
  %v2000 = vrot.slane %v1998, 4
  %v2001 = vrot.slane %v1850, 5
  %v2002 = vsel %vm1567, %v2000, %v2001
  %v2003 = vrot.slane %v1851, 5
  %v2004 = vrot.slane %v2003, 4
  %v2005 = vrot.slane %v1852, 5
  %v2006 = vsel %vm1567, %v2004, %v2005
  %v2007 = vrot.slane %v2005, 4
  %v2008 = vrot.slane %v1853, 5
  %v2009 = vsel %vm1567, %v2007, %v2008
  %v2010 = vrot.slane %v1854, 5
  %v2011 = vrot.slane %v2010, 4
  %v2012 = vrot.slane %v1855, 5
  %v2013 = vsel %vm1567, %v2011, %v2012
  %v2014 = vrot.slane %v2012, 4
  %v2015 = vrot.slane %v1856, 5
  %v2016 = vsel %vm1567, %v2014, %v2015
  %2017 = vrot.lane.b32.xlu0 %v1908, 64
  %v2018 = vpop.permute.xlu0 %2017
  %2019 = vrot.lane.b32.xlu0 %v1911, 64
  %v2020 = vpop.permute.xlu0 %2019
  %2021 = vrot.lane.b32.xlu0 %v1915, 64
  %v2022 = vpop.permute.xlu0 %2021
  %2023 = vrot.lane.b32.xlu0 %v1918, 64
  %v2024 = vpop.permute.xlu0 %2023
  %2025 = vrot.lane.b32.xlu0 %v1922, 64
  %v2026 = vpop.permute.xlu0 %2025
  %2027 = vrot.lane.b32.xlu0 %v1925, 64
  %v2028 = vpop.permute.xlu0 %2027
  %2029 = vrot.lane.b32.xlu0 %v1929, 64
  %v2030 = vpop.permute.xlu0 %2029
  %2031 = vrot.lane.b32.xlu0 %v1932, 64
  %v2032 = vpop.permute.xlu0 %2031
  %2033 = vrot.lane.b32.xlu0 %v1936, 64
  %v2034 = vpop.permute.xlu0 %2033
  %2035 = vrot.lane.b32.xlu0 %v1939, 64
  %v2036 = vpop.permute.xlu0 %2035
  %2037 = vrot.lane.b32.xlu0 %v1943, 64
  %v2038 = vpop.permute.xlu0 %2037
  %2039 = vrot.lane.b32.xlu0 %v1946, 64
  %v2040 = vpop.permute.xlu0 %2039
  %2041 = vrot.lane.b32.xlu0 %v1950, 64
  %v2042 = vpop.permute.xlu0 %2041
  %2043 = vrot.lane.b32.xlu0 %v1953, 64
  %v2044 = vpop.permute.xlu0 %2043
  %2045 = vrot.lane.b32.xlu0 %v1957, 64
  %v2046 = vpop.permute.xlu0 %2045
  %2047 = vrot.lane.b32.xlu0 %v1960, 64
  %v2048 = vpop.permute.xlu0 %2047
  %2049 = vrot.lane.b32.xlu0 %v1964, 64
  %v2050 = vpop.permute.xlu0 %2049
  %2051 = vrot.lane.b32.xlu0 %v1967, 64
  %v2052 = vpop.permute.xlu0 %2051
  %2053 = vrot.lane.b32.xlu0 %v1971, 64
  %v2054 = vpop.permute.xlu0 %2053
  %2055 = vrot.lane.b32.xlu0 %v1974, 64
  %v2056 = vpop.permute.xlu0 %2055
  %2057 = vrot.lane.b32.xlu0 %v1978, 64
  %v2058 = vpop.permute.xlu0 %2057
  %2059 = vrot.lane.b32.xlu0 %v1981, 64
  %v2060 = vpop.permute.xlu0 %2059
  %2061 = vrot.lane.b32.xlu0 %v1985, 64
  %v2062 = vpop.permute.xlu0 %2061
  %2063 = vrot.lane.b32.xlu0 %v1988, 64
  %v2064 = vpop.permute.xlu0 %2063
  %2065 = vrot.lane.b32.xlu0 %v1992, 64
  %v2066 = vpop.permute.xlu0 %2065
  %2067 = vrot.lane.b32.xlu0 %v1995, 64
  %v2068 = vpop.permute.xlu0 %2067
  %2069 = vrot.lane.b32.xlu0 %v1999, 64
  %v2070 = vpop.permute.xlu0 %2069
  %2071 = vrot.lane.b32.xlu0 %v2002, 64
  %v2072 = vpop.permute.xlu0 %2071
  %2073 = vrot.lane.b32.xlu0 %v2006, 64
  %v2074 = vpop.permute.xlu0 %2073
  %2075 = vrot.lane.b32.xlu0 %v2009, 64
  %v2076 = vpop.permute.xlu0 %2075
  %2077 = vrot.lane.b32.xlu0 %v2013, 64
  %v2078 = vpop.permute.xlu0 %2077
  %2079 = vrot.lane.b32.xlu0 %v2016, 64
  %v2080 = vpop.permute.xlu0 %2079
  %vm2113 = vcmask 650752
  %2114 = vst.msk [vmem:[#allocation2 + $0x8] sm:$0xf] %vm2113, %v2018
  %2115 = vst.msk [vmem:[#allocation2 + $0x18] sm:$0xf] %vm2113, %v2020
  %2116 = vst.msk [vmem:[#allocation2 + $0x28] sm:$0xf] %vm2113, %v2022
  %2117 = vst.msk [vmem:[#allocation2 + $0x38] sm:$0xf] %vm2113, %v2024
  %2118 = vst.msk [vmem:[#allocation2 + $0x48] sm:$0xf] %vm2113, %v2026
  %2119 = vst.msk [vmem:[#allocation2 + $0x58] sm:$0xf] %vm2113, %v2028
  %2120 = vst.msk [vmem:[#allocation2 + $0x68] sm:$0xf] %vm2113, %v2030
  %2121 = vst.msk [vmem:[#allocation2 + $0x78] sm:$0xf] %vm2113, %v2032
  %2122 = vst.msk [vmem:[#allocation2 + $0x88] sm:$0xf] %vm2113, %v2034
  %2123 = vst.msk [vmem:[#allocation2 + $0x98] sm:$0xf] %vm2113, %v2036
  %2124 = vst.msk [vmem:[#allocation2 + $0xa8] sm:$0xf] %vm2113, %v2038
  %2125 = vst.msk [vmem:[#allocation2 + $0xb8] sm:$0xf] %vm2113, %v2040
  %2126 = vst.msk [vmem:[#allocation2 + $0xc8] sm:$0xf] %vm2113, %v2042
  %2127 = vst.msk [vmem:[#allocation2 + $0xd8] sm:$0xf] %vm2113, %v2044
  %2128 = vst.msk [vmem:[#allocation2 + $0xe8] sm:$0xf] %vm2113, %v2046
  %2129 = vst.msk [vmem:[#allocation2 + $0xf8] sm:$0xf] %vm2113, %v2048
  %2130 = vst.msk [vmem:[#allocation2 + $0x108] sm:$0xf] %vm2113, %v2050
  %2131 = vst.msk [vmem:[#allocation2 + $0x118] sm:$0xf] %vm2113, %v2052
  %2132 = vst.msk [vmem:[#allocation2 + $0x128] sm:$0xf] %vm2113, %v2054
  %2133 = vst.msk [vmem:[#allocation2 + $0x138] sm:$0xf] %vm2113, %v2056
  %2134 = vst.msk [vmem:[#allocation2 + $0x148] sm:$0xf] %vm2113, %v2058
  %2135 = vst.msk [vmem:[#allocation2 + $0x158] sm:$0xf] %vm2113, %v2060
  %2136 = vst.msk [vmem:[#allocation2 + $0x168] sm:$0xf] %vm2113, %v2062
  %2137 = vst.msk [vmem:[#allocation2 + $0x178] sm:$0xf] %vm2113, %v2064
  %2138 = vst.msk [vmem:[#allocation2 + $0x188] sm:$0xf] %vm2113, %v2066
  %2139 = vst.msk [vmem:[#allocation2 + $0x198] sm:$0xf] %vm2113, %v2068
  %2140 = vst.msk [vmem:[#allocation2 + $0x1a8] sm:$0xf] %vm2113, %v2070
  %2141 = vst.msk [vmem:[#allocation2 + $0x1b8] sm:$0xf] %vm2113, %v2072
  %2142 = vst.msk [vmem:[#allocation2 + $0x1c8] sm:$0xf] %vm2113, %v2074
  %2143 = vst.msk [vmem:[#allocation2 + $0x1d8] sm:$0xf] %vm2113, %v2076
  %2144 = vst.msk [vmem:[#allocation2 + $0x1e8] sm:$0xf] %vm2113, %v2078
  %2145 = vst.msk [vmem:[#allocation2 + $0x1f8] sm:$0xf] %vm2113, %v2080
  %s2146 = scalar_lea.vmem %s0, 12
  %v2147 = vld [vmem:[%s2146] sm:$0xf]
  %v2148 = vld [vmem:[%s2146 + $0x4] sm:$0xf]
  %v2149 = vld [vmem:[%s2146 + $0xc] sm:$0xf]
  %v2150 = vld [vmem:[%s2146 + $0x10] sm:$0xf]
  %v2151 = vld [vmem:[%s2146 + $0x18] sm:$0xf]
  %v2152 = vld [vmem:[%s2146 + $0x1c] sm:$0xf]
  %v2153 = vld [vmem:[%s2146 + $0x24] sm:$0xf]
  %v2154 = vld [vmem:[%s2146 + $0x28] sm:$0xf]
  %v2155 = vld [vmem:[%s2146 + $0x30] sm:$0xf]
  %v2156 = vld [vmem:[%s2146 + $0x34] sm:$0xf]
  %v2157 = vld [vmem:[%s2146 + $0x3c] sm:$0xf]
  %v2158 = vld [vmem:[%s2146 + $0x40] sm:$0xf]
  %v2159 = vld [vmem:[%s2146 + $0x48] sm:$0xf]
  %v2160 = vld [vmem:[%s2146 + $0x4c] sm:$0xf]
  %v2161 = vld [vmem:[%s2146 + $0x54] sm:$0xf]
  %v2162 = vld [vmem:[%s2146 + $0x58] sm:$0xf]
  %v2163 = vld [vmem:[%s2146 + $0x60] sm:$0xf]
  %v2164 = vld [vmem:[%s2146 + $0x64] sm:$0xf]
  %v2165 = vld [vmem:[%s2146 + $0x6c] sm:$0xf]
  %v2166 = vld [vmem:[%s2146 + $0x70] sm:$0xf]
  %v2167 = vld [vmem:[%s2146 + $0x78] sm:$0xf]
  %v2168 = vld [vmem:[%s2146 + $0x7c] sm:$0xf]
  %v2169 = vld [vmem:[%s2146 + $0x84] sm:$0xf]
  %v2170 = vld [vmem:[%s2146 + $0x88] sm:$0xf]
  %v2171 = vld [vmem:[%s2146 + $0x90] sm:$0xf]
  %v2172 = vld [vmem:[%s2146 + $0x94] sm:$0xf]
  %v2173 = vld [vmem:[%s2146 + $0x9c] sm:$0xf]
  %v2174 = vld [vmem:[%s2146 + $0xa0] sm:$0xf]
  %v2175 = vld [vmem:[%s2146 + $0xa8] sm:$0xf]
  %v2176 = vld [vmem:[%s2146 + $0xac] sm:$0xf]
  %v2177 = vld [vmem:[%s2146 + $0xb4] sm:$0xf]
  %v2178 = vld [vmem:[%s2146 + $0xb8] sm:$0xf]
  %2211 = vrot.lane.b32.xlu0 %v2147, 96
  %v2212 = vpop.permute.xlu0 %2211
  %2213 = vrot.lane.b32.xlu0 %v2148, 96
  %v2214 = vpop.permute.xlu0 %2213
  %2215 = vrot.lane.b32.xlu0 %v2149, 96
  %v2216 = vpop.permute.xlu0 %2215
  %2217 = vrot.lane.b32.xlu0 %v2150, 96
  %v2218 = vpop.permute.xlu0 %2217
  %2219 = vrot.lane.b32.xlu0 %v2151, 96
  %v2220 = vpop.permute.xlu0 %2219
  %2221 = vrot.lane.b32.xlu0 %v2152, 96
  %v2222 = vpop.permute.xlu0 %2221
  %2223 = vrot.lane.b32.xlu0 %v2153, 96
  %v2224 = vpop.permute.xlu0 %2223
  %2225 = vrot.lane.b32.xlu0 %v2154, 96
  %v2226 = vpop.permute.xlu0 %2225
  %2227 = vrot.lane.b32.xlu0 %v2155, 96
  %v2228 = vpop.permute.xlu0 %2227
  %2229 = vrot.lane.b32.xlu0 %v2156, 96
  %v2230 = vpop.permute.xlu0 %2229
  %2231 = vrot.lane.b32.xlu0 %v2157, 96
  %v2232 = vpop.permute.xlu0 %2231
  %2233 = vrot.lane.b32.xlu0 %v2158, 96
  %v2234 = vpop.permute.xlu0 %2233
  %2235 = vrot.lane.b32.xlu0 %v2159, 96
  %v2236 = vpop.permute.xlu0 %2235
  %2237 = vrot.lane.b32.xlu0 %v2160, 96
  %v2238 = vpop.permute.xlu0 %2237
  %2239 = vrot.lane.b32.xlu0 %v2161, 96
  %v2240 = vpop.permute.xlu0 %2239
  %2241 = vrot.lane.b32.xlu0 %v2162, 96
  %v2242 = vpop.permute.xlu0 %2241
  %2243 = vrot.lane.b32.xlu0 %v2163, 96
  %v2244 = vpop.permute.xlu0 %2243
  %2245 = vrot.lane.b32.xlu0 %v2164, 96
  %v2246 = vpop.permute.xlu0 %2245
  %2247 = vrot.lane.b32.xlu0 %v2165, 96
  %v2248 = vpop.permute.xlu0 %2247
  %2249 = vrot.lane.b32.xlu0 %v2166, 96
  %v2250 = vpop.permute.xlu0 %2249
  %2251 = vrot.lane.b32.xlu0 %v2167, 96
  %v2252 = vpop.permute.xlu0 %2251
  %2253 = vrot.lane.b32.xlu0 %v2168, 96
  %v2254 = vpop.permute.xlu0 %2253
  %2255 = vrot.lane.b32.xlu0 %v2169, 96
  %v2256 = vpop.permute.xlu0 %2255
  %2257 = vrot.lane.b32.xlu0 %v2170, 96
  %v2258 = vpop.permute.xlu0 %2257
  %2259 = vrot.lane.b32.xlu0 %v2171, 96
  %v2260 = vpop.permute.xlu0 %2259
  %2261 = vrot.lane.b32.xlu0 %v2172, 96
  %v2262 = vpop.permute.xlu0 %2261
  %2263 = vrot.lane.b32.xlu0 %v2173, 96
  %v2264 = vpop.permute.xlu0 %2263
  %2265 = vrot.lane.b32.xlu0 %v2174, 96
  %v2266 = vpop.permute.xlu0 %2265
  %2267 = vrot.lane.b32.xlu0 %v2175, 96
  %v2268 = vpop.permute.xlu0 %2267
  %2269 = vrot.lane.b32.xlu0 %v2176, 96
  %v2270 = vpop.permute.xlu0 %2269
  %2271 = vrot.lane.b32.xlu0 %v2177, 96
  %v2272 = vpop.permute.xlu0 %2271
  %2273 = vrot.lane.b32.xlu0 %v2178, 96
  %v2274 = vpop.permute.xlu0 %2273
  %vm2307 = vcmask 1044224
  %2308 = vst.msk [vmem:[#allocation2] sm:$0xf] %vm2307, %v2212
  %2309 = vst.msk [vmem:[#allocation2 + $0x10] sm:$0xf] %vm2307, %v2214
  %2310 = vst.msk [vmem:[#allocation2 + $0x20] sm:$0xf] %vm2307, %v2216
  %2311 = vst.msk [vmem:[#allocation2 + $0x30] sm:$0xf] %vm2307, %v2218
  %2312 = vst.msk [vmem:[#allocation2 + $0x40] sm:$0xf] %vm2307, %v2220
  %2313 = vst.msk [vmem:[#allocation2 + $0x50] sm:$0xf] %vm2307, %v2222
  %2314 = vst.msk [vmem:[#allocation2 + $0x60] sm:$0xf] %vm2307, %v2224
  %2315 = vst.msk [vmem:[#allocation2 + $0x70] sm:$0xf] %vm2307, %v2226
  %2316 = vst.msk [vmem:[#allocation2 + $0x80] sm:$0xf] %vm2307, %v2228
  %2317 = vst.msk [vmem:[#allocation2 + $0x90] sm:$0xf] %vm2307, %v2230
  %2318 = vst.msk [vmem:[#allocation2 + $0xa0] sm:$0xf] %vm2307, %v2232
  %2319 = vst.msk [vmem:[#allocation2 + $0xb0] sm:$0xf] %vm2307, %v2234
  %2320 = vst.msk [vmem:[#allocation2 + $0xc0] sm:$0xf] %vm2307, %v2236
  %2321 = vst.msk [vmem:[#allocation2 + $0xd0] sm:$0xf] %vm2307, %v2238
  %2322 = vst.msk [vmem:[#allocation2 + $0xe0] sm:$0xf] %vm2307, %v2240
  %2323 = vst.msk [vmem:[#allocation2 + $0xf0] sm:$0xf] %vm2307, %v2242
  %2324 = vst.msk [vmem:[#allocation2 + $0x100] sm:$0xf] %vm2307, %v2244
  %2325 = vst.msk [vmem:[#allocation2 + $0x110] sm:$0xf] %vm2307, %v2246
  %2326 = vst.msk [vmem:[#allocation2 + $0x120] sm:$0xf] %vm2307, %v2248
  %2327 = vst.msk [vmem:[#allocation2 + $0x130] sm:$0xf] %vm2307, %v2250
  %2328 = vst.msk [vmem:[#allocation2 + $0x140] sm:$0xf] %vm2307, %v2252
  %2329 = vst.msk [vmem:[#allocation2 + $0x150] sm:$0xf] %vm2307, %v2254
  %2330 = vst.msk [vmem:[#allocation2 + $0x160] sm:$0xf] %vm2307, %v2256
  %2331 = vst.msk [vmem:[#allocation2 + $0x170] sm:$0xf] %vm2307, %v2258
  %2332 = vst.msk [vmem:[#allocation2 + $0x180] sm:$0xf] %vm2307, %v2260
  %2333 = vst.msk [vmem:[#allocation2 + $0x190] sm:$0xf] %vm2307, %v2262
  %2334 = vst.msk [vmem:[#allocation2 + $0x1a0] sm:$0xf] %vm2307, %v2264
  %2335 = vst.msk [vmem:[#allocation2 + $0x1b0] sm:$0xf] %vm2307, %v2266
  %2336 = vst.msk [vmem:[#allocation2 + $0x1c0] sm:$0xf] %vm2307, %v2268
  %2337 = vst.msk [vmem:[#allocation2 + $0x1d0] sm:$0xf] %vm2307, %v2270
  %2338 = vst.msk [vmem:[#allocation2 + $0x1e0] sm:$0xf] %vm2307, %v2272
  %2339 = vst.msk [vmem:[#allocation2 + $0x1f0] sm:$0xf] %vm2307, %v2274
  %s2340 = scalar_lea.vmem %s1, 12
  %v2341 = vld [vmem:[%s2340] sm:$0xf]
  %v2342 = vld [vmem:[%s2340 + $0x4] sm:$0xf]
  %v2343 = vld [vmem:[%s2340 + $0xc] sm:$0xf]
  %v2344 = vld [vmem:[%s2340 + $0x10] sm:$0xf]
  %v2345 = vld [vmem:[%s2340 + $0x18] sm:$0xf]
  %v2346 = vld [vmem:[%s2340 + $0x1c] sm:$0xf]
  %v2347 = vld [vmem:[%s2340 + $0x24] sm:$0xf]
  %v2348 = vld [vmem:[%s2340 + $0x28] sm:$0xf]
  %v2349 = vld [vmem:[%s2340 + $0x30] sm:$0xf]
  %v2350 = vld [vmem:[%s2340 + $0x34] sm:$0xf]
  %v2351 = vld [vmem:[%s2340 + $0x3c] sm:$0xf]
  %v2352 = vld [vmem:[%s2340 + $0x40] sm:$0xf]
  %v2353 = vld [vmem:[%s2340 + $0x48] sm:$0xf]
  %v2354 = vld [vmem:[%s2340 + $0x4c] sm:$0xf]
  %v2355 = vld [vmem:[%s2340 + $0x54] sm:$0xf]
  %v2356 = vld [vmem:[%s2340 + $0x58] sm:$0xf]
  %v2357 = vld [vmem:[%s2340 + $0x60] sm:$0xf]
  %v2358 = vld [vmem:[%s2340 + $0x64] sm:$0xf]
  %v2359 = vld [vmem:[%s2340 + $0x6c] sm:$0xf]
  %v2360 = vld [vmem:[%s2340 + $0x70] sm:$0xf]
  %v2361 = vld [vmem:[%s2340 + $0x78] sm:$0xf]
  %v2362 = vld [vmem:[%s2340 + $0x7c] sm:$0xf]
  %v2363 = vld [vmem:[%s2340 + $0x84] sm:$0xf]
  %v2364 = vld [vmem:[%s2340 + $0x88] sm:$0xf]
  %v2365 = vld [vmem:[%s2340 + $0x90] sm:$0xf]
  %v2366 = vld [vmem:[%s2340 + $0x94] sm:$0xf]
  %v2367 = vld [vmem:[%s2340 + $0x9c] sm:$0xf]
  %v2368 = vld [vmem:[%s2340 + $0xa0] sm:$0xf]
  %v2369 = vld [vmem:[%s2340 + $0xa8] sm:$0xf]
  %v2370 = vld [vmem:[%s2340 + $0xac] sm:$0xf]
  %v2371 = vld [vmem:[%s2340 + $0xb4] sm:$0xf]
  %v2372 = vld [vmem:[%s2340 + $0xb8] sm:$0xf]
  %2405 = vrot.lane.b32.xlu0 %v2341, 80
  %v2406 = vpop.permute.xlu0 %2405
  %2407 = vrot.lane.b32.xlu0 %v2342, 80
  %v2408 = vpop.permute.xlu0 %2407
  %2409 = vrot.lane.b32.xlu0 %v2343, 80
  %v2410 = vpop.permute.xlu0 %2409
  %2411 = vrot.lane.b32.xlu0 %v2344, 80
  %v2412 = vpop.permute.xlu0 %2411
  %2413 = vrot.lane.b32.xlu0 %v2345, 80
  %v2414 = vpop.permute.xlu0 %2413
  %2415 = vrot.lane.b32.xlu0 %v2346, 80
  %v2416 = vpop.permute.xlu0 %2415
  %2417 = vrot.lane.b32.xlu0 %v2347, 80
  %v2418 = vpop.permute.xlu0 %2417
  %2419 = vrot.lane.b32.xlu0 %v2348, 80
  %v2420 = vpop.permute.xlu0 %2419
  %2421 = vrot.lane.b32.xlu0 %v2349, 80
  %v2422 = vpop.permute.xlu0 %2421
  %2423 = vrot.lane.b32.xlu0 %v2350, 80
  %v2424 = vpop.permute.xlu0 %2423
  %2425 = vrot.lane.b32.xlu0 %v2351, 80
  %v2426 = vpop.permute.xlu0 %2425
  %2427 = vrot.lane.b32.xlu0 %v2352, 80
  %v2428 = vpop.permute.xlu0 %2427
  %2429 = vrot.lane.b32.xlu0 %v2353, 80
  %v2430 = vpop.permute.xlu0 %2429
  %2431 = vrot.lane.b32.xlu0 %v2354, 80
  %v2432 = vpop.permute.xlu0 %2431
  %2433 = vrot.lane.b32.xlu0 %v2355, 80
  %v2434 = vpop.permute.xlu0 %2433
  %2435 = vrot.lane.b32.xlu0 %v2356, 80
  %v2436 = vpop.permute.xlu0 %2435
  %2437 = vrot.lane.b32.xlu0 %v2357, 80
  %v2438 = vpop.permute.xlu0 %2437
  %2439 = vrot.lane.b32.xlu0 %v2358, 80
  %v2440 = vpop.permute.xlu0 %2439
  %2441 = vrot.lane.b32.xlu0 %v2359, 80
  %v2442 = vpop.permute.xlu0 %2441
  %2443 = vrot.lane.b32.xlu0 %v2360, 80
  %v2444 = vpop.permute.xlu0 %2443
  %2445 = vrot.lane.b32.xlu0 %v2361, 80
  %v2446 = vpop.permute.xlu0 %2445
  %2447 = vrot.lane.b32.xlu0 %v2362, 80
  %v2448 = vpop.permute.xlu0 %2447
  %2449 = vrot.lane.b32.xlu0 %v2363, 80
  %v2450 = vpop.permute.xlu0 %2449
  %2451 = vrot.lane.b32.xlu0 %v2364, 80
  %v2452 = vpop.permute.xlu0 %2451
  %2453 = vrot.lane.b32.xlu0 %v2365, 80
  %v2454 = vpop.permute.xlu0 %2453
  %2455 = vrot.lane.b32.xlu0 %v2366, 80
  %v2456 = vpop.permute.xlu0 %2455
  %2457 = vrot.lane.b32.xlu0 %v2367, 80
  %v2458 = vpop.permute.xlu0 %2457
  %2459 = vrot.lane.b32.xlu0 %v2368, 80
  %v2460 = vpop.permute.xlu0 %2459
  %2461 = vrot.lane.b32.xlu0 %v2369, 80
  %v2462 = vpop.permute.xlu0 %2461
  %2463 = vrot.lane.b32.xlu0 %v2370, 80
  %v2464 = vpop.permute.xlu0 %2463
  %2465 = vrot.lane.b32.xlu0 %v2371, 80
  %v2466 = vpop.permute.xlu0 %2465
  %2467 = vrot.lane.b32.xlu0 %v2372, 80
  %v2468 = vpop.permute.xlu0 %2467
  %vm2501 = vcmask 781952
  %2502 = vst.msk [vmem:[#allocation2 + $0x8] sm:$0xf] %vm2501, %v2406
  %2503 = vst.msk [vmem:[#allocation2 + $0x18] sm:$0xf] %vm2501, %v2408
  %2504 = vst.msk [vmem:[#allocation2 + $0x28] sm:$0xf] %vm2501, %v2410
  %2505 = vst.msk [vmem:[#allocation2 + $0x38] sm:$0xf] %vm2501, %v2412
  %2506 = vst.msk [vmem:[#allocation2 + $0x48] sm:$0xf] %vm2501, %v2414
  %2507 = vst.msk [vmem:[#allocation2 + $0x58] sm:$0xf] %vm2501, %v2416
  %2508 = vst.msk [vmem:[#allocation2 + $0x68] sm:$0xf] %vm2501, %v2418
  %2509 = vst.msk [vmem:[#allocation2 + $0x78] sm:$0xf] %vm2501, %v2420
  %2510 = vst.msk [vmem:[#allocation2 + $0x88] sm:$0xf] %vm2501, %v2422
  %2511 = vst.msk [vmem:[#allocation2 + $0x98] sm:$0xf] %vm2501, %v2424
  %2512 = vst.msk [vmem:[#allocation2 + $0xa8] sm:$0xf] %vm2501, %v2426
  %2513 = vst.msk [vmem:[#allocation2 + $0xb8] sm:$0xf] %vm2501, %v2428
  %2514 = vst.msk [vmem:[#allocation2 + $0xc8] sm:$0xf] %vm2501, %v2430
  %2515 = vst.msk [vmem:[#allocation2 + $0xd8] sm:$0xf] %vm2501, %v2432
  %2516 = vst.msk [vmem:[#allocation2 + $0xe8] sm:$0xf] %vm2501, %v2434
  %2517 = vst.msk [vmem:[#allocation2 + $0xf8] sm:$0xf] %vm2501, %v2436
  %2518 = vst.msk [vmem:[#allocation2 + $0x108] sm:$0xf] %vm2501, %v2438
  %2519 = vst.msk [vmem:[#allocation2 + $0x118] sm:$0xf] %vm2501, %v2440
  %2520 = vst.msk [vmem:[#allocation2 + $0x128] sm:$0xf] %vm2501, %v2442
  %2521 = vst.msk [vmem:[#allocation2 + $0x138] sm:$0xf] %vm2501, %v2444
  %2522 = vst.msk [vmem:[#allocation2 + $0x148] sm:$0xf] %vm2501, %v2446
  %2523 = vst.msk [vmem:[#allocation2 + $0x158] sm:$0xf] %vm2501, %v2448
  %2524 = vst.msk [vmem:[#allocation2 + $0x168] sm:$0xf] %vm2501, %v2450
  %2525 = vst.msk [vmem:[#allocation2 + $0x178] sm:$0xf] %vm2501, %v2452
  %2526 = vst.msk [vmem:[#allocation2 + $0x188] sm:$0xf] %vm2501, %v2454
  %2527 = vst.msk [vmem:[#allocation2 + $0x198] sm:$0xf] %vm2501, %v2456
  %2528 = vst.msk [vmem:[#allocation2 + $0x1a8] sm:$0xf] %vm2501, %v2458
  %2529 = vst.msk [vmem:[#allocation2 + $0x1b8] sm:$0xf] %vm2501, %v2460
  %2530 = vst.msk [vmem:[#allocation2 + $0x1c8] sm:$0xf] %vm2501, %v2462
  %2531 = vst.msk [vmem:[#allocation2 + $0x1d8] sm:$0xf] %vm2501, %v2464
  %2532 = vst.msk [vmem:[#allocation2 + $0x1e8] sm:$0xf] %vm2501, %v2466
  %2533 = vst.msk [vmem:[#allocation2 + $0x1f8] sm:$0xf] %vm2501, %v2468
  %v2534 = vld [vmem:[%s2146] sm:$0xf]
  %v2535 = vld [vmem:[%s2146 + $0x4] sm:$0xf]
  %v2536 = vld [vmem:[%s2146 + $0x8] sm:$0x1]
  %v2537 = vld [vmem:[%s2146 + $0xc] sm:$0xf]
  %v2538 = vld [vmem:[%s2146 + $0x10] sm:$0xf]
  %v2539 = vld [vmem:[%s2146 + $0x14] sm:$0x1]
  %v2540 = vld [vmem:[%s2146 + $0x18] sm:$0xf]
  %v2541 = vld [vmem:[%s2146 + $0x1c] sm:$0xf]
  %v2542 = vld [vmem:[%s2146 + $0x20] sm:$0x1]
  %v2543 = vld [vmem:[%s2146 + $0x24] sm:$0xf]
  %v2544 = vld [vmem:[%s2146 + $0x28] sm:$0xf]
  %v2545 = vld [vmem:[%s2146 + $0x2c] sm:$0x1]
  %v2546 = vld [vmem:[%s2146 + $0x30] sm:$0xf]
  %v2547 = vld [vmem:[%s2146 + $0x34] sm:$0xf]
  %v2548 = vld [vmem:[%s2146 + $0x38] sm:$0x1]
  %v2549 = vld [vmem:[%s2146 + $0x3c] sm:$0xf]
  %v2550 = vld [vmem:[%s2146 + $0x40] sm:$0xf]
  %v2551 = vld [vmem:[%s2146 + $0x44] sm:$0x1]
  %v2552 = vld [vmem:[%s2146 + $0x48] sm:$0xf]
  %v2553 = vld [vmem:[%s2146 + $0x4c] sm:$0xf]
  %v2554 = vld [vmem:[%s2146 + $0x50] sm:$0x1]
  %v2555 = vld [vmem:[%s2146 + $0x54] sm:$0xf]
  %v2556 = vld [vmem:[%s2146 + $0x58] sm:$0xf]
  %v2557 = vld [vmem:[%s2146 + $0x5c] sm:$0x1]
  %v2558 = vld [vmem:[%s2146 + $0x60] sm:$0xf]
  %v2559 = vld [vmem:[%s2146 + $0x64] sm:$0xf]
  %v2560 = vld [vmem:[%s2146 + $0x68] sm:$0x1]
  %v2561 = vld [vmem:[%s2146 + $0x6c] sm:$0xf]
  %v2562 = vld [vmem:[%s2146 + $0x70] sm:$0xf]
  %v2563 = vld [vmem:[%s2146 + $0x74] sm:$0x1]
  %v2564 = vld [vmem:[%s2146 + $0x78] sm:$0xf]
  %v2565 = vld [vmem:[%s2146 + $0x7c] sm:$0xf]
  %v2566 = vld [vmem:[%s2146 + $0x80] sm:$0x1]
  %v2567 = vld [vmem:[%s2146 + $0x84] sm:$0xf]
  %v2568 = vld [vmem:[%s2146 + $0x88] sm:$0xf]
  %v2569 = vld [vmem:[%s2146 + $0x8c] sm:$0x1]
  %v2570 = vld [vmem:[%s2146 + $0x90] sm:$0xf]
  %v2571 = vld [vmem:[%s2146 + $0x94] sm:$0xf]
  %v2572 = vld [vmem:[%s2146 + $0x98] sm:$0x1]
  %v2573 = vld [vmem:[%s2146 + $0x9c] sm:$0xf]
  %v2574 = vld [vmem:[%s2146 + $0xa0] sm:$0xf]
  %v2575 = vld [vmem:[%s2146 + $0xa4] sm:$0x1]
  %v2576 = vld [vmem:[%s2146 + $0xa8] sm:$0xf]
  %v2577 = vld [vmem:[%s2146 + $0xac] sm:$0xf]
  %v2578 = vld [vmem:[%s2146 + $0xb0] sm:$0x1]
  %v2579 = vld [vmem:[%s2146 + $0xb4] sm:$0xf]
  %v2580 = vld [vmem:[%s2146 + $0xb8] sm:$0xf]
  %v2581 = vld [vmem:[%s2146 + $0xbc] sm:$0x1]
  %v2583 = vshrl.u32 %v2534, 16
  %v2585 = vrot.slane %v2583, 4
  %v2586 = vshll.u32 %v2534, 16
  %v2588 = vrot.slane %v2586, 5
  %v2589 = vor.u32 %v2585, %v2588
  %v2590 = vrot.slane %v2589, 4
  %v2592 = vshll.u32 %v2535, 16
  %v2594 = vrot.slane %v2592, 5
  %v2595 = vsel %vm394, %v2590, %v2594
  %v2596 = vshrl.u32 %v2535, 16
  %v2598 = vrot.slane %v2596, 4
  %v2599 = vor.u32 %v2598, %v2594
  %v2600 = vrot.slane %v2599, 4
  %v2602 = vshll.u32 %v2536, 16
  %v2604 = vrot.slane %v2602, 5
  %v2605 = vsel %vm394, %v2600, %v2604
  %v2607 = vshrl.u32 %v2537, 16
  %v2609 = vrot.slane %v2607, 4
  %v2610 = vshll.u32 %v2537, 16
  %v2612 = vrot.slane %v2610, 5
  %v2613 = vor.u32 %v2609, %v2612
  %v2614 = vrot.slane %v2613, 4
  %v2616 = vshll.u32 %v2538, 16
  %v2618 = vrot.slane %v2616, 5
  %v2619 = vsel %vm394, %v2614, %v2618
  %v2620 = vshrl.u32 %v2538, 16
  %v2622 = vrot.slane %v2620, 4
  %v2623 = vor.u32 %v2622, %v2618
  %v2624 = vrot.slane %v2623, 4
  %v2626 = vshll.u32 %v2539, 16
  %v2628 = vrot.slane %v2626, 5
  %v2629 = vsel %vm394, %v2624, %v2628
  %v2631 = vshrl.u32 %v2540, 16
  %v2633 = vrot.slane %v2631, 4
  %v2634 = vshll.u32 %v2540, 16
  %v2636 = vrot.slane %v2634, 5
  %v2637 = vor.u32 %v2633, %v2636
  %v2638 = vrot.slane %v2637, 4
  %v2640 = vshll.u32 %v2541, 16
  %v2642 = vrot.slane %v2640, 5
  %v2643 = vsel %vm394, %v2638, %v2642
  %v2644 = vshrl.u32 %v2541, 16
  %v2646 = vrot.slane %v2644, 4
  %v2647 = vor.u32 %v2646, %v2642
  %v2648 = vrot.slane %v2647, 4
  %v2650 = vshll.u32 %v2542, 16
  %v2652 = vrot.slane %v2650, 5
  %v2653 = vsel %vm394, %v2648, %v2652
  %v2655 = vshrl.u32 %v2543, 16
  %v2657 = vrot.slane %v2655, 4
  %v2658 = vshll.u32 %v2543, 16
  %v2660 = vrot.slane %v2658, 5
  %v2661 = vor.u32 %v2657, %v2660
  %v2662 = vrot.slane %v2661, 4
  %v2664 = vshll.u32 %v2544, 16
  %v2666 = vrot.slane %v2664, 5
  %v2667 = vsel %vm394, %v2662, %v2666
  %v2668 = vshrl.u32 %v2544, 16
  %v2670 = vrot.slane %v2668, 4
  %v2671 = vor.u32 %v2670, %v2666
  %v2672 = vrot.slane %v2671, 4
  %v2674 = vshll.u32 %v2545, 16
  %v2676 = vrot.slane %v2674, 5
  %v2677 = vsel %vm394, %v2672, %v2676
  %v2679 = vshrl.u32 %v2546, 16
  %v2681 = vrot.slane %v2679, 4
  %v2682 = vshll.u32 %v2546, 16
  %v2684 = vrot.slane %v2682, 5
  %v2685 = vor.u32 %v2681, %v2684
  %v2686 = vrot.slane %v2685, 4
  %v2688 = vshll.u32 %v2547, 16
  %v2690 = vrot.slane %v2688, 5
  %v2691 = vsel %vm394, %v2686, %v2690
  %v2692 = vshrl.u32 %v2547, 16
  %v2694 = vrot.slane %v2692, 4
  %v2695 = vor.u32 %v2694, %v2690
  %v2696 = vrot.slane %v2695, 4
  %v2698 = vshll.u32 %v2548, 16
  %v2700 = vrot.slane %v2698, 5
  %v2701 = vsel %vm394, %v2696, %v2700
  %v2703 = vshrl.u32 %v2549, 16
  %v2705 = vrot.slane %v2703, 4
  %v2706 = vshll.u32 %v2549, 16
  %v2708 = vrot.slane %v2706, 5
  %v2709 = vor.u32 %v2705, %v2708
  %v2710 = vrot.slane %v2709, 4
  %v2712 = vshll.u32 %v2550, 16
  %v2714 = vrot.slane %v2712, 5
  %v2715 = vsel %vm394, %v2710, %v2714
  %v2716 = vshrl.u32 %v2550, 16
  %v2718 = vrot.slane %v2716, 4
  %v2719 = vor.u32 %v2718, %v2714
  %v2720 = vrot.slane %v2719, 4
  %v2722 = vshll.u32 %v2551, 16
  %v2724 = vrot.slane %v2722, 5
  %v2725 = vsel %vm394, %v2720, %v2724
  %v2727 = vshrl.u32 %v2552, 16
  %v2729 = vrot.slane %v2727, 4
  %v2730 = vshll.u32 %v2552, 16
  %v2732 = vrot.slane %v2730, 5
  %v2733 = vor.u32 %v2729, %v2732
  %v2734 = vrot.slane %v2733, 4
  %v2736 = vshll.u32 %v2553, 16
  %v2738 = vrot.slane %v2736, 5
  %v2739 = vsel %vm394, %v2734, %v2738
  %v2740 = vshrl.u32 %v2553, 16
  %v2742 = vrot.slane %v2740, 4
  %v2743 = vor.u32 %v2742, %v2738
  %v2744 = vrot.slane %v2743, 4
  %v2746 = vshll.u32 %v2554, 16
  %v2748 = vrot.slane %v2746, 5
  %v2749 = vsel %vm394, %v2744, %v2748
  %v2751 = vshrl.u32 %v2555, 16
  %v2753 = vrot.slane %v2751, 4
  %v2754 = vshll.u32 %v2555, 16
  %v2756 = vrot.slane %v2754, 5
  %v2757 = vor.u32 %v2753, %v2756
  %v2758 = vrot.slane %v2757, 4
  %v2760 = vshll.u32 %v2556, 16
  %v2762 = vrot.slane %v2760, 5
  %v2763 = vsel %vm394, %v2758, %v2762
  %v2764 = vshrl.u32 %v2556, 16
  %v2766 = vrot.slane %v2764, 4
  %v2767 = vor.u32 %v2766, %v2762
  %v2768 = vrot.slane %v2767, 4
  %v2770 = vshll.u32 %v2557, 16
  %v2772 = vrot.slane %v2770, 5
  %v2773 = vsel %vm394, %v2768, %v2772
  %v2775 = vshrl.u32 %v2558, 16
  %v2777 = vrot.slane %v2775, 4
  %v2778 = vshll.u32 %v2558, 16
  %v2780 = vrot.slane %v2778, 5
  %v2781 = vor.u32 %v2777, %v2780
  %v2782 = vrot.slane %v2781, 4
  %v2784 = vshll.u32 %v2559, 16
  %v2786 = vrot.slane %v2784, 5
  %v2787 = vsel %vm394, %v2782, %v2786
  %v2788 = vshrl.u32 %v2559, 16
  %v2790 = vrot.slane %v2788, 4
  %v2791 = vor.u32 %v2790, %v2786
  %v2792 = vrot.slane %v2791, 4
  %v2794 = vshll.u32 %v2560, 16
  %v2796 = vrot.slane %v2794, 5
  %v2797 = vsel %vm394, %v2792, %v2796
  %v2799 = vshrl.u32 %v2561, 16
  %v2801 = vrot.slane %v2799, 4
  %v2802 = vshll.u32 %v2561, 16
  %v2804 = vrot.slane %v2802, 5
  %v2805 = vor.u32 %v2801, %v2804
  %v2806 = vrot.slane %v2805, 4
  %v2808 = vshll.u32 %v2562, 16
  %v2810 = vrot.slane %v2808, 5
  %v2811 = vsel %vm394, %v2806, %v2810
  %v2812 = vshrl.u32 %v2562, 16
  %v2814 = vrot.slane %v2812, 4
  %v2815 = vor.u32 %v2814, %v2810
  %v2816 = vrot.slane %v2815, 4
  %v2818 = vshll.u32 %v2563, 16
  %v2820 = vrot.slane %v2818, 5
  %v2821 = vsel %vm394, %v2816, %v2820
  %v2823 = vshrl.u32 %v2564, 16
  %v2825 = vrot.slane %v2823, 4
  %v2826 = vshll.u32 %v2564, 16
  %v2828 = vrot.slane %v2826, 5
  %v2829 = vor.u32 %v2825, %v2828
  %v2830 = vrot.slane %v2829, 4
  %v2832 = vshll.u32 %v2565, 16
  %v2834 = vrot.slane %v2832, 5
  %v2835 = vsel %vm394, %v2830, %v2834
  %v2836 = vshrl.u32 %v2565, 16
  %v2838 = vrot.slane %v2836, 4
  %v2839 = vor.u32 %v2838, %v2834
  %v2840 = vrot.slane %v2839, 4
  %v2842 = vshll.u32 %v2566, 16
  %v2844 = vrot.slane %v2842, 5
  %v2845 = vsel %vm394, %v2840, %v2844
  %v2847 = vshrl.u32 %v2567, 16
  %v2849 = vrot.slane %v2847, 4
  %v2850 = vshll.u32 %v2567, 16
  %v2852 = vrot.slane %v2850, 5
  %v2853 = vor.u32 %v2849, %v2852
  %v2854 = vrot.slane %v2853, 4
  %v2856 = vshll.u32 %v2568, 16
  %v2858 = vrot.slane %v2856, 5
  %v2859 = vsel %vm394, %v2854, %v2858
  %v2860 = vshrl.u32 %v2568, 16
  %v2862 = vrot.slane %v2860, 4
  %v2863 = vor.u32 %v2862, %v2858
  %v2864 = vrot.slane %v2863, 4
  %v2866 = vshll.u32 %v2569, 16
  %v2868 = vrot.slane %v2866, 5
  %v2869 = vsel %vm394, %v2864, %v2868
  %v2871 = vshrl.u32 %v2570, 16
  %v2873 = vrot.slane %v2871, 4
  %v2874 = vshll.u32 %v2570, 16
  %v2876 = vrot.slane %v2874, 5
  %v2877 = vor.u32 %v2873, %v2876
  %v2878 = vrot.slane %v2877, 4
  %v2880 = vshll.u32 %v2571, 16
  %v2882 = vrot.slane %v2880, 5
  %v2883 = vsel %vm394, %v2878, %v2882
  %v2884 = vshrl.u32 %v2571, 16
  %v2886 = vrot.slane %v2884, 4
  %v2887 = vor.u32 %v2886, %v2882
  %v2888 = vrot.slane %v2887, 4
  %v2890 = vshll.u32 %v2572, 16
  %v2892 = vrot.slane %v2890, 5
  %v2893 = vsel %vm394, %v2888, %v2892
  %v2895 = vshrl.u32 %v2573, 16
  %v2897 = vrot.slane %v2895, 4
  %v2898 = vshll.u32 %v2573, 16
  %v2900 = vrot.slane %v2898, 5
  %v2901 = vor.u32 %v2897, %v2900
  %v2902 = vrot.slane %v2901, 4
  %v2904 = vshll.u32 %v2574, 16
  %v2906 = vrot.slane %v2904, 5
  %v2907 = vsel %vm394, %v2902, %v2906
  %v2908 = vshrl.u32 %v2574, 16
  %v2910 = vrot.slane %v2908, 4
  %v2911 = vor.u32 %v2910, %v2906
  %v2912 = vrot.slane %v2911, 4
  %v2914 = vshll.u32 %v2575, 16
  %v2916 = vrot.slane %v2914, 5
  %v2917 = vsel %vm394, %v2912, %v2916
  %v2919 = vshrl.u32 %v2576, 16
  %v2921 = vrot.slane %v2919, 4
  %v2922 = vshll.u32 %v2576, 16
  %v2924 = vrot.slane %v2922, 5
  %v2925 = vor.u32 %v2921, %v2924
  %v2926 = vrot.slane %v2925, 4
  %v2928 = vshll.u32 %v2577, 16
  %v2930 = vrot.slane %v2928, 5
  %v2931 = vsel %vm394, %v2926, %v2930
  %v2932 = vshrl.u32 %v2577, 16
  %v2934 = vrot.slane %v2932, 4
  %v2935 = vor.u32 %v2934, %v2930
  %v2936 = vrot.slane %v2935, 4
  %v2938 = vshll.u32 %v2578, 16
  %v2940 = vrot.slane %v2938, 5
  %v2941 = vsel %vm394, %v2936, %v2940
  %v2943 = vshrl.u32 %v2579, 16
  %v2945 = vrot.slane %v2943, 4
  %v2946 = vshll.u32 %v2579, 16
  %v2948 = vrot.slane %v2946, 5
  %v2949 = vor.u32 %v2945, %v2948
  %v2950 = vrot.slane %v2949, 4
  %v2952 = vshll.u32 %v2580, 16
  %v2954 = vrot.slane %v2952, 5
  %v2955 = vsel %vm394, %v2950, %v2954
  %v2956 = vshrl.u32 %v2580, 16
  %v2958 = vrot.slane %v2956, 4
  %v2959 = vor.u32 %v2958, %v2954
  %v2960 = vrot.slane %v2959, 4
  %v2962 = vshll.u32 %v2581, 16
  %v2964 = vrot.slane %v2962, 5
  %v2965 = vsel %vm394, %v2960, %v2964
  %2998 = vst.msk [vmem:[#allocation2 + $0x4] sm:$0xf] %vm118, %v2595
  %2999 = vst.msk [vmem:[#allocation2 + $0x14] sm:$0xf] %vm118, %v2605
  %3000 = vst.msk [vmem:[#allocation2 + $0x24] sm:$0xf] %vm118, %v2619
  %3001 = vst.msk [vmem:[#allocation2 + $0x34] sm:$0xf] %vm118, %v2629
  %3002 = vst.msk [vmem:[#allocation2 + $0x44] sm:$0xf] %vm118, %v2643
  %3003 = vst.msk [vmem:[#allocation2 + $0x54] sm:$0xf] %vm118, %v2653
  %3004 = vst.msk [vmem:[#allocation2 + $0x64] sm:$0xf] %vm118, %v2667
  %3005 = vst.msk [vmem:[#allocation2 + $0x74] sm:$0xf] %vm118, %v2677
  %3006 = vst.msk [vmem:[#allocation2 + $0x84] sm:$0xf] %vm118, %v2691
  %3007 = vst.msk [vmem:[#allocation2 + $0x94] sm:$0xf] %vm118, %v2701
  %3008 = vst.msk [vmem:[#allocation2 + $0xa4] sm:$0xf] %vm118, %v2715
  %3009 = vst.msk [vmem:[#allocation2 + $0xb4] sm:$0xf] %vm118, %v2725
  %3010 = vst.msk [vmem:[#allocation2 + $0xc4] sm:$0xf] %vm118, %v2739
  %3011 = vst.msk [vmem:[#allocation2 + $0xd4] sm:$0xf] %vm118, %v2749
  %3012 = vst.msk [vmem:[#allocation2 + $0xe4] sm:$0xf] %vm118, %v2763
  %3013 = vst.msk [vmem:[#allocation2 + $0xf4] sm:$0xf] %vm118, %v2773
  %3014 = vst.msk [vmem:[#allocation2 + $0x104] sm:$0xf] %vm118, %v2787
  %3015 = vst.msk [vmem:[#allocation2 + $0x114] sm:$0xf] %vm118, %v2797
  %3016 = vst.msk [vmem:[#allocation2 + $0x124] sm:$0xf] %vm118, %v2811
  %3017 = vst.msk [vmem:[#allocation2 + $0x134] sm:$0xf] %vm118, %v2821
  %3018 = vst.msk [vmem:[#allocation2 + $0x144] sm:$0xf] %vm118, %v2835
  %3019 = vst.msk [vmem:[#allocation2 + $0x154] sm:$0xf] %vm118, %v2845
  %3020 = vst.msk [vmem:[#allocation2 + $0x164] sm:$0xf] %vm118, %v2859
  %3021 = vst.msk [vmem:[#allocation2 + $0x174] sm:$0xf] %vm118, %v2869
  %3022 = vst.msk [vmem:[#allocation2 + $0x184] sm:$0xf] %vm118, %v2883
  %3023 = vst.msk [vmem:[#allocation2 + $0x194] sm:$0xf] %vm118, %v2893
  %3024 = vst.msk [vmem:[#allocation2 + $0x1a4] sm:$0xf] %vm118, %v2907
  %3025 = vst.msk [vmem:[#allocation2 + $0x1b4] sm:$0xf] %vm118, %v2917
  %3026 = vst.msk [vmem:[#allocation2 + $0x1c4] sm:$0xf] %vm118, %v2931
  %3027 = vst.msk [vmem:[#allocation2 + $0x1d4] sm:$0xf] %vm118, %v2941
  %3028 = vst.msk [vmem:[#allocation2 + $0x1e4] sm:$0xf] %vm118, %v2955
  %3029 = vst.msk [vmem:[#allocation2 + $0x1f4] sm:$0xf] %vm118, %v2965
  %v3030 = vld [vmem:[%s2340] sm:$0xf]
  %v3031 = vld [vmem:[%s2340 + $0x4] sm:$0xf]
  %v3032 = vld [vmem:[%s2340 + $0x8] sm:$0x1]
  %v3033 = vld [vmem:[%s2340 + $0xc] sm:$0xf]
  %v3034 = vld [vmem:[%s2340 + $0x10] sm:$0xf]
  %v3035 = vld [vmem:[%s2340 + $0x14] sm:$0x1]
  %v3036 = vld [vmem:[%s2340 + $0x18] sm:$0xf]
  %v3037 = vld [vmem:[%s2340 + $0x1c] sm:$0xf]
  %v3038 = vld [vmem:[%s2340 + $0x20] sm:$0x1]
  %v3039 = vld [vmem:[%s2340 + $0x24] sm:$0xf]
  %v3040 = vld [vmem:[%s2340 + $0x28] sm:$0xf]
  %v3041 = vld [vmem:[%s2340 + $0x2c] sm:$0x1]
  %v3042 = vld [vmem:[%s2340 + $0x30] sm:$0xf]
  %v3043 = vld [vmem:[%s2340 + $0x34] sm:$0xf]
  %v3044 = vld [vmem:[%s2340 + $0x38] sm:$0x1]
  %v3045 = vld [vmem:[%s2340 + $0x3c] sm:$0xf]
  %v3046 = vld [vmem:[%s2340 + $0x40] sm:$0xf]
  %v3047 = vld [vmem:[%s2340 + $0x44] sm:$0x1]
  %v3048 = vld [vmem:[%s2340 + $0x48] sm:$0xf]
  %v3049 = vld [vmem:[%s2340 + $0x4c] sm:$0xf]
  %v3050 = vld [vmem:[%s2340 + $0x50] sm:$0x1]
  %v3051 = vld [vmem:[%s2340 + $0x54] sm:$0xf]
  %v3052 = vld [vmem:[%s2340 + $0x58] sm:$0xf]
  %v3053 = vld [vmem:[%s2340 + $0x5c] sm:$0x1]
  %v3054 = vld [vmem:[%s2340 + $0x60] sm:$0xf]
  %v3055 = vld [vmem:[%s2340 + $0x64] sm:$0xf]
  %v3056 = vld [vmem:[%s2340 + $0x68] sm:$0x1]
  %v3057 = vld [vmem:[%s2340 + $0x6c] sm:$0xf]
  %v3058 = vld [vmem:[%s2340 + $0x70] sm:$0xf]
  %v3059 = vld [vmem:[%s2340 + $0x74] sm:$0x1]
  %v3060 = vld [vmem:[%s2340 + $0x78] sm:$0xf]
  %v3061 = vld [vmem:[%s2340 + $0x7c] sm:$0xf]
  %v3062 = vld [vmem:[%s2340 + $0x80] sm:$0x1]
  %v3063 = vld [vmem:[%s2340 + $0x84] sm:$0xf]
  %v3064 = vld [vmem:[%s2340 + $0x88] sm:$0xf]
  %v3065 = vld [vmem:[%s2340 + $0x8c] sm:$0x1]
  %v3066 = vld [vmem:[%s2340 + $0x90] sm:$0xf]
  %v3067 = vld [vmem:[%s2340 + $0x94] sm:$0xf]
  %v3068 = vld [vmem:[%s2340 + $0x98] sm:$0x1]
  %v3069 = vld [vmem:[%s2340 + $0x9c] sm:$0xf]
  %v3070 = vld [vmem:[%s2340 + $0xa0] sm:$0xf]
  %v3071 = vld [vmem:[%s2340 + $0xa4] sm:$0x1]
  %v3072 = vld [vmem:[%s2340 + $0xa8] sm:$0xf]
  %v3073 = vld [vmem:[%s2340 + $0xac] sm:$0xf]
  %v3074 = vld [vmem:[%s2340 + $0xb0] sm:$0x1]
  %v3075 = vld [vmem:[%s2340 + $0xb4] sm:$0xf]
  %v3076 = vld [vmem:[%s2340 + $0xb8] sm:$0xf]
  %v3077 = vld [vmem:[%s2340 + $0xbc] sm:$0x1]
  %v3079 = vshrl.u32 %v3030, 16
  %v3081 = vrot.slane %v3079, 4
  %v3082 = vshll.u32 %v3030, 16
  %v3084 = vrot.slane %v3082, 5
  %v3085 = vor.u32 %v3081, %v3084
  %v3086 = vrot.slane %v3085, 4
  %v3088 = vshll.u32 %v3031, 16
  %v3090 = vrot.slane %v3088, 5
  %v3091 = vsel %vm394, %v3086, %v3090
  %v3092 = vshrl.u32 %v3031, 16
  %v3094 = vrot.slane %v3092, 4
  %v3095 = vor.u32 %v3094, %v3090
  %v3096 = vrot.slane %v3095, 4
  %v3098 = vshll.u32 %v3032, 16
  %v3100 = vrot.slane %v3098, 5
  %v3101 = vsel %vm394, %v3096, %v3100
  %v3103 = vshrl.u32 %v3033, 16
  %v3105 = vrot.slane %v3103, 4
  %v3106 = vshll.u32 %v3033, 16
  %v3108 = vrot.slane %v3106, 5
  %v3109 = vor.u32 %v3105, %v3108
  %v3110 = vrot.slane %v3109, 4
  %v3112 = vshll.u32 %v3034, 16
  %v3114 = vrot.slane %v3112, 5
  %v3115 = vsel %vm394, %v3110, %v3114
  %v3116 = vshrl.u32 %v3034, 16
  %v3118 = vrot.slane %v3116, 4
  %v3119 = vor.u32 %v3118, %v3114
  %v3120 = vrot.slane %v3119, 4
  %v3122 = vshll.u32 %v3035, 16
  %v3124 = vrot.slane %v3122, 5
  %v3125 = vsel %vm394, %v3120, %v3124
  %v3127 = vshrl.u32 %v3036, 16
  %v3129 = vrot.slane %v3127, 4
  %v3130 = vshll.u32 %v3036, 16
  %v3132 = vrot.slane %v3130, 5
  %v3133 = vor.u32 %v3129, %v3132
  %v3134 = vrot.slane %v3133, 4
  %v3136 = vshll.u32 %v3037, 16
  %v3138 = vrot.slane %v3136, 5
  %v3139 = vsel %vm394, %v3134, %v3138
  %v3140 = vshrl.u32 %v3037, 16
  %v3142 = vrot.slane %v3140, 4
  %v3143 = vor.u32 %v3142, %v3138
  %v3144 = vrot.slane %v3143, 4
  %v3146 = vshll.u32 %v3038, 16
  %v3148 = vrot.slane %v3146, 5
  %v3149 = vsel %vm394, %v3144, %v3148
  %v3151 = vshrl.u32 %v3039, 16
  %v3153 = vrot.slane %v3151, 4
  %v3154 = vshll.u32 %v3039, 16
  %v3156 = vrot.slane %v3154, 5
  %v3157 = vor.u32 %v3153, %v3156
  %v3158 = vrot.slane %v3157, 4
  %v3160 = vshll.u32 %v3040, 16
  %v3162 = vrot.slane %v3160, 5
  %v3163 = vsel %vm394, %v3158, %v3162
  %v3164 = vshrl.u32 %v3040, 16
  %v3166 = vrot.slane %v3164, 4
  %v3167 = vor.u32 %v3166, %v3162
  %v3168 = vrot.slane %v3167, 4
  %v3170 = vshll.u32 %v3041, 16
  %v3172 = vrot.slane %v3170, 5
  %v3173 = vsel %vm394, %v3168, %v3172
  %v3175 = vshrl.u32 %v3042, 16
  %v3177 = vrot.slane %v3175, 4
  %v3178 = vshll.u32 %v3042, 16
  %v3180 = vrot.slane %v3178, 5
  %v3181 = vor.u32 %v3177, %v3180
  %v3182 = vrot.slane %v3181, 4
  %v3184 = vshll.u32 %v3043, 16
  %v3186 = vrot.slane %v3184, 5
  %v3187 = vsel %vm394, %v3182, %v3186
  %v3188 = vshrl.u32 %v3043, 16
  %v3190 = vrot.slane %v3188, 4
  %v3191 = vor.u32 %v3190, %v3186
  %v3192 = vrot.slane %v3191, 4
  %v3194 = vshll.u32 %v3044, 16
  %v3196 = vrot.slane %v3194, 5
  %v3197 = vsel %vm394, %v3192, %v3196
  %v3199 = vshrl.u32 %v3045, 16
  %v3201 = vrot.slane %v3199, 4
  %v3202 = vshll.u32 %v3045, 16
  %v3204 = vrot.slane %v3202, 5
  %v3205 = vor.u32 %v3201, %v3204
  %v3206 = vrot.slane %v3205, 4
  %v3208 = vshll.u32 %v3046, 16
  %v3210 = vrot.slane %v3208, 5
  %v3211 = vsel %vm394, %v3206, %v3210
  %v3212 = vshrl.u32 %v3046, 16
  %v3214 = vrot.slane %v3212, 4
  %v3215 = vor.u32 %v3214, %v3210
  %v3216 = vrot.slane %v3215, 4
  %v3218 = vshll.u32 %v3047, 16
  %v3220 = vrot.slane %v3218, 5
  %v3221 = vsel %vm394, %v3216, %v3220
  %v3223 = vshrl.u32 %v3048, 16
  %v3225 = vrot.slane %v3223, 4
  %v3226 = vshll.u32 %v3048, 16
  %v3228 = vrot.slane %v3226, 5
  %v3229 = vor.u32 %v3225, %v3228
  %v3230 = vrot.slane %v3229, 4
  %v3232 = vshll.u32 %v3049, 16
  %v3234 = vrot.slane %v3232, 5
  %v3235 = vsel %vm394, %v3230, %v3234
  %v3236 = vshrl.u32 %v3049, 16
  %v3238 = vrot.slane %v3236, 4
  %v3239 = vor.u32 %v3238, %v3234
  %v3240 = vrot.slane %v3239, 4
  %v3242 = vshll.u32 %v3050, 16
  %v3244 = vrot.slane %v3242, 5
  %v3245 = vsel %vm394, %v3240, %v3244
  %v3247 = vshrl.u32 %v3051, 16
  %v3249 = vrot.slane %v3247, 4
  %v3250 = vshll.u32 %v3051, 16
  %v3252 = vrot.slane %v3250, 5
  %v3253 = vor.u32 %v3249, %v3252
  %v3254 = vrot.slane %v3253, 4
  %v3256 = vshll.u32 %v3052, 16
  %v3258 = vrot.slane %v3256, 5
  %v3259 = vsel %vm394, %v3254, %v3258
  %v3260 = vshrl.u32 %v3052, 16
  %v3262 = vrot.slane %v3260, 4
  %v3263 = vor.u32 %v3262, %v3258
  %v3264 = vrot.slane %v3263, 4
  %v3266 = vshll.u32 %v3053, 16
  %v3268 = vrot.slane %v3266, 5
  %v3269 = vsel %vm394, %v3264, %v3268
  %v3271 = vshrl.u32 %v3054, 16
  %v3273 = vrot.slane %v3271, 4
  %v3274 = vshll.u32 %v3054, 16
  %v3276 = vrot.slane %v3274, 5
  %v3277 = vor.u32 %v3273, %v3276
  %v3278 = vrot.slane %v3277, 4
  %v3280 = vshll.u32 %v3055, 16
  %v3282 = vrot.slane %v3280, 5
  %v3283 = vsel %vm394, %v3278, %v3282
  %v3284 = vshrl.u32 %v3055, 16
  %v3286 = vrot.slane %v3284, 4
  %v3287 = vor.u32 %v3286, %v3282
  %v3288 = vrot.slane %v3287, 4
  %v3290 = vshll.u32 %v3056, 16
  %v3292 = vrot.slane %v3290, 5
  %v3293 = vsel %vm394, %v3288, %v3292
  %v3295 = vshrl.u32 %v3057, 16
  %v3297 = vrot.slane %v3295, 4
  %v3298 = vshll.u32 %v3057, 16
  %v3300 = vrot.slane %v3298, 5
  %v3301 = vor.u32 %v3297, %v3300
  %v3302 = vrot.slane %v3301, 4
  %v3304 = vshll.u32 %v3058, 16
  %v3306 = vrot.slane %v3304, 5
  %v3307 = vsel %vm394, %v3302, %v3306
  %v3308 = vshrl.u32 %v3058, 16
  %v3310 = vrot.slane %v3308, 4
  %v3311 = vor.u32 %v3310, %v3306
  %v3312 = vrot.slane %v3311, 4
  %v3314 = vshll.u32 %v3059, 16
  %v3316 = vrot.slane %v3314, 5
  %v3317 = vsel %vm394, %v3312, %v3316
  %v3319 = vshrl.u32 %v3060, 16
  %v3321 = vrot.slane %v3319, 4
  %v3322 = vshll.u32 %v3060, 16
  %v3324 = vrot.slane %v3322, 5
  %v3325 = vor.u32 %v3321, %v3324
  %v3326 = vrot.slane %v3325, 4
  %v3328 = vshll.u32 %v3061, 16
  %v3330 = vrot.slane %v3328, 5
  %v3331 = vsel %vm394, %v3326, %v3330
  %v3332 = vshrl.u32 %v3061, 16
  %v3334 = vrot.slane %v3332, 4
  %v3335 = vor.u32 %v3334, %v3330
  %v3336 = vrot.slane %v3335, 4
  %v3338 = vshll.u32 %v3062, 16
  %v3340 = vrot.slane %v3338, 5
  %v3341 = vsel %vm394, %v3336, %v3340
  %v3343 = vshrl.u32 %v3063, 16
  %v3345 = vrot.slane %v3343, 4
  %v3346 = vshll.u32 %v3063, 16
  %v3348 = vrot.slane %v3346, 5
  %v3349 = vor.u32 %v3345, %v3348
  %v3350 = vrot.slane %v3349, 4
  %v3352 = vshll.u32 %v3064, 16
  %v3354 = vrot.slane %v3352, 5
  %v3355 = vsel %vm394, %v3350, %v3354
  %v3356 = vshrl.u32 %v3064, 16
  %v3358 = vrot.slane %v3356, 4
  %v3359 = vor.u32 %v3358, %v3354
  %v3360 = vrot.slane %v3359, 4
  %v3362 = vshll.u32 %v3065, 16
  %v3364 = vrot.slane %v3362, 5
  %v3365 = vsel %vm394, %v3360, %v3364
  %v3367 = vshrl.u32 %v3066, 16
  %v3369 = vrot.slane %v3367, 4
  %v3370 = vshll.u32 %v3066, 16
  %v3372 = vrot.slane %v3370, 5
  %v3373 = vor.u32 %v3369, %v3372
  %v3374 = vrot.slane %v3373, 4
  %v3376 = vshll.u32 %v3067, 16
  %v3378 = vrot.slane %v3376, 5
  %v3379 = vsel %vm394, %v3374, %v3378
  %v3380 = vshrl.u32 %v3067, 16
  %v3382 = vrot.slane %v3380, 4
  %v3383 = vor.u32 %v3382, %v3378
  %v3384 = vrot.slane %v3383, 4
  %v3386 = vshll.u32 %v3068, 16
  %v3388 = vrot.slane %v3386, 5
  %v3389 = vsel %vm394, %v3384, %v3388
  %v3391 = vshrl.u32 %v3069, 16
  %v3393 = vrot.slane %v3391, 4
  %v3394 = vshll.u32 %v3069, 16
  %v3396 = vrot.slane %v3394, 5
  %v3397 = vor.u32 %v3393, %v3396
  %v3398 = vrot.slane %v3397, 4
  %v3400 = vshll.u32 %v3070, 16
  %v3402 = vrot.slane %v3400, 5
  %v3403 = vsel %vm394, %v3398, %v3402
  %v3404 = vshrl.u32 %v3070, 16
  %v3406 = vrot.slane %v3404, 4
  %v3407 = vor.u32 %v3406, %v3402
  %v3408 = vrot.slane %v3407, 4
  %v3410 = vshll.u32 %v3071, 16
  %v3412 = vrot.slane %v3410, 5
  %v3413 = vsel %vm394, %v3408, %v3412
  %v3415 = vshrl.u32 %v3072, 16
  %v3417 = vrot.slane %v3415, 4
  %v3418 = vshll.u32 %v3072, 16
  %v3420 = vrot.slane %v3418, 5
  %v3421 = vor.u32 %v3417, %v3420
  %v3422 = vrot.slane %v3421, 4
  %v3424 = vshll.u32 %v3073, 16
  %v3426 = vrot.slane %v3424, 5
  %v3427 = vsel %vm394, %v3422, %v3426
  %v3428 = vshrl.u32 %v3073, 16
  %v3430 = vrot.slane %v3428, 4
  %v3431 = vor.u32 %v3430, %v3426
  %v3432 = vrot.slane %v3431, 4
  %v3434 = vshll.u32 %v3074, 16
  %v3436 = vrot.slane %v3434, 5
  %v3437 = vsel %vm394, %v3432, %v3436
  %v3439 = vshrl.u32 %v3075, 16
  %v3441 = vrot.slane %v3439, 4
  %v3442 = vshll.u32 %v3075, 16
  %v3444 = vrot.slane %v3442, 5
  %v3445 = vor.u32 %v3441, %v3444
  %v3446 = vrot.slane %v3445, 4
  %v3448 = vshll.u32 %v3076, 16
  %v3450 = vrot.slane %v3448, 5
  %v3451 = vsel %vm394, %v3446, %v3450
  %v3452 = vshrl.u32 %v3076, 16
  %v3454 = vrot.slane %v3452, 4
  %v3455 = vor.u32 %v3454, %v3450
  %v3456 = vrot.slane %v3455, 4
  %v3458 = vshll.u32 %v3077, 16
  %v3460 = vrot.slane %v3458, 5
  %v3461 = vsel %vm394, %v3456, %v3460
  %3462 = vrot.lane.b32.xlu0 %v3091, 96
  %v3463 = vpop.permute.xlu0 %3462
  %3464 = vrot.lane.b32.xlu0 %v3101, 96
  %v3465 = vpop.permute.xlu0 %3464
  %3466 = vrot.lane.b32.xlu0 %v3115, 96
  %v3467 = vpop.permute.xlu0 %3466
  %3468 = vrot.lane.b32.xlu0 %v3125, 96
  %v3469 = vpop.permute.xlu0 %3468
  %3470 = vrot.lane.b32.xlu0 %v3139, 96
  %v3471 = vpop.permute.xlu0 %3470
  %3472 = vrot.lane.b32.xlu0 %v3149, 96
  %v3473 = vpop.permute.xlu0 %3472
  %3474 = vrot.lane.b32.xlu0 %v3163, 96
  %v3475 = vpop.permute.xlu0 %3474
  %3476 = vrot.lane.b32.xlu0 %v3173, 96
  %v3477 = vpop.permute.xlu0 %3476
  %3478 = vrot.lane.b32.xlu0 %v3187, 96
  %v3479 = vpop.permute.xlu0 %3478
  %3480 = vrot.lane.b32.xlu0 %v3197, 96
  %v3481 = vpop.permute.xlu0 %3480
  %3482 = vrot.lane.b32.xlu0 %v3211, 96
  %v3483 = vpop.permute.xlu0 %3482
  %3484 = vrot.lane.b32.xlu0 %v3221, 96
  %v3485 = vpop.permute.xlu0 %3484
  %3486 = vrot.lane.b32.xlu0 %v3235, 96
  %v3487 = vpop.permute.xlu0 %3486
  %3488 = vrot.lane.b32.xlu0 %v3245, 96
  %v3489 = vpop.permute.xlu0 %3488
  %3490 = vrot.lane.b32.xlu0 %v3259, 96
  %v3491 = vpop.permute.xlu0 %3490
  %3492 = vrot.lane.b32.xlu0 %v3269, 96
  %v3493 = vpop.permute.xlu0 %3492
  %3494 = vrot.lane.b32.xlu0 %v3283, 96
  %v3495 = vpop.permute.xlu0 %3494
  %3496 = vrot.lane.b32.xlu0 %v3293, 96
  %v3497 = vpop.permute.xlu0 %3496
  %3498 = vrot.lane.b32.xlu0 %v3307, 96
  %v3499 = vpop.permute.xlu0 %3498
  %3500 = vrot.lane.b32.xlu0 %v3317, 96
  %v3501 = vpop.permute.xlu0 %3500
  %3502 = vrot.lane.b32.xlu0 %v3331, 96
  %v3503 = vpop.permute.xlu0 %3502
  %3504 = vrot.lane.b32.xlu0 %v3341, 96
  %v3505 = vpop.permute.xlu0 %3504
  %3506 = vrot.lane.b32.xlu0 %v3355, 96
  %v3507 = vpop.permute.xlu0 %3506
  %3508 = vrot.lane.b32.xlu0 %v3365, 96
  %v3509 = vpop.permute.xlu0 %3508
  %3510 = vrot.lane.b32.xlu0 %v3379, 96
  %v3511 = vpop.permute.xlu0 %3510
  %3512 = vrot.lane.b32.xlu0 %v3389, 96
  %v3513 = vpop.permute.xlu0 %3512
  %3514 = vrot.lane.b32.xlu0 %v3403, 96
  %v3515 = vpop.permute.xlu0 %3514
  %3516 = vrot.lane.b32.xlu0 %v3413, 96
  %v3517 = vpop.permute.xlu0 %3516
  %3518 = vrot.lane.b32.xlu0 %v3427, 96
  %v3519 = vpop.permute.xlu0 %3518
  %3520 = vrot.lane.b32.xlu0 %v3437, 96
  %v3521 = vpop.permute.xlu0 %3520
  %3522 = vrot.lane.b32.xlu0 %v3451, 96
  %v3523 = vpop.permute.xlu0 %3522
  %3524 = vrot.lane.b32.xlu0 %v3461, 96
  %v3525 = vpop.permute.xlu0 %3524
  %vm3558 = vcmask 913152
  %3559 = vst.msk [vmem:[#allocation2 + $0x8] sm:$0xf] %vm3558, %v3463
  %3560 = vst.msk [vmem:[#allocation2 + $0x18] sm:$0xf] %vm3558, %v3465
  %3561 = vst.msk [vmem:[#allocation2 + $0x28] sm:$0xf] %vm3558, %v3467
  %3562 = vst.msk [vmem:[#allocation2 + $0x38] sm:$0xf] %vm3558, %v3469
  %3563 = vst.msk [vmem:[#allocation2 + $0x48] sm:$0xf] %vm3558, %v3471
  %3564 = vst.msk [vmem:[#allocation2 + $0x58] sm:$0xf] %vm3558, %v3473
  %3565 = vst.msk [vmem:[#allocation2 + $0x68] sm:$0xf] %vm3558, %v3475
  %3566 = vst.msk [vmem:[#allocation2 + $0x78] sm:$0xf] %vm3558, %v3477
  %3567 = vst.msk [vmem:[#allocation2 + $0x88] sm:$0xf] %vm3558, %v3479
  %3568 = vst.msk [vmem:[#allocation2 + $0x98] sm:$0xf] %vm3558, %v3481
  %3569 = vst.msk [vmem:[#allocation2 + $0xa8] sm:$0xf] %vm3558, %v3483
  %3570 = vst.msk [vmem:[#allocation2 + $0xb8] sm:$0xf] %vm3558, %v3485
  %3571 = vst.msk [vmem:[#allocation2 + $0xc8] sm:$0xf] %vm3558, %v3487
  %3572 = vst.msk [vmem:[#allocation2 + $0xd8] sm:$0xf] %vm3558, %v3489
  %3573 = vst.msk [vmem:[#allocation2 + $0xe8] sm:$0xf] %vm3558, %v3491
  %3574 = vst.msk [vmem:[#allocation2 + $0xf8] sm:$0xf] %vm3558, %v3493
  %3575 = vst.msk [vmem:[#allocation2 + $0x108] sm:$0xf] %vm3558, %v3495
  %3576 = vst.msk [vmem:[#allocation2 + $0x118] sm:$0xf] %vm3558, %v3497
  %3577 = vst.msk [vmem:[#allocation2 + $0x128] sm:$0xf] %vm3558, %v3499
  %3578 = vst.msk [vmem:[#allocation2 + $0x138] sm:$0xf] %vm3558, %v3501
  %3579 = vst.msk [vmem:[#allocation2 + $0x148] sm:$0xf] %vm3558, %v3503
  %3580 = vst.msk [vmem:[#allocation2 + $0x158] sm:$0xf] %vm3558, %v3505
  %3581 = vst.msk [vmem:[#allocation2 + $0x168] sm:$0xf] %vm3558, %v3507
  %3582 = vst.msk [vmem:[#allocation2 + $0x178] sm:$0xf] %vm3558, %v3509
  %3583 = vst.msk [vmem:[#allocation2 + $0x188] sm:$0xf] %vm3558, %v3511
  %3584 = vst.msk [vmem:[#allocation2 + $0x198] sm:$0xf] %vm3558, %v3513
  %3585 = vst.msk [vmem:[#allocation2 + $0x1a8] sm:$0xf] %vm3558, %v3515
  %3586 = vst.msk [vmem:[#allocation2 + $0x1b8] sm:$0xf] %vm3558, %v3517
  %3587 = vst.msk [vmem:[#allocation2 + $0x1c8] sm:$0xf] %vm3558, %v3519
  %3588 = vst.msk [vmem:[#allocation2 + $0x1d8] sm:$0xf] %vm3558, %v3521
  %3589 = vst.msk [vmem:[#allocation2 + $0x1e8] sm:$0xf] %vm3558, %v3523
  %3590 = vst.msk [vmem:[#allocation2 + $0x1f8] sm:$0xf] %vm3558, %v3525
  %v3591 = vld [vmem:[%s2146] sm:$0xe]
  %v3592 = vld [vmem:[%s2146 + $0x4] sm:$0xf]
  %v3593 = vld [vmem:[%s2146 + $0x8] sm:$0x1]
  %v3594 = vld [vmem:[%s2146 + $0xc] sm:$0xe]
  %v3595 = vld [vmem:[%s2146 + $0x10] sm:$0xf]
  %v3596 = vld [vmem:[%s2146 + $0x14] sm:$0x1]
  %v3597 = vld [vmem:[%s2146 + $0x18] sm:$0xe]
  %v3598 = vld [vmem:[%s2146 + $0x1c] sm:$0xf]
  %v3599 = vld [vmem:[%s2146 + $0x20] sm:$0x1]
  %v3600 = vld [vmem:[%s2146 + $0x24] sm:$0xe]
  %v3601 = vld [vmem:[%s2146 + $0x28] sm:$0xf]
  %v3602 = vld [vmem:[%s2146 + $0x2c] sm:$0x1]
  %v3603 = vld [vmem:[%s2146 + $0x30] sm:$0xe]
  %v3604 = vld [vmem:[%s2146 + $0x34] sm:$0xf]
  %v3605 = vld [vmem:[%s2146 + $0x38] sm:$0x1]
  %v3606 = vld [vmem:[%s2146 + $0x3c] sm:$0xe]
  %v3607 = vld [vmem:[%s2146 + $0x40] sm:$0xf]
  %v3608 = vld [vmem:[%s2146 + $0x44] sm:$0x1]
  %v3609 = vld [vmem:[%s2146 + $0x48] sm:$0xe]
  %v3610 = vld [vmem:[%s2146 + $0x4c] sm:$0xf]
  %v3611 = vld [vmem:[%s2146 + $0x50] sm:$0x1]
  %v3612 = vld [vmem:[%s2146 + $0x54] sm:$0xe]
  %v3613 = vld [vmem:[%s2146 + $0x58] sm:$0xf]
  %v3614 = vld [vmem:[%s2146 + $0x5c] sm:$0x1]
  %v3615 = vld [vmem:[%s2146 + $0x60] sm:$0xe]
  %v3616 = vld [vmem:[%s2146 + $0x64] sm:$0xf]
  %v3617 = vld [vmem:[%s2146 + $0x68] sm:$0x1]
  %v3618 = vld [vmem:[%s2146 + $0x6c] sm:$0xe]
  %v3619 = vld [vmem:[%s2146 + $0x70] sm:$0xf]
  %v3620 = vld [vmem:[%s2146 + $0x74] sm:$0x1]
  %v3621 = vld [vmem:[%s2146 + $0x78] sm:$0xe]
  %v3622 = vld [vmem:[%s2146 + $0x7c] sm:$0xf]
  %v3623 = vld [vmem:[%s2146 + $0x80] sm:$0x1]
  %v3624 = vld [vmem:[%s2146 + $0x84] sm:$0xe]
  %v3625 = vld [vmem:[%s2146 + $0x88] sm:$0xf]
  %v3626 = vld [vmem:[%s2146 + $0x8c] sm:$0x1]
  %v3627 = vld [vmem:[%s2146 + $0x90] sm:$0xe]
  %v3628 = vld [vmem:[%s2146 + $0x94] sm:$0xf]
  %v3629 = vld [vmem:[%s2146 + $0x98] sm:$0x1]
  %v3630 = vld [vmem:[%s2146 + $0x9c] sm:$0xe]
  %v3631 = vld [vmem:[%s2146 + $0xa0] sm:$0xf]
  %v3632 = vld [vmem:[%s2146 + $0xa4] sm:$0x1]
  %v3633 = vld [vmem:[%s2146 + $0xa8] sm:$0xe]
  %v3634 = vld [vmem:[%s2146 + $0xac] sm:$0xf]
  %v3635 = vld [vmem:[%s2146 + $0xb0] sm:$0x1]
  %v3636 = vld [vmem:[%s2146 + $0xb4] sm:$0xe]
  %v3637 = vld [vmem:[%s2146 + $0xb8] sm:$0xf]
  %v3638 = vld [vmem:[%s2146 + $0xbc] sm:$0x1]
  %v3687 = vrot.slane %v3591, 5
  %v3688 = vrot.slane %v3687, 4
  %v3689 = vrot.slane %v3592, 5
  %v3690 = vsel %vm1567, %v3688, %v3689
  %v3691 = vrot.slane %v3689, 4
  %v3692 = vrot.slane %v3593, 5
  %v3693 = vsel %vm1567, %v3691, %v3692
  %v3694 = vrot.slane %v3594, 5
  %v3695 = vrot.slane %v3694, 4
  %v3696 = vrot.slane %v3595, 5
  %v3697 = vsel %vm1567, %v3695, %v3696
  %v3698 = vrot.slane %v3696, 4
  %v3699 = vrot.slane %v3596, 5
  %v3700 = vsel %vm1567, %v3698, %v3699
  %v3701 = vrot.slane %v3597, 5
  %v3702 = vrot.slane %v3701, 4
  %v3703 = vrot.slane %v3598, 5
  %v3704 = vsel %vm1567, %v3702, %v3703
  %v3705 = vrot.slane %v3703, 4
  %v3706 = vrot.slane %v3599, 5
  %v3707 = vsel %vm1567, %v3705, %v3706
  %v3708 = vrot.slane %v3600, 5
  %v3709 = vrot.slane %v3708, 4
  %v3710 = vrot.slane %v3601, 5
  %v3711 = vsel %vm1567, %v3709, %v3710
  %v3712 = vrot.slane %v3710, 4
  %v3713 = vrot.slane %v3602, 5
  %v3714 = vsel %vm1567, %v3712, %v3713
  %v3715 = vrot.slane %v3603, 5
  %v3716 = vrot.slane %v3715, 4
  %v3717 = vrot.slane %v3604, 5
  %v3718 = vsel %vm1567, %v3716, %v3717
  %v3719 = vrot.slane %v3717, 4
  %v3720 = vrot.slane %v3605, 5
  %v3721 = vsel %vm1567, %v3719, %v3720
  %v3722 = vrot.slane %v3606, 5
  %v3723 = vrot.slane %v3722, 4
  %v3724 = vrot.slane %v3607, 5
  %v3725 = vsel %vm1567, %v3723, %v3724
  %v3726 = vrot.slane %v3724, 4
  %v3727 = vrot.slane %v3608, 5
  %v3728 = vsel %vm1567, %v3726, %v3727
  %v3729 = vrot.slane %v3609, 5
  %v3730 = vrot.slane %v3729, 4
  %v3731 = vrot.slane %v3610, 5
  %v3732 = vsel %vm1567, %v3730, %v3731
  %v3733 = vrot.slane %v3731, 4
  %v3734 = vrot.slane %v3611, 5
  %v3735 = vsel %vm1567, %v3733, %v3734
  %v3736 = vrot.slane %v3612, 5
  %v3737 = vrot.slane %v3736, 4
  %v3738 = vrot.slane %v3613, 5
  %v3739 = vsel %vm1567, %v3737, %v3738
  %v3740 = vrot.slane %v3738, 4
  %v3741 = vrot.slane %v3614, 5
  %v3742 = vsel %vm1567, %v3740, %v3741
  %v3743 = vrot.slane %v3615, 5
  %v3744 = vrot.slane %v3743, 4
  %v3745 = vrot.slane %v3616, 5
  %v3746 = vsel %vm1567, %v3744, %v3745
  %v3747 = vrot.slane %v3745, 4
  %v3748 = vrot.slane %v3617, 5
  %v3749 = vsel %vm1567, %v3747, %v3748
  %v3750 = vrot.slane %v3618, 5
  %v3751 = vrot.slane %v3750, 4
  %v3752 = vrot.slane %v3619, 5
  %v3753 = vsel %vm1567, %v3751, %v3752
  %v3754 = vrot.slane %v3752, 4
  %v3755 = vrot.slane %v3620, 5
  %v3756 = vsel %vm1567, %v3754, %v3755
  %v3757 = vrot.slane %v3621, 5
  %v3758 = vrot.slane %v3757, 4
  %v3759 = vrot.slane %v3622, 5
  %v3760 = vsel %vm1567, %v3758, %v3759
  %v3761 = vrot.slane %v3759, 4
  %v3762 = vrot.slane %v3623, 5
  %v3763 = vsel %vm1567, %v3761, %v3762
  %v3764 = vrot.slane %v3624, 5
  %v3765 = vrot.slane %v3764, 4
  %v3766 = vrot.slane %v3625, 5
  %v3767 = vsel %vm1567, %v3765, %v3766
  %v3768 = vrot.slane %v3766, 4
  %v3769 = vrot.slane %v3626, 5
  %v3770 = vsel %vm1567, %v3768, %v3769
  %v3771 = vrot.slane %v3627, 5
  %v3772 = vrot.slane %v3771, 4
  %v3773 = vrot.slane %v3628, 5
  %v3774 = vsel %vm1567, %v3772, %v3773
  %v3775 = vrot.slane %v3773, 4
  %v3776 = vrot.slane %v3629, 5
  %v3777 = vsel %vm1567, %v3775, %v3776
  %v3778 = vrot.slane %v3630, 5
  %v3779 = vrot.slane %v3778, 4
  %v3780 = vrot.slane %v3631, 5
  %v3781 = vsel %vm1567, %v3779, %v3780
  %v3782 = vrot.slane %v3780, 4
  %v3783 = vrot.slane %v3632, 5
  %v3784 = vsel %vm1567, %v3782, %v3783
  %v3785 = vrot.slane %v3633, 5
  %v3786 = vrot.slane %v3785, 4
  %v3787 = vrot.slane %v3634, 5
  %v3788 = vsel %vm1567, %v3786, %v3787
  %v3789 = vrot.slane %v3787, 4
  %v3790 = vrot.slane %v3635, 5
  %v3791 = vsel %vm1567, %v3789, %v3790
  %v3792 = vrot.slane %v3636, 5
  %v3793 = vrot.slane %v3792, 4
  %v3794 = vrot.slane %v3637, 5
  %v3795 = vsel %vm1567, %v3793, %v3794
  %v3796 = vrot.slane %v3794, 4
  %v3797 = vrot.slane %v3638, 5
  %v3798 = vsel %vm1567, %v3796, %v3797
  %3799 = vrot.lane.b32.xlu0 %v3690, 32
  %v3800 = vpop.permute.xlu0 %3799
  %3801 = vrot.lane.b32.xlu0 %v3693, 32
  %v3802 = vpop.permute.xlu0 %3801
  %3803 = vrot.lane.b32.xlu0 %v3697, 32
  %v3804 = vpop.permute.xlu0 %3803
  %3805 = vrot.lane.b32.xlu0 %v3700, 32
  %v3806 = vpop.permute.xlu0 %3805
  %3807 = vrot.lane.b32.xlu0 %v3704, 32
  %v3808 = vpop.permute.xlu0 %3807
  %3809 = vrot.lane.b32.xlu0 %v3707, 32
  %v3810 = vpop.permute.xlu0 %3809
  %3811 = vrot.lane.b32.xlu0 %v3711, 32
  %v3812 = vpop.permute.xlu0 %3811
  %3813 = vrot.lane.b32.xlu0 %v3714, 32
  %v3814 = vpop.permute.xlu0 %3813
  %3815 = vrot.lane.b32.xlu0 %v3718, 32
  %v3816 = vpop.permute.xlu0 %3815
  %3817 = vrot.lane.b32.xlu0 %v3721, 32
  %v3818 = vpop.permute.xlu0 %3817
  %3819 = vrot.lane.b32.xlu0 %v3725, 32
  %v3820 = vpop.permute.xlu0 %3819
  %3821 = vrot.lane.b32.xlu0 %v3728, 32
  %v3822 = vpop.permute.xlu0 %3821
  %3823 = vrot.lane.b32.xlu0 %v3732, 32
  %v3824 = vpop.permute.xlu0 %3823
  %3825 = vrot.lane.b32.xlu0 %v3735, 32
  %v3826 = vpop.permute.xlu0 %3825
  %3827 = vrot.lane.b32.xlu0 %v3739, 32
  %v3828 = vpop.permute.xlu0 %3827
  %3829 = vrot.lane.b32.xlu0 %v3742, 32
  %v3830 = vpop.permute.xlu0 %3829
  %3831 = vrot.lane.b32.xlu0 %v3746, 32
  %v3832 = vpop.permute.xlu0 %3831
  %3833 = vrot.lane.b32.xlu0 %v3749, 32
  %v3834 = vpop.permute.xlu0 %3833
  %3835 = vrot.lane.b32.xlu0 %v3753, 32
  %v3836 = vpop.permute.xlu0 %3835
  %3837 = vrot.lane.b32.xlu0 %v3756, 32
  %v3838 = vpop.permute.xlu0 %3837
  %3839 = vrot.lane.b32.xlu0 %v3760, 32
  %v3840 = vpop.permute.xlu0 %3839
  %3841 = vrot.lane.b32.xlu0 %v3763, 32
  %v3842 = vpop.permute.xlu0 %3841
  %3843 = vrot.lane.b32.xlu0 %v3767, 32
  %v3844 = vpop.permute.xlu0 %3843
  %3845 = vrot.lane.b32.xlu0 %v3770, 32
  %v3846 = vpop.permute.xlu0 %3845
  %3847 = vrot.lane.b32.xlu0 %v3774, 32
  %v3848 = vpop.permute.xlu0 %3847
  %3849 = vrot.lane.b32.xlu0 %v3777, 32
  %v3850 = vpop.permute.xlu0 %3849
  %3851 = vrot.lane.b32.xlu0 %v3781, 32
  %v3852 = vpop.permute.xlu0 %3851
  %3853 = vrot.lane.b32.xlu0 %v3784, 32
  %v3854 = vpop.permute.xlu0 %3853
  %3855 = vrot.lane.b32.xlu0 %v3788, 32
  %v3856 = vpop.permute.xlu0 %3855
  %3857 = vrot.lane.b32.xlu0 %v3791, 32
  %v3858 = vpop.permute.xlu0 %3857
  %3859 = vrot.lane.b32.xlu0 %v3795, 32
  %v3860 = vpop.permute.xlu0 %3859
  %3861 = vrot.lane.b32.xlu0 %v3798, 32
  %v3862 = vpop.permute.xlu0 %3861
  %3895 = vst.msk [vmem:[#allocation2 + $0x4] sm:$0xf] %vm875, %v3800
  %3896 = vst.msk [vmem:[#allocation2 + $0x14] sm:$0xf] %vm875, %v3802
  %3897 = vst.msk [vmem:[#allocation2 + $0x24] sm:$0xf] %vm875, %v3804
  %3898 = vst.msk [vmem:[#allocation2 + $0x34] sm:$0xf] %vm875, %v3806
  %3899 = vst.msk [vmem:[#allocation2 + $0x44] sm:$0xf] %vm875, %v3808
  %3900 = vst.msk [vmem:[#allocation2 + $0x54] sm:$0xf] %vm875, %v3810
  %3901 = vst.msk [vmem:[#allocation2 + $0x64] sm:$0xf] %vm875, %v3812
  %3902 = vst.msk [vmem:[#allocation2 + $0x74] sm:$0xf] %vm875, %v3814
  %3903 = vst.msk [vmem:[#allocation2 + $0x84] sm:$0xf] %vm875, %v3816
  %3904 = vst.msk [vmem:[#allocation2 + $0x94] sm:$0xf] %vm875, %v3818
  %3905 = vst.msk [vmem:[#allocation2 + $0xa4] sm:$0xf] %vm875, %v3820
  %3906 = vst.msk [vmem:[#allocation2 + $0xb4] sm:$0xf] %vm875, %v3822
  %3907 = vst.msk [vmem:[#allocation2 + $0xc4] sm:$0xf] %vm875, %v3824
  %3908 = vst.msk [vmem:[#allocation2 + $0xd4] sm:$0xf] %vm875, %v3826
  %3909 = vst.msk [vmem:[#allocation2 + $0xe4] sm:$0xf] %vm875, %v3828
  %3910 = vst.msk [vmem:[#allocation2 + $0xf4] sm:$0xf] %vm875, %v3830
  %3911 = vst.msk [vmem:[#allocation2 + $0x104] sm:$0xf] %vm875, %v3832
  %3912 = vst.msk [vmem:[#allocation2 + $0x114] sm:$0xf] %vm875, %v3834
  %3913 = vst.msk [vmem:[#allocation2 + $0x124] sm:$0xf] %vm875, %v3836
  %3914 = vst.msk [vmem:[#allocation2 + $0x134] sm:$0xf] %vm875, %v3838
  %3915 = vst.msk [vmem:[#allocation2 + $0x144] sm:$0xf] %vm875, %v3840
  %3916 = vst.msk [vmem:[#allocation2 + $0x154] sm:$0xf] %vm875, %v3842
  %3917 = vst.msk [vmem:[#allocation2 + $0x164] sm:$0xf] %vm875, %v3844
  %3918 = vst.msk [vmem:[#allocation2 + $0x174] sm:$0xf] %vm875, %v3846
  %3919 = vst.msk [vmem:[#allocation2 + $0x184] sm:$0xf] %vm875, %v3848
  %3920 = vst.msk [vmem:[#allocation2 + $0x194] sm:$0xf] %vm875, %v3850
  %3921 = vst.msk [vmem:[#allocation2 + $0x1a4] sm:$0xf] %vm875, %v3852
  %3922 = vst.msk [vmem:[#allocation2 + $0x1b4] sm:$0xf] %vm875, %v3854
  %3923 = vst.msk [vmem:[#allocation2 + $0x1c4] sm:$0xf] %vm875, %v3856
  %3924 = vst.msk [vmem:[#allocation2 + $0x1d4] sm:$0xf] %vm875, %v3858
  %3925 = vst.msk [vmem:[#allocation2 + $0x1e4] sm:$0xf] %vm875, %v3860
  %3926 = vst.msk [vmem:[#allocation2 + $0x1f4] sm:$0xf] %vm875, %v3862
  %v3927 = vld [vmem:[%s2340] sm:$0xe]
  %v3928 = vld [vmem:[%s2340 + $0x4] sm:$0xf]
  %v3929 = vld [vmem:[%s2340 + $0x8] sm:$0x1]
  %v3930 = vld [vmem:[%s2340 + $0xc] sm:$0xe]
  %v3931 = vld [vmem:[%s2340 + $0x10] sm:$0xf]
  %v3932 = vld [vmem:[%s2340 + $0x14] sm:$0x1]
  %v3933 = vld [vmem:[%s2340 + $0x18] sm:$0xe]
  %v3934 = vld [vmem:[%s2340 + $0x1c] sm:$0xf]
  %v3935 = vld [vmem:[%s2340 + $0x20] sm:$0x1]
  %v3936 = vld [vmem:[%s2340 + $0x24] sm:$0xe]
  %v3937 = vld [vmem:[%s2340 + $0x28] sm:$0xf]
  %v3938 = vld [vmem:[%s2340 + $0x2c] sm:$0x1]
  %v3939 = vld [vmem:[%s2340 + $0x30] sm:$0xe]
  %v3940 = vld [vmem:[%s2340 + $0x34] sm:$0xf]
  %v3941 = vld [vmem:[%s2340 + $0x38] sm:$0x1]
  %v3942 = vld [vmem:[%s2340 + $0x3c] sm:$0xe]
  %v3943 = vld [vmem:[%s2340 + $0x40] sm:$0xf]
  %v3944 = vld [vmem:[%s2340 + $0x44] sm:$0x1]
  %v3945 = vld [vmem:[%s2340 + $0x48] sm:$0xe]
  %v3946 = vld [vmem:[%s2340 + $0x4c] sm:$0xf]
  %v3947 = vld [vmem:[%s2340 + $0x50] sm:$0x1]
  %v3948 = vld [vmem:[%s2340 + $0x54] sm:$0xe]
  %v3949 = vld [vmem:[%s2340 + $0x58] sm:$0xf]
  %v3950 = vld [vmem:[%s2340 + $0x5c] sm:$0x1]
  %v3951 = vld [vmem:[%s2340 + $0x60] sm:$0xe]
  %v3952 = vld [vmem:[%s2340 + $0x64] sm:$0xf]
  %v3953 = vld [vmem:[%s2340 + $0x68] sm:$0x1]
  %v3954 = vld [vmem:[%s2340 + $0x6c] sm:$0xe]
  %v3955 = vld [vmem:[%s2340 + $0x70] sm:$0xf]
  %v3956 = vld [vmem:[%s2340 + $0x74] sm:$0x1]
  %v3957 = vld [vmem:[%s2340 + $0x78] sm:$0xe]
  %v3958 = vld [vmem:[%s2340 + $0x7c] sm:$0xf]
  %v3959 = vld [vmem:[%s2340 + $0x80] sm:$0x1]
  %v3960 = vld [vmem:[%s2340 + $0x84] sm:$0xe]
  %v3961 = vld [vmem:[%s2340 + $0x88] sm:$0xf]
  %v3962 = vld [vmem:[%s2340 + $0x8c] sm:$0x1]
  %v3963 = vld [vmem:[%s2340 + $0x90] sm:$0xe]
  %v3964 = vld [vmem:[%s2340 + $0x94] sm:$0xf]
  %v3965 = vld [vmem:[%s2340 + $0x98] sm:$0x1]
  %v3966 = vld [vmem:[%s2340 + $0x9c] sm:$0xe]
  %v3967 = vld [vmem:[%s2340 + $0xa0] sm:$0xf]
  %v3968 = vld [vmem:[%s2340 + $0xa4] sm:$0x1]
  %v3969 = vld [vmem:[%s2340 + $0xa8] sm:$0xe]
  %v3970 = vld [vmem:[%s2340 + $0xac] sm:$0xf]
  %v3971 = vld [vmem:[%s2340 + $0xb0] sm:$0x1]
  %v3972 = vld [vmem:[%s2340 + $0xb4] sm:$0xe]
  %v3973 = vld [vmem:[%s2340 + $0xb8] sm:$0xf]
  %v3974 = vld [vmem:[%s2340 + $0xbc] sm:$0x1]
  %v4023 = vrot.slane %v3927, 5
  %v4024 = vrot.slane %v4023, 4
  %v4025 = vrot.slane %v3928, 5
  %v4026 = vsel %vm1567, %v4024, %v4025
  %v4027 = vrot.slane %v4025, 4
  %v4028 = vrot.slane %v3929, 5
  %v4029 = vsel %vm1567, %v4027, %v4028
  %v4030 = vrot.slane %v3930, 5
  %v4031 = vrot.slane %v4030, 4
  %v4032 = vrot.slane %v3931, 5
  %v4033 = vsel %vm1567, %v4031, %v4032
  %v4034 = vrot.slane %v4032, 4
  %v4035 = vrot.slane %v3932, 5
  %v4036 = vsel %vm1567, %v4034, %v4035
  %v4037 = vrot.slane %v3933, 5
  %v4038 = vrot.slane %v4037, 4
  %v4039 = vrot.slane %v3934, 5
  %v4040 = vsel %vm1567, %v4038, %v4039
  %v4041 = vrot.slane %v4039, 4
  %v4042 = vrot.slane %v3935, 5
  %v4043 = vsel %vm1567, %v4041, %v4042
  %v4044 = vrot.slane %v3936, 5
  %v4045 = vrot.slane %v4044, 4
  %v4046 = vrot.slane %v3937, 5
  %v4047 = vsel %vm1567, %v4045, %v4046
  %v4048 = vrot.slane %v4046, 4
  %v4049 = vrot.slane %v3938, 5
  %v4050 = vsel %vm1567, %v4048, %v4049
  %v4051 = vrot.slane %v3939, 5
  %v4052 = vrot.slane %v4051, 4
  %v4053 = vrot.slane %v3940, 5
  %v4054 = vsel %vm1567, %v4052, %v4053
  %v4055 = vrot.slane %v4053, 4
  %v4056 = vrot.slane %v3941, 5
  %v4057 = vsel %vm1567, %v4055, %v4056
  %v4058 = vrot.slane %v3942, 5
  %v4059 = vrot.slane %v4058, 4
  %v4060 = vrot.slane %v3943, 5
  %v4061 = vsel %vm1567, %v4059, %v4060
  %v4062 = vrot.slane %v4060, 4
  %v4063 = vrot.slane %v3944, 5
  %v4064 = vsel %vm1567, %v4062, %v4063
  %v4065 = vrot.slane %v3945, 5
  %v4066 = vrot.slane %v4065, 4
  %v4067 = vrot.slane %v3946, 5
  %v4068 = vsel %vm1567, %v4066, %v4067
  %v4069 = vrot.slane %v4067, 4
  %v4070 = vrot.slane %v3947, 5
  %v4071 = vsel %vm1567, %v4069, %v4070
  %v4072 = vrot.slane %v3948, 5
  %v4073 = vrot.slane %v4072, 4
  %v4074 = vrot.slane %v3949, 5
  %v4075 = vsel %vm1567, %v4073, %v4074
  %v4076 = vrot.slane %v4074, 4
  %v4077 = vrot.slane %v3950, 5
  %v4078 = vsel %vm1567, %v4076, %v4077
  %v4079 = vrot.slane %v3951, 5
  %v4080 = vrot.slane %v4079, 4
  %v4081 = vrot.slane %v3952, 5
  %v4082 = vsel %vm1567, %v4080, %v4081
  %v4083 = vrot.slane %v4081, 4
  %v4084 = vrot.slane %v3953, 5
  %v4085 = vsel %vm1567, %v4083, %v4084
  %v4086 = vrot.slane %v3954, 5
  %v4087 = vrot.slane %v4086, 4
  %v4088 = vrot.slane %v3955, 5
  %v4089 = vsel %vm1567, %v4087, %v4088
  %v4090 = vrot.slane %v4088, 4
  %v4091 = vrot.slane %v3956, 5
  %v4092 = vsel %vm1567, %v4090, %v4091
  %v4093 = vrot.slane %v3957, 5
  %v4094 = vrot.slane %v4093, 4
  %v4095 = vrot.slane %v3958, 5
  %v4096 = vsel %vm1567, %v4094, %v4095
  %v4097 = vrot.slane %v4095, 4
  %v4098 = vrot.slane %v3959, 5
  %v4099 = vsel %vm1567, %v4097, %v4098
  %v4100 = vrot.slane %v3960, 5
  %v4101 = vrot.slane %v4100, 4
  %v4102 = vrot.slane %v3961, 5
  %v4103 = vsel %vm1567, %v4101, %v4102
  %v4104 = vrot.slane %v4102, 4
  %v4105 = vrot.slane %v3962, 5
  %v4106 = vsel %vm1567, %v4104, %v4105
  %v4107 = vrot.slane %v3963, 5
  %v4108 = vrot.slane %v4107, 4
  %v4109 = vrot.slane %v3964, 5
  %v4110 = vsel %vm1567, %v4108, %v4109
  %v4111 = vrot.slane %v4109, 4
  %v4112 = vrot.slane %v3965, 5
  %v4113 = vsel %vm1567, %v4111, %v4112
  %v4114 = vrot.slane %v3966, 5
  %v4115 = vrot.slane %v4114, 4
  %v4116 = vrot.slane %v3967, 5
  %v4117 = vsel %vm1567, %v4115, %v4116
  %v4118 = vrot.slane %v4116, 4
  %v4119 = vrot.slane %v3968, 5
  %v4120 = vsel %vm1567, %v4118, %v4119
  %v4121 = vrot.slane %v3969, 5
  %v4122 = vrot.slane %v4121, 4
  %v4123 = vrot.slane %v3970, 5
  %v4124 = vsel %vm1567, %v4122, %v4123
  %v4125 = vrot.slane %v4123, 4
  %v4126 = vrot.slane %v3971, 5
  %v4127 = vsel %vm1567, %v4125, %v4126
  %v4128 = vrot.slane %v3972, 5
  %v4129 = vrot.slane %v4128, 4
  %v4130 = vrot.slane %v3973, 5
  %v4131 = vsel %vm1567, %v4129, %v4130
  %v4132 = vrot.slane %v4130, 4
  %v4133 = vrot.slane %v3974, 5
  %v4134 = vsel %vm1567, %v4132, %v4133
  %4135 = vrot.lane.b32.xlu0 %v4026, 112
  %v4136 = vpop.permute.xlu0 %4135
  %4137 = vrot.lane.b32.xlu0 %v4029, 112
  %v4138 = vpop.permute.xlu0 %4137
  %4139 = vrot.lane.b32.xlu0 %v4033, 112
  %v4140 = vpop.permute.xlu0 %4139
  %4141 = vrot.lane.b32.xlu0 %v4036, 112
  %v4142 = vpop.permute.xlu0 %4141
  %4143 = vrot.lane.b32.xlu0 %v4040, 112
  %v4144 = vpop.permute.xlu0 %4143
  %4145 = vrot.lane.b32.xlu0 %v4043, 112
  %v4146 = vpop.permute.xlu0 %4145
  %4147 = vrot.lane.b32.xlu0 %v4047, 112
  %v4148 = vpop.permute.xlu0 %4147
  %4149 = vrot.lane.b32.xlu0 %v4050, 112
  %v4150 = vpop.permute.xlu0 %4149
  %4151 = vrot.lane.b32.xlu0 %v4054, 112
  %v4152 = vpop.permute.xlu0 %4151
  %4153 = vrot.lane.b32.xlu0 %v4057, 112
  %v4154 = vpop.permute.xlu0 %4153
  %4155 = vrot.lane.b32.xlu0 %v4061, 112
  %v4156 = vpop.permute.xlu0 %4155
  %4157 = vrot.lane.b32.xlu0 %v4064, 112
  %v4158 = vpop.permute.xlu0 %4157
  %4159 = vrot.lane.b32.xlu0 %v4068, 112
  %v4160 = vpop.permute.xlu0 %4159
  %4161 = vrot.lane.b32.xlu0 %v4071, 112
  %v4162 = vpop.permute.xlu0 %4161
  %4163 = vrot.lane.b32.xlu0 %v4075, 112
  %v4164 = vpop.permute.xlu0 %4163
  %4165 = vrot.lane.b32.xlu0 %v4078, 112
  %v4166 = vpop.permute.xlu0 %4165
  %4167 = vrot.lane.b32.xlu0 %v4082, 112
  %v4168 = vpop.permute.xlu0 %4167
  %4169 = vrot.lane.b32.xlu0 %v4085, 112
  %v4170 = vpop.permute.xlu0 %4169
  %4171 = vrot.lane.b32.xlu0 %v4089, 112
  %v4172 = vpop.permute.xlu0 %4171
  %4173 = vrot.lane.b32.xlu0 %v4092, 112
  %v4174 = vpop.permute.xlu0 %4173
  %4175 = vrot.lane.b32.xlu0 %v4096, 112
  %v4176 = vpop.permute.xlu0 %4175
  %4177 = vrot.lane.b32.xlu0 %v4099, 112
  %v4178 = vpop.permute.xlu0 %4177
  %4179 = vrot.lane.b32.xlu0 %v4103, 112
  %v4180 = vpop.permute.xlu0 %4179
  %4181 = vrot.lane.b32.xlu0 %v4106, 112
  %v4182 = vpop.permute.xlu0 %4181
  %4183 = vrot.lane.b32.xlu0 %v4110, 112
  %v4184 = vpop.permute.xlu0 %4183
  %4185 = vrot.lane.b32.xlu0 %v4113, 112
  %v4186 = vpop.permute.xlu0 %4185
  %4187 = vrot.lane.b32.xlu0 %v4117, 112
  %v4188 = vpop.permute.xlu0 %4187
  %4189 = vrot.lane.b32.xlu0 %v4120, 112
  %v4190 = vpop.permute.xlu0 %4189
  %4191 = vrot.lane.b32.xlu0 %v4124, 112
  %v4192 = vpop.permute.xlu0 %4191
  %4193 = vrot.lane.b32.xlu0 %v4127, 112
  %v4194 = vpop.permute.xlu0 %4193
  %4195 = vrot.lane.b32.xlu0 %v4131, 112
  %v4196 = vpop.permute.xlu0 %4195
  %4197 = vrot.lane.b32.xlu0 %v4134, 112
  %v4198 = vpop.permute.xlu0 %4197
  %vm4231 = vcmask 1044352
  %4232 = vst.msk [vmem:[#allocation2 + $0x8] sm:$0xf] %vm4231, %v4136
  %4233 = vst.msk [vmem:[#allocation2 + $0x18] sm:$0xf] %vm4231, %v4138
  %4234 = vst.msk [vmem:[#allocation2 + $0x28] sm:$0xf] %vm4231, %v4140
  %4235 = vst.msk [vmem:[#allocation2 + $0x38] sm:$0xf] %vm4231, %v4142
  %4236 = vst.msk [vmem:[#allocation2 + $0x48] sm:$0xf] %vm4231, %v4144
  %4237 = vst.msk [vmem:[#allocation2 + $0x58] sm:$0xf] %vm4231, %v4146
  %4238 = vst.msk [vmem:[#allocation2 + $0x68] sm:$0xf] %vm4231, %v4148
  %4239 = vst.msk [vmem:[#allocation2 + $0x78] sm:$0xf] %vm4231, %v4150
  %4240 = vst.msk [vmem:[#allocation2 + $0x88] sm:$0xf] %vm4231, %v4152
  %4241 = vst.msk [vmem:[#allocation2 + $0x98] sm:$0xf] %vm4231, %v4154
  %4242 = vst.msk [vmem:[#allocation2 + $0xa8] sm:$0xf] %vm4231, %v4156
  %4243 = vst.msk [vmem:[#allocation2 + $0xb8] sm:$0xf] %vm4231, %v4158
  %4244 = vst.msk [vmem:[#allocation2 + $0xc8] sm:$0xf] %vm4231, %v4160
  %4245 = vst.msk [vmem:[#allocation2 + $0xd8] sm:$0xf] %vm4231, %v4162
  %4246 = vst.msk [vmem:[#allocation2 + $0xe8] sm:$0xf] %vm4231, %v4164
  %4247 = vst.msk [vmem:[#allocation2 + $0xf8] sm:$0xf] %vm4231, %v4166
  %4248 = vst.msk [vmem:[#allocation2 + $0x108] sm:$0xf] %vm4231, %v4168
  %4249 = vst.msk [vmem:[#allocation2 + $0x118] sm:$0xf] %vm4231, %v4170
  %4250 = vst.msk [vmem:[#allocation2 + $0x128] sm:$0xf] %vm4231, %v4172
  %4251 = vst.msk [vmem:[#allocation2 + $0x138] sm:$0xf] %vm4231, %v4174
  %4252 = vst.msk [vmem:[#allocation2 + $0x148] sm:$0xf] %vm4231, %v4176
  %4253 = vst.msk [vmem:[#allocation2 + $0x158] sm:$0xf] %vm4231, %v4178
  %4254 = vst.msk [vmem:[#allocation2 + $0x168] sm:$0xf] %vm4231, %v4180
  %4255 = vst.msk [vmem:[#allocation2 + $0x178] sm:$0xf] %vm4231, %v4182
  %4256 = vst.msk [vmem:[#allocation2 + $0x188] sm:$0xf] %vm4231, %v4184
  %4257 = vst.msk [vmem:[#allocation2 + $0x198] sm:$0xf] %vm4231, %v4186
  %4258 = vst.msk [vmem:[#allocation2 + $0x1a8] sm:$0xf] %vm4231, %v4188
  %4259 = vst.msk [vmem:[#allocation2 + $0x1b8] sm:$0xf] %vm4231, %v4190
  %4260 = vst.msk [vmem:[#allocation2 + $0x1c8] sm:$0xf] %vm4231, %v4192
  %4261 = vst.msk [vmem:[#allocation2 + $0x1d8] sm:$0xf] %vm4231, %v4194
  %4262 = vst.msk [vmem:[#allocation2 + $0x1e8] sm:$0xf] %vm4231, %v4196
  %4263 = vst.msk [vmem:[#allocation2 + $0x1f8] sm:$0xf] %vm4231, %v4198
  %s4264 = scalar_lea.vmem %s0, 24
  %v4265 = vld [vmem:[%s4264] sm:$0xf]
  %v4266 = vld [vmem:[%s4264 + $0x4] sm:$0xf]
  %v4267 = vld [vmem:[%s4264 + $0xc] sm:$0xf]
  %v4268 = vld [vmem:[%s4264 + $0x10] sm:$0xf]
  %v4269 = vld [vmem:[%s4264 + $0x18] sm:$0xf]
  %v4270 = vld [vmem:[%s4264 + $0x1c] sm:$0xf]
  %v4271 = vld [vmem:[%s4264 + $0x24] sm:$0xf]
  %v4272 = vld [vmem:[%s4264 + $0x28] sm:$0xf]
  %v4273 = vld [vmem:[%s4264 + $0x30] sm:$0xf]
  %v4274 = vld [vmem:[%s4264 + $0x34] sm:$0xf]
  %v4275 = vld [vmem:[%s4264 + $0x3c] sm:$0xf]
  %v4276 = vld [vmem:[%s4264 + $0x40] sm:$0xf]
  %v4277 = vld [vmem:[%s4264 + $0x48] sm:$0xf]
  %v4278 = vld [vmem:[%s4264 + $0x4c] sm:$0xf]
  %v4279 = vld [vmem:[%s4264 + $0x54] sm:$0xf]
  %v4280 = vld [vmem:[%s4264 + $0x58] sm:$0xf]
  %v4281 = vld [vmem:[%s4264 + $0x60] sm:$0xf]
  %v4282 = vld [vmem:[%s4264 + $0x64] sm:$0xf]
  %v4283 = vld [vmem:[%s4264 + $0x6c] sm:$0xf]
  %v4284 = vld [vmem:[%s4264 + $0x70] sm:$0xf]
  %v4285 = vld [vmem:[%s4264 + $0x78] sm:$0xf]
  %v4286 = vld [vmem:[%s4264 + $0x7c] sm:$0xf]
  %v4287 = vld [vmem:[%s4264 + $0x84] sm:$0xf]
  %v4288 = vld [vmem:[%s4264 + $0x88] sm:$0xf]
  %v4289 = vld [vmem:[%s4264 + $0x90] sm:$0xf]
  %v4290 = vld [vmem:[%s4264 + $0x94] sm:$0xf]
  %v4291 = vld [vmem:[%s4264 + $0x9c] sm:$0xf]
  %v4292 = vld [vmem:[%s4264 + $0xa0] sm:$0xf]
  %v4293 = vld [vmem:[%s4264 + $0xa8] sm:$0xf]
  %v4294 = vld [vmem:[%s4264 + $0xac] sm:$0xf]
  %v4295 = vld [vmem:[%s4264 + $0xb4] sm:$0xf]
  %v4296 = vld [vmem:[%s4264 + $0xb8] sm:$0xf]
  %4329 = vrot.lane.b32.xlu0 %v4265, 64
  %v4330 = vpop.permute.xlu0 %4329
  %4331 = vrot.lane.b32.xlu0 %v4266, 64
  %v4332 = vpop.permute.xlu0 %4331
  %4333 = vrot.lane.b32.xlu0 %v4267, 64
  %v4334 = vpop.permute.xlu0 %4333
  %4335 = vrot.lane.b32.xlu0 %v4268, 64
  %v4336 = vpop.permute.xlu0 %4335
  %4337 = vrot.lane.b32.xlu0 %v4269, 64
  %v4338 = vpop.permute.xlu0 %4337
  %4339 = vrot.lane.b32.xlu0 %v4270, 64
  %v4340 = vpop.permute.xlu0 %4339
  %4341 = vrot.lane.b32.xlu0 %v4271, 64
  %v4342 = vpop.permute.xlu0 %4341
  %4343 = vrot.lane.b32.xlu0 %v4272, 64
  %v4344 = vpop.permute.xlu0 %4343
  %4345 = vrot.lane.b32.xlu0 %v4273, 64
  %v4346 = vpop.permute.xlu0 %4345
  %4347 = vrot.lane.b32.xlu0 %v4274, 64
  %v4348 = vpop.permute.xlu0 %4347
  %4349 = vrot.lane.b32.xlu0 %v4275, 64
  %v4350 = vpop.permute.xlu0 %4349
  %4351 = vrot.lane.b32.xlu0 %v4276, 64
  %v4352 = vpop.permute.xlu0 %4351
  %4353 = vrot.lane.b32.xlu0 %v4277, 64
  %v4354 = vpop.permute.xlu0 %4353
  %4355 = vrot.lane.b32.xlu0 %v4278, 64
  %v4356 = vpop.permute.xlu0 %4355
  %4357 = vrot.lane.b32.xlu0 %v4279, 64
  %v4358 = vpop.permute.xlu0 %4357
  %4359 = vrot.lane.b32.xlu0 %v4280, 64
  %v4360 = vpop.permute.xlu0 %4359
  %4361 = vrot.lane.b32.xlu0 %v4281, 64
  %v4362 = vpop.permute.xlu0 %4361
  %4363 = vrot.lane.b32.xlu0 %v4282, 64
  %v4364 = vpop.permute.xlu0 %4363
  %4365 = vrot.lane.b32.xlu0 %v4283, 64
  %v4366 = vpop.permute.xlu0 %4365
  %4367 = vrot.lane.b32.xlu0 %v4284, 64
  %v4368 = vpop.permute.xlu0 %4367
  %4369 = vrot.lane.b32.xlu0 %v4285, 64
  %v4370 = vpop.permute.xlu0 %4369
  %4371 = vrot.lane.b32.xlu0 %v4286, 64
  %v4372 = vpop.permute.xlu0 %4371
  %4373 = vrot.lane.b32.xlu0 %v4287, 64
  %v4374 = vpop.permute.xlu0 %4373
  %4375 = vrot.lane.b32.xlu0 %v4288, 64
  %v4376 = vpop.permute.xlu0 %4375
  %4377 = vrot.lane.b32.xlu0 %v4289, 64
  %v4378 = vpop.permute.xlu0 %4377
  %4379 = vrot.lane.b32.xlu0 %v4290, 64
  %v4380 = vpop.permute.xlu0 %4379
  %4381 = vrot.lane.b32.xlu0 %v4291, 64
  %v4382 = vpop.permute.xlu0 %4381
  %4383 = vrot.lane.b32.xlu0 %v4292, 64
  %v4384 = vpop.permute.xlu0 %4383
  %4385 = vrot.lane.b32.xlu0 %v4293, 64
  %v4386 = vpop.permute.xlu0 %4385
  %4387 = vrot.lane.b32.xlu0 %v4294, 64
  %v4388 = vpop.permute.xlu0 %4387
  %4389 = vrot.lane.b32.xlu0 %v4295, 64
  %v4390 = vpop.permute.xlu0 %4389
  %4391 = vrot.lane.b32.xlu0 %v4296, 64
  %v4392 = vpop.permute.xlu0 %4391
  %4425 = vst.msk [vmem:[#allocation2 + $0x4] sm:$0xf] %vm1776, %v4330
  %4426 = vst.msk [vmem:[#allocation2 + $0x14] sm:$0xf] %vm1776, %v4332
  %4427 = vst.msk [vmem:[#allocation2 + $0x24] sm:$0xf] %vm1776, %v4334
  %4428 = vst.msk [vmem:[#allocation2 + $0x34] sm:$0xf] %vm1776, %v4336
  %4429 = vst.msk [vmem:[#allocation2 + $0x44] sm:$0xf] %vm1776, %v4338
  %4430 = vst.msk [vmem:[#allocation2 + $0x54] sm:$0xf] %vm1776, %v4340
  %4431 = vst.msk [vmem:[#allocation2 + $0x64] sm:$0xf] %vm1776, %v4342
  %4432 = vst.msk [vmem:[#allocation2 + $0x74] sm:$0xf] %vm1776, %v4344
  %4433 = vst.msk [vmem:[#allocation2 + $0x84] sm:$0xf] %vm1776, %v4346
  %4434 = vst.msk [vmem:[#allocation2 + $0x94] sm:$0xf] %vm1776, %v4348
  %4435 = vst.msk [vmem:[#allocation2 + $0xa4] sm:$0xf] %vm1776, %v4350
  %4436 = vst.msk [vmem:[#allocation2 + $0xb4] sm:$0xf] %vm1776, %v4352
  %4437 = vst.msk [vmem:[#allocation2 + $0xc4] sm:$0xf] %vm1776, %v4354
  %4438 = vst.msk [vmem:[#allocation2 + $0xd4] sm:$0xf] %vm1776, %v4356
  %4439 = vst.msk [vmem:[#allocation2 + $0xe4] sm:$0xf] %vm1776, %v4358
  %4440 = vst.msk [vmem:[#allocation2 + $0xf4] sm:$0xf] %vm1776, %v4360
  %4441 = vst.msk [vmem:[#allocation2 + $0x104] sm:$0xf] %vm1776, %v4362
  %4442 = vst.msk [vmem:[#allocation2 + $0x114] sm:$0xf] %vm1776, %v4364
  %4443 = vst.msk [vmem:[#allocation2 + $0x124] sm:$0xf] %vm1776, %v4366
  %4444 = vst.msk [vmem:[#allocation2 + $0x134] sm:$0xf] %vm1776, %v4368
  %4445 = vst.msk [vmem:[#allocation2 + $0x144] sm:$0xf] %vm1776, %v4370
  %4446 = vst.msk [vmem:[#allocation2 + $0x154] sm:$0xf] %vm1776, %v4372
  %4447 = vst.msk [vmem:[#allocation2 + $0x164] sm:$0xf] %vm1776, %v4374
  %4448 = vst.msk [vmem:[#allocation2 + $0x174] sm:$0xf] %vm1776, %v4376
  %4449 = vst.msk [vmem:[#allocation2 + $0x184] sm:$0xf] %vm1776, %v4378
  %4450 = vst.msk [vmem:[#allocation2 + $0x194] sm:$0xf] %vm1776, %v4380
  %4451 = vst.msk [vmem:[#allocation2 + $0x1a4] sm:$0xf] %vm1776, %v4382
  %4452 = vst.msk [vmem:[#allocation2 + $0x1b4] sm:$0xf] %vm1776, %v4384
  %4453 = vst.msk [vmem:[#allocation2 + $0x1c4] sm:$0xf] %vm1776, %v4386
  %4454 = vst.msk [vmem:[#allocation2 + $0x1d4] sm:$0xf] %vm1776, %v4388
  %4455 = vst.msk [vmem:[#allocation2 + $0x1e4] sm:$0xf] %vm1776, %v4390
  %4456 = vst.msk [vmem:[#allocation2 + $0x1f4] sm:$0xf] %vm1776, %v4392
  %s4457 = scalar_lea.vmem %s1, 24
  %v4458 = vld [vmem:[%s4457] sm:$0xf]
  %v4459 = vld [vmem:[%s4457 + $0x4] sm:$0xf]
  %v4460 = vld [vmem:[%s4457 + $0xc] sm:$0xf]
  %v4461 = vld [vmem:[%s4457 + $0x10] sm:$0xf]
  %v4462 = vld [vmem:[%s4457 + $0x18] sm:$0xf]
  %v4463 = vld [vmem:[%s4457 + $0x1c] sm:$0xf]
  %v4464 = vld [vmem:[%s4457 + $0x24] sm:$0xf]
  %v4465 = vld [vmem:[%s4457 + $0x28] sm:$0xf]
  %v4466 = vld [vmem:[%s4457 + $0x30] sm:$0xf]
  %v4467 = vld [vmem:[%s4457 + $0x34] sm:$0xf]
  %v4468 = vld [vmem:[%s4457 + $0x3c] sm:$0xf]
  %v4469 = vld [vmem:[%s4457 + $0x40] sm:$0xf]
  %v4470 = vld [vmem:[%s4457 + $0x48] sm:$0xf]
  %v4471 = vld [vmem:[%s4457 + $0x4c] sm:$0xf]
  %v4472 = vld [vmem:[%s4457 + $0x54] sm:$0xf]
  %v4473 = vld [vmem:[%s4457 + $0x58] sm:$0xf]
  %v4474 = vld [vmem:[%s4457 + $0x60] sm:$0xf]
  %v4475 = vld [vmem:[%s4457 + $0x64] sm:$0xf]
  %v4476 = vld [vmem:[%s4457 + $0x6c] sm:$0xf]
  %v4477 = vld [vmem:[%s4457 + $0x70] sm:$0xf]
  %v4478 = vld [vmem:[%s4457 + $0x78] sm:$0xf]
  %v4479 = vld [vmem:[%s4457 + $0x7c] sm:$0xf]
  %v4480 = vld [vmem:[%s4457 + $0x84] sm:$0xf]
  %v4481 = vld [vmem:[%s4457 + $0x88] sm:$0xf]
  %v4482 = vld [vmem:[%s4457 + $0x90] sm:$0xf]
  %v4483 = vld [vmem:[%s4457 + $0x94] sm:$0xf]
  %v4484 = vld [vmem:[%s4457 + $0x9c] sm:$0xf]
  %v4485 = vld [vmem:[%s4457 + $0xa0] sm:$0xf]
  %v4486 = vld [vmem:[%s4457 + $0xa8] sm:$0xf]
  %v4487 = vld [vmem:[%s4457 + $0xac] sm:$0xf]
  %v4488 = vld [vmem:[%s4457 + $0xb4] sm:$0xf]
  %v4489 = vld [vmem:[%s4457 + $0xb8] sm:$0xf]
  %vm4490 = vcmask 125952
  %4491 = vst.msk [vmem:[#allocation2 + $0xc] sm:$0xf] %vm4490, %v4458
  %4492 = vst.msk [vmem:[#allocation2 + $0x1c] sm:$0xf] %vm4490, %v4459
  %4493 = vst.msk [vmem:[#allocation2 + $0x2c] sm:$0xf] %vm4490, %v4460
  %4494 = vst.msk [vmem:[#allocation2 + $0x3c] sm:$0xf] %vm4490, %v4461
  %4495 = vst.msk [vmem:[#allocation2 + $0x4c] sm:$0xf] %vm4490, %v4462
  %4496 = vst.msk [vmem:[#allocation2 + $0x5c] sm:$0xf] %vm4490, %v4463
  %4497 = vst.msk [vmem:[#allocation2 + $0x6c] sm:$0xf] %vm4490, %v4464
  %4498 = vst.msk [vmem:[#allocation2 + $0x7c] sm:$0xf] %vm4490, %v4465
  %4499 = vst.msk [vmem:[#allocation2 + $0x8c] sm:$0xf] %vm4490, %v4466
  %4500 = vst.msk [vmem:[#allocation2 + $0x9c] sm:$0xf] %vm4490, %v4467
  %4501 = vst.msk [vmem:[#allocation2 + $0xac] sm:$0xf] %vm4490, %v4468
  %4502 = vst.msk [vmem:[#allocation2 + $0xbc] sm:$0xf] %vm4490, %v4469
  %4503 = vst.msk [vmem:[#allocation2 + $0xcc] sm:$0xf] %vm4490, %v4470
  %4504 = vst.msk [vmem:[#allocation2 + $0xdc] sm:$0xf] %vm4490, %v4471
  %4505 = vst.msk [vmem:[#allocation2 + $0xec] sm:$0xf] %vm4490, %v4472
  %4506 = vst.msk [vmem:[#allocation2 + $0xfc] sm:$0xf] %vm4490, %v4473
  %4507 = vst.msk [vmem:[#allocation2 + $0x10c] sm:$0xf] %vm4490, %v4474
  %4508 = vst.msk [vmem:[#allocation2 + $0x11c] sm:$0xf] %vm4490, %v4475
  %4509 = vst.msk [vmem:[#allocation2 + $0x12c] sm:$0xf] %vm4490, %v4476
  %4510 = vst.msk [vmem:[#allocation2 + $0x13c] sm:$0xf] %vm4490, %v4477
  %4511 = vst.msk [vmem:[#allocation2 + $0x14c] sm:$0xf] %vm4490, %v4478
  %4512 = vst.msk [vmem:[#allocation2 + $0x15c] sm:$0xf] %vm4490, %v4479
  %4513 = vst.msk [vmem:[#allocation2 + $0x16c] sm:$0xf] %vm4490, %v4480
  %4514 = vst.msk [vmem:[#allocation2 + $0x17c] sm:$0xf] %vm4490, %v4481
  %4515 = vst.msk [vmem:[#allocation2 + $0x18c] sm:$0xf] %vm4490, %v4482
  %4516 = vst.msk [vmem:[#allocation2 + $0x19c] sm:$0xf] %vm4490, %v4483
  %4517 = vst.msk [vmem:[#allocation2 + $0x1ac] sm:$0xf] %vm4490, %v4484
  %4518 = vst.msk [vmem:[#allocation2 + $0x1bc] sm:$0xf] %vm4490, %v4485
  %4519 = vst.msk [vmem:[#allocation2 + $0x1cc] sm:$0xf] %vm4490, %v4486
  %4520 = vst.msk [vmem:[#allocation2 + $0x1dc] sm:$0xf] %vm4490, %v4487
  %4521 = vst.msk [vmem:[#allocation2 + $0x1ec] sm:$0xf] %vm4490, %v4488
  %4522 = vst.msk [vmem:[#allocation2 + $0x1fc] sm:$0xf] %vm4490, %v4489
  %v4523 = vld [vmem:[%s4264] sm:$0xf]
  %v4524 = vld [vmem:[%s4264 + $0x4] sm:$0xf]
  %v4525 = vld [vmem:[%s4264 + $0x8] sm:$0x1]
  %v4526 = vld [vmem:[%s4264 + $0xc] sm:$0xf]
  %v4527 = vld [vmem:[%s4264 + $0x10] sm:$0xf]
  %v4528 = vld [vmem:[%s4264 + $0x14] sm:$0x1]
  %v4529 = vld [vmem:[%s4264 + $0x18] sm:$0xf]
  %v4530 = vld [vmem:[%s4264 + $0x1c] sm:$0xf]
  %v4531 = vld [vmem:[%s4264 + $0x20] sm:$0x1]
  %v4532 = vld [vmem:[%s4264 + $0x24] sm:$0xf]
  %v4533 = vld [vmem:[%s4264 + $0x28] sm:$0xf]
  %v4534 = vld [vmem:[%s4264 + $0x2c] sm:$0x1]
  %v4535 = vld [vmem:[%s4264 + $0x30] sm:$0xf]
  %v4536 = vld [vmem:[%s4264 + $0x34] sm:$0xf]
  %v4537 = vld [vmem:[%s4264 + $0x38] sm:$0x1]
  %v4538 = vld [vmem:[%s4264 + $0x3c] sm:$0xf]
  %v4539 = vld [vmem:[%s4264 + $0x40] sm:$0xf]
  %v4540 = vld [vmem:[%s4264 + $0x44] sm:$0x1]
  %v4541 = vld [vmem:[%s4264 + $0x48] sm:$0xf]
  %v4542 = vld [vmem:[%s4264 + $0x4c] sm:$0xf]
  %v4543 = vld [vmem:[%s4264 + $0x50] sm:$0x1]
  %v4544 = vld [vmem:[%s4264 + $0x54] sm:$0xf]
  %v4545 = vld [vmem:[%s4264 + $0x58] sm:$0xf]
  %v4546 = vld [vmem:[%s4264 + $0x5c] sm:$0x1]
  %v4547 = vld [vmem:[%s4264 + $0x60] sm:$0xf]
  %v4548 = vld [vmem:[%s4264 + $0x64] sm:$0xf]
  %v4549 = vld [vmem:[%s4264 + $0x68] sm:$0x1]
  %v4550 = vld [vmem:[%s4264 + $0x6c] sm:$0xf]
  %v4551 = vld [vmem:[%s4264 + $0x70] sm:$0xf]
  %v4552 = vld [vmem:[%s4264 + $0x74] sm:$0x1]
  %v4553 = vld [vmem:[%s4264 + $0x78] sm:$0xf]
  %v4554 = vld [vmem:[%s4264 + $0x7c] sm:$0xf]
  %v4555 = vld [vmem:[%s4264 + $0x80] sm:$0x1]
  %v4556 = vld [vmem:[%s4264 + $0x84] sm:$0xf]
  %v4557 = vld [vmem:[%s4264 + $0x88] sm:$0xf]
  %v4558 = vld [vmem:[%s4264 + $0x8c] sm:$0x1]
  %v4559 = vld [vmem:[%s4264 + $0x90] sm:$0xf]
  %v4560 = vld [vmem:[%s4264 + $0x94] sm:$0xf]
  %v4561 = vld [vmem:[%s4264 + $0x98] sm:$0x1]
  %v4562 = vld [vmem:[%s4264 + $0x9c] sm:$0xf]
  %v4563 = vld [vmem:[%s4264 + $0xa0] sm:$0xf]
  %v4564 = vld [vmem:[%s4264 + $0xa4] sm:$0x1]
  %v4565 = vld [vmem:[%s4264 + $0xa8] sm:$0xf]
  %v4566 = vld [vmem:[%s4264 + $0xac] sm:$0xf]
  %v4567 = vld [vmem:[%s4264 + $0xb0] sm:$0x1]
  %v4568 = vld [vmem:[%s4264 + $0xb4] sm:$0xf]
  %v4569 = vld [vmem:[%s4264 + $0xb8] sm:$0xf]
  %v4570 = vld [vmem:[%s4264 + $0xbc] sm:$0x1]
  %v4572 = vshrl.u32 %v4523, 16
  %v4574 = vrot.slane %v4572, 4
  %v4575 = vshll.u32 %v4523, 16
  %v4577 = vrot.slane %v4575, 5
  %v4578 = vor.u32 %v4574, %v4577
  %v4579 = vrot.slane %v4578, 4
  %v4581 = vshll.u32 %v4524, 16
  %v4583 = vrot.slane %v4581, 5
  %v4584 = vsel %vm394, %v4579, %v4583
  %v4585 = vshrl.u32 %v4524, 16
  %v4587 = vrot.slane %v4585, 4
  %v4588 = vor.u32 %v4587, %v4583
  %v4589 = vrot.slane %v4588, 4
  %v4591 = vshll.u32 %v4525, 16
  %v4593 = vrot.slane %v4591, 5
  %v4594 = vsel %vm394, %v4589, %v4593
  %v4596 = vshrl.u32 %v4526, 16
  %v4598 = vrot.slane %v4596, 4
  %v4599 = vshll.u32 %v4526, 16
  %v4601 = vrot.slane %v4599, 5
  %v4602 = vor.u32 %v4598, %v4601
  %v4603 = vrot.slane %v4602, 4
  %v4605 = vshll.u32 %v4527, 16
  %v4607 = vrot.slane %v4605, 5
  %v4608 = vsel %vm394, %v4603, %v4607
  %v4609 = vshrl.u32 %v4527, 16
  %v4611 = vrot.slane %v4609, 4
  %v4612 = vor.u32 %v4611, %v4607
  %v4613 = vrot.slane %v4612, 4
  %v4615 = vshll.u32 %v4528, 16
  %v4617 = vrot.slane %v4615, 5
  %v4618 = vsel %vm394, %v4613, %v4617
  %v4620 = vshrl.u32 %v4529, 16
  %v4622 = vrot.slane %v4620, 4
  %v4623 = vshll.u32 %v4529, 16
  %v4625 = vrot.slane %v4623, 5
  %v4626 = vor.u32 %v4622, %v4625
  %v4627 = vrot.slane %v4626, 4
  %v4629 = vshll.u32 %v4530, 16
  %v4631 = vrot.slane %v4629, 5
  %v4632 = vsel %vm394, %v4627, %v4631
  %v4633 = vshrl.u32 %v4530, 16
  %v4635 = vrot.slane %v4633, 4
  %v4636 = vor.u32 %v4635, %v4631
  %v4637 = vrot.slane %v4636, 4
  %v4639 = vshll.u32 %v4531, 16
  %v4641 = vrot.slane %v4639, 5
  %v4642 = vsel %vm394, %v4637, %v4641
  %v4644 = vshrl.u32 %v4532, 16
  %v4646 = vrot.slane %v4644, 4
  %v4647 = vshll.u32 %v4532, 16
  %v4649 = vrot.slane %v4647, 5
  %v4650 = vor.u32 %v4646, %v4649
  %v4651 = vrot.slane %v4650, 4
  %v4653 = vshll.u32 %v4533, 16
  %v4655 = vrot.slane %v4653, 5
  %v4656 = vsel %vm394, %v4651, %v4655
  %v4657 = vshrl.u32 %v4533, 16
  %v4659 = vrot.slane %v4657, 4
  %v4660 = vor.u32 %v4659, %v4655
  %v4661 = vrot.slane %v4660, 4
  %v4663 = vshll.u32 %v4534, 16
  %v4665 = vrot.slane %v4663, 5
  %v4666 = vsel %vm394, %v4661, %v4665
  %v4668 = vshrl.u32 %v4535, 16
  %v4670 = vrot.slane %v4668, 4
  %v4671 = vshll.u32 %v4535, 16
  %v4673 = vrot.slane %v4671, 5
  %v4674 = vor.u32 %v4670, %v4673
  %v4675 = vrot.slane %v4674, 4
  %v4677 = vshll.u32 %v4536, 16
  %v4679 = vrot.slane %v4677, 5
  %v4680 = vsel %vm394, %v4675, %v4679
  %v4681 = vshrl.u32 %v4536, 16
  %v4683 = vrot.slane %v4681, 4
  %v4684 = vor.u32 %v4683, %v4679
  %v4685 = vrot.slane %v4684, 4
  %v4687 = vshll.u32 %v4537, 16
  %v4689 = vrot.slane %v4687, 5
  %v4690 = vsel %vm394, %v4685, %v4689
  %v4692 = vshrl.u32 %v4538, 16
  %v4694 = vrot.slane %v4692, 4
  %v4695 = vshll.u32 %v4538, 16
  %v4697 = vrot.slane %v4695, 5
  %v4698 = vor.u32 %v4694, %v4697
  %v4699 = vrot.slane %v4698, 4
  %v4701 = vshll.u32 %v4539, 16
  %v4703 = vrot.slane %v4701, 5
  %v4704 = vsel %vm394, %v4699, %v4703
  %v4705 = vshrl.u32 %v4539, 16
  %v4707 = vrot.slane %v4705, 4
  %v4708 = vor.u32 %v4707, %v4703
  %v4709 = vrot.slane %v4708, 4
  %v4711 = vshll.u32 %v4540, 16
  %v4713 = vrot.slane %v4711, 5
  %v4714 = vsel %vm394, %v4709, %v4713
  %v4716 = vshrl.u32 %v4541, 16
  %v4718 = vrot.slane %v4716, 4
  %v4719 = vshll.u32 %v4541, 16
  %v4721 = vrot.slane %v4719, 5
  %v4722 = vor.u32 %v4718, %v4721
  %v4723 = vrot.slane %v4722, 4
  %v4725 = vshll.u32 %v4542, 16
  %v4727 = vrot.slane %v4725, 5
  %v4728 = vsel %vm394, %v4723, %v4727
  %v4729 = vshrl.u32 %v4542, 16
  %v4731 = vrot.slane %v4729, 4
  %v4732 = vor.u32 %v4731, %v4727
  %v4733 = vrot.slane %v4732, 4
  %v4735 = vshll.u32 %v4543, 16
  %v4737 = vrot.slane %v4735, 5
  %v4738 = vsel %vm394, %v4733, %v4737
  %v4740 = vshrl.u32 %v4544, 16
  %v4742 = vrot.slane %v4740, 4
  %v4743 = vshll.u32 %v4544, 16
  %v4745 = vrot.slane %v4743, 5
  %v4746 = vor.u32 %v4742, %v4745
  %v4747 = vrot.slane %v4746, 4
  %v4749 = vshll.u32 %v4545, 16
  %v4751 = vrot.slane %v4749, 5
  %v4752 = vsel %vm394, %v4747, %v4751
  %v4753 = vshrl.u32 %v4545, 16
  %v4755 = vrot.slane %v4753, 4
  %v4756 = vor.u32 %v4755, %v4751
  %v4757 = vrot.slane %v4756, 4
  %v4759 = vshll.u32 %v4546, 16
  %v4761 = vrot.slane %v4759, 5
  %v4762 = vsel %vm394, %v4757, %v4761
  %v4764 = vshrl.u32 %v4547, 16
  %v4766 = vrot.slane %v4764, 4
  %v4767 = vshll.u32 %v4547, 16
  %v4769 = vrot.slane %v4767, 5
  %v4770 = vor.u32 %v4766, %v4769
  %v4771 = vrot.slane %v4770, 4
  %v4773 = vshll.u32 %v4548, 16
  %v4775 = vrot.slane %v4773, 5
  %v4776 = vsel %vm394, %v4771, %v4775
  %v4777 = vshrl.u32 %v4548, 16
  %v4779 = vrot.slane %v4777, 4
  %v4780 = vor.u32 %v4779, %v4775
  %v4781 = vrot.slane %v4780, 4
  %v4783 = vshll.u32 %v4549, 16
  %v4785 = vrot.slane %v4783, 5
  %v4786 = vsel %vm394, %v4781, %v4785
  %v4788 = vshrl.u32 %v4550, 16
  %v4790 = vrot.slane %v4788, 4
  %v4791 = vshll.u32 %v4550, 16
  %v4793 = vrot.slane %v4791, 5
  %v4794 = vor.u32 %v4790, %v4793
  %v4795 = vrot.slane %v4794, 4
  %v4797 = vshll.u32 %v4551, 16
  %v4799 = vrot.slane %v4797, 5
  %v4800 = vsel %vm394, %v4795, %v4799
  %v4801 = vshrl.u32 %v4551, 16
  %v4803 = vrot.slane %v4801, 4
  %v4804 = vor.u32 %v4803, %v4799
  %v4805 = vrot.slane %v4804, 4
  %v4807 = vshll.u32 %v4552, 16
  %v4809 = vrot.slane %v4807, 5
  %v4810 = vsel %vm394, %v4805, %v4809
  %v4812 = vshrl.u32 %v4553, 16
  %v4814 = vrot.slane %v4812, 4
  %v4815 = vshll.u32 %v4553, 16
  %v4817 = vrot.slane %v4815, 5
  %v4818 = vor.u32 %v4814, %v4817
  %v4819 = vrot.slane %v4818, 4
  %v4821 = vshll.u32 %v4554, 16
  %v4823 = vrot.slane %v4821, 5
  %v4824 = vsel %vm394, %v4819, %v4823
  %v4825 = vshrl.u32 %v4554, 16
  %v4827 = vrot.slane %v4825, 4
  %v4828 = vor.u32 %v4827, %v4823
  %v4829 = vrot.slane %v4828, 4
  %v4831 = vshll.u32 %v4555, 16
  %v4833 = vrot.slane %v4831, 5
  %v4834 = vsel %vm394, %v4829, %v4833
  %v4836 = vshrl.u32 %v4556, 16
  %v4838 = vrot.slane %v4836, 4
  %v4839 = vshll.u32 %v4556, 16
  %v4841 = vrot.slane %v4839, 5
  %v4842 = vor.u32 %v4838, %v4841
  %v4843 = vrot.slane %v4842, 4
  %v4845 = vshll.u32 %v4557, 16
  %v4847 = vrot.slane %v4845, 5
  %v4848 = vsel %vm394, %v4843, %v4847
  %v4849 = vshrl.u32 %v4557, 16
  %v4851 = vrot.slane %v4849, 4
  %v4852 = vor.u32 %v4851, %v4847
  %v4853 = vrot.slane %v4852, 4
  %v4855 = vshll.u32 %v4558, 16
  %v4857 = vrot.slane %v4855, 5
  %v4858 = vsel %vm394, %v4853, %v4857
  %v4860 = vshrl.u32 %v4559, 16
  %v4862 = vrot.slane %v4860, 4
  %v4863 = vshll.u32 %v4559, 16
  %v4865 = vrot.slane %v4863, 5
  %v4866 = vor.u32 %v4862, %v4865
  %v4867 = vrot.slane %v4866, 4
  %v4869 = vshll.u32 %v4560, 16
  %v4871 = vrot.slane %v4869, 5
  %v4872 = vsel %vm394, %v4867, %v4871
  %v4873 = vshrl.u32 %v4560, 16
  %v4875 = vrot.slane %v4873, 4
  %v4876 = vor.u32 %v4875, %v4871
  %v4877 = vrot.slane %v4876, 4
  %v4879 = vshll.u32 %v4561, 16
  %v4881 = vrot.slane %v4879, 5
  %v4882 = vsel %vm394, %v4877, %v4881
  %v4884 = vshrl.u32 %v4562, 16
  %v4886 = vrot.slane %v4884, 4
  %v4887 = vshll.u32 %v4562, 16
  %v4889 = vrot.slane %v4887, 5
  %v4890 = vor.u32 %v4886, %v4889
  %v4891 = vrot.slane %v4890, 4
  %v4893 = vshll.u32 %v4563, 16
  %v4895 = vrot.slane %v4893, 5
  %v4896 = vsel %vm394, %v4891, %v4895
  %v4897 = vshrl.u32 %v4563, 16
  %v4899 = vrot.slane %v4897, 4
  %v4900 = vor.u32 %v4899, %v4895
  %v4901 = vrot.slane %v4900, 4
  %v4903 = vshll.u32 %v4564, 16
  %v4905 = vrot.slane %v4903, 5
  %v4906 = vsel %vm394, %v4901, %v4905
  %v4908 = vshrl.u32 %v4565, 16
  %v4910 = vrot.slane %v4908, 4
  %v4911 = vshll.u32 %v4565, 16
  %v4913 = vrot.slane %v4911, 5
  %v4914 = vor.u32 %v4910, %v4913
  %v4915 = vrot.slane %v4914, 4
  %v4917 = vshll.u32 %v4566, 16
  %v4919 = vrot.slane %v4917, 5
  %v4920 = vsel %vm394, %v4915, %v4919
  %v4921 = vshrl.u32 %v4566, 16
  %v4923 = vrot.slane %v4921, 4
  %v4924 = vor.u32 %v4923, %v4919
  %v4925 = vrot.slane %v4924, 4
  %v4927 = vshll.u32 %v4567, 16
  %v4929 = vrot.slane %v4927, 5
  %v4930 = vsel %vm394, %v4925, %v4929
  %v4932 = vshrl.u32 %v4568, 16
  %v4934 = vrot.slane %v4932, 4
  %v4935 = vshll.u32 %v4568, 16
  %v4937 = vrot.slane %v4935, 5
  %v4938 = vor.u32 %v4934, %v4937
  %v4939 = vrot.slane %v4938, 4
  %v4941 = vshll.u32 %v4569, 16
  %v4943 = vrot.slane %v4941, 5
  %v4944 = vsel %vm394, %v4939, %v4943
  %v4945 = vshrl.u32 %v4569, 16
  %v4947 = vrot.slane %v4945, 4
  %v4948 = vor.u32 %v4947, %v4943
  %v4949 = vrot.slane %v4948, 4
  %v4951 = vshll.u32 %v4570, 16
  %v4953 = vrot.slane %v4951, 5
  %v4954 = vsel %vm394, %v4949, %v4953
  %4955 = vrot.lane.b32.xlu0 %v4584, 96
  %v4956 = vpop.permute.xlu0 %4955
  %4957 = vrot.lane.b32.xlu0 %v4594, 96
  %v4958 = vpop.permute.xlu0 %4957
  %4959 = vrot.lane.b32.xlu0 %v4608, 96
  %v4960 = vpop.permute.xlu0 %4959
  %4961 = vrot.lane.b32.xlu0 %v4618, 96
  %v4962 = vpop.permute.xlu0 %4961
  %4963 = vrot.lane.b32.xlu0 %v4632, 96
  %v4964 = vpop.permute.xlu0 %4963
  %4965 = vrot.lane.b32.xlu0 %v4642, 96
  %v4966 = vpop.permute.xlu0 %4965
  %4967 = vrot.lane.b32.xlu0 %v4656, 96
  %v4968 = vpop.permute.xlu0 %4967
  %4969 = vrot.lane.b32.xlu0 %v4666, 96
  %v4970 = vpop.permute.xlu0 %4969
  %4971 = vrot.lane.b32.xlu0 %v4680, 96
  %v4972 = vpop.permute.xlu0 %4971
  %4973 = vrot.lane.b32.xlu0 %v4690, 96
  %v4974 = vpop.permute.xlu0 %4973
  %4975 = vrot.lane.b32.xlu0 %v4704, 96
  %v4976 = vpop.permute.xlu0 %4975
  %4977 = vrot.lane.b32.xlu0 %v4714, 96
  %v4978 = vpop.permute.xlu0 %4977
  %4979 = vrot.lane.b32.xlu0 %v4728, 96
  %v4980 = vpop.permute.xlu0 %4979
  %4981 = vrot.lane.b32.xlu0 %v4738, 96
  %v4982 = vpop.permute.xlu0 %4981
  %4983 = vrot.lane.b32.xlu0 %v4752, 96
  %v4984 = vpop.permute.xlu0 %4983
  %4985 = vrot.lane.b32.xlu0 %v4762, 96
  %v4986 = vpop.permute.xlu0 %4985
  %4987 = vrot.lane.b32.xlu0 %v4776, 96
  %v4988 = vpop.permute.xlu0 %4987
  %4989 = vrot.lane.b32.xlu0 %v4786, 96
  %v4990 = vpop.permute.xlu0 %4989
  %4991 = vrot.lane.b32.xlu0 %v4800, 96
  %v4992 = vpop.permute.xlu0 %4991
  %4993 = vrot.lane.b32.xlu0 %v4810, 96
  %v4994 = vpop.permute.xlu0 %4993
  %4995 = vrot.lane.b32.xlu0 %v4824, 96
  %v4996 = vpop.permute.xlu0 %4995
  %4997 = vrot.lane.b32.xlu0 %v4834, 96
  %v4998 = vpop.permute.xlu0 %4997
  %4999 = vrot.lane.b32.xlu0 %v4848, 96
  %v5000 = vpop.permute.xlu0 %4999
  %5001 = vrot.lane.b32.xlu0 %v4858, 96
  %v5002 = vpop.permute.xlu0 %5001
  %5003 = vrot.lane.b32.xlu0 %v4872, 96
  %v5004 = vpop.permute.xlu0 %5003
  %5005 = vrot.lane.b32.xlu0 %v4882, 96
  %v5006 = vpop.permute.xlu0 %5005
  %5007 = vrot.lane.b32.xlu0 %v4896, 96
  %v5008 = vpop.permute.xlu0 %5007
  %5009 = vrot.lane.b32.xlu0 %v4906, 96
  %v5010 = vpop.permute.xlu0 %5009
  %5011 = vrot.lane.b32.xlu0 %v4920, 96
  %v5012 = vpop.permute.xlu0 %5011
  %5013 = vrot.lane.b32.xlu0 %v4930, 96
  %v5014 = vpop.permute.xlu0 %5013
  %5015 = vrot.lane.b32.xlu0 %v4944, 96
  %v5016 = vpop.permute.xlu0 %5015
  %5017 = vrot.lane.b32.xlu0 %v4954, 96
  %v5018 = vpop.permute.xlu0 %5017
  %5051 = vst.msk [vmem:[#allocation2 + $0x4] sm:$0xf] %vm2307, %v4956
  %5052 = vst.msk [vmem:[#allocation2 + $0x14] sm:$0xf] %vm2307, %v4958
  %5053 = vst.msk [vmem:[#allocation2 + $0x24] sm:$0xf] %vm2307, %v4960
  %5054 = vst.msk [vmem:[#allocation2 + $0x34] sm:$0xf] %vm2307, %v4962
  %5055 = vst.msk [vmem:[#allocation2 + $0x44] sm:$0xf] %vm2307, %v4964
  %5056 = vst.msk [vmem:[#allocation2 + $0x54] sm:$0xf] %vm2307, %v4966
  %5057 = vst.msk [vmem:[#allocation2 + $0x64] sm:$0xf] %vm2307, %v4968
  %5058 = vst.msk [vmem:[#allocation2 + $0x74] sm:$0xf] %vm2307, %v4970
  %5059 = vst.msk [vmem:[#allocation2 + $0x84] sm:$0xf] %vm2307, %v4972
  %5060 = vst.msk [vmem:[#allocation2 + $0x94] sm:$0xf] %vm2307, %v4974
  %5061 = vst.msk [vmem:[#allocation2 + $0xa4] sm:$0xf] %vm2307, %v4976
  %5062 = vst.msk [vmem:[#allocation2 + $0xb4] sm:$0xf] %vm2307, %v4978
  %5063 = vst.msk [vmem:[#allocation2 + $0xc4] sm:$0xf] %vm2307, %v4980
  %5064 = vst.msk [vmem:[#allocation2 + $0xd4] sm:$0xf] %vm2307, %v4982
  %5065 = vst.msk [vmem:[#allocation2 + $0xe4] sm:$0xf] %vm2307, %v4984
  %5066 = vst.msk [vmem:[#allocation2 + $0xf4] sm:$0xf] %vm2307, %v4986
  %5067 = vst.msk [vmem:[#allocation2 + $0x104] sm:$0xf] %vm2307, %v4988
  %5068 = vst.msk [vmem:[#allocation2 + $0x114] sm:$0xf] %vm2307, %v4990
  %5069 = vst.msk [vmem:[#allocation2 + $0x124] sm:$0xf] %vm2307, %v4992
  %5070 = vst.msk [vmem:[#allocation2 + $0x134] sm:$0xf] %vm2307, %v4994
  %5071 = vst.msk [vmem:[#allocation2 + $0x144] sm:$0xf] %vm2307, %v4996
  %5072 = vst.msk [vmem:[#allocation2 + $0x154] sm:$0xf] %vm2307, %v4998
  %5073 = vst.msk [vmem:[#allocation2 + $0x164] sm:$0xf] %vm2307, %v5000
  %5074 = vst.msk [vmem:[#allocation2 + $0x174] sm:$0xf] %vm2307, %v5002
  %5075 = vst.msk [vmem:[#allocation2 + $0x184] sm:$0xf] %vm2307, %v5004
  %5076 = vst.msk [vmem:[#allocation2 + $0x194] sm:$0xf] %vm2307, %v5006
  %5077 = vst.msk [vmem:[#allocation2 + $0x1a4] sm:$0xf] %vm2307, %v5008
  %5078 = vst.msk [vmem:[#allocation2 + $0x1b4] sm:$0xf] %vm2307, %v5010
  %5079 = vst.msk [vmem:[#allocation2 + $0x1c4] sm:$0xf] %vm2307, %v5012
  %5080 = vst.msk [vmem:[#allocation2 + $0x1d4] sm:$0xf] %vm2307, %v5014
  %5081 = vst.msk [vmem:[#allocation2 + $0x1e4] sm:$0xf] %vm2307, %v5016
  %5082 = vst.msk [vmem:[#allocation2 + $0x1f4] sm:$0xf] %vm2307, %v5018
  %v5083 = vld [vmem:[%s4457] sm:$0xf]
  %v5084 = vld [vmem:[%s4457 + $0x4] sm:$0xf]
  %v5085 = vld [vmem:[%s4457 + $0x8] sm:$0x1]
  %v5086 = vld [vmem:[%s4457 + $0xc] sm:$0xf]
  %v5087 = vld [vmem:[%s4457 + $0x10] sm:$0xf]
  %v5088 = vld [vmem:[%s4457 + $0x14] sm:$0x1]
  %v5089 = vld [vmem:[%s4457 + $0x18] sm:$0xf]
  %v5090 = vld [vmem:[%s4457 + $0x1c] sm:$0xf]
  %v5091 = vld [vmem:[%s4457 + $0x20] sm:$0x1]
  %v5092 = vld [vmem:[%s4457 + $0x24] sm:$0xf]
  %v5093 = vld [vmem:[%s4457 + $0x28] sm:$0xf]
  %v5094 = vld [vmem:[%s4457 + $0x2c] sm:$0x1]
  %v5095 = vld [vmem:[%s4457 + $0x30] sm:$0xf]
  %v5096 = vld [vmem:[%s4457 + $0x34] sm:$0xf]
  %v5097 = vld [vmem:[%s4457 + $0x38] sm:$0x1]
  %v5098 = vld [vmem:[%s4457 + $0x3c] sm:$0xf]
  %v5099 = vld [vmem:[%s4457 + $0x40] sm:$0xf]
  %v5100 = vld [vmem:[%s4457 + $0x44] sm:$0x1]
  %v5101 = vld [vmem:[%s4457 + $0x48] sm:$0xf]
  %v5102 = vld [vmem:[%s4457 + $0x4c] sm:$0xf]
  %v5103 = vld [vmem:[%s4457 + $0x50] sm:$0x1]
  %v5104 = vld [vmem:[%s4457 + $0x54] sm:$0xf]
  %v5105 = vld [vmem:[%s4457 + $0x58] sm:$0xf]
  %v5106 = vld [vmem:[%s4457 + $0x5c] sm:$0x1]
  %v5107 = vld [vmem:[%s4457 + $0x60] sm:$0xf]
  %v5108 = vld [vmem:[%s4457 + $0x64] sm:$0xf]
  %v5109 = vld [vmem:[%s4457 + $0x68] sm:$0x1]
  %v5110 = vld [vmem:[%s4457 + $0x6c] sm:$0xf]
  %v5111 = vld [vmem:[%s4457 + $0x70] sm:$0xf]
  %v5112 = vld [vmem:[%s4457 + $0x74] sm:$0x1]
  %v5113 = vld [vmem:[%s4457 + $0x78] sm:$0xf]
  %v5114 = vld [vmem:[%s4457 + $0x7c] sm:$0xf]
  %v5115 = vld [vmem:[%s4457 + $0x80] sm:$0x1]
  %v5116 = vld [vmem:[%s4457 + $0x84] sm:$0xf]
  %v5117 = vld [vmem:[%s4457 + $0x88] sm:$0xf]
  %v5118 = vld [vmem:[%s4457 + $0x8c] sm:$0x1]
  %v5119 = vld [vmem:[%s4457 + $0x90] sm:$0xf]
  %v5120 = vld [vmem:[%s4457 + $0x94] sm:$0xf]
  %v5121 = vld [vmem:[%s4457 + $0x98] sm:$0x1]
  %v5122 = vld [vmem:[%s4457 + $0x9c] sm:$0xf]
  %v5123 = vld [vmem:[%s4457 + $0xa0] sm:$0xf]
  %v5124 = vld [vmem:[%s4457 + $0xa4] sm:$0x1]
  %v5125 = vld [vmem:[%s4457 + $0xa8] sm:$0xf]
  %v5126 = vld [vmem:[%s4457 + $0xac] sm:$0xf]
  %v5127 = vld [vmem:[%s4457 + $0xb0] sm:$0x1]
  %v5128 = vld [vmem:[%s4457 + $0xb4] sm:$0xf]
  %v5129 = vld [vmem:[%s4457 + $0xb8] sm:$0xf]
  %v5130 = vld [vmem:[%s4457 + $0xbc] sm:$0x1]
  %v5132 = vshrl.u32 %v5083, 16
  %v5134 = vrot.slane %v5132, 4
  %v5135 = vshll.u32 %v5083, 16
  %v5137 = vrot.slane %v5135, 5
  %v5138 = vor.u32 %v5134, %v5137
  %v5139 = vrot.slane %v5138, 4
  %v5141 = vshll.u32 %v5084, 16
  %v5143 = vrot.slane %v5141, 5
  %v5144 = vsel %vm394, %v5139, %v5143
  %v5145 = vshrl.u32 %v5084, 16
  %v5147 = vrot.slane %v5145, 4
  %v5148 = vor.u32 %v5147, %v5143
  %v5149 = vrot.slane %v5148, 4
  %v5151 = vshll.u32 %v5085, 16
  %v5153 = vrot.slane %v5151, 5
  %v5154 = vsel %vm394, %v5149, %v5153
  %v5156 = vshrl.u32 %v5086, 16
  %v5158 = vrot.slane %v5156, 4
  %v5159 = vshll.u32 %v5086, 16
  %v5161 = vrot.slane %v5159, 5
  %v5162 = vor.u32 %v5158, %v5161
  %v5163 = vrot.slane %v5162, 4
  %v5165 = vshll.u32 %v5087, 16
  %v5167 = vrot.slane %v5165, 5
  %v5168 = vsel %vm394, %v5163, %v5167
  %v5169 = vshrl.u32 %v5087, 16
  %v5171 = vrot.slane %v5169, 4
  %v5172 = vor.u32 %v5171, %v5167
  %v5173 = vrot.slane %v5172, 4
  %v5175 = vshll.u32 %v5088, 16
  %v5177 = vrot.slane %v5175, 5
  %v5178 = vsel %vm394, %v5173, %v5177
  %v5180 = vshrl.u32 %v5089, 16
  %v5182 = vrot.slane %v5180, 4
  %v5183 = vshll.u32 %v5089, 16
  %v5185 = vrot.slane %v5183, 5
  %v5186 = vor.u32 %v5182, %v5185
  %v5187 = vrot.slane %v5186, 4
  %v5189 = vshll.u32 %v5090, 16
  %v5191 = vrot.slane %v5189, 5
  %v5192 = vsel %vm394, %v5187, %v5191
  %v5193 = vshrl.u32 %v5090, 16
  %v5195 = vrot.slane %v5193, 4
  %v5196 = vor.u32 %v5195, %v5191
  %v5197 = vrot.slane %v5196, 4
  %v5199 = vshll.u32 %v5091, 16
  %v5201 = vrot.slane %v5199, 5
  %v5202 = vsel %vm394, %v5197, %v5201
  %v5204 = vshrl.u32 %v5092, 16
  %v5206 = vrot.slane %v5204, 4
  %v5207 = vshll.u32 %v5092, 16
  %v5209 = vrot.slane %v5207, 5
  %v5210 = vor.u32 %v5206, %v5209
  %v5211 = vrot.slane %v5210, 4
  %v5213 = vshll.u32 %v5093, 16
  %v5215 = vrot.slane %v5213, 5
  %v5216 = vsel %vm394, %v5211, %v5215
  %v5217 = vshrl.u32 %v5093, 16
  %v5219 = vrot.slane %v5217, 4
  %v5220 = vor.u32 %v5219, %v5215
  %v5221 = vrot.slane %v5220, 4
  %v5223 = vshll.u32 %v5094, 16
  %v5225 = vrot.slane %v5223, 5
  %v5226 = vsel %vm394, %v5221, %v5225
  %v5228 = vshrl.u32 %v5095, 16
  %v5230 = vrot.slane %v5228, 4
  %v5231 = vshll.u32 %v5095, 16
  %v5233 = vrot.slane %v5231, 5
  %v5234 = vor.u32 %v5230, %v5233
  %v5235 = vrot.slane %v5234, 4
  %v5237 = vshll.u32 %v5096, 16
  %v5239 = vrot.slane %v5237, 5
  %v5240 = vsel %vm394, %v5235, %v5239
  %v5241 = vshrl.u32 %v5096, 16
  %v5243 = vrot.slane %v5241, 4
  %v5244 = vor.u32 %v5243, %v5239
  %v5245 = vrot.slane %v5244, 4
  %v5247 = vshll.u32 %v5097, 16
  %v5249 = vrot.slane %v5247, 5
  %v5250 = vsel %vm394, %v5245, %v5249
  %v5252 = vshrl.u32 %v5098, 16
  %v5254 = vrot.slane %v5252, 4
  %v5255 = vshll.u32 %v5098, 16
  %v5257 = vrot.slane %v5255, 5
  %v5258 = vor.u32 %v5254, %v5257
  %v5259 = vrot.slane %v5258, 4
  %v5261 = vshll.u32 %v5099, 16
  %v5263 = vrot.slane %v5261, 5
  %v5264 = vsel %vm394, %v5259, %v5263
  %v5265 = vshrl.u32 %v5099, 16
  %v5267 = vrot.slane %v5265, 4
  %v5268 = vor.u32 %v5267, %v5263
  %v5269 = vrot.slane %v5268, 4
  %v5271 = vshll.u32 %v5100, 16
  %v5273 = vrot.slane %v5271, 5
  %v5274 = vsel %vm394, %v5269, %v5273
  %v5276 = vshrl.u32 %v5101, 16
  %v5278 = vrot.slane %v5276, 4
  %v5279 = vshll.u32 %v5101, 16
  %v5281 = vrot.slane %v5279, 5
  %v5282 = vor.u32 %v5278, %v5281
  %v5283 = vrot.slane %v5282, 4
  %v5285 = vshll.u32 %v5102, 16
  %v5287 = vrot.slane %v5285, 5
  %v5288 = vsel %vm394, %v5283, %v5287
  %v5289 = vshrl.u32 %v5102, 16
  %v5291 = vrot.slane %v5289, 4
  %v5292 = vor.u32 %v5291, %v5287
  %v5293 = vrot.slane %v5292, 4
  %v5295 = vshll.u32 %v5103, 16
  %v5297 = vrot.slane %v5295, 5
  %v5298 = vsel %vm394, %v5293, %v5297
  %v5300 = vshrl.u32 %v5104, 16
  %v5302 = vrot.slane %v5300, 4
  %v5303 = vshll.u32 %v5104, 16
  %v5305 = vrot.slane %v5303, 5
  %v5306 = vor.u32 %v5302, %v5305
  %v5307 = vrot.slane %v5306, 4
  %v5309 = vshll.u32 %v5105, 16
  %v5311 = vrot.slane %v5309, 5
  %v5312 = vsel %vm394, %v5307, %v5311
  %v5313 = vshrl.u32 %v5105, 16
  %v5315 = vrot.slane %v5313, 4
  %v5316 = vor.u32 %v5315, %v5311
  %v5317 = vrot.slane %v5316, 4
  %v5319 = vshll.u32 %v5106, 16
  %v5321 = vrot.slane %v5319, 5
  %v5322 = vsel %vm394, %v5317, %v5321
  %v5324 = vshrl.u32 %v5107, 16
  %v5326 = vrot.slane %v5324, 4
  %v5327 = vshll.u32 %v5107, 16
  %v5329 = vrot.slane %v5327, 5
  %v5330 = vor.u32 %v5326, %v5329
  %v5331 = vrot.slane %v5330, 4
  %v5333 = vshll.u32 %v5108, 16
  %v5335 = vrot.slane %v5333, 5
  %v5336 = vsel %vm394, %v5331, %v5335
  %v5337 = vshrl.u32 %v5108, 16
  %v5339 = vrot.slane %v5337, 4
  %v5340 = vor.u32 %v5339, %v5335
  %v5341 = vrot.slane %v5340, 4
  %v5343 = vshll.u32 %v5109, 16
  %v5345 = vrot.slane %v5343, 5
  %v5346 = vsel %vm394, %v5341, %v5345
  %v5348 = vshrl.u32 %v5110, 16
  %v5350 = vrot.slane %v5348, 4
  %v5351 = vshll.u32 %v5110, 16
  %v5353 = vrot.slane %v5351, 5
  %v5354 = vor.u32 %v5350, %v5353
  %v5355 = vrot.slane %v5354, 4
  %v5357 = vshll.u32 %v5111, 16
  %v5359 = vrot.slane %v5357, 5
  %v5360 = vsel %vm394, %v5355, %v5359
  %v5361 = vshrl.u32 %v5111, 16
  %v5363 = vrot.slane %v5361, 4
  %v5364 = vor.u32 %v5363, %v5359
  %v5365 = vrot.slane %v5364, 4
  %v5367 = vshll.u32 %v5112, 16
  %v5369 = vrot.slane %v5367, 5
  %v5370 = vsel %vm394, %v5365, %v5369
  %v5372 = vshrl.u32 %v5113, 16
  %v5374 = vrot.slane %v5372, 4
  %v5375 = vshll.u32 %v5113, 16
  %v5377 = vrot.slane %v5375, 5
  %v5378 = vor.u32 %v5374, %v5377
  %v5379 = vrot.slane %v5378, 4
  %v5381 = vshll.u32 %v5114, 16
  %v5383 = vrot.slane %v5381, 5
  %v5384 = vsel %vm394, %v5379, %v5383
  %v5385 = vshrl.u32 %v5114, 16
  %v5387 = vrot.slane %v5385, 4
  %v5388 = vor.u32 %v5387, %v5383
  %v5389 = vrot.slane %v5388, 4
  %v5391 = vshll.u32 %v5115, 16
  %v5393 = vrot.slane %v5391, 5
  %v5394 = vsel %vm394, %v5389, %v5393
  %v5396 = vshrl.u32 %v5116, 16
  %v5398 = vrot.slane %v5396, 4
  %v5399 = vshll.u32 %v5116, 16
  %v5401 = vrot.slane %v5399, 5
  %v5402 = vor.u32 %v5398, %v5401
  %v5403 = vrot.slane %v5402, 4
  %v5405 = vshll.u32 %v5117, 16
  %v5407 = vrot.slane %v5405, 5
  %v5408 = vsel %vm394, %v5403, %v5407
  %v5409 = vshrl.u32 %v5117, 16
  %v5411 = vrot.slane %v5409, 4
  %v5412 = vor.u32 %v5411, %v5407
  %v5413 = vrot.slane %v5412, 4
  %v5415 = vshll.u32 %v5118, 16
  %v5417 = vrot.slane %v5415, 5
  %v5418 = vsel %vm394, %v5413, %v5417
  %v5420 = vshrl.u32 %v5119, 16
  %v5422 = vrot.slane %v5420, 4
  %v5423 = vshll.u32 %v5119, 16
  %v5425 = vrot.slane %v5423, 5
  %v5426 = vor.u32 %v5422, %v5425
  %v5427 = vrot.slane %v5426, 4
  %v5429 = vshll.u32 %v5120, 16
  %v5431 = vrot.slane %v5429, 5
  %v5432 = vsel %vm394, %v5427, %v5431
  %v5433 = vshrl.u32 %v5120, 16
  %v5435 = vrot.slane %v5433, 4
  %v5436 = vor.u32 %v5435, %v5431
  %v5437 = vrot.slane %v5436, 4
  %v5439 = vshll.u32 %v5121, 16
  %v5441 = vrot.slane %v5439, 5
  %v5442 = vsel %vm394, %v5437, %v5441
  %v5444 = vshrl.u32 %v5122, 16
  %v5446 = vrot.slane %v5444, 4
  %v5447 = vshll.u32 %v5122, 16
  %v5449 = vrot.slane %v5447, 5
  %v5450 = vor.u32 %v5446, %v5449
  %v5451 = vrot.slane %v5450, 4
  %v5453 = vshll.u32 %v5123, 16
  %v5455 = vrot.slane %v5453, 5
  %v5456 = vsel %vm394, %v5451, %v5455
  %v5457 = vshrl.u32 %v5123, 16
  %v5459 = vrot.slane %v5457, 4
  %v5460 = vor.u32 %v5459, %v5455
  %v5461 = vrot.slane %v5460, 4
  %v5463 = vshll.u32 %v5124, 16
  %v5465 = vrot.slane %v5463, 5
  %v5466 = vsel %vm394, %v5461, %v5465
  %v5468 = vshrl.u32 %v5125, 16
  %v5470 = vrot.slane %v5468, 4
  %v5471 = vshll.u32 %v5125, 16
  %v5473 = vrot.slane %v5471, 5
  %v5474 = vor.u32 %v5470, %v5473
  %v5475 = vrot.slane %v5474, 4
  %v5477 = vshll.u32 %v5126, 16
  %v5479 = vrot.slane %v5477, 5
  %v5480 = vsel %vm394, %v5475, %v5479
  %v5481 = vshrl.u32 %v5126, 16
  %v5483 = vrot.slane %v5481, 4
  %v5484 = vor.u32 %v5483, %v5479
  %v5485 = vrot.slane %v5484, 4
  %v5487 = vshll.u32 %v5127, 16
  %v5489 = vrot.slane %v5487, 5
  %v5490 = vsel %vm394, %v5485, %v5489
  %v5492 = vshrl.u32 %v5128, 16
  %v5494 = vrot.slane %v5492, 4
  %v5495 = vshll.u32 %v5128, 16
  %v5497 = vrot.slane %v5495, 5
  %v5498 = vor.u32 %v5494, %v5497
  %v5499 = vrot.slane %v5498, 4
  %v5501 = vshll.u32 %v5129, 16
  %v5503 = vrot.slane %v5501, 5
  %v5504 = vsel %vm394, %v5499, %v5503
  %v5505 = vshrl.u32 %v5129, 16
  %v5507 = vrot.slane %v5505, 4
  %v5508 = vor.u32 %v5507, %v5503
  %v5509 = vrot.slane %v5508, 4
  %v5511 = vshll.u32 %v5130, 16
  %v5513 = vrot.slane %v5511, 5
  %v5514 = vsel %vm394, %v5509, %v5513
  %5515 = vrot.lane.b32.xlu0 %v5144, 16
  %v5516 = vpop.permute.xlu0 %5515
  %5517 = vrot.lane.b32.xlu0 %v5154, 16
  %v5518 = vpop.permute.xlu0 %5517
  %5519 = vrot.lane.b32.xlu0 %v5168, 16
  %v5520 = vpop.permute.xlu0 %5519
  %5521 = vrot.lane.b32.xlu0 %v5178, 16
  %v5522 = vpop.permute.xlu0 %5521
  %5523 = vrot.lane.b32.xlu0 %v5192, 16
  %v5524 = vpop.permute.xlu0 %5523
  %5525 = vrot.lane.b32.xlu0 %v5202, 16
  %v5526 = vpop.permute.xlu0 %5525
  %5527 = vrot.lane.b32.xlu0 %v5216, 16
  %v5528 = vpop.permute.xlu0 %5527
  %5529 = vrot.lane.b32.xlu0 %v5226, 16
  %v5530 = vpop.permute.xlu0 %5529
  %5531 = vrot.lane.b32.xlu0 %v5240, 16
  %v5532 = vpop.permute.xlu0 %5531
  %5533 = vrot.lane.b32.xlu0 %v5250, 16
  %v5534 = vpop.permute.xlu0 %5533
  %5535 = vrot.lane.b32.xlu0 %v5264, 16
  %v5536 = vpop.permute.xlu0 %5535
  %5537 = vrot.lane.b32.xlu0 %v5274, 16
  %v5538 = vpop.permute.xlu0 %5537
  %5539 = vrot.lane.b32.xlu0 %v5288, 16
  %v5540 = vpop.permute.xlu0 %5539
  %5541 = vrot.lane.b32.xlu0 %v5298, 16
  %v5542 = vpop.permute.xlu0 %5541
  %5543 = vrot.lane.b32.xlu0 %v5312, 16
  %v5544 = vpop.permute.xlu0 %5543
  %5545 = vrot.lane.b32.xlu0 %v5322, 16
  %v5546 = vpop.permute.xlu0 %5545
  %5547 = vrot.lane.b32.xlu0 %v5336, 16
  %v5548 = vpop.permute.xlu0 %5547
  %5549 = vrot.lane.b32.xlu0 %v5346, 16
  %v5550 = vpop.permute.xlu0 %5549
  %5551 = vrot.lane.b32.xlu0 %v5360, 16
  %v5552 = vpop.permute.xlu0 %5551
  %5553 = vrot.lane.b32.xlu0 %v5370, 16
  %v5554 = vpop.permute.xlu0 %5553
  %5555 = vrot.lane.b32.xlu0 %v5384, 16
  %v5556 = vpop.permute.xlu0 %5555
  %5557 = vrot.lane.b32.xlu0 %v5394, 16
  %v5558 = vpop.permute.xlu0 %5557
  %5559 = vrot.lane.b32.xlu0 %v5408, 16
  %v5560 = vpop.permute.xlu0 %5559
  %5561 = vrot.lane.b32.xlu0 %v5418, 16
  %v5562 = vpop.permute.xlu0 %5561
  %5563 = vrot.lane.b32.xlu0 %v5432, 16
  %v5564 = vpop.permute.xlu0 %5563
  %5565 = vrot.lane.b32.xlu0 %v5442, 16
  %v5566 = vpop.permute.xlu0 %5565
  %5567 = vrot.lane.b32.xlu0 %v5456, 16
  %v5568 = vpop.permute.xlu0 %5567
  %5569 = vrot.lane.b32.xlu0 %v5466, 16
  %v5570 = vpop.permute.xlu0 %5569
  %5571 = vrot.lane.b32.xlu0 %v5480, 16
  %v5572 = vpop.permute.xlu0 %5571
  %5573 = vrot.lane.b32.xlu0 %v5490, 16
  %v5574 = vpop.permute.xlu0 %5573
  %5575 = vrot.lane.b32.xlu0 %v5504, 16
  %v5576 = vpop.permute.xlu0 %5575
  %5577 = vrot.lane.b32.xlu0 %v5514, 16
  %v5578 = vpop.permute.xlu0 %5577
  %vm5611 = vcmask 257152
  %5612 = vst.msk [vmem:[#allocation2 + $0xc] sm:$0xf] %vm5611, %v5516
  %5613 = vst.msk [vmem:[#allocation2 + $0x1c] sm:$0xf] %vm5611, %v5518
  %5614 = vst.msk [vmem:[#allocation2 + $0x2c] sm:$0xf] %vm5611, %v5520
  %5615 = vst.msk [vmem:[#allocation2 + $0x3c] sm:$0xf] %vm5611, %v5522
  %5616 = vst.msk [vmem:[#allocation2 + $0x4c] sm:$0xf] %vm5611, %v5524
  %5617 = vst.msk [vmem:[#allocation2 + $0x5c] sm:$0xf] %vm5611, %v5526
  %5618 = vst.msk [vmem:[#allocation2 + $0x6c] sm:$0xf] %vm5611, %v5528
  %5619 = vst.msk [vmem:[#allocation2 + $0x7c] sm:$0xf] %vm5611, %v5530
  %5620 = vst.msk [vmem:[#allocation2 + $0x8c] sm:$0xf] %vm5611, %v5532
  %5621 = vst.msk [vmem:[#allocation2 + $0x9c] sm:$0xf] %vm5611, %v5534
  %5622 = vst.msk [vmem:[#allocation2 + $0xac] sm:$0xf] %vm5611, %v5536
  %5623 = vst.msk [vmem:[#allocation2 + $0xbc] sm:$0xf] %vm5611, %v5538
  %5624 = vst.msk [vmem:[#allocation2 + $0xcc] sm:$0xf] %vm5611, %v5540
  %5625 = vst.msk [vmem:[#allocation2 + $0xdc] sm:$0xf] %vm5611, %v5542
  %5626 = vst.msk [vmem:[#allocation2 + $0xec] sm:$0xf] %vm5611, %v5544
  %5627 = vst.msk [vmem:[#allocation2 + $0xfc] sm:$0xf] %vm5611, %v5546
  %5628 = vst.msk [vmem:[#allocation2 + $0x10c] sm:$0xf] %vm5611, %v5548
  %5629 = vst.msk [vmem:[#allocation2 + $0x11c] sm:$0xf] %vm5611, %v5550
  %5630 = vst.msk [vmem:[#allocation2 + $0x12c] sm:$0xf] %vm5611, %v5552
  %5631 = vst.msk [vmem:[#allocation2 + $0x13c] sm:$0xf] %vm5611, %v5554
  %5632 = vst.msk [vmem:[#allocation2 + $0x14c] sm:$0xf] %vm5611, %v5556
  %5633 = vst.msk [vmem:[#allocation2 + $0x15c] sm:$0xf] %vm5611, %v5558
  %5634 = vst.msk [vmem:[#allocation2 + $0x16c] sm:$0xf] %vm5611, %v5560
  %5635 = vst.msk [vmem:[#allocation2 + $0x17c] sm:$0xf] %vm5611, %v5562
  %5636 = vst.msk [vmem:[#allocation2 + $0x18c] sm:$0xf] %vm5611, %v5564
  %5637 = vst.msk [vmem:[#allocation2 + $0x19c] sm:$0xf] %vm5611, %v5566
  %5638 = vst.msk [vmem:[#allocation2 + $0x1ac] sm:$0xf] %vm5611, %v5568
  %5639 = vst.msk [vmem:[#allocation2 + $0x1bc] sm:$0xf] %vm5611, %v5570
  %5640 = vst.msk [vmem:[#allocation2 + $0x1cc] sm:$0xf] %vm5611, %v5572
  %5641 = vst.msk [vmem:[#allocation2 + $0x1dc] sm:$0xf] %vm5611, %v5574
  %5642 = vst.msk [vmem:[#allocation2 + $0x1ec] sm:$0xf] %vm5611, %v5576
  %5643 = vst.msk [vmem:[#allocation2 + $0x1fc] sm:$0xf] %vm5611, %v5578
  %v5644 = vld [vmem:[%s4264] sm:$0xe]
  %v5645 = vld [vmem:[%s4264 + $0x4] sm:$0xf]
  %v5646 = vld [vmem:[%s4264 + $0x8] sm:$0x1]
  %v5647 = vld [vmem:[%s4264 + $0xc] sm:$0xe]
  %v5648 = vld [vmem:[%s4264 + $0x10] sm:$0xf]
  %v5649 = vld [vmem:[%s4264 + $0x14] sm:$0x1]
  %v5650 = vld [vmem:[%s4264 + $0x18] sm:$0xe]
  %v5651 = vld [vmem:[%s4264 + $0x1c] sm:$0xf]
  %v5652 = vld [vmem:[%s4264 + $0x20] sm:$0x1]
  %v5653 = vld [vmem:[%s4264 + $0x24] sm:$0xe]
  %v5654 = vld [vmem:[%s4264 + $0x28] sm:$0xf]
  %v5655 = vld [vmem:[%s4264 + $0x2c] sm:$0x1]
  %v5656 = vld [vmem:[%s4264 + $0x30] sm:$0xe]
  %v5657 = vld [vmem:[%s4264 + $0x34] sm:$0xf]
  %v5658 = vld [vmem:[%s4264 + $0x38] sm:$0x1]
  %v5659 = vld [vmem:[%s4264 + $0x3c] sm:$0xe]
  %v5660 = vld [vmem:[%s4264 + $0x40] sm:$0xf]
  %v5661 = vld [vmem:[%s4264 + $0x44] sm:$0x1]
  %v5662 = vld [vmem:[%s4264 + $0x48] sm:$0xe]
  %v5663 = vld [vmem:[%s4264 + $0x4c] sm:$0xf]
  %v5664 = vld [vmem:[%s4264 + $0x50] sm:$0x1]
  %v5665 = vld [vmem:[%s4264 + $0x54] sm:$0xe]
  %v5666 = vld [vmem:[%s4264 + $0x58] sm:$0xf]
  %v5667 = vld [vmem:[%s4264 + $0x5c] sm:$0x1]
  %v5668 = vld [vmem:[%s4264 + $0x60] sm:$0xe]
  %v5669 = vld [vmem:[%s4264 + $0x64] sm:$0xf]
  %v5670 = vld [vmem:[%s4264 + $0x68] sm:$0x1]
  %v5671 = vld [vmem:[%s4264 + $0x6c] sm:$0xe]
  %v5672 = vld [vmem:[%s4264 + $0x70] sm:$0xf]
  %v5673 = vld [vmem:[%s4264 + $0x74] sm:$0x1]
  %v5674 = vld [vmem:[%s4264 + $0x78] sm:$0xe]
  %v5675 = vld [vmem:[%s4264 + $0x7c] sm:$0xf]
  %v5676 = vld [vmem:[%s4264 + $0x80] sm:$0x1]
  %v5677 = vld [vmem:[%s4264 + $0x84] sm:$0xe]
  %v5678 = vld [vmem:[%s4264 + $0x88] sm:$0xf]
  %v5679 = vld [vmem:[%s4264 + $0x8c] sm:$0x1]
  %v5680 = vld [vmem:[%s4264 + $0x90] sm:$0xe]
  %v5681 = vld [vmem:[%s4264 + $0x94] sm:$0xf]
  %v5682 = vld [vmem:[%s4264 + $0x98] sm:$0x1]
  %v5683 = vld [vmem:[%s4264 + $0x9c] sm:$0xe]
  %v5684 = vld [vmem:[%s4264 + $0xa0] sm:$0xf]
  %v5685 = vld [vmem:[%s4264 + $0xa4] sm:$0x1]
  %v5686 = vld [vmem:[%s4264 + $0xa8] sm:$0xe]
  %v5687 = vld [vmem:[%s4264 + $0xac] sm:$0xf]
  %v5688 = vld [vmem:[%s4264 + $0xb0] sm:$0x1]
  %v5689 = vld [vmem:[%s4264 + $0xb4] sm:$0xe]
  %v5690 = vld [vmem:[%s4264 + $0xb8] sm:$0xf]
  %v5691 = vld [vmem:[%s4264 + $0xbc] sm:$0x1]
  %v5740 = vrot.slane %v5644, 5
  %v5741 = vrot.slane %v5740, 4
  %v5742 = vrot.slane %v5645, 5
  %v5743 = vsel %vm1567, %v5741, %v5742
  %v5744 = vrot.slane %v5742, 4
  %v5745 = vrot.slane %v5646, 5
  %v5746 = vsel %vm1567, %v5744, %v5745
  %v5747 = vrot.slane %v5647, 5
  %v5748 = vrot.slane %v5747, 4
  %v5749 = vrot.slane %v5648, 5
  %v5750 = vsel %vm1567, %v5748, %v5749
  %v5751 = vrot.slane %v5749, 4
  %v5752 = vrot.slane %v5649, 5
  %v5753 = vsel %vm1567, %v5751, %v5752
  %v5754 = vrot.slane %v5650, 5
  %v5755 = vrot.slane %v5754, 4
  %v5756 = vrot.slane %v5651, 5
  %v5757 = vsel %vm1567, %v5755, %v5756
  %v5758 = vrot.slane %v5756, 4
  %v5759 = vrot.slane %v5652, 5
  %v5760 = vsel %vm1567, %v5758, %v5759
  %v5761 = vrot.slane %v5653, 5
  %v5762 = vrot.slane %v5761, 4
  %v5763 = vrot.slane %v5654, 5
  %v5764 = vsel %vm1567, %v5762, %v5763
  %v5765 = vrot.slane %v5763, 4
  %v5766 = vrot.slane %v5655, 5
  %v5767 = vsel %vm1567, %v5765, %v5766
  %v5768 = vrot.slane %v5656, 5
  %v5769 = vrot.slane %v5768, 4
  %v5770 = vrot.slane %v5657, 5
  %v5771 = vsel %vm1567, %v5769, %v5770
  %v5772 = vrot.slane %v5770, 4
  %v5773 = vrot.slane %v5658, 5
  %v5774 = vsel %vm1567, %v5772, %v5773
  %v5775 = vrot.slane %v5659, 5
  %v5776 = vrot.slane %v5775, 4
  %v5777 = vrot.slane %v5660, 5
  %v5778 = vsel %vm1567, %v5776, %v5777
  %v5779 = vrot.slane %v5777, 4
  %v5780 = vrot.slane %v5661, 5
  %v5781 = vsel %vm1567, %v5779, %v5780
  %v5782 = vrot.slane %v5662, 5
  %v5783 = vrot.slane %v5782, 4
  %v5784 = vrot.slane %v5663, 5
  %v5785 = vsel %vm1567, %v5783, %v5784
  %v5786 = vrot.slane %v5784, 4
  %v5787 = vrot.slane %v5664, 5
  %v5788 = vsel %vm1567, %v5786, %v5787
  %v5789 = vrot.slane %v5665, 5
  %v5790 = vrot.slane %v5789, 4
  %v5791 = vrot.slane %v5666, 5
  %v5792 = vsel %vm1567, %v5790, %v5791
  %v5793 = vrot.slane %v5791, 4
  %v5794 = vrot.slane %v5667, 5
  %v5795 = vsel %vm1567, %v5793, %v5794
  %v5796 = vrot.slane %v5668, 5
  %v5797 = vrot.slane %v5796, 4
  %v5798 = vrot.slane %v5669, 5
  %v5799 = vsel %vm1567, %v5797, %v5798
  %v5800 = vrot.slane %v5798, 4
  %v5801 = vrot.slane %v5670, 5
  %v5802 = vsel %vm1567, %v5800, %v5801
  %v5803 = vrot.slane %v5671, 5
  %v5804 = vrot.slane %v5803, 4
  %v5805 = vrot.slane %v5672, 5
  %v5806 = vsel %vm1567, %v5804, %v5805
  %v5807 = vrot.slane %v5805, 4
  %v5808 = vrot.slane %v5673, 5
  %v5809 = vsel %vm1567, %v5807, %v5808
  %v5810 = vrot.slane %v5674, 5
  %v5811 = vrot.slane %v5810, 4
  %v5812 = vrot.slane %v5675, 5
  %v5813 = vsel %vm1567, %v5811, %v5812
  %v5814 = vrot.slane %v5812, 4
  %v5815 = vrot.slane %v5676, 5
  %v5816 = vsel %vm1567, %v5814, %v5815
  %v5817 = vrot.slane %v5677, 5
  %v5818 = vrot.slane %v5817, 4
  %v5819 = vrot.slane %v5678, 5
  %v5820 = vsel %vm1567, %v5818, %v5819
  %v5821 = vrot.slane %v5819, 4
  %v5822 = vrot.slane %v5679, 5
  %v5823 = vsel %vm1567, %v5821, %v5822
  %v5824 = vrot.slane %v5680, 5
  %v5825 = vrot.slane %v5824, 4
  %v5826 = vrot.slane %v5681, 5
  %v5827 = vsel %vm1567, %v5825, %v5826
  %v5828 = vrot.slane %v5826, 4
  %v5829 = vrot.slane %v5682, 5
  %v5830 = vsel %vm1567, %v5828, %v5829
  %v5831 = vrot.slane %v5683, 5
  %v5832 = vrot.slane %v5831, 4
  %v5833 = vrot.slane %v5684, 5
  %v5834 = vsel %vm1567, %v5832, %v5833
  %v5835 = vrot.slane %v5833, 4
  %v5836 = vrot.slane %v5685, 5
  %v5837 = vsel %vm1567, %v5835, %v5836
  %v5838 = vrot.slane %v5686, 5
  %v5839 = vrot.slane %v5838, 4
  %v5840 = vrot.slane %v5687, 5
  %v5841 = vsel %vm1567, %v5839, %v5840
  %v5842 = vrot.slane %v5840, 4
  %v5843 = vrot.slane %v5688, 5
  %v5844 = vsel %vm1567, %v5842, %v5843
  %v5845 = vrot.slane %v5689, 5
  %v5846 = vrot.slane %v5845, 4
  %v5847 = vrot.slane %v5690, 5
  %v5848 = vsel %vm1567, %v5846, %v5847
  %v5849 = vrot.slane %v5847, 4
  %v5850 = vrot.slane %v5691, 5
  %v5851 = vsel %vm1567, %v5849, %v5850
  %5884 = vst.msk [vmem:[#allocation2 + $0x8] sm:$0xf] %vm118, %v5743
  %5885 = vst.msk [vmem:[#allocation2 + $0x18] sm:$0xf] %vm118, %v5746
  %5886 = vst.msk [vmem:[#allocation2 + $0x28] sm:$0xf] %vm118, %v5750
  %5887 = vst.msk [vmem:[#allocation2 + $0x38] sm:$0xf] %vm118, %v5753
  %5888 = vst.msk [vmem:[#allocation2 + $0x48] sm:$0xf] %vm118, %v5757
  %5889 = vst.msk [vmem:[#allocation2 + $0x58] sm:$0xf] %vm118, %v5760
  %5890 = vst.msk [vmem:[#allocation2 + $0x68] sm:$0xf] %vm118, %v5764
  %5891 = vst.msk [vmem:[#allocation2 + $0x78] sm:$0xf] %vm118, %v5767
  %5892 = vst.msk [vmem:[#allocation2 + $0x88] sm:$0xf] %vm118, %v5771
  %5893 = vst.msk [vmem:[#allocation2 + $0x98] sm:$0xf] %vm118, %v5774
  %5894 = vst.msk [vmem:[#allocation2 + $0xa8] sm:$0xf] %vm118, %v5778
  %5895 = vst.msk [vmem:[#allocation2 + $0xb8] sm:$0xf] %vm118, %v5781
  %5896 = vst.msk [vmem:[#allocation2 + $0xc8] sm:$0xf] %vm118, %v5785
  %5897 = vst.msk [vmem:[#allocation2 + $0xd8] sm:$0xf] %vm118, %v5788
  %5898 = vst.msk [vmem:[#allocation2 + $0xe8] sm:$0xf] %vm118, %v5792
  %5899 = vst.msk [vmem:[#allocation2 + $0xf8] sm:$0xf] %vm118, %v5795
  %5900 = vst.msk [vmem:[#allocation2 + $0x108] sm:$0xf] %vm118, %v5799
  %5901 = vst.msk [vmem:[#allocation2 + $0x118] sm:$0xf] %vm118, %v5802
  %5902 = vst.msk [vmem:[#allocation2 + $0x128] sm:$0xf] %vm118, %v5806
  %5903 = vst.msk [vmem:[#allocation2 + $0x138] sm:$0xf] %vm118, %v5809
  %5904 = vst.msk [vmem:[#allocation2 + $0x148] sm:$0xf] %vm118, %v5813
  %5905 = vst.msk [vmem:[#allocation2 + $0x158] sm:$0xf] %vm118, %v5816
  %5906 = vst.msk [vmem:[#allocation2 + $0x168] sm:$0xf] %vm118, %v5820
  %5907 = vst.msk [vmem:[#allocation2 + $0x178] sm:$0xf] %vm118, %v5823
  %5908 = vst.msk [vmem:[#allocation2 + $0x188] sm:$0xf] %vm118, %v5827
  %5909 = vst.msk [vmem:[#allocation2 + $0x198] sm:$0xf] %vm118, %v5830
  %5910 = vst.msk [vmem:[#allocation2 + $0x1a8] sm:$0xf] %vm118, %v5834
  %5911 = vst.msk [vmem:[#allocation2 + $0x1b8] sm:$0xf] %vm118, %v5837
  %5912 = vst.msk [vmem:[#allocation2 + $0x1c8] sm:$0xf] %vm118, %v5841
  %5913 = vst.msk [vmem:[#allocation2 + $0x1d8] sm:$0xf] %vm118, %v5844
  %5914 = vst.msk [vmem:[#allocation2 + $0x1e8] sm:$0xf] %vm118, %v5848
  %5915 = vst.msk [vmem:[#allocation2 + $0x1f8] sm:$0xf] %vm118, %v5851
  %v5916 = vld [vmem:[%s4457] sm:$0xe]
  %v5917 = vld [vmem:[%s4457 + $0x4] sm:$0xf]
  %v5918 = vld [vmem:[%s4457 + $0x8] sm:$0x1]
  %v5919 = vld [vmem:[%s4457 + $0xc] sm:$0xe]
  %v5920 = vld [vmem:[%s4457 + $0x10] sm:$0xf]
  %v5921 = vld [vmem:[%s4457 + $0x14] sm:$0x1]
  %v5922 = vld [vmem:[%s4457 + $0x18] sm:$0xe]
  %v5923 = vld [vmem:[%s4457 + $0x1c] sm:$0xf]
  %v5924 = vld [vmem:[%s4457 + $0x20] sm:$0x1]
  %v5925 = vld [vmem:[%s4457 + $0x24] sm:$0xe]
  %v5926 = vld [vmem:[%s4457 + $0x28] sm:$0xf]
  %v5927 = vld [vmem:[%s4457 + $0x2c] sm:$0x1]
  %v5928 = vld [vmem:[%s4457 + $0x30] sm:$0xe]
  %v5929 = vld [vmem:[%s4457 + $0x34] sm:$0xf]
  %v5930 = vld [vmem:[%s4457 + $0x38] sm:$0x1]
  %v5931 = vld [vmem:[%s4457 + $0x3c] sm:$0xe]
  %v5932 = vld [vmem:[%s4457 + $0x40] sm:$0xf]
  %v5933 = vld [vmem:[%s4457 + $0x44] sm:$0x1]
  %v5934 = vld [vmem:[%s4457 + $0x48] sm:$0xe]
  %v5935 = vld [vmem:[%s4457 + $0x4c] sm:$0xf]
  %v5936 = vld [vmem:[%s4457 + $0x50] sm:$0x1]
  %v5937 = vld [vmem:[%s4457 + $0x54] sm:$0xe]
  %v5938 = vld [vmem:[%s4457 + $0x58] sm:$0xf]
  %v5939 = vld [vmem:[%s4457 + $0x5c] sm:$0x1]
  %v5940 = vld [vmem:[%s4457 + $0x60] sm:$0xe]
  %v5941 = vld [vmem:[%s4457 + $0x64] sm:$0xf]
  %v5942 = vld [vmem:[%s4457 + $0x68] sm:$0x1]
  %v5943 = vld [vmem:[%s4457 + $0x6c] sm:$0xe]
  %v5944 = vld [vmem:[%s4457 + $0x70] sm:$0xf]
  %v5945 = vld [vmem:[%s4457 + $0x74] sm:$0x1]
  %v5946 = vld [vmem:[%s4457 + $0x78] sm:$0xe]
  %v5947 = vld [vmem:[%s4457 + $0x7c] sm:$0xf]
  %v5948 = vld [vmem:[%s4457 + $0x80] sm:$0x1]
  %v5949 = vld [vmem:[%s4457 + $0x84] sm:$0xe]
  %v5950 = vld [vmem:[%s4457 + $0x88] sm:$0xf]
  %v5951 = vld [vmem:[%s4457 + $0x8c] sm:$0x1]
  %v5952 = vld [vmem:[%s4457 + $0x90] sm:$0xe]
  %v5953 = vld [vmem:[%s4457 + $0x94] sm:$0xf]
  %v5954 = vld [vmem:[%s4457 + $0x98] sm:$0x1]
  %v5955 = vld [vmem:[%s4457 + $0x9c] sm:$0xe]
  %v5956 = vld [vmem:[%s4457 + $0xa0] sm:$0xf]
  %v5957 = vld [vmem:[%s4457 + $0xa4] sm:$0x1]
  %v5958 = vld [vmem:[%s4457 + $0xa8] sm:$0xe]
  %v5959 = vld [vmem:[%s4457 + $0xac] sm:$0xf]
  %v5960 = vld [vmem:[%s4457 + $0xb0] sm:$0x1]
  %v5961 = vld [vmem:[%s4457 + $0xb4] sm:$0xe]
  %v5962 = vld [vmem:[%s4457 + $0xb8] sm:$0xf]
  %v5963 = vld [vmem:[%s4457 + $0xbc] sm:$0x1]
  %v6012 = vrot.slane %v5916, 5
  %v6013 = vrot.slane %v6012, 4
  %v6014 = vrot.slane %v5917, 5
  %v6015 = vsel %vm1567, %v6013, %v6014
  %v6016 = vrot.slane %v6014, 4
  %v6017 = vrot.slane %v5918, 5
  %v6018 = vsel %vm1567, %v6016, %v6017
  %v6019 = vrot.slane %v5919, 5
  %v6020 = vrot.slane %v6019, 4
  %v6021 = vrot.slane %v5920, 5
  %v6022 = vsel %vm1567, %v6020, %v6021
  %v6023 = vrot.slane %v6021, 4
  %v6024 = vrot.slane %v5921, 5
  %v6025 = vsel %vm1567, %v6023, %v6024
  %v6026 = vrot.slane %v5922, 5
  %v6027 = vrot.slane %v6026, 4
  %v6028 = vrot.slane %v5923, 5
  %v6029 = vsel %vm1567, %v6027, %v6028
  %v6030 = vrot.slane %v6028, 4
  %v6031 = vrot.slane %v5924, 5
  %v6032 = vsel %vm1567, %v6030, %v6031
  %v6033 = vrot.slane %v5925, 5
  %v6034 = vrot.slane %v6033, 4
  %v6035 = vrot.slane %v5926, 5
  %v6036 = vsel %vm1567, %v6034, %v6035
  %v6037 = vrot.slane %v6035, 4
  %v6038 = vrot.slane %v5927, 5
  %v6039 = vsel %vm1567, %v6037, %v6038
  %v6040 = vrot.slane %v5928, 5
  %v6041 = vrot.slane %v6040, 4
  %v6042 = vrot.slane %v5929, 5
  %v6043 = vsel %vm1567, %v6041, %v6042
  %v6044 = vrot.slane %v6042, 4
  %v6045 = vrot.slane %v5930, 5
  %v6046 = vsel %vm1567, %v6044, %v6045
  %v6047 = vrot.slane %v5931, 5
  %v6048 = vrot.slane %v6047, 4
  %v6049 = vrot.slane %v5932, 5
  %v6050 = vsel %vm1567, %v6048, %v6049
  %v6051 = vrot.slane %v6049, 4
  %v6052 = vrot.slane %v5933, 5
  %v6053 = vsel %vm1567, %v6051, %v6052
  %v6054 = vrot.slane %v5934, 5
  %v6055 = vrot.slane %v6054, 4
  %v6056 = vrot.slane %v5935, 5
  %v6057 = vsel %vm1567, %v6055, %v6056
  %v6058 = vrot.slane %v6056, 4
  %v6059 = vrot.slane %v5936, 5
  %v6060 = vsel %vm1567, %v6058, %v6059
  %v6061 = vrot.slane %v5937, 5
  %v6062 = vrot.slane %v6061, 4
  %v6063 = vrot.slane %v5938, 5
  %v6064 = vsel %vm1567, %v6062, %v6063
  %v6065 = vrot.slane %v6063, 4
  %v6066 = vrot.slane %v5939, 5
  %v6067 = vsel %vm1567, %v6065, %v6066
  %v6068 = vrot.slane %v5940, 5
  %v6069 = vrot.slane %v6068, 4
  %v6070 = vrot.slane %v5941, 5
  %v6071 = vsel %vm1567, %v6069, %v6070
  %v6072 = vrot.slane %v6070, 4
  %v6073 = vrot.slane %v5942, 5
  %v6074 = vsel %vm1567, %v6072, %v6073
  %v6075 = vrot.slane %v5943, 5
  %v6076 = vrot.slane %v6075, 4
  %v6077 = vrot.slane %v5944, 5
  %v6078 = vsel %vm1567, %v6076, %v6077
  %v6079 = vrot.slane %v6077, 4
  %v6080 = vrot.slane %v5945, 5
  %v6081 = vsel %vm1567, %v6079, %v6080
  %v6082 = vrot.slane %v5946, 5
  %v6083 = vrot.slane %v6082, 4
  %v6084 = vrot.slane %v5947, 5
  %v6085 = vsel %vm1567, %v6083, %v6084
  %v6086 = vrot.slane %v6084, 4
  %v6087 = vrot.slane %v5948, 5
  %v6088 = vsel %vm1567, %v6086, %v6087
  %v6089 = vrot.slane %v5949, 5
  %v6090 = vrot.slane %v6089, 4
  %v6091 = vrot.slane %v5950, 5
  %v6092 = vsel %vm1567, %v6090, %v6091
  %v6093 = vrot.slane %v6091, 4
  %v6094 = vrot.slane %v5951, 5
  %v6095 = vsel %vm1567, %v6093, %v6094
  %v6096 = vrot.slane %v5952, 5
  %v6097 = vrot.slane %v6096, 4
  %v6098 = vrot.slane %v5953, 5
  %v6099 = vsel %vm1567, %v6097, %v6098
  %v6100 = vrot.slane %v6098, 4
  %v6101 = vrot.slane %v5954, 5
  %v6102 = vsel %vm1567, %v6100, %v6101
  %v6103 = vrot.slane %v5955, 5
  %v6104 = vrot.slane %v6103, 4
  %v6105 = vrot.slane %v5956, 5
  %v6106 = vsel %vm1567, %v6104, %v6105
  %v6107 = vrot.slane %v6105, 4
  %v6108 = vrot.slane %v5957, 5
  %v6109 = vsel %vm1567, %v6107, %v6108
  %v6110 = vrot.slane %v5958, 5
  %v6111 = vrot.slane %v6110, 4
  %v6112 = vrot.slane %v5959, 5
  %v6113 = vsel %vm1567, %v6111, %v6112
  %v6114 = vrot.slane %v6112, 4
  %v6115 = vrot.slane %v5960, 5
  %v6116 = vsel %vm1567, %v6114, %v6115
  %v6117 = vrot.slane %v5961, 5
  %v6118 = vrot.slane %v6117, 4
  %v6119 = vrot.slane %v5962, 5
  %v6120 = vsel %vm1567, %v6118, %v6119
  %v6121 = vrot.slane %v6119, 4
  %v6122 = vrot.slane %v5963, 5
  %v6123 = vsel %vm1567, %v6121, %v6122
  %6124 = vrot.lane.b32.xlu0 %v6015, 32
  %v6125 = vpop.permute.xlu0 %6124
  %6126 = vrot.lane.b32.xlu0 %v6018, 32
  %v6127 = vpop.permute.xlu0 %6126
  %6128 = vrot.lane.b32.xlu0 %v6022, 32
  %v6129 = vpop.permute.xlu0 %6128
  %6130 = vrot.lane.b32.xlu0 %v6025, 32
  %v6131 = vpop.permute.xlu0 %6130
  %6132 = vrot.lane.b32.xlu0 %v6029, 32
  %v6133 = vpop.permute.xlu0 %6132
  %6134 = vrot.lane.b32.xlu0 %v6032, 32
  %v6135 = vpop.permute.xlu0 %6134
  %6136 = vrot.lane.b32.xlu0 %v6036, 32
  %v6137 = vpop.permute.xlu0 %6136
  %6138 = vrot.lane.b32.xlu0 %v6039, 32
  %v6139 = vpop.permute.xlu0 %6138
  %6140 = vrot.lane.b32.xlu0 %v6043, 32
  %v6141 = vpop.permute.xlu0 %6140
  %6142 = vrot.lane.b32.xlu0 %v6046, 32
  %v6143 = vpop.permute.xlu0 %6142
  %6144 = vrot.lane.b32.xlu0 %v6050, 32
  %v6145 = vpop.permute.xlu0 %6144
  %6146 = vrot.lane.b32.xlu0 %v6053, 32
  %v6147 = vpop.permute.xlu0 %6146
  %6148 = vrot.lane.b32.xlu0 %v6057, 32
  %v6149 = vpop.permute.xlu0 %6148
  %6150 = vrot.lane.b32.xlu0 %v6060, 32
  %v6151 = vpop.permute.xlu0 %6150
  %6152 = vrot.lane.b32.xlu0 %v6064, 32
  %v6153 = vpop.permute.xlu0 %6152
  %6154 = vrot.lane.b32.xlu0 %v6067, 32
  %v6155 = vpop.permute.xlu0 %6154
  %6156 = vrot.lane.b32.xlu0 %v6071, 32
  %v6157 = vpop.permute.xlu0 %6156
  %6158 = vrot.lane.b32.xlu0 %v6074, 32
  %v6159 = vpop.permute.xlu0 %6158
  %6160 = vrot.lane.b32.xlu0 %v6078, 32
  %v6161 = vpop.permute.xlu0 %6160
  %6162 = vrot.lane.b32.xlu0 %v6081, 32
  %v6163 = vpop.permute.xlu0 %6162
  %6164 = vrot.lane.b32.xlu0 %v6085, 32
  %v6165 = vpop.permute.xlu0 %6164
  %6166 = vrot.lane.b32.xlu0 %v6088, 32
  %v6167 = vpop.permute.xlu0 %6166
  %6168 = vrot.lane.b32.xlu0 %v6092, 32
  %v6169 = vpop.permute.xlu0 %6168
  %6170 = vrot.lane.b32.xlu0 %v6095, 32
  %v6171 = vpop.permute.xlu0 %6170
  %6172 = vrot.lane.b32.xlu0 %v6099, 32
  %v6173 = vpop.permute.xlu0 %6172
  %6174 = vrot.lane.b32.xlu0 %v6102, 32
  %v6175 = vpop.permute.xlu0 %6174
  %6176 = vrot.lane.b32.xlu0 %v6106, 32
  %v6177 = vpop.permute.xlu0 %6176
  %6178 = vrot.lane.b32.xlu0 %v6109, 32
  %v6179 = vpop.permute.xlu0 %6178
  %6180 = vrot.lane.b32.xlu0 %v6113, 32
  %v6181 = vpop.permute.xlu0 %6180
  %6182 = vrot.lane.b32.xlu0 %v6116, 32
  %v6183 = vpop.permute.xlu0 %6182
  %6184 = vrot.lane.b32.xlu0 %v6120, 32
  %v6185 = vpop.permute.xlu0 %6184
  %6186 = vrot.lane.b32.xlu0 %v6123, 32
  %v6187 = vpop.permute.xlu0 %6186
  %6220 = vst.msk [vmem:[#allocation2 + $0xc] sm:$0xf] %vm311, %v6125
  %6221 = vst.msk [vmem:[#allocation2 + $0x1c] sm:$0xf] %vm311, %v6127
  %6222 = vst.msk [vmem:[#allocation2 + $0x2c] sm:$0xf] %vm311, %v6129
  %6223 = vst.msk [vmem:[#allocation2 + $0x3c] sm:$0xf] %vm311, %v6131
  %6224 = vst.msk [vmem:[#allocation2 + $0x4c] sm:$0xf] %vm311, %v6133
  %6225 = vst.msk [vmem:[#allocation2 + $0x5c] sm:$0xf] %vm311, %v6135
  %6226 = vst.msk [vmem:[#allocation2 + $0x6c] sm:$0xf] %vm311, %v6137
  %6227 = vst.msk [vmem:[#allocation2 + $0x7c] sm:$0xf] %vm311, %v6139
  %6228 = vst.msk [vmem:[#allocation2 + $0x8c] sm:$0xf] %vm311, %v6141
  %6229 = vst.msk [vmem:[#allocation2 + $0x9c] sm:$0xf] %vm311, %v6143
  %6230 = vst.msk [vmem:[#allocation2 + $0xac] sm:$0xf] %vm311, %v6145
  %6231 = vst.msk [vmem:[#allocation2 + $0xbc] sm:$0xf] %vm311, %v6147
  %6232 = vst.msk [vmem:[#allocation2 + $0xcc] sm:$0xf] %vm311, %v6149
  %6233 = vst.msk [vmem:[#allocation2 + $0xdc] sm:$0xf] %vm311, %v6151
  %6234 = vst.msk [vmem:[#allocation2 + $0xec] sm:$0xf] %vm311, %v6153
  %6235 = vst.msk [vmem:[#allocation2 + $0xfc] sm:$0xf] %vm311, %v6155
  %6236 = vst.msk [vmem:[#allocation2 + $0x10c] sm:$0xf] %vm311, %v6157
  %6237 = vst.msk [vmem:[#allocation2 + $0x11c] sm:$0xf] %vm311, %v6159
  %6238 = vst.msk [vmem:[#allocation2 + $0x12c] sm:$0xf] %vm311, %v6161
  %6239 = vst.msk [vmem:[#allocation2 + $0x13c] sm:$0xf] %vm311, %v6163
  %6240 = vst.msk [vmem:[#allocation2 + $0x14c] sm:$0xf] %vm311, %v6165
  %6241 = vst.msk [vmem:[#allocation2 + $0x15c] sm:$0xf] %vm311, %v6167
  %6242 = vst.msk [vmem:[#allocation2 + $0x16c] sm:$0xf] %vm311, %v6169
  %6243 = vst.msk [vmem:[#allocation2 + $0x17c] sm:$0xf] %vm311, %v6171
  %6244 = vst.msk [vmem:[#allocation2 + $0x18c] sm:$0xf] %vm311, %v6173
  %6245 = vst.msk [vmem:[#allocation2 + $0x19c] sm:$0xf] %vm311, %v6175
  %6246 = vst.msk [vmem:[#allocation2 + $0x1ac] sm:$0xf] %vm311, %v6177
  %6247 = vst.msk [vmem:[#allocation2 + $0x1bc] sm:$0xf] %vm311, %v6179
  %6248 = vst.msk [vmem:[#allocation2 + $0x1cc] sm:$0xf] %vm311, %v6181
  %6249 = vst.msk [vmem:[#allocation2 + $0x1dc] sm:$0xf] %vm311, %v6183
  %6250 = vst.msk [vmem:[#allocation2 + $0x1ec] sm:$0xf] %vm311, %v6185
  %6251 = vst.msk [vmem:[#allocation2 + $0x1fc] sm:$0xf] %vm311, %v6187
  %s6252 = scalar_lea.vmem %s0, 216
  %v6253 = vld [vmem:[%s6252] sm:$0xf]
  %v6254 = vld [vmem:[%s6252 + $0x4] sm:$0xf]
  %v6255 = vld [vmem:[%s6252 + $0xc] sm:$0xf]
  %v6256 = vld [vmem:[%s6252 + $0x10] sm:$0xf]
  %v6257 = vld [vmem:[%s6252 + $0x18] sm:$0xf]
  %v6258 = vld [vmem:[%s6252 + $0x1c] sm:$0xf]
  %v6259 = vld [vmem:[%s6252 + $0x24] sm:$0xf]
  %v6260 = vld [vmem:[%s6252 + $0x28] sm:$0xf]
  %v6261 = vld [vmem:[%s6252 + $0x30] sm:$0xf]
  %v6262 = vld [vmem:[%s6252 + $0x34] sm:$0xf]
  %v6263 = vld [vmem:[%s6252 + $0x3c] sm:$0xf]
  %v6264 = vld [vmem:[%s6252 + $0x40] sm:$0xf]
  %v6265 = vld [vmem:[%s6252 + $0x48] sm:$0xf]
  %v6266 = vld [vmem:[%s6252 + $0x4c] sm:$0xf]
  %v6267 = vld [vmem:[%s6252 + $0x54] sm:$0xf]
  %v6268 = vld [vmem:[%s6252 + $0x58] sm:$0xf]
  %v6269 = vld [vmem:[%s6252 + $0x60] sm:$0xf]
  %v6270 = vld [vmem:[%s6252 + $0x64] sm:$0xf]
  %v6271 = vld [vmem:[%s6252 + $0x6c] sm:$0xf]
  %v6272 = vld [vmem:[%s6252 + $0x70] sm:$0xf]
  %v6273 = vld [vmem:[%s6252 + $0x78] sm:$0xf]
  %v6274 = vld [vmem:[%s6252 + $0x7c] sm:$0xf]
  %v6275 = vld [vmem:[%s6252 + $0x84] sm:$0xf]
  %v6276 = vld [vmem:[%s6252 + $0x88] sm:$0xf]
  %v6277 = vld [vmem:[%s6252 + $0x90] sm:$0xf]
  %v6278 = vld [vmem:[%s6252 + $0x94] sm:$0xf]
  %v6279 = vld [vmem:[%s6252 + $0x9c] sm:$0xf]
  %v6280 = vld [vmem:[%s6252 + $0xa0] sm:$0xf]
  %v6281 = vld [vmem:[%s6252 + $0xa8] sm:$0xf]
  %v6282 = vld [vmem:[%s6252 + $0xac] sm:$0xf]
  %v6283 = vld [vmem:[%s6252 + $0xb4] sm:$0xf]
  %v6284 = vld [vmem:[%s6252 + $0xb8] sm:$0xf]
  %6285 = vst.msk [vmem:[#allocation2 + $0x200] sm:$0xf] %vm118, %v6253
  %6286 = vst.msk [vmem:[#allocation2 + $0x210] sm:$0xf] %vm118, %v6254
  %6287 = vst.msk [vmem:[#allocation2 + $0x220] sm:$0xf] %vm118, %v6255
  %6288 = vst.msk [vmem:[#allocation2 + $0x230] sm:$0xf] %vm118, %v6256
  %6289 = vst.msk [vmem:[#allocation2 + $0x240] sm:$0xf] %vm118, %v6257
  %6290 = vst.msk [vmem:[#allocation2 + $0x250] sm:$0xf] %vm118, %v6258
  %6291 = vst.msk [vmem:[#allocation2 + $0x260] sm:$0xf] %vm118, %v6259
  %6292 = vst.msk [vmem:[#allocation2 + $0x270] sm:$0xf] %vm118, %v6260
  %6293 = vst.msk [vmem:[#allocation2 + $0x280] sm:$0xf] %vm118, %v6261
  %6294 = vst.msk [vmem:[#allocation2 + $0x290] sm:$0xf] %vm118, %v6262
  %6295 = vst.msk [vmem:[#allocation2 + $0x2a0] sm:$0xf] %vm118, %v6263
  %6296 = vst.msk [vmem:[#allocation2 + $0x2b0] sm:$0xf] %vm118, %v6264
  %6297 = vst.msk [vmem:[#allocation2 + $0x2c0] sm:$0xf] %vm118, %v6265
  %6298 = vst.msk [vmem:[#allocation2 + $0x2d0] sm:$0xf] %vm118, %v6266
  %6299 = vst.msk [vmem:[#allocation2 + $0x2e0] sm:$0xf] %vm118, %v6267
  %6300 = vst.msk [vmem:[#allocation2 + $0x2f0] sm:$0xf] %vm118, %v6268
  %6301 = vst.msk [vmem:[#allocation2 + $0x300] sm:$0xf] %vm118, %v6269
  %6302 = vst.msk [vmem:[#allocation2 + $0x310] sm:$0xf] %vm118, %v6270
  %6303 = vst.msk [vmem:[#allocation2 + $0x320] sm:$0xf] %vm118, %v6271
  %6304 = vst.msk [vmem:[#allocation2 + $0x330] sm:$0xf] %vm118, %v6272
  %6305 = vst.msk [vmem:[#allocation2 + $0x340] sm:$0xf] %vm118, %v6273
  %6306 = vst.msk [vmem:[#allocation2 + $0x350] sm:$0xf] %vm118, %v6274
  %6307 = vst.msk [vmem:[#allocation2 + $0x360] sm:$0xf] %vm118, %v6275
  %6308 = vst.msk [vmem:[#allocation2 + $0x370] sm:$0xf] %vm118, %v6276
  %6309 = vst.msk [vmem:[#allocation2 + $0x380] sm:$0xf] %vm118, %v6277
  %6310 = vst.msk [vmem:[#allocation2 + $0x390] sm:$0xf] %vm118, %v6278
  %6311 = vst.msk [vmem:[#allocation2 + $0x3a0] sm:$0xf] %vm118, %v6279
  %6312 = vst.msk [vmem:[#allocation2 + $0x3b0] sm:$0xf] %vm118, %v6280
  %6313 = vst.msk [vmem:[#allocation2 + $0x3c0] sm:$0xf] %vm118, %v6281
  %6314 = vst.msk [vmem:[#allocation2 + $0x3d0] sm:$0xf] %vm118, %v6282
  %6315 = vst.msk [vmem:[#allocation2 + $0x3e0] sm:$0xf] %vm118, %v6283
  %6316 = vst.msk [vmem:[#allocation2 + $0x3f0] sm:$0xf] %vm118, %v6284
  %s6317 = scalar_lea.vmem %s1, 216
  %v6318 = vld [vmem:[%s6317] sm:$0xf]
  %v6319 = vld [vmem:[%s6317 + $0x4] sm:$0xf]
  %v6320 = vld [vmem:[%s6317 + $0xc] sm:$0xf]
  %v6321 = vld [vmem:[%s6317 + $0x10] sm:$0xf]
  %v6322 = vld [vmem:[%s6317 + $0x18] sm:$0xf]
  %v6323 = vld [vmem:[%s6317 + $0x1c] sm:$0xf]
  %v6324 = vld [vmem:[%s6317 + $0x24] sm:$0xf]
  %v6325 = vld [vmem:[%s6317 + $0x28] sm:$0xf]
  %v6326 = vld [vmem:[%s6317 + $0x30] sm:$0xf]
  %v6327 = vld [vmem:[%s6317 + $0x34] sm:$0xf]
  %v6328 = vld [vmem:[%s6317 + $0x3c] sm:$0xf]
  %v6329 = vld [vmem:[%s6317 + $0x40] sm:$0xf]
  %v6330 = vld [vmem:[%s6317 + $0x48] sm:$0xf]
  %v6331 = vld [vmem:[%s6317 + $0x4c] sm:$0xf]
  %v6332 = vld [vmem:[%s6317 + $0x54] sm:$0xf]
  %v6333 = vld [vmem:[%s6317 + $0x58] sm:$0xf]
  %v6334 = vld [vmem:[%s6317 + $0x60] sm:$0xf]
  %v6335 = vld [vmem:[%s6317 + $0x64] sm:$0xf]
  %v6336 = vld [vmem:[%s6317 + $0x6c] sm:$0xf]
  %v6337 = vld [vmem:[%s6317 + $0x70] sm:$0xf]
  %v6338 = vld [vmem:[%s6317 + $0x78] sm:$0xf]
  %v6339 = vld [vmem:[%s6317 + $0x7c] sm:$0xf]
  %v6340 = vld [vmem:[%s6317 + $0x84] sm:$0xf]
  %v6341 = vld [vmem:[%s6317 + $0x88] sm:$0xf]
  %v6342 = vld [vmem:[%s6317 + $0x90] sm:$0xf]
  %v6343 = vld [vmem:[%s6317 + $0x94] sm:$0xf]
  %v6344 = vld [vmem:[%s6317 + $0x9c] sm:$0xf]
  %v6345 = vld [vmem:[%s6317 + $0xa0] sm:$0xf]
  %v6346 = vld [vmem:[%s6317 + $0xa8] sm:$0xf]
  %v6347 = vld [vmem:[%s6317 + $0xac] sm:$0xf]
  %v6348 = vld [vmem:[%s6317 + $0xb4] sm:$0xf]
  %v6349 = vld [vmem:[%s6317 + $0xb8] sm:$0xf]
  %6382 = vrot.lane.b32.xlu0 %v6318, 32
  %v6383 = vpop.permute.xlu0 %6382
  %6384 = vrot.lane.b32.xlu0 %v6319, 32
  %v6385 = vpop.permute.xlu0 %6384
  %6386 = vrot.lane.b32.xlu0 %v6320, 32
  %v6387 = vpop.permute.xlu0 %6386
  %6388 = vrot.lane.b32.xlu0 %v6321, 32
  %v6389 = vpop.permute.xlu0 %6388
  %6390 = vrot.lane.b32.xlu0 %v6322, 32
  %v6391 = vpop.permute.xlu0 %6390
  %6392 = vrot.lane.b32.xlu0 %v6323, 32
  %v6393 = vpop.permute.xlu0 %6392
  %6394 = vrot.lane.b32.xlu0 %v6324, 32
  %v6395 = vpop.permute.xlu0 %6394
  %6396 = vrot.lane.b32.xlu0 %v6325, 32
  %v6397 = vpop.permute.xlu0 %6396
  %6398 = vrot.lane.b32.xlu0 %v6326, 32
  %v6399 = vpop.permute.xlu0 %6398
  %6400 = vrot.lane.b32.xlu0 %v6327, 32
  %v6401 = vpop.permute.xlu0 %6400
  %6402 = vrot.lane.b32.xlu0 %v6328, 32
  %v6403 = vpop.permute.xlu0 %6402
  %6404 = vrot.lane.b32.xlu0 %v6329, 32
  %v6405 = vpop.permute.xlu0 %6404
  %6406 = vrot.lane.b32.xlu0 %v6330, 32
  %v6407 = vpop.permute.xlu0 %6406
  %6408 = vrot.lane.b32.xlu0 %v6331, 32
  %v6409 = vpop.permute.xlu0 %6408
  %6410 = vrot.lane.b32.xlu0 %v6332, 32
  %v6411 = vpop.permute.xlu0 %6410
  %6412 = vrot.lane.b32.xlu0 %v6333, 32
  %v6413 = vpop.permute.xlu0 %6412
  %6414 = vrot.lane.b32.xlu0 %v6334, 32
  %v6415 = vpop.permute.xlu0 %6414
  %6416 = vrot.lane.b32.xlu0 %v6335, 32
  %v6417 = vpop.permute.xlu0 %6416
  %6418 = vrot.lane.b32.xlu0 %v6336, 32
  %v6419 = vpop.permute.xlu0 %6418
  %6420 = vrot.lane.b32.xlu0 %v6337, 32
  %v6421 = vpop.permute.xlu0 %6420
  %6422 = vrot.lane.b32.xlu0 %v6338, 32
  %v6423 = vpop.permute.xlu0 %6422
  %6424 = vrot.lane.b32.xlu0 %v6339, 32
  %v6425 = vpop.permute.xlu0 %6424
  %6426 = vrot.lane.b32.xlu0 %v6340, 32
  %v6427 = vpop.permute.xlu0 %6426
  %6428 = vrot.lane.b32.xlu0 %v6341, 32
  %v6429 = vpop.permute.xlu0 %6428
  %6430 = vrot.lane.b32.xlu0 %v6342, 32
  %v6431 = vpop.permute.xlu0 %6430
  %6432 = vrot.lane.b32.xlu0 %v6343, 32
  %v6433 = vpop.permute.xlu0 %6432
  %6434 = vrot.lane.b32.xlu0 %v6344, 32
  %v6435 = vpop.permute.xlu0 %6434
  %6436 = vrot.lane.b32.xlu0 %v6345, 32
  %v6437 = vpop.permute.xlu0 %6436
  %6438 = vrot.lane.b32.xlu0 %v6346, 32
  %v6439 = vpop.permute.xlu0 %6438
  %6440 = vrot.lane.b32.xlu0 %v6347, 32
  %v6441 = vpop.permute.xlu0 %6440
  %6442 = vrot.lane.b32.xlu0 %v6348, 32
  %v6443 = vpop.permute.xlu0 %6442
  %6444 = vrot.lane.b32.xlu0 %v6349, 32
  %v6445 = vpop.permute.xlu0 %6444
  %6478 = vst.msk [vmem:[#allocation2 + $0x208] sm:$0xf] %vm311, %v6383
  %6479 = vst.msk [vmem:[#allocation2 + $0x218] sm:$0xf] %vm311, %v6385
  %6480 = vst.msk [vmem:[#allocation2 + $0x228] sm:$0xf] %vm311, %v6387
  %6481 = vst.msk [vmem:[#allocation2 + $0x238] sm:$0xf] %vm311, %v6389
  %6482 = vst.msk [vmem:[#allocation2 + $0x248] sm:$0xf] %vm311, %v6391
  %6483 = vst.msk [vmem:[#allocation2 + $0x258] sm:$0xf] %vm311, %v6393
  %6484 = vst.msk [vmem:[#allocation2 + $0x268] sm:$0xf] %vm311, %v6395
  %6485 = vst.msk [vmem:[#allocation2 + $0x278] sm:$0xf] %vm311, %v6397
  %6486 = vst.msk [vmem:[#allocation2 + $0x288] sm:$0xf] %vm311, %v6399
  %6487 = vst.msk [vmem:[#allocation2 + $0x298] sm:$0xf] %vm311, %v6401
  %6488 = vst.msk [vmem:[#allocation2 + $0x2a8] sm:$0xf] %vm311, %v6403
  %6489 = vst.msk [vmem:[#allocation2 + $0x2b8] sm:$0xf] %vm311, %v6405
  %6490 = vst.msk [vmem:[#allocation2 + $0x2c8] sm:$0xf] %vm311, %v6407
  %6491 = vst.msk [vmem:[#allocation2 + $0x2d8] sm:$0xf] %vm311, %v6409
  %6492 = vst.msk [vmem:[#allocation2 + $0x2e8] sm:$0xf] %vm311, %v6411
  %6493 = vst.msk [vmem:[#allocation2 + $0x2f8] sm:$0xf] %vm311, %v6413
  %6494 = vst.msk [vmem:[#allocation2 + $0x308] sm:$0xf] %vm311, %v6415
  %6495 = vst.msk [vmem:[#allocation2 + $0x318] sm:$0xf] %vm311, %v6417
  %6496 = vst.msk [vmem:[#allocation2 + $0x328] sm:$0xf] %vm311, %v6419
  %6497 = vst.msk [vmem:[#allocation2 + $0x338] sm:$0xf] %vm311, %v6421
  %6498 = vst.msk [vmem:[#allocation2 + $0x348] sm:$0xf] %vm311, %v6423
  %6499 = vst.msk [vmem:[#allocation2 + $0x358] sm:$0xf] %vm311, %v6425
  %6500 = vst.msk [vmem:[#allocation2 + $0x368] sm:$0xf] %vm311, %v6427
  %6501 = vst.msk [vmem:[#allocation2 + $0x378] sm:$0xf] %vm311, %v6429
  %6502 = vst.msk [vmem:[#allocation2 + $0x388] sm:$0xf] %vm311, %v6431
  %6503 = vst.msk [vmem:[#allocation2 + $0x398] sm:$0xf] %vm311, %v6433
  %6504 = vst.msk [vmem:[#allocation2 + $0x3a8] sm:$0xf] %vm311, %v6435
  %6505 = vst.msk [vmem:[#allocation2 + $0x3b8] sm:$0xf] %vm311, %v6437
  %6506 = vst.msk [vmem:[#allocation2 + $0x3c8] sm:$0xf] %vm311, %v6439
  %6507 = vst.msk [vmem:[#allocation2 + $0x3d8] sm:$0xf] %vm311, %v6441
  %6508 = vst.msk [vmem:[#allocation2 + $0x3e8] sm:$0xf] %vm311, %v6443
  %6509 = vst.msk [vmem:[#allocation2 + $0x3f8] sm:$0xf] %vm311, %v6445
  %v6510 = vld [vmem:[%s6252] sm:$0xf]
  %v6511 = vld [vmem:[%s6252 + $0x4] sm:$0xf]
  %v6512 = vld [vmem:[%s6252 + $0x8] sm:$0x1]
  %v6513 = vld [vmem:[%s6252 + $0xc] sm:$0xf]
  %v6514 = vld [vmem:[%s6252 + $0x10] sm:$0xf]
  %v6515 = vld [vmem:[%s6252 + $0x14] sm:$0x1]
  %v6516 = vld [vmem:[%s6252 + $0x18] sm:$0xf]
  %v6517 = vld [vmem:[%s6252 + $0x1c] sm:$0xf]
  %v6518 = vld [vmem:[%s6252 + $0x20] sm:$0x1]
  %v6519 = vld [vmem:[%s6252 + $0x24] sm:$0xf]
  %v6520 = vld [vmem:[%s6252 + $0x28] sm:$0xf]
  %v6521 = vld [vmem:[%s6252 + $0x2c] sm:$0x1]
  %v6522 = vld [vmem:[%s6252 + $0x30] sm:$0xf]
  %v6523 = vld [vmem:[%s6252 + $0x34] sm:$0xf]
  %v6524 = vld [vmem:[%s6252 + $0x38] sm:$0x1]
  %v6525 = vld [vmem:[%s6252 + $0x3c] sm:$0xf]
  %v6526 = vld [vmem:[%s6252 + $0x40] sm:$0xf]
  %v6527 = vld [vmem:[%s6252 + $0x44] sm:$0x1]
  %v6528 = vld [vmem:[%s6252 + $0x48] sm:$0xf]
  %v6529 = vld [vmem:[%s6252 + $0x4c] sm:$0xf]
  %v6530 = vld [vmem:[%s6252 + $0x50] sm:$0x1]
  %v6531 = vld [vmem:[%s6252 + $0x54] sm:$0xf]
  %v6532 = vld [vmem:[%s6252 + $0x58] sm:$0xf]
  %v6533 = vld [vmem:[%s6252 + $0x5c] sm:$0x1]
  %v6534 = vld [vmem:[%s6252 + $0x60] sm:$0xf]
  %v6535 = vld [vmem:[%s6252 + $0x64] sm:$0xf]
  %v6536 = vld [vmem:[%s6252 + $0x68] sm:$0x1]
  %v6537 = vld [vmem:[%s6252 + $0x6c] sm:$0xf]
  %v6538 = vld [vmem:[%s6252 + $0x70] sm:$0xf]
  %v6539 = vld [vmem:[%s6252 + $0x74] sm:$0x1]
  %v6540 = vld [vmem:[%s6252 + $0x78] sm:$0xf]
  %v6541 = vld [vmem:[%s6252 + $0x7c] sm:$0xf]
  %v6542 = vld [vmem:[%s6252 + $0x80] sm:$0x1]
  %v6543 = vld [vmem:[%s6252 + $0x84] sm:$0xf]
  %v6544 = vld [vmem:[%s6252 + $0x88] sm:$0xf]
  %v6545 = vld [vmem:[%s6252 + $0x8c] sm:$0x1]
  %v6546 = vld [vmem:[%s6252 + $0x90] sm:$0xf]
  %v6547 = vld [vmem:[%s6252 + $0x94] sm:$0xf]
  %v6548 = vld [vmem:[%s6252 + $0x98] sm:$0x1]
  %v6549 = vld [vmem:[%s6252 + $0x9c] sm:$0xf]
  %v6550 = vld [vmem:[%s6252 + $0xa0] sm:$0xf]
  %v6551 = vld [vmem:[%s6252 + $0xa4] sm:$0x1]
  %v6552 = vld [vmem:[%s6252 + $0xa8] sm:$0xf]
  %v6553 = vld [vmem:[%s6252 + $0xac] sm:$0xf]
  %v6554 = vld [vmem:[%s6252 + $0xb0] sm:$0x1]
  %v6555 = vld [vmem:[%s6252 + $0xb4] sm:$0xf]
  %v6556 = vld [vmem:[%s6252 + $0xb8] sm:$0xf]
  %v6557 = vld [vmem:[%s6252 + $0xbc] sm:$0x1]
  %v6559 = vshrl.u32 %v6510, 16
  %v6561 = vrot.slane %v6559, 4
  %v6562 = vshll.u32 %v6510, 16
  %v6564 = vrot.slane %v6562, 5
  %v6565 = vor.u32 %v6561, %v6564
  %v6566 = vrot.slane %v6565, 4
  %v6568 = vshll.u32 %v6511, 16
  %v6570 = vrot.slane %v6568, 5
  %v6571 = vsel %vm394, %v6566, %v6570
  %v6572 = vshrl.u32 %v6511, 16
  %v6574 = vrot.slane %v6572, 4
  %v6575 = vor.u32 %v6574, %v6570
  %v6576 = vrot.slane %v6575, 4
  %v6578 = vshll.u32 %v6512, 16
  %v6580 = vrot.slane %v6578, 5
  %v6581 = vsel %vm394, %v6576, %v6580
  %v6583 = vshrl.u32 %v6513, 16
  %v6585 = vrot.slane %v6583, 4
  %v6586 = vshll.u32 %v6513, 16
  %v6588 = vrot.slane %v6586, 5
  %v6589 = vor.u32 %v6585, %v6588
  %v6590 = vrot.slane %v6589, 4
  %v6592 = vshll.u32 %v6514, 16
  %v6594 = vrot.slane %v6592, 5
  %v6595 = vsel %vm394, %v6590, %v6594
  %v6596 = vshrl.u32 %v6514, 16
  %v6598 = vrot.slane %v6596, 4
  %v6599 = vor.u32 %v6598, %v6594
  %v6600 = vrot.slane %v6599, 4
  %v6602 = vshll.u32 %v6515, 16
  %v6604 = vrot.slane %v6602, 5
  %v6605 = vsel %vm394, %v6600, %v6604
  %v6607 = vshrl.u32 %v6516, 16
  %v6609 = vrot.slane %v6607, 4
  %v6610 = vshll.u32 %v6516, 16
  %v6612 = vrot.slane %v6610, 5
  %v6613 = vor.u32 %v6609, %v6612
  %v6614 = vrot.slane %v6613, 4
  %v6616 = vshll.u32 %v6517, 16
  %v6618 = vrot.slane %v6616, 5
  %v6619 = vsel %vm394, %v6614, %v6618
  %v6620 = vshrl.u32 %v6517, 16
  %v6622 = vrot.slane %v6620, 4
  %v6623 = vor.u32 %v6622, %v6618
  %v6624 = vrot.slane %v6623, 4
  %v6626 = vshll.u32 %v6518, 16
  %v6628 = vrot.slane %v6626, 5
  %v6629 = vsel %vm394, %v6624, %v6628
  %v6631 = vshrl.u32 %v6519, 16
  %v6633 = vrot.slane %v6631, 4
  %v6634 = vshll.u32 %v6519, 16
  %v6636 = vrot.slane %v6634, 5
  %v6637 = vor.u32 %v6633, %v6636
  %v6638 = vrot.slane %v6637, 4
  %v6640 = vshll.u32 %v6520, 16
  %v6642 = vrot.slane %v6640, 5
  %v6643 = vsel %vm394, %v6638, %v6642
  %v6644 = vshrl.u32 %v6520, 16
  %v6646 = vrot.slane %v6644, 4
  %v6647 = vor.u32 %v6646, %v6642
  %v6648 = vrot.slane %v6647, 4
  %v6650 = vshll.u32 %v6521, 16
  %v6652 = vrot.slane %v6650, 5
  %v6653 = vsel %vm394, %v6648, %v6652
  %v6655 = vshrl.u32 %v6522, 16
  %v6657 = vrot.slane %v6655, 4
  %v6658 = vshll.u32 %v6522, 16
  %v6660 = vrot.slane %v6658, 5
  %v6661 = vor.u32 %v6657, %v6660
  %v6662 = vrot.slane %v6661, 4
  %v6664 = vshll.u32 %v6523, 16
  %v6666 = vrot.slane %v6664, 5
  %v6667 = vsel %vm394, %v6662, %v6666
  %v6668 = vshrl.u32 %v6523, 16
  %v6670 = vrot.slane %v6668, 4
  %v6671 = vor.u32 %v6670, %v6666
  %v6672 = vrot.slane %v6671, 4
  %v6674 = vshll.u32 %v6524, 16
  %v6676 = vrot.slane %v6674, 5
  %v6677 = vsel %vm394, %v6672, %v6676
  %v6679 = vshrl.u32 %v6525, 16
  %v6681 = vrot.slane %v6679, 4
  %v6682 = vshll.u32 %v6525, 16
  %v6684 = vrot.slane %v6682, 5
  %v6685 = vor.u32 %v6681, %v6684
  %v6686 = vrot.slane %v6685, 4
  %v6688 = vshll.u32 %v6526, 16
  %v6690 = vrot.slane %v6688, 5
  %v6691 = vsel %vm394, %v6686, %v6690
  %v6692 = vshrl.u32 %v6526, 16
  %v6694 = vrot.slane %v6692, 4
  %v6695 = vor.u32 %v6694, %v6690
  %v6696 = vrot.slane %v6695, 4
  %v6698 = vshll.u32 %v6527, 16
  %v6700 = vrot.slane %v6698, 5
  %v6701 = vsel %vm394, %v6696, %v6700
  %v6703 = vshrl.u32 %v6528, 16
  %v6705 = vrot.slane %v6703, 4
  %v6706 = vshll.u32 %v6528, 16
  %v6708 = vrot.slane %v6706, 5
  %v6709 = vor.u32 %v6705, %v6708
  %v6710 = vrot.slane %v6709, 4
  %v6712 = vshll.u32 %v6529, 16
  %v6714 = vrot.slane %v6712, 5
  %v6715 = vsel %vm394, %v6710, %v6714
  %v6716 = vshrl.u32 %v6529, 16
  %v6718 = vrot.slane %v6716, 4
  %v6719 = vor.u32 %v6718, %v6714
  %v6720 = vrot.slane %v6719, 4
  %v6722 = vshll.u32 %v6530, 16
  %v6724 = vrot.slane %v6722, 5
  %v6725 = vsel %vm394, %v6720, %v6724
  %v6727 = vshrl.u32 %v6531, 16
  %v6729 = vrot.slane %v6727, 4
  %v6730 = vshll.u32 %v6531, 16
  %v6732 = vrot.slane %v6730, 5
  %v6733 = vor.u32 %v6729, %v6732
  %v6734 = vrot.slane %v6733, 4
  %v6736 = vshll.u32 %v6532, 16
  %v6738 = vrot.slane %v6736, 5
  %v6739 = vsel %vm394, %v6734, %v6738
  %v6740 = vshrl.u32 %v6532, 16
  %v6742 = vrot.slane %v6740, 4
  %v6743 = vor.u32 %v6742, %v6738
  %v6744 = vrot.slane %v6743, 4
  %v6746 = vshll.u32 %v6533, 16
  %v6748 = vrot.slane %v6746, 5
  %v6749 = vsel %vm394, %v6744, %v6748
  %v6751 = vshrl.u32 %v6534, 16
  %v6753 = vrot.slane %v6751, 4
  %v6754 = vshll.u32 %v6534, 16
  %v6756 = vrot.slane %v6754, 5
  %v6757 = vor.u32 %v6753, %v6756
  %v6758 = vrot.slane %v6757, 4
  %v6760 = vshll.u32 %v6535, 16
  %v6762 = vrot.slane %v6760, 5
  %v6763 = vsel %vm394, %v6758, %v6762
  %v6764 = vshrl.u32 %v6535, 16
  %v6766 = vrot.slane %v6764, 4
  %v6767 = vor.u32 %v6766, %v6762
  %v6768 = vrot.slane %v6767, 4
  %v6770 = vshll.u32 %v6536, 16
  %v6772 = vrot.slane %v6770, 5
  %v6773 = vsel %vm394, %v6768, %v6772
  %v6775 = vshrl.u32 %v6537, 16
  %v6777 = vrot.slane %v6775, 4
  %v6778 = vshll.u32 %v6537, 16
  %v6780 = vrot.slane %v6778, 5
  %v6781 = vor.u32 %v6777, %v6780
  %v6782 = vrot.slane %v6781, 4
  %v6784 = vshll.u32 %v6538, 16
  %v6786 = vrot.slane %v6784, 5
  %v6787 = vsel %vm394, %v6782, %v6786
  %v6788 = vshrl.u32 %v6538, 16
  %v6790 = vrot.slane %v6788, 4
  %v6791 = vor.u32 %v6790, %v6786
  %v6792 = vrot.slane %v6791, 4
  %v6794 = vshll.u32 %v6539, 16
  %v6796 = vrot.slane %v6794, 5
  %v6797 = vsel %vm394, %v6792, %v6796
  %v6799 = vshrl.u32 %v6540, 16
  %v6801 = vrot.slane %v6799, 4
  %v6802 = vshll.u32 %v6540, 16
  %v6804 = vrot.slane %v6802, 5
  %v6805 = vor.u32 %v6801, %v6804
  %v6806 = vrot.slane %v6805, 4
  %v6808 = vshll.u32 %v6541, 16
  %v6810 = vrot.slane %v6808, 5
  %v6811 = vsel %vm394, %v6806, %v6810
  %v6812 = vshrl.u32 %v6541, 16
  %v6814 = vrot.slane %v6812, 4
  %v6815 = vor.u32 %v6814, %v6810
  %v6816 = vrot.slane %v6815, 4
  %v6818 = vshll.u32 %v6542, 16
  %v6820 = vrot.slane %v6818, 5
  %v6821 = vsel %vm394, %v6816, %v6820
  %v6823 = vshrl.u32 %v6543, 16
  %v6825 = vrot.slane %v6823, 4
  %v6826 = vshll.u32 %v6543, 16
  %v6828 = vrot.slane %v6826, 5
  %v6829 = vor.u32 %v6825, %v6828
  %v6830 = vrot.slane %v6829, 4
  %v6832 = vshll.u32 %v6544, 16
  %v6834 = vrot.slane %v6832, 5
  %v6835 = vsel %vm394, %v6830, %v6834
  %v6836 = vshrl.u32 %v6544, 16
  %v6838 = vrot.slane %v6836, 4
  %v6839 = vor.u32 %v6838, %v6834
  %v6840 = vrot.slane %v6839, 4
  %v6842 = vshll.u32 %v6545, 16
  %v6844 = vrot.slane %v6842, 5
  %v6845 = vsel %vm394, %v6840, %v6844
  %v6847 = vshrl.u32 %v6546, 16
  %v6849 = vrot.slane %v6847, 4
  %v6850 = vshll.u32 %v6546, 16
  %v6852 = vrot.slane %v6850, 5
  %v6853 = vor.u32 %v6849, %v6852
  %v6854 = vrot.slane %v6853, 4
  %v6856 = vshll.u32 %v6547, 16
  %v6858 = vrot.slane %v6856, 5
  %v6859 = vsel %vm394, %v6854, %v6858
  %v6860 = vshrl.u32 %v6547, 16
  %v6862 = vrot.slane %v6860, 4
  %v6863 = vor.u32 %v6862, %v6858
  %v6864 = vrot.slane %v6863, 4
  %v6866 = vshll.u32 %v6548, 16
  %v6868 = vrot.slane %v6866, 5
  %v6869 = vsel %vm394, %v6864, %v6868
  %v6871 = vshrl.u32 %v6549, 16
  %v6873 = vrot.slane %v6871, 4
  %v6874 = vshll.u32 %v6549, 16
  %v6876 = vrot.slane %v6874, 5
  %v6877 = vor.u32 %v6873, %v6876
  %v6878 = vrot.slane %v6877, 4
  %v6880 = vshll.u32 %v6550, 16
  %v6882 = vrot.slane %v6880, 5
  %v6883 = vsel %vm394, %v6878, %v6882
  %v6884 = vshrl.u32 %v6550, 16
  %v6886 = vrot.slane %v6884, 4
  %v6887 = vor.u32 %v6886, %v6882
  %v6888 = vrot.slane %v6887, 4
  %v6890 = vshll.u32 %v6551, 16
  %v6892 = vrot.slane %v6890, 5
  %v6893 = vsel %vm394, %v6888, %v6892
  %v6895 = vshrl.u32 %v6552, 16
  %v6897 = vrot.slane %v6895, 4
  %v6898 = vshll.u32 %v6552, 16
  %v6900 = vrot.slane %v6898, 5
  %v6901 = vor.u32 %v6897, %v6900
  %v6902 = vrot.slane %v6901, 4
  %v6904 = vshll.u32 %v6553, 16
  %v6906 = vrot.slane %v6904, 5
  %v6907 = vsel %vm394, %v6902, %v6906
  %v6908 = vshrl.u32 %v6553, 16
  %v6910 = vrot.slane %v6908, 4
  %v6911 = vor.u32 %v6910, %v6906
  %v6912 = vrot.slane %v6911, 4
  %v6914 = vshll.u32 %v6554, 16
  %v6916 = vrot.slane %v6914, 5
  %v6917 = vsel %vm394, %v6912, %v6916
  %v6919 = vshrl.u32 %v6555, 16
  %v6921 = vrot.slane %v6919, 4
  %v6922 = vshll.u32 %v6555, 16
  %v6924 = vrot.slane %v6922, 5
  %v6925 = vor.u32 %v6921, %v6924
  %v6926 = vrot.slane %v6925, 4
  %v6928 = vshll.u32 %v6556, 16
  %v6930 = vrot.slane %v6928, 5
  %v6931 = vsel %vm394, %v6926, %v6930
  %v6932 = vshrl.u32 %v6556, 16
  %v6934 = vrot.slane %v6932, 4
  %v6935 = vor.u32 %v6934, %v6930
  %v6936 = vrot.slane %v6935, 4
  %v6938 = vshll.u32 %v6557, 16
  %v6940 = vrot.slane %v6938, 5
  %v6941 = vsel %vm394, %v6936, %v6940
  %6942 = vrot.lane.b32.xlu0 %v6571, 32
  %v6943 = vpop.permute.xlu0 %6942
  %6944 = vrot.lane.b32.xlu0 %v6581, 32
  %v6945 = vpop.permute.xlu0 %6944
  %6946 = vrot.lane.b32.xlu0 %v6595, 32
  %v6947 = vpop.permute.xlu0 %6946
  %6948 = vrot.lane.b32.xlu0 %v6605, 32
  %v6949 = vpop.permute.xlu0 %6948
  %6950 = vrot.lane.b32.xlu0 %v6619, 32
  %v6951 = vpop.permute.xlu0 %6950
  %6952 = vrot.lane.b32.xlu0 %v6629, 32
  %v6953 = vpop.permute.xlu0 %6952
  %6954 = vrot.lane.b32.xlu0 %v6643, 32
  %v6955 = vpop.permute.xlu0 %6954
  %6956 = vrot.lane.b32.xlu0 %v6653, 32
  %v6957 = vpop.permute.xlu0 %6956
  %6958 = vrot.lane.b32.xlu0 %v6667, 32
  %v6959 = vpop.permute.xlu0 %6958
  %6960 = vrot.lane.b32.xlu0 %v6677, 32
  %v6961 = vpop.permute.xlu0 %6960
  %6962 = vrot.lane.b32.xlu0 %v6691, 32
  %v6963 = vpop.permute.xlu0 %6962
  %6964 = vrot.lane.b32.xlu0 %v6701, 32
  %v6965 = vpop.permute.xlu0 %6964
  %6966 = vrot.lane.b32.xlu0 %v6715, 32
  %v6967 = vpop.permute.xlu0 %6966
  %6968 = vrot.lane.b32.xlu0 %v6725, 32
  %v6969 = vpop.permute.xlu0 %6968
  %6970 = vrot.lane.b32.xlu0 %v6739, 32
  %v6971 = vpop.permute.xlu0 %6970
  %6972 = vrot.lane.b32.xlu0 %v6749, 32
  %v6973 = vpop.permute.xlu0 %6972
  %6974 = vrot.lane.b32.xlu0 %v6763, 32
  %v6975 = vpop.permute.xlu0 %6974
  %6976 = vrot.lane.b32.xlu0 %v6773, 32
  %v6977 = vpop.permute.xlu0 %6976
  %6978 = vrot.lane.b32.xlu0 %v6787, 32
  %v6979 = vpop.permute.xlu0 %6978
  %6980 = vrot.lane.b32.xlu0 %v6797, 32
  %v6981 = vpop.permute.xlu0 %6980
  %6982 = vrot.lane.b32.xlu0 %v6811, 32
  %v6983 = vpop.permute.xlu0 %6982
  %6984 = vrot.lane.b32.xlu0 %v6821, 32
  %v6985 = vpop.permute.xlu0 %6984
  %6986 = vrot.lane.b32.xlu0 %v6835, 32
  %v6987 = vpop.permute.xlu0 %6986
  %6988 = vrot.lane.b32.xlu0 %v6845, 32
  %v6989 = vpop.permute.xlu0 %6988
  %6990 = vrot.lane.b32.xlu0 %v6859, 32
  %v6991 = vpop.permute.xlu0 %6990
  %6992 = vrot.lane.b32.xlu0 %v6869, 32
  %v6993 = vpop.permute.xlu0 %6992
  %6994 = vrot.lane.b32.xlu0 %v6883, 32
  %v6995 = vpop.permute.xlu0 %6994
  %6996 = vrot.lane.b32.xlu0 %v6893, 32
  %v6997 = vpop.permute.xlu0 %6996
  %6998 = vrot.lane.b32.xlu0 %v6907, 32
  %v6999 = vpop.permute.xlu0 %6998
  %7000 = vrot.lane.b32.xlu0 %v6917, 32
  %v7001 = vpop.permute.xlu0 %7000
  %7002 = vrot.lane.b32.xlu0 %v6931, 32
  %v7003 = vpop.permute.xlu0 %7002
  %7004 = vrot.lane.b32.xlu0 %v6941, 32
  %v7005 = vpop.permute.xlu0 %7004
  %7038 = vst.msk [vmem:[#allocation2 + $0x200] sm:$0xf] %vm875, %v6943
  %7039 = vst.msk [vmem:[#allocation2 + $0x210] sm:$0xf] %vm875, %v6945
  %7040 = vst.msk [vmem:[#allocation2 + $0x220] sm:$0xf] %vm875, %v6947
  %7041 = vst.msk [vmem:[#allocation2 + $0x230] sm:$0xf] %vm875, %v6949
  %7042 = vst.msk [vmem:[#allocation2 + $0x240] sm:$0xf] %vm875, %v6951
  %7043 = vst.msk [vmem:[#allocation2 + $0x250] sm:$0xf] %vm875, %v6953
  %7044 = vst.msk [vmem:[#allocation2 + $0x260] sm:$0xf] %vm875, %v6955
  %7045 = vst.msk [vmem:[#allocation2 + $0x270] sm:$0xf] %vm875, %v6957
  %7046 = vst.msk [vmem:[#allocation2 + $0x280] sm:$0xf] %vm875, %v6959
  %7047 = vst.msk [vmem:[#allocation2 + $0x290] sm:$0xf] %vm875, %v6961
  %7048 = vst.msk [vmem:[#allocation2 + $0x2a0] sm:$0xf] %vm875, %v6963
  %7049 = vst.msk [vmem:[#allocation2 + $0x2b0] sm:$0xf] %vm875, %v6965
  %7050 = vst.msk [vmem:[#allocation2 + $0x2c0] sm:$0xf] %vm875, %v6967
  %7051 = vst.msk [vmem:[#allocation2 + $0x2d0] sm:$0xf] %vm875, %v6969
  %7052 = vst.msk [vmem:[#allocation2 + $0x2e0] sm:$0xf] %vm875, %v6971
  %7053 = vst.msk [vmem:[#allocation2 + $0x2f0] sm:$0xf] %vm875, %v6973
  %7054 = vst.msk [vmem:[#allocation2 + $0x300] sm:$0xf] %vm875, %v6975
  %7055 = vst.msk [vmem:[#allocation2 + $0x310] sm:$0xf] %vm875, %v6977
  %7056 = vst.msk [vmem:[#allocation2 + $0x320] sm:$0xf] %vm875, %v6979
  %7057 = vst.msk [vmem:[#allocation2 + $0x330] sm:$0xf] %vm875, %v6981
  %7058 = vst.msk [vmem:[#allocation2 + $0x340] sm:$0xf] %vm875, %v6983
  %7059 = vst.msk [vmem:[#allocation2 + $0x350] sm:$0xf] %vm875, %v6985
  %7060 = vst.msk [vmem:[#allocation2 + $0x360] sm:$0xf] %vm875, %v6987
  %7061 = vst.msk [vmem:[#allocation2 + $0x370] sm:$0xf] %vm875, %v6989
  %7062 = vst.msk [vmem:[#allocation2 + $0x380] sm:$0xf] %vm875, %v6991
  %7063 = vst.msk [vmem:[#allocation2 + $0x390] sm:$0xf] %vm875, %v6993
  %7064 = vst.msk [vmem:[#allocation2 + $0x3a0] sm:$0xf] %vm875, %v6995
  %7065 = vst.msk [vmem:[#allocation2 + $0x3b0] sm:$0xf] %vm875, %v6997
  %7066 = vst.msk [vmem:[#allocation2 + $0x3c0] sm:$0xf] %vm875, %v6999
  %7067 = vst.msk [vmem:[#allocation2 + $0x3d0] sm:$0xf] %vm875, %v7001
  %7068 = vst.msk [vmem:[#allocation2 + $0x3e0] sm:$0xf] %vm875, %v7003
  %7069 = vst.msk [vmem:[#allocation2 + $0x3f0] sm:$0xf] %vm875, %v7005
  %v7070 = vld [vmem:[%s6317] sm:$0xf]
  %v7071 = vld [vmem:[%s6317 + $0x4] sm:$0xf]
  %v7072 = vld [vmem:[%s6317 + $0x8] sm:$0x1]
  %v7073 = vld [vmem:[%s6317 + $0xc] sm:$0xf]
  %v7074 = vld [vmem:[%s6317 + $0x10] sm:$0xf]
  %v7075 = vld [vmem:[%s6317 + $0x14] sm:$0x1]
  %v7076 = vld [vmem:[%s6317 + $0x18] sm:$0xf]
  %v7077 = vld [vmem:[%s6317 + $0x1c] sm:$0xf]
  %v7078 = vld [vmem:[%s6317 + $0x20] sm:$0x1]
  %v7079 = vld [vmem:[%s6317 + $0x24] sm:$0xf]
  %v7080 = vld [vmem:[%s6317 + $0x28] sm:$0xf]
  %v7081 = vld [vmem:[%s6317 + $0x2c] sm:$0x1]
  %v7082 = vld [vmem:[%s6317 + $0x30] sm:$0xf]
  %v7083 = vld [vmem:[%s6317 + $0x34] sm:$0xf]
  %v7084 = vld [vmem:[%s6317 + $0x38] sm:$0x1]
  %v7085 = vld [vmem:[%s6317 + $0x3c] sm:$0xf]
  %v7086 = vld [vmem:[%s6317 + $0x40] sm:$0xf]
  %v7087 = vld [vmem:[%s6317 + $0x44] sm:$0x1]
  %v7088 = vld [vmem:[%s6317 + $0x48] sm:$0xf]
  %v7089 = vld [vmem:[%s6317 + $0x4c] sm:$0xf]
  %v7090 = vld [vmem:[%s6317 + $0x50] sm:$0x1]
  %v7091 = vld [vmem:[%s6317 + $0x54] sm:$0xf]
  %v7092 = vld [vmem:[%s6317 + $0x58] sm:$0xf]
  %v7093 = vld [vmem:[%s6317 + $0x5c] sm:$0x1]
  %v7094 = vld [vmem:[%s6317 + $0x60] sm:$0xf]
  %v7095 = vld [vmem:[%s6317 + $0x64] sm:$0xf]
  %v7096 = vld [vmem:[%s6317 + $0x68] sm:$0x1]
  %v7097 = vld [vmem:[%s6317 + $0x6c] sm:$0xf]
  %v7098 = vld [vmem:[%s6317 + $0x70] sm:$0xf]
  %v7099 = vld [vmem:[%s6317 + $0x74] sm:$0x1]
  %v7100 = vld [vmem:[%s6317 + $0x78] sm:$0xf]
  %v7101 = vld [vmem:[%s6317 + $0x7c] sm:$0xf]
  %v7102 = vld [vmem:[%s6317 + $0x80] sm:$0x1]
  %v7103 = vld [vmem:[%s6317 + $0x84] sm:$0xf]
  %v7104 = vld [vmem:[%s6317 + $0x88] sm:$0xf]
  %v7105 = vld [vmem:[%s6317 + $0x8c] sm:$0x1]
  %v7106 = vld [vmem:[%s6317 + $0x90] sm:$0xf]
  %v7107 = vld [vmem:[%s6317 + $0x94] sm:$0xf]
  %v7108 = vld [vmem:[%s6317 + $0x98] sm:$0x1]
  %v7109 = vld [vmem:[%s6317 + $0x9c] sm:$0xf]
  %v7110 = vld [vmem:[%s6317 + $0xa0] sm:$0xf]
  %v7111 = vld [vmem:[%s6317 + $0xa4] sm:$0x1]
  %v7112 = vld [vmem:[%s6317 + $0xa8] sm:$0xf]
  %v7113 = vld [vmem:[%s6317 + $0xac] sm:$0xf]
  %v7114 = vld [vmem:[%s6317 + $0xb0] sm:$0x1]
  %v7115 = vld [vmem:[%s6317 + $0xb4] sm:$0xf]
  %v7116 = vld [vmem:[%s6317 + $0xb8] sm:$0xf]
  %v7117 = vld [vmem:[%s6317 + $0xbc] sm:$0x1]
  %v7119 = vshrl.u32 %v7070, 16
  %v7121 = vrot.slane %v7119, 4
  %v7122 = vshll.u32 %v7070, 16
  %v7124 = vrot.slane %v7122, 5
  %v7125 = vor.u32 %v7121, %v7124
  %v7126 = vrot.slane %v7125, 4
  %v7128 = vshll.u32 %v7071, 16
  %v7130 = vrot.slane %v7128, 5
  %v7131 = vsel %vm394, %v7126, %v7130
  %v7132 = vshrl.u32 %v7071, 16
  %v7134 = vrot.slane %v7132, 4
  %v7135 = vor.u32 %v7134, %v7130
  %v7136 = vrot.slane %v7135, 4
  %v7138 = vshll.u32 %v7072, 16
  %v7140 = vrot.slane %v7138, 5
  %v7141 = vsel %vm394, %v7136, %v7140
  %v7143 = vshrl.u32 %v7073, 16
  %v7145 = vrot.slane %v7143, 4
  %v7146 = vshll.u32 %v7073, 16
  %v7148 = vrot.slane %v7146, 5
  %v7149 = vor.u32 %v7145, %v7148
  %v7150 = vrot.slane %v7149, 4
  %v7152 = vshll.u32 %v7074, 16
  %v7154 = vrot.slane %v7152, 5
  %v7155 = vsel %vm394, %v7150, %v7154
  %v7156 = vshrl.u32 %v7074, 16
  %v7158 = vrot.slane %v7156, 4
  %v7159 = vor.u32 %v7158, %v7154
  %v7160 = vrot.slane %v7159, 4
  %v7162 = vshll.u32 %v7075, 16
  %v7164 = vrot.slane %v7162, 5
  %v7165 = vsel %vm394, %v7160, %v7164
  %v7167 = vshrl.u32 %v7076, 16
  %v7169 = vrot.slane %v7167, 4
  %v7170 = vshll.u32 %v7076, 16
  %v7172 = vrot.slane %v7170, 5
  %v7173 = vor.u32 %v7169, %v7172
  %v7174 = vrot.slane %v7173, 4
  %v7176 = vshll.u32 %v7077, 16
  %v7178 = vrot.slane %v7176, 5
  %v7179 = vsel %vm394, %v7174, %v7178
  %v7180 = vshrl.u32 %v7077, 16
  %v7182 = vrot.slane %v7180, 4
  %v7183 = vor.u32 %v7182, %v7178
  %v7184 = vrot.slane %v7183, 4
  %v7186 = vshll.u32 %v7078, 16
  %v7188 = vrot.slane %v7186, 5
  %v7189 = vsel %vm394, %v7184, %v7188
  %v7191 = vshrl.u32 %v7079, 16
  %v7193 = vrot.slane %v7191, 4
  %v7194 = vshll.u32 %v7079, 16
  %v7196 = vrot.slane %v7194, 5
  %v7197 = vor.u32 %v7193, %v7196
  %v7198 = vrot.slane %v7197, 4
  %v7200 = vshll.u32 %v7080, 16
  %v7202 = vrot.slane %v7200, 5
  %v7203 = vsel %vm394, %v7198, %v7202
  %v7204 = vshrl.u32 %v7080, 16
  %v7206 = vrot.slane %v7204, 4
  %v7207 = vor.u32 %v7206, %v7202
  %v7208 = vrot.slane %v7207, 4
  %v7210 = vshll.u32 %v7081, 16
  %v7212 = vrot.slane %v7210, 5
  %v7213 = vsel %vm394, %v7208, %v7212
  %v7215 = vshrl.u32 %v7082, 16
  %v7217 = vrot.slane %v7215, 4
  %v7218 = vshll.u32 %v7082, 16
  %v7220 = vrot.slane %v7218, 5
  %v7221 = vor.u32 %v7217, %v7220
  %v7222 = vrot.slane %v7221, 4
  %v7224 = vshll.u32 %v7083, 16
  %v7226 = vrot.slane %v7224, 5
  %v7227 = vsel %vm394, %v7222, %v7226
  %v7228 = vshrl.u32 %v7083, 16
  %v7230 = vrot.slane %v7228, 4
  %v7231 = vor.u32 %v7230, %v7226
  %v7232 = vrot.slane %v7231, 4
  %v7234 = vshll.u32 %v7084, 16
  %v7236 = vrot.slane %v7234, 5
  %v7237 = vsel %vm394, %v7232, %v7236
  %v7239 = vshrl.u32 %v7085, 16
  %v7241 = vrot.slane %v7239, 4
  %v7242 = vshll.u32 %v7085, 16
  %v7244 = vrot.slane %v7242, 5
  %v7245 = vor.u32 %v7241, %v7244
  %v7246 = vrot.slane %v7245, 4
  %v7248 = vshll.u32 %v7086, 16
  %v7250 = vrot.slane %v7248, 5
  %v7251 = vsel %vm394, %v7246, %v7250
  %v7252 = vshrl.u32 %v7086, 16
  %v7254 = vrot.slane %v7252, 4
  %v7255 = vor.u32 %v7254, %v7250
  %v7256 = vrot.slane %v7255, 4
  %v7258 = vshll.u32 %v7087, 16
  %v7260 = vrot.slane %v7258, 5
  %v7261 = vsel %vm394, %v7256, %v7260
  %v7263 = vshrl.u32 %v7088, 16
  %v7265 = vrot.slane %v7263, 4
  %v7266 = vshll.u32 %v7088, 16
  %v7268 = vrot.slane %v7266, 5
  %v7269 = vor.u32 %v7265, %v7268
  %v7270 = vrot.slane %v7269, 4
  %v7272 = vshll.u32 %v7089, 16
  %v7274 = vrot.slane %v7272, 5
  %v7275 = vsel %vm394, %v7270, %v7274
  %v7276 = vshrl.u32 %v7089, 16
  %v7278 = vrot.slane %v7276, 4
  %v7279 = vor.u32 %v7278, %v7274
  %v7280 = vrot.slane %v7279, 4
  %v7282 = vshll.u32 %v7090, 16
  %v7284 = vrot.slane %v7282, 5
  %v7285 = vsel %vm394, %v7280, %v7284
  %v7287 = vshrl.u32 %v7091, 16
  %v7289 = vrot.slane %v7287, 4
  %v7290 = vshll.u32 %v7091, 16
  %v7292 = vrot.slane %v7290, 5
  %v7293 = vor.u32 %v7289, %v7292
  %v7294 = vrot.slane %v7293, 4
  %v7296 = vshll.u32 %v7092, 16
  %v7298 = vrot.slane %v7296, 5
  %v7299 = vsel %vm394, %v7294, %v7298
  %v7300 = vshrl.u32 %v7092, 16
  %v7302 = vrot.slane %v7300, 4
  %v7303 = vor.u32 %v7302, %v7298
  %v7304 = vrot.slane %v7303, 4
  %v7306 = vshll.u32 %v7093, 16
  %v7308 = vrot.slane %v7306, 5
  %v7309 = vsel %vm394, %v7304, %v7308
  %v7311 = vshrl.u32 %v7094, 16
  %v7313 = vrot.slane %v7311, 4
  %v7314 = vshll.u32 %v7094, 16
  %v7316 = vrot.slane %v7314, 5
  %v7317 = vor.u32 %v7313, %v7316
  %v7318 = vrot.slane %v7317, 4
  %v7320 = vshll.u32 %v7095, 16
  %v7322 = vrot.slane %v7320, 5
  %v7323 = vsel %vm394, %v7318, %v7322
  %v7324 = vshrl.u32 %v7095, 16
  %v7326 = vrot.slane %v7324, 4
  %v7327 = vor.u32 %v7326, %v7322
  %v7328 = vrot.slane %v7327, 4
  %v7330 = vshll.u32 %v7096, 16
  %v7332 = vrot.slane %v7330, 5
  %v7333 = vsel %vm394, %v7328, %v7332
  %v7335 = vshrl.u32 %v7097, 16
  %v7337 = vrot.slane %v7335, 4
  %v7338 = vshll.u32 %v7097, 16
  %v7340 = vrot.slane %v7338, 5
  %v7341 = vor.u32 %v7337, %v7340
  %v7342 = vrot.slane %v7341, 4
  %v7344 = vshll.u32 %v7098, 16
  %v7346 = vrot.slane %v7344, 5
  %v7347 = vsel %vm394, %v7342, %v7346
  %v7348 = vshrl.u32 %v7098, 16
  %v7350 = vrot.slane %v7348, 4
  %v7351 = vor.u32 %v7350, %v7346
  %v7352 = vrot.slane %v7351, 4
  %v7354 = vshll.u32 %v7099, 16
  %v7356 = vrot.slane %v7354, 5
  %v7357 = vsel %vm394, %v7352, %v7356
  %v7359 = vshrl.u32 %v7100, 16
  %v7361 = vrot.slane %v7359, 4
  %v7362 = vshll.u32 %v7100, 16
  %v7364 = vrot.slane %v7362, 5
  %v7365 = vor.u32 %v7361, %v7364
  %v7366 = vrot.slane %v7365, 4
  %v7368 = vshll.u32 %v7101, 16
  %v7370 = vrot.slane %v7368, 5
  %v7371 = vsel %vm394, %v7366, %v7370
  %v7372 = vshrl.u32 %v7101, 16
  %v7374 = vrot.slane %v7372, 4
  %v7375 = vor.u32 %v7374, %v7370
  %v7376 = vrot.slane %v7375, 4
  %v7378 = vshll.u32 %v7102, 16
  %v7380 = vrot.slane %v7378, 5
  %v7381 = vsel %vm394, %v7376, %v7380
  %v7383 = vshrl.u32 %v7103, 16
  %v7385 = vrot.slane %v7383, 4
  %v7386 = vshll.u32 %v7103, 16
  %v7388 = vrot.slane %v7386, 5
  %v7389 = vor.u32 %v7385, %v7388
  %v7390 = vrot.slane %v7389, 4
  %v7392 = vshll.u32 %v7104, 16
  %v7394 = vrot.slane %v7392, 5
  %v7395 = vsel %vm394, %v7390, %v7394
  %v7396 = vshrl.u32 %v7104, 16
  %v7398 = vrot.slane %v7396, 4
  %v7399 = vor.u32 %v7398, %v7394
  %v7400 = vrot.slane %v7399, 4
  %v7402 = vshll.u32 %v7105, 16
  %v7404 = vrot.slane %v7402, 5
  %v7405 = vsel %vm394, %v7400, %v7404
  %v7407 = vshrl.u32 %v7106, 16
  %v7409 = vrot.slane %v7407, 4
  %v7410 = vshll.u32 %v7106, 16
  %v7412 = vrot.slane %v7410, 5
  %v7413 = vor.u32 %v7409, %v7412
  %v7414 = vrot.slane %v7413, 4
  %v7416 = vshll.u32 %v7107, 16
  %v7418 = vrot.slane %v7416, 5
  %v7419 = vsel %vm394, %v7414, %v7418
  %v7420 = vshrl.u32 %v7107, 16
  %v7422 = vrot.slane %v7420, 4
  %v7423 = vor.u32 %v7422, %v7418
  %v7424 = vrot.slane %v7423, 4
  %v7426 = vshll.u32 %v7108, 16
  %v7428 = vrot.slane %v7426, 5
  %v7429 = vsel %vm394, %v7424, %v7428
  %v7431 = vshrl.u32 %v7109, 16
  %v7433 = vrot.slane %v7431, 4
  %v7434 = vshll.u32 %v7109, 16
  %v7436 = vrot.slane %v7434, 5
  %v7437 = vor.u32 %v7433, %v7436
  %v7438 = vrot.slane %v7437, 4
  %v7440 = vshll.u32 %v7110, 16
  %v7442 = vrot.slane %v7440, 5
  %v7443 = vsel %vm394, %v7438, %v7442
  %v7444 = vshrl.u32 %v7110, 16
  %v7446 = vrot.slane %v7444, 4
  %v7447 = vor.u32 %v7446, %v7442
  %v7448 = vrot.slane %v7447, 4
  %v7450 = vshll.u32 %v7111, 16
  %v7452 = vrot.slane %v7450, 5
  %v7453 = vsel %vm394, %v7448, %v7452
  %v7455 = vshrl.u32 %v7112, 16
  %v7457 = vrot.slane %v7455, 4
  %v7458 = vshll.u32 %v7112, 16
  %v7460 = vrot.slane %v7458, 5
  %v7461 = vor.u32 %v7457, %v7460
  %v7462 = vrot.slane %v7461, 4
  %v7464 = vshll.u32 %v7113, 16
  %v7466 = vrot.slane %v7464, 5
  %v7467 = vsel %vm394, %v7462, %v7466
  %v7468 = vshrl.u32 %v7113, 16
  %v7470 = vrot.slane %v7468, 4
  %v7471 = vor.u32 %v7470, %v7466
  %v7472 = vrot.slane %v7471, 4
  %v7474 = vshll.u32 %v7114, 16
  %v7476 = vrot.slane %v7474, 5
  %v7477 = vsel %vm394, %v7472, %v7476
  %v7479 = vshrl.u32 %v7115, 16
  %v7481 = vrot.slane %v7479, 4
  %v7482 = vshll.u32 %v7115, 16
  %v7484 = vrot.slane %v7482, 5
  %v7485 = vor.u32 %v7481, %v7484
  %v7486 = vrot.slane %v7485, 4
  %v7488 = vshll.u32 %v7116, 16
  %v7490 = vrot.slane %v7488, 5
  %v7491 = vsel %vm394, %v7486, %v7490
  %v7492 = vshrl.u32 %v7116, 16
  %v7494 = vrot.slane %v7492, 4
  %v7495 = vor.u32 %v7494, %v7490
  %v7496 = vrot.slane %v7495, 4
  %v7498 = vshll.u32 %v7117, 16
  %v7500 = vrot.slane %v7498, 5
  %v7501 = vsel %vm394, %v7496, %v7500
  %7502 = vrot.lane.b32.xlu0 %v7131, 48
  %v7503 = vpop.permute.xlu0 %7502
  %7504 = vrot.lane.b32.xlu0 %v7141, 48
  %v7505 = vpop.permute.xlu0 %7504
  %7506 = vrot.lane.b32.xlu0 %v7155, 48
  %v7507 = vpop.permute.xlu0 %7506
  %7508 = vrot.lane.b32.xlu0 %v7165, 48
  %v7509 = vpop.permute.xlu0 %7508
  %7510 = vrot.lane.b32.xlu0 %v7179, 48
  %v7511 = vpop.permute.xlu0 %7510
  %7512 = vrot.lane.b32.xlu0 %v7189, 48
  %v7513 = vpop.permute.xlu0 %7512
  %7514 = vrot.lane.b32.xlu0 %v7203, 48
  %v7515 = vpop.permute.xlu0 %7514
  %7516 = vrot.lane.b32.xlu0 %v7213, 48
  %v7517 = vpop.permute.xlu0 %7516
  %7518 = vrot.lane.b32.xlu0 %v7227, 48
  %v7519 = vpop.permute.xlu0 %7518
  %7520 = vrot.lane.b32.xlu0 %v7237, 48
  %v7521 = vpop.permute.xlu0 %7520
  %7522 = vrot.lane.b32.xlu0 %v7251, 48
  %v7523 = vpop.permute.xlu0 %7522
  %7524 = vrot.lane.b32.xlu0 %v7261, 48
  %v7525 = vpop.permute.xlu0 %7524
  %7526 = vrot.lane.b32.xlu0 %v7275, 48
  %v7527 = vpop.permute.xlu0 %7526
  %7528 = vrot.lane.b32.xlu0 %v7285, 48
  %v7529 = vpop.permute.xlu0 %7528
  %7530 = vrot.lane.b32.xlu0 %v7299, 48
  %v7531 = vpop.permute.xlu0 %7530
  %7532 = vrot.lane.b32.xlu0 %v7309, 48
  %v7533 = vpop.permute.xlu0 %7532
  %7534 = vrot.lane.b32.xlu0 %v7323, 48
  %v7535 = vpop.permute.xlu0 %7534
  %7536 = vrot.lane.b32.xlu0 %v7333, 48
  %v7537 = vpop.permute.xlu0 %7536
  %7538 = vrot.lane.b32.xlu0 %v7347, 48
  %v7539 = vpop.permute.xlu0 %7538
  %7540 = vrot.lane.b32.xlu0 %v7357, 48
  %v7541 = vpop.permute.xlu0 %7540
  %7542 = vrot.lane.b32.xlu0 %v7371, 48
  %v7543 = vpop.permute.xlu0 %7542
  %7544 = vrot.lane.b32.xlu0 %v7381, 48
  %v7545 = vpop.permute.xlu0 %7544
  %7546 = vrot.lane.b32.xlu0 %v7395, 48
  %v7547 = vpop.permute.xlu0 %7546
  %7548 = vrot.lane.b32.xlu0 %v7405, 48
  %v7549 = vpop.permute.xlu0 %7548
  %7550 = vrot.lane.b32.xlu0 %v7419, 48
  %v7551 = vpop.permute.xlu0 %7550
  %7552 = vrot.lane.b32.xlu0 %v7429, 48
  %v7553 = vpop.permute.xlu0 %7552
  %7554 = vrot.lane.b32.xlu0 %v7443, 48
  %v7555 = vpop.permute.xlu0 %7554
  %7556 = vrot.lane.b32.xlu0 %v7453, 48
  %v7557 = vpop.permute.xlu0 %7556
  %7558 = vrot.lane.b32.xlu0 %v7467, 48
  %v7559 = vpop.permute.xlu0 %7558
  %7560 = vrot.lane.b32.xlu0 %v7477, 48
  %v7561 = vpop.permute.xlu0 %7560
  %7562 = vrot.lane.b32.xlu0 %v7491, 48
  %v7563 = vpop.permute.xlu0 %7562
  %7564 = vrot.lane.b32.xlu0 %v7501, 48
  %v7565 = vpop.permute.xlu0 %7564
  %7598 = vst.msk [vmem:[#allocation2 + $0x208] sm:$0xf] %vm1436, %v7503
  %7599 = vst.msk [vmem:[#allocation2 + $0x218] sm:$0xf] %vm1436, %v7505
  %7600 = vst.msk [vmem:[#allocation2 + $0x228] sm:$0xf] %vm1436, %v7507
  %7601 = vst.msk [vmem:[#allocation2 + $0x238] sm:$0xf] %vm1436, %v7509
  %7602 = vst.msk [vmem:[#allocation2 + $0x248] sm:$0xf] %vm1436, %v7511
  %7603 = vst.msk [vmem:[#allocation2 + $0x258] sm:$0xf] %vm1436, %v7513
  %7604 = vst.msk [vmem:[#allocation2 + $0x268] sm:$0xf] %vm1436, %v7515
  %7605 = vst.msk [vmem:[#allocation2 + $0x278] sm:$0xf] %vm1436, %v7517
  %7606 = vst.msk [vmem:[#allocation2 + $0x288] sm:$0xf] %vm1436, %v7519
  %7607 = vst.msk [vmem:[#allocation2 + $0x298] sm:$0xf] %vm1436, %v7521
  %7608 = vst.msk [vmem:[#allocation2 + $0x2a8] sm:$0xf] %vm1436, %v7523
  %7609 = vst.msk [vmem:[#allocation2 + $0x2b8] sm:$0xf] %vm1436, %v7525
  %7610 = vst.msk [vmem:[#allocation2 + $0x2c8] sm:$0xf] %vm1436, %v7527
  %7611 = vst.msk [vmem:[#allocation2 + $0x2d8] sm:$0xf] %vm1436, %v7529
  %7612 = vst.msk [vmem:[#allocation2 + $0x2e8] sm:$0xf] %vm1436, %v7531
  %7613 = vst.msk [vmem:[#allocation2 + $0x2f8] sm:$0xf] %vm1436, %v7533
  %7614 = vst.msk [vmem:[#allocation2 + $0x308] sm:$0xf] %vm1436, %v7535
  %7615 = vst.msk [vmem:[#allocation2 + $0x318] sm:$0xf] %vm1436, %v7537
  %7616 = vst.msk [vmem:[#allocation2 + $0x328] sm:$0xf] %vm1436, %v7539
  %7617 = vst.msk [vmem:[#allocation2 + $0x338] sm:$0xf] %vm1436, %v7541
  %7618 = vst.msk [vmem:[#allocation2 + $0x348] sm:$0xf] %vm1436, %v7543
  %7619 = vst.msk [vmem:[#allocation2 + $0x358] sm:$0xf] %vm1436, %v7545
  %7620 = vst.msk [vmem:[#allocation2 + $0x368] sm:$0xf] %vm1436, %v7547
  %7621 = vst.msk [vmem:[#allocation2 + $0x378] sm:$0xf] %vm1436, %v7549
  %7622 = vst.msk [vmem:[#allocation2 + $0x388] sm:$0xf] %vm1436, %v7551
  %7623 = vst.msk [vmem:[#allocation2 + $0x398] sm:$0xf] %vm1436, %v7553
  %7624 = vst.msk [vmem:[#allocation2 + $0x3a8] sm:$0xf] %vm1436, %v7555
  %7625 = vst.msk [vmem:[#allocation2 + $0x3b8] sm:$0xf] %vm1436, %v7557
  %7626 = vst.msk [vmem:[#allocation2 + $0x3c8] sm:$0xf] %vm1436, %v7559
  %7627 = vst.msk [vmem:[#allocation2 + $0x3d8] sm:$0xf] %vm1436, %v7561
  %7628 = vst.msk [vmem:[#allocation2 + $0x3e8] sm:$0xf] %vm1436, %v7563
  %7629 = vst.msk [vmem:[#allocation2 + $0x3f8] sm:$0xf] %vm1436, %v7565
  %v7630 = vld [vmem:[%s6252] sm:$0xe]
  %v7631 = vld [vmem:[%s6252 + $0x4] sm:$0xf]
  %v7632 = vld [vmem:[%s6252 + $0x8] sm:$0x1]
  %v7633 = vld [vmem:[%s6252 + $0xc] sm:$0xe]
  %v7634 = vld [vmem:[%s6252 + $0x10] sm:$0xf]
  %v7635 = vld [vmem:[%s6252 + $0x14] sm:$0x1]
  %v7636 = vld [vmem:[%s6252 + $0x18] sm:$0xe]
  %v7637 = vld [vmem:[%s6252 + $0x1c] sm:$0xf]
  %v7638 = vld [vmem:[%s6252 + $0x20] sm:$0x1]
  %v7639 = vld [vmem:[%s6252 + $0x24] sm:$0xe]
  %v7640 = vld [vmem:[%s6252 + $0x28] sm:$0xf]
  %v7641 = vld [vmem:[%s6252 + $0x2c] sm:$0x1]
  %v7642 = vld [vmem:[%s6252 + $0x30] sm:$0xe]
  %v7643 = vld [vmem:[%s6252 + $0x34] sm:$0xf]
  %v7644 = vld [vmem:[%s6252 + $0x38] sm:$0x1]
  %v7645 = vld [vmem:[%s6252 + $0x3c] sm:$0xe]
  %v7646 = vld [vmem:[%s6252 + $0x40] sm:$0xf]
  %v7647 = vld [vmem:[%s6252 + $0x44] sm:$0x1]
  %v7648 = vld [vmem:[%s6252 + $0x48] sm:$0xe]
  %v7649 = vld [vmem:[%s6252 + $0x4c] sm:$0xf]
  %v7650 = vld [vmem:[%s6252 + $0x50] sm:$0x1]
  %v7651 = vld [vmem:[%s6252 + $0x54] sm:$0xe]
  %v7652 = vld [vmem:[%s6252 + $0x58] sm:$0xf]
  %v7653 = vld [vmem:[%s6252 + $0x5c] sm:$0x1]
  %v7654 = vld [vmem:[%s6252 + $0x60] sm:$0xe]
  %v7655 = vld [vmem:[%s6252 + $0x64] sm:$0xf]
  %v7656 = vld [vmem:[%s6252 + $0x68] sm:$0x1]
  %v7657 = vld [vmem:[%s6252 + $0x6c] sm:$0xe]
  %v7658 = vld [vmem:[%s6252 + $0x70] sm:$0xf]
  %v7659 = vld [vmem:[%s6252 + $0x74] sm:$0x1]
  %v7660 = vld [vmem:[%s6252 + $0x78] sm:$0xe]
  %v7661 = vld [vmem:[%s6252 + $0x7c] sm:$0xf]
  %v7662 = vld [vmem:[%s6252 + $0x80] sm:$0x1]
  %v7663 = vld [vmem:[%s6252 + $0x84] sm:$0xe]
  %v7664 = vld [vmem:[%s6252 + $0x88] sm:$0xf]
  %v7665 = vld [vmem:[%s6252 + $0x8c] sm:$0x1]
  %v7666 = vld [vmem:[%s6252 + $0x90] sm:$0xe]
  %v7667 = vld [vmem:[%s6252 + $0x94] sm:$0xf]
  %v7668 = vld [vmem:[%s6252 + $0x98] sm:$0x1]
  %v7669 = vld [vmem:[%s6252 + $0x9c] sm:$0xe]
  %v7670 = vld [vmem:[%s6252 + $0xa0] sm:$0xf]
  %v7671 = vld [vmem:[%s6252 + $0xa4] sm:$0x1]
  %v7672 = vld [vmem:[%s6252 + $0xa8] sm:$0xe]
  %v7673 = vld [vmem:[%s6252 + $0xac] sm:$0xf]
  %v7674 = vld [vmem:[%s6252 + $0xb0] sm:$0x1]
  %v7675 = vld [vmem:[%s6252 + $0xb4] sm:$0xe]
  %v7676 = vld [vmem:[%s6252 + $0xb8] sm:$0xf]
  %v7677 = vld [vmem:[%s6252 + $0xbc] sm:$0x1]
  %v7726 = vrot.slane %v7630, 5
  %v7727 = vrot.slane %v7726, 4
  %v7728 = vrot.slane %v7631, 5
  %v7729 = vsel %vm1567, %v7727, %v7728
  %v7730 = vrot.slane %v7728, 4
  %v7731 = vrot.slane %v7632, 5
  %v7732 = vsel %vm1567, %v7730, %v7731
  %v7733 = vrot.slane %v7633, 5
  %v7734 = vrot.slane %v7733, 4
  %v7735 = vrot.slane %v7634, 5
  %v7736 = vsel %vm1567, %v7734, %v7735
  %v7737 = vrot.slane %v7735, 4
  %v7738 = vrot.slane %v7635, 5
  %v7739 = vsel %vm1567, %v7737, %v7738
  %v7740 = vrot.slane %v7636, 5
  %v7741 = vrot.slane %v7740, 4
  %v7742 = vrot.slane %v7637, 5
  %v7743 = vsel %vm1567, %v7741, %v7742
  %v7744 = vrot.slane %v7742, 4
  %v7745 = vrot.slane %v7638, 5
  %v7746 = vsel %vm1567, %v7744, %v7745
  %v7747 = vrot.slane %v7639, 5
  %v7748 = vrot.slane %v7747, 4
  %v7749 = vrot.slane %v7640, 5
  %v7750 = vsel %vm1567, %v7748, %v7749
  %v7751 = vrot.slane %v7749, 4
  %v7752 = vrot.slane %v7641, 5
  %v7753 = vsel %vm1567, %v7751, %v7752
  %v7754 = vrot.slane %v7642, 5
  %v7755 = vrot.slane %v7754, 4
  %v7756 = vrot.slane %v7643, 5
  %v7757 = vsel %vm1567, %v7755, %v7756
  %v7758 = vrot.slane %v7756, 4
  %v7759 = vrot.slane %v7644, 5
  %v7760 = vsel %vm1567, %v7758, %v7759
  %v7761 = vrot.slane %v7645, 5
  %v7762 = vrot.slane %v7761, 4
  %v7763 = vrot.slane %v7646, 5
  %v7764 = vsel %vm1567, %v7762, %v7763
  %v7765 = vrot.slane %v7763, 4
  %v7766 = vrot.slane %v7647, 5
  %v7767 = vsel %vm1567, %v7765, %v7766
  %v7768 = vrot.slane %v7648, 5
  %v7769 = vrot.slane %v7768, 4
  %v7770 = vrot.slane %v7649, 5
  %v7771 = vsel %vm1567, %v7769, %v7770
  %v7772 = vrot.slane %v7770, 4
  %v7773 = vrot.slane %v7650, 5
  %v7774 = vsel %vm1567, %v7772, %v7773
  %v7775 = vrot.slane %v7651, 5
  %v7776 = vrot.slane %v7775, 4
  %v7777 = vrot.slane %v7652, 5
  %v7778 = vsel %vm1567, %v7776, %v7777
  %v7779 = vrot.slane %v7777, 4
  %v7780 = vrot.slane %v7653, 5
  %v7781 = vsel %vm1567, %v7779, %v7780
  %v7782 = vrot.slane %v7654, 5
  %v7783 = vrot.slane %v7782, 4
  %v7784 = vrot.slane %v7655, 5
  %v7785 = vsel %vm1567, %v7783, %v7784
  %v7786 = vrot.slane %v7784, 4
  %v7787 = vrot.slane %v7656, 5
  %v7788 = vsel %vm1567, %v7786, %v7787
  %v7789 = vrot.slane %v7657, 5
  %v7790 = vrot.slane %v7789, 4
  %v7791 = vrot.slane %v7658, 5
  %v7792 = vsel %vm1567, %v7790, %v7791
  %v7793 = vrot.slane %v7791, 4
  %v7794 = vrot.slane %v7659, 5
  %v7795 = vsel %vm1567, %v7793, %v7794
  %v7796 = vrot.slane %v7660, 5
  %v7797 = vrot.slane %v7796, 4
  %v7798 = vrot.slane %v7661, 5
  %v7799 = vsel %vm1567, %v7797, %v7798
  %v7800 = vrot.slane %v7798, 4
  %v7801 = vrot.slane %v7662, 5
  %v7802 = vsel %vm1567, %v7800, %v7801
  %v7803 = vrot.slane %v7663, 5
  %v7804 = vrot.slane %v7803, 4
  %v7805 = vrot.slane %v7664, 5
  %v7806 = vsel %vm1567, %v7804, %v7805
  %v7807 = vrot.slane %v7805, 4
  %v7808 = vrot.slane %v7665, 5
  %v7809 = vsel %vm1567, %v7807, %v7808
  %v7810 = vrot.slane %v7666, 5
  %v7811 = vrot.slane %v7810, 4
  %v7812 = vrot.slane %v7667, 5
  %v7813 = vsel %vm1567, %v7811, %v7812
  %v7814 = vrot.slane %v7812, 4
  %v7815 = vrot.slane %v7668, 5
  %v7816 = vsel %vm1567, %v7814, %v7815
  %v7817 = vrot.slane %v7669, 5
  %v7818 = vrot.slane %v7817, 4
  %v7819 = vrot.slane %v7670, 5
  %v7820 = vsel %vm1567, %v7818, %v7819
  %v7821 = vrot.slane %v7819, 4
  %v7822 = vrot.slane %v7671, 5
  %v7823 = vsel %vm1567, %v7821, %v7822
  %v7824 = vrot.slane %v7672, 5
  %v7825 = vrot.slane %v7824, 4
  %v7826 = vrot.slane %v7673, 5
  %v7827 = vsel %vm1567, %v7825, %v7826
  %v7828 = vrot.slane %v7826, 4
  %v7829 = vrot.slane %v7674, 5
  %v7830 = vsel %vm1567, %v7828, %v7829
  %v7831 = vrot.slane %v7675, 5
  %v7832 = vrot.slane %v7831, 4
  %v7833 = vrot.slane %v7676, 5
  %v7834 = vsel %vm1567, %v7832, %v7833
  %v7835 = vrot.slane %v7833, 4
  %v7836 = vrot.slane %v7677, 5
  %v7837 = vsel %vm1567, %v7835, %v7836
  %7838 = vrot.lane.b32.xlu0 %v7729, 64
  %v7839 = vpop.permute.xlu0 %7838
  %7840 = vrot.lane.b32.xlu0 %v7732, 64
  %v7841 = vpop.permute.xlu0 %7840
  %7842 = vrot.lane.b32.xlu0 %v7736, 64
  %v7843 = vpop.permute.xlu0 %7842
  %7844 = vrot.lane.b32.xlu0 %v7739, 64
  %v7845 = vpop.permute.xlu0 %7844
  %7846 = vrot.lane.b32.xlu0 %v7743, 64
  %v7847 = vpop.permute.xlu0 %7846
  %7848 = vrot.lane.b32.xlu0 %v7746, 64
  %v7849 = vpop.permute.xlu0 %7848
  %7850 = vrot.lane.b32.xlu0 %v7750, 64
  %v7851 = vpop.permute.xlu0 %7850
  %7852 = vrot.lane.b32.xlu0 %v7753, 64
  %v7853 = vpop.permute.xlu0 %7852
  %7854 = vrot.lane.b32.xlu0 %v7757, 64
  %v7855 = vpop.permute.xlu0 %7854
  %7856 = vrot.lane.b32.xlu0 %v7760, 64
  %v7857 = vpop.permute.xlu0 %7856
  %7858 = vrot.lane.b32.xlu0 %v7764, 64
  %v7859 = vpop.permute.xlu0 %7858
  %7860 = vrot.lane.b32.xlu0 %v7767, 64
  %v7861 = vpop.permute.xlu0 %7860
  %7862 = vrot.lane.b32.xlu0 %v7771, 64
  %v7863 = vpop.permute.xlu0 %7862
  %7864 = vrot.lane.b32.xlu0 %v7774, 64
  %v7865 = vpop.permute.xlu0 %7864
  %7866 = vrot.lane.b32.xlu0 %v7778, 64
  %v7867 = vpop.permute.xlu0 %7866
  %7868 = vrot.lane.b32.xlu0 %v7781, 64
  %v7869 = vpop.permute.xlu0 %7868
  %7870 = vrot.lane.b32.xlu0 %v7785, 64
  %v7871 = vpop.permute.xlu0 %7870
  %7872 = vrot.lane.b32.xlu0 %v7788, 64
  %v7873 = vpop.permute.xlu0 %7872
  %7874 = vrot.lane.b32.xlu0 %v7792, 64
  %v7875 = vpop.permute.xlu0 %7874
  %7876 = vrot.lane.b32.xlu0 %v7795, 64
  %v7877 = vpop.permute.xlu0 %7876
  %7878 = vrot.lane.b32.xlu0 %v7799, 64
  %v7879 = vpop.permute.xlu0 %7878
  %7880 = vrot.lane.b32.xlu0 %v7802, 64
  %v7881 = vpop.permute.xlu0 %7880
  %7882 = vrot.lane.b32.xlu0 %v7806, 64
  %v7883 = vpop.permute.xlu0 %7882
  %7884 = vrot.lane.b32.xlu0 %v7809, 64
  %v7885 = vpop.permute.xlu0 %7884
  %7886 = vrot.lane.b32.xlu0 %v7813, 64
  %v7887 = vpop.permute.xlu0 %7886
  %7888 = vrot.lane.b32.xlu0 %v7816, 64
  %v7889 = vpop.permute.xlu0 %7888
  %7890 = vrot.lane.b32.xlu0 %v7820, 64
  %v7891 = vpop.permute.xlu0 %7890
  %7892 = vrot.lane.b32.xlu0 %v7823, 64
  %v7893 = vpop.permute.xlu0 %7892
  %7894 = vrot.lane.b32.xlu0 %v7827, 64
  %v7895 = vpop.permute.xlu0 %7894
  %7896 = vrot.lane.b32.xlu0 %v7830, 64
  %v7897 = vpop.permute.xlu0 %7896
  %7898 = vrot.lane.b32.xlu0 %v7834, 64
  %v7899 = vpop.permute.xlu0 %7898
  %7900 = vrot.lane.b32.xlu0 %v7837, 64
  %v7901 = vpop.permute.xlu0 %7900
  %7934 = vst.msk [vmem:[#allocation2 + $0x200] sm:$0xf] %vm1776, %v7839
  %7935 = vst.msk [vmem:[#allocation2 + $0x210] sm:$0xf] %vm1776, %v7841
  %7936 = vst.msk [vmem:[#allocation2 + $0x220] sm:$0xf] %vm1776, %v7843
  %7937 = vst.msk [vmem:[#allocation2 + $0x230] sm:$0xf] %vm1776, %v7845
  %7938 = vst.msk [vmem:[#allocation2 + $0x240] sm:$0xf] %vm1776, %v7847
  %7939 = vst.msk [vmem:[#allocation2 + $0x250] sm:$0xf] %vm1776, %v7849
  %7940 = vst.msk [vmem:[#allocation2 + $0x260] sm:$0xf] %vm1776, %v7851
  %7941 = vst.msk [vmem:[#allocation2 + $0x270] sm:$0xf] %vm1776, %v7853
  %7942 = vst.msk [vmem:[#allocation2 + $0x280] sm:$0xf] %vm1776, %v7855
  %7943 = vst.msk [vmem:[#allocation2 + $0x290] sm:$0xf] %vm1776, %v7857
  %7944 = vst.msk [vmem:[#allocation2 + $0x2a0] sm:$0xf] %vm1776, %v7859
  %7945 = vst.msk [vmem:[#allocation2 + $0x2b0] sm:$0xf] %vm1776, %v7861
  %7946 = vst.msk [vmem:[#allocation2 + $0x2c0] sm:$0xf] %vm1776, %v7863
  %7947 = vst.msk [vmem:[#allocation2 + $0x2d0] sm:$0xf] %vm1776, %v7865
  %7948 = vst.msk [vmem:[#allocation2 + $0x2e0] sm:$0xf] %vm1776, %v7867
  %7949 = vst.msk [vmem:[#allocation2 + $0x2f0] sm:$0xf] %vm1776, %v7869
  %7950 = vst.msk [vmem:[#allocation2 + $0x300] sm:$0xf] %vm1776, %v7871
  %7951 = vst.msk [vmem:[#allocation2 + $0x310] sm:$0xf] %vm1776, %v7873
  %7952 = vst.msk [vmem:[#allocation2 + $0x320] sm:$0xf] %vm1776, %v7875
  %7953 = vst.msk [vmem:[#allocation2 + $0x330] sm:$0xf] %vm1776, %v7877
  %7954 = vst.msk [vmem:[#allocation2 + $0x340] sm:$0xf] %vm1776, %v7879
  %7955 = vst.msk [vmem:[#allocation2 + $0x350] sm:$0xf] %vm1776, %v7881
  %7956 = vst.msk [vmem:[#allocation2 + $0x360] sm:$0xf] %vm1776, %v7883
  %7957 = vst.msk [vmem:[#allocation2 + $0x370] sm:$0xf] %vm1776, %v7885
  %7958 = vst.msk [vmem:[#allocation2 + $0x380] sm:$0xf] %vm1776, %v7887
  %7959 = vst.msk [vmem:[#allocation2 + $0x390] sm:$0xf] %vm1776, %v7889
  %7960 = vst.msk [vmem:[#allocation2 + $0x3a0] sm:$0xf] %vm1776, %v7891
  %7961 = vst.msk [vmem:[#allocation2 + $0x3b0] sm:$0xf] %vm1776, %v7893
  %7962 = vst.msk [vmem:[#allocation2 + $0x3c0] sm:$0xf] %vm1776, %v7895
  %7963 = vst.msk [vmem:[#allocation2 + $0x3d0] sm:$0xf] %vm1776, %v7897
  %7964 = vst.msk [vmem:[#allocation2 + $0x3e0] sm:$0xf] %vm1776, %v7899
  %7965 = vst.msk [vmem:[#allocation2 + $0x3f0] sm:$0xf] %vm1776, %v7901
  %v7966 = vld [vmem:[%s6317] sm:$0xe]
  %v7967 = vld [vmem:[%s6317 + $0x4] sm:$0xf]
  %v7968 = vld [vmem:[%s6317 + $0x8] sm:$0x1]
  %v7969 = vld [vmem:[%s6317 + $0xc] sm:$0xe]
  %v7970 = vld [vmem:[%s6317 + $0x10] sm:$0xf]
  %v7971 = vld [vmem:[%s6317 + $0x14] sm:$0x1]
  %v7972 = vld [vmem:[%s6317 + $0x18] sm:$0xe]
  %v7973 = vld [vmem:[%s6317 + $0x1c] sm:$0xf]
  %v7974 = vld [vmem:[%s6317 + $0x20] sm:$0x1]
  %v7975 = vld [vmem:[%s6317 + $0x24] sm:$0xe]
  %v7976 = vld [vmem:[%s6317 + $0x28] sm:$0xf]
  %v7977 = vld [vmem:[%s6317 + $0x2c] sm:$0x1]
  %v7978 = vld [vmem:[%s6317 + $0x30] sm:$0xe]
  %v7979 = vld [vmem:[%s6317 + $0x34] sm:$0xf]
  %v7980 = vld [vmem:[%s6317 + $0x38] sm:$0x1]
  %v7981 = vld [vmem:[%s6317 + $0x3c] sm:$0xe]
  %v7982 = vld [vmem:[%s6317 + $0x40] sm:$0xf]
  %v7983 = vld [vmem:[%s6317 + $0x44] sm:$0x1]
  %v7984 = vld [vmem:[%s6317 + $0x48] sm:$0xe]
  %v7985 = vld [vmem:[%s6317 + $0x4c] sm:$0xf]
  %v7986 = vld [vmem:[%s6317 + $0x50] sm:$0x1]
  %v7987 = vld [vmem:[%s6317 + $0x54] sm:$0xe]
  %v7988 = vld [vmem:[%s6317 + $0x58] sm:$0xf]
  %v7989 = vld [vmem:[%s6317 + $0x5c] sm:$0x1]
  %v7990 = vld [vmem:[%s6317 + $0x60] sm:$0xe]
  %v7991 = vld [vmem:[%s6317 + $0x64] sm:$0xf]
  %v7992 = vld [vmem:[%s6317 + $0x68] sm:$0x1]
  %v7993 = vld [vmem:[%s6317 + $0x6c] sm:$0xe]
  %v7994 = vld [vmem:[%s6317 + $0x70] sm:$0xf]
  %v7995 = vld [vmem:[%s6317 + $0x74] sm:$0x1]
  %v7996 = vld [vmem:[%s6317 + $0x78] sm:$0xe]
  %v7997 = vld [vmem:[%s6317 + $0x7c] sm:$0xf]
  %v7998 = vld [vmem:[%s6317 + $0x80] sm:$0x1]
  %v7999 = vld [vmem:[%s6317 + $0x84] sm:$0xe]
  %v8000 = vld [vmem:[%s6317 + $0x88] sm:$0xf]
  %v8001 = vld [vmem:[%s6317 + $0x8c] sm:$0x1]
  %v8002 = vld [vmem:[%s6317 + $0x90] sm:$0xe]
  %v8003 = vld [vmem:[%s6317 + $0x94] sm:$0xf]
  %v8004 = vld [vmem:[%s6317 + $0x98] sm:$0x1]
  %v8005 = vld [vmem:[%s6317 + $0x9c] sm:$0xe]
  %v8006 = vld [vmem:[%s6317 + $0xa0] sm:$0xf]
  %v8007 = vld [vmem:[%s6317 + $0xa4] sm:$0x1]
  %v8008 = vld [vmem:[%s6317 + $0xa8] sm:$0xe]
  %v8009 = vld [vmem:[%s6317 + $0xac] sm:$0xf]
  %v8010 = vld [vmem:[%s6317 + $0xb0] sm:$0x1]
  %v8011 = vld [vmem:[%s6317 + $0xb4] sm:$0xe]
  %v8012 = vld [vmem:[%s6317 + $0xb8] sm:$0xf]
  %v8013 = vld [vmem:[%s6317 + $0xbc] sm:$0x1]
  %v8062 = vrot.slane %v7966, 5
  %v8063 = vrot.slane %v8062, 4
  %v8064 = vrot.slane %v7967, 5
  %v8065 = vsel %vm1567, %v8063, %v8064
  %v8066 = vrot.slane %v8064, 4
  %v8067 = vrot.slane %v7968, 5
  %v8068 = vsel %vm1567, %v8066, %v8067
  %v8069 = vrot.slane %v7969, 5
  %v8070 = vrot.slane %v8069, 4
  %v8071 = vrot.slane %v7970, 5
  %v8072 = vsel %vm1567, %v8070, %v8071
  %v8073 = vrot.slane %v8071, 4
  %v8074 = vrot.slane %v7971, 5
  %v8075 = vsel %vm1567, %v8073, %v8074
  %v8076 = vrot.slane %v7972, 5
  %v8077 = vrot.slane %v8076, 4
  %v8078 = vrot.slane %v7973, 5
  %v8079 = vsel %vm1567, %v8077, %v8078
  %v8080 = vrot.slane %v8078, 4
  %v8081 = vrot.slane %v7974, 5
  %v8082 = vsel %vm1567, %v8080, %v8081
  %v8083 = vrot.slane %v7975, 5
  %v8084 = vrot.slane %v8083, 4
  %v8085 = vrot.slane %v7976, 5
  %v8086 = vsel %vm1567, %v8084, %v8085
  %v8087 = vrot.slane %v8085, 4
  %v8088 = vrot.slane %v7977, 5
  %v8089 = vsel %vm1567, %v8087, %v8088
  %v8090 = vrot.slane %v7978, 5
  %v8091 = vrot.slane %v8090, 4
  %v8092 = vrot.slane %v7979, 5
  %v8093 = vsel %vm1567, %v8091, %v8092
  %v8094 = vrot.slane %v8092, 4
  %v8095 = vrot.slane %v7980, 5
  %v8096 = vsel %vm1567, %v8094, %v8095
  %v8097 = vrot.slane %v7981, 5
  %v8098 = vrot.slane %v8097, 4
  %v8099 = vrot.slane %v7982, 5
  %v8100 = vsel %vm1567, %v8098, %v8099
  %v8101 = vrot.slane %v8099, 4
  %v8102 = vrot.slane %v7983, 5
  %v8103 = vsel %vm1567, %v8101, %v8102
  %v8104 = vrot.slane %v7984, 5
  %v8105 = vrot.slane %v8104, 4
  %v8106 = vrot.slane %v7985, 5
  %v8107 = vsel %vm1567, %v8105, %v8106
  %v8108 = vrot.slane %v8106, 4
  %v8109 = vrot.slane %v7986, 5
  %v8110 = vsel %vm1567, %v8108, %v8109
  %v8111 = vrot.slane %v7987, 5
  %v8112 = vrot.slane %v8111, 4
  %v8113 = vrot.slane %v7988, 5
  %v8114 = vsel %vm1567, %v8112, %v8113
  %v8115 = vrot.slane %v8113, 4
  %v8116 = vrot.slane %v7989, 5
  %v8117 = vsel %vm1567, %v8115, %v8116
  %v8118 = vrot.slane %v7990, 5
  %v8119 = vrot.slane %v8118, 4
  %v8120 = vrot.slane %v7991, 5
  %v8121 = vsel %vm1567, %v8119, %v8120
  %v8122 = vrot.slane %v8120, 4
  %v8123 = vrot.slane %v7992, 5
  %v8124 = vsel %vm1567, %v8122, %v8123
  %v8125 = vrot.slane %v7993, 5
  %v8126 = vrot.slane %v8125, 4
  %v8127 = vrot.slane %v7994, 5
  %v8128 = vsel %vm1567, %v8126, %v8127
  %v8129 = vrot.slane %v8127, 4
  %v8130 = vrot.slane %v7995, 5
  %v8131 = vsel %vm1567, %v8129, %v8130
  %v8132 = vrot.slane %v7996, 5
  %v8133 = vrot.slane %v8132, 4
  %v8134 = vrot.slane %v7997, 5
  %v8135 = vsel %vm1567, %v8133, %v8134
  %v8136 = vrot.slane %v8134, 4
  %v8137 = vrot.slane %v7998, 5
  %v8138 = vsel %vm1567, %v8136, %v8137
  %v8139 = vrot.slane %v7999, 5
  %v8140 = vrot.slane %v8139, 4
  %v8141 = vrot.slane %v8000, 5
  %v8142 = vsel %vm1567, %v8140, %v8141
  %v8143 = vrot.slane %v8141, 4
  %v8144 = vrot.slane %v8001, 5
  %v8145 = vsel %vm1567, %v8143, %v8144
  %v8146 = vrot.slane %v8002, 5
  %v8147 = vrot.slane %v8146, 4
  %v8148 = vrot.slane %v8003, 5
  %v8149 = vsel %vm1567, %v8147, %v8148
  %v8150 = vrot.slane %v8148, 4
  %v8151 = vrot.slane %v8004, 5
  %v8152 = vsel %vm1567, %v8150, %v8151
  %v8153 = vrot.slane %v8005, 5
  %v8154 = vrot.slane %v8153, 4
  %v8155 = vrot.slane %v8006, 5
  %v8156 = vsel %vm1567, %v8154, %v8155
  %v8157 = vrot.slane %v8155, 4
  %v8158 = vrot.slane %v8007, 5
  %v8159 = vsel %vm1567, %v8157, %v8158
  %v8160 = vrot.slane %v8008, 5
  %v8161 = vrot.slane %v8160, 4
  %v8162 = vrot.slane %v8009, 5
  %v8163 = vsel %vm1567, %v8161, %v8162
  %v8164 = vrot.slane %v8162, 4
  %v8165 = vrot.slane %v8010, 5
  %v8166 = vsel %vm1567, %v8164, %v8165
  %v8167 = vrot.slane %v8011, 5
  %v8168 = vrot.slane %v8167, 4
  %v8169 = vrot.slane %v8012, 5
  %v8170 = vsel %vm1567, %v8168, %v8169
  %v8171 = vrot.slane %v8169, 4
  %v8172 = vrot.slane %v8013, 5
  %v8173 = vsel %vm1567, %v8171, %v8172
  %8174 = vrot.lane.b32.xlu0 %v8065, 64
  %v8175 = vpop.permute.xlu0 %8174
  %8176 = vrot.lane.b32.xlu0 %v8068, 64
  %v8177 = vpop.permute.xlu0 %8176
  %8178 = vrot.lane.b32.xlu0 %v8072, 64
  %v8179 = vpop.permute.xlu0 %8178
  %8180 = vrot.lane.b32.xlu0 %v8075, 64
  %v8181 = vpop.permute.xlu0 %8180
  %8182 = vrot.lane.b32.xlu0 %v8079, 64
  %v8183 = vpop.permute.xlu0 %8182
  %8184 = vrot.lane.b32.xlu0 %v8082, 64
  %v8185 = vpop.permute.xlu0 %8184
  %8186 = vrot.lane.b32.xlu0 %v8086, 64
  %v8187 = vpop.permute.xlu0 %8186
  %8188 = vrot.lane.b32.xlu0 %v8089, 64
  %v8189 = vpop.permute.xlu0 %8188
  %8190 = vrot.lane.b32.xlu0 %v8093, 64
  %v8191 = vpop.permute.xlu0 %8190
  %8192 = vrot.lane.b32.xlu0 %v8096, 64
  %v8193 = vpop.permute.xlu0 %8192
  %8194 = vrot.lane.b32.xlu0 %v8100, 64
  %v8195 = vpop.permute.xlu0 %8194
  %8196 = vrot.lane.b32.xlu0 %v8103, 64
  %v8197 = vpop.permute.xlu0 %8196
  %8198 = vrot.lane.b32.xlu0 %v8107, 64
  %v8199 = vpop.permute.xlu0 %8198
  %8200 = vrot.lane.b32.xlu0 %v8110, 64
  %v8201 = vpop.permute.xlu0 %8200
  %8202 = vrot.lane.b32.xlu0 %v8114, 64
  %v8203 = vpop.permute.xlu0 %8202
  %8204 = vrot.lane.b32.xlu0 %v8117, 64
  %v8205 = vpop.permute.xlu0 %8204
  %8206 = vrot.lane.b32.xlu0 %v8121, 64
  %v8207 = vpop.permute.xlu0 %8206
  %8208 = vrot.lane.b32.xlu0 %v8124, 64
  %v8209 = vpop.permute.xlu0 %8208
  %8210 = vrot.lane.b32.xlu0 %v8128, 64
  %v8211 = vpop.permute.xlu0 %8210
  %8212 = vrot.lane.b32.xlu0 %v8131, 64
  %v8213 = vpop.permute.xlu0 %8212
  %8214 = vrot.lane.b32.xlu0 %v8135, 64
  %v8215 = vpop.permute.xlu0 %8214
  %8216 = vrot.lane.b32.xlu0 %v8138, 64
  %v8217 = vpop.permute.xlu0 %8216
  %8218 = vrot.lane.b32.xlu0 %v8142, 64
  %v8219 = vpop.permute.xlu0 %8218
  %8220 = vrot.lane.b32.xlu0 %v8145, 64
  %v8221 = vpop.permute.xlu0 %8220
  %8222 = vrot.lane.b32.xlu0 %v8149, 64
  %v8223 = vpop.permute.xlu0 %8222
  %8224 = vrot.lane.b32.xlu0 %v8152, 64
  %v8225 = vpop.permute.xlu0 %8224
  %8226 = vrot.lane.b32.xlu0 %v8156, 64
  %v8227 = vpop.permute.xlu0 %8226
  %8228 = vrot.lane.b32.xlu0 %v8159, 64
  %v8229 = vpop.permute.xlu0 %8228
  %8230 = vrot.lane.b32.xlu0 %v8163, 64
  %v8231 = vpop.permute.xlu0 %8230
  %8232 = vrot.lane.b32.xlu0 %v8166, 64
  %v8233 = vpop.permute.xlu0 %8232
  %8234 = vrot.lane.b32.xlu0 %v8170, 64
  %v8235 = vpop.permute.xlu0 %8234
  %8236 = vrot.lane.b32.xlu0 %v8173, 64
  %v8237 = vpop.permute.xlu0 %8236
  %8270 = vst.msk [vmem:[#allocation2 + $0x208] sm:$0xf] %vm2113, %v8175
  %8271 = vst.msk [vmem:[#allocation2 + $0x218] sm:$0xf] %vm2113, %v8177
  %8272 = vst.msk [vmem:[#allocation2 + $0x228] sm:$0xf] %vm2113, %v8179
  %8273 = vst.msk [vmem:[#allocation2 + $0x238] sm:$0xf] %vm2113, %v8181
  %8274 = vst.msk [vmem:[#allocation2 + $0x248] sm:$0xf] %vm2113, %v8183
  %8275 = vst.msk [vmem:[#allocation2 + $0x258] sm:$0xf] %vm2113, %v8185
  %8276 = vst.msk [vmem:[#allocation2 + $0x268] sm:$0xf] %vm2113, %v8187
  %8277 = vst.msk [vmem:[#allocation2 + $0x278] sm:$0xf] %vm2113, %v8189
  %8278 = vst.msk [vmem:[#allocation2 + $0x288] sm:$0xf] %vm2113, %v8191
  %8279 = vst.msk [vmem:[#allocation2 + $0x298] sm:$0xf] %vm2113, %v8193
  %8280 = vst.msk [vmem:[#allocation2 + $0x2a8] sm:$0xf] %vm2113, %v8195
  %8281 = vst.msk [vmem:[#allocation2 + $0x2b8] sm:$0xf] %vm2113, %v8197
  %8282 = vst.msk [vmem:[#allocation2 + $0x2c8] sm:$0xf] %vm2113, %v8199
  %8283 = vst.msk [vmem:[#allocation2 + $0x2d8] sm:$0xf] %vm2113, %v8201
  %8284 = vst.msk [vmem:[#allocation2 + $0x2e8] sm:$0xf] %vm2113, %v8203
  %8285 = vst.msk [vmem:[#allocation2 + $0x2f8] sm:$0xf] %vm2113, %v8205
  %8286 = vst.msk [vmem:[#allocation2 + $0x308] sm:$0xf] %vm2113, %v8207
  %8287 = vst.msk [vmem:[#allocation2 + $0x318] sm:$0xf] %vm2113, %v8209
  %8288 = vst.msk [vmem:[#allocation2 + $0x328] sm:$0xf] %vm2113, %v8211
  %8289 = vst.msk [vmem:[#allocation2 + $0x338] sm:$0xf] %vm2113, %v8213
  %8290 = vst.msk [vmem:[#allocation2 + $0x348] sm:$0xf] %vm2113, %v8215
  %8291 = vst.msk [vmem:[#allocation2 + $0x358] sm:$0xf] %vm2113, %v8217
  %8292 = vst.msk [vmem:[#allocation2 + $0x368] sm:$0xf] %vm2113, %v8219
  %8293 = vst.msk [vmem:[#allocation2 + $0x378] sm:$0xf] %vm2113, %v8221
  %8294 = vst.msk [vmem:[#allocation2 + $0x388] sm:$0xf] %vm2113, %v8223
  %8295 = vst.msk [vmem:[#allocation2 + $0x398] sm:$0xf] %vm2113, %v8225
  %8296 = vst.msk [vmem:[#allocation2 + $0x3a8] sm:$0xf] %vm2113, %v8227
  %8297 = vst.msk [vmem:[#allocation2 + $0x3b8] sm:$0xf] %vm2113, %v8229
  %8298 = vst.msk [vmem:[#allocation2 + $0x3c8] sm:$0xf] %vm2113, %v8231
  %8299 = vst.msk [vmem:[#allocation2 + $0x3d8] sm:$0xf] %vm2113, %v8233
  %8300 = vst.msk [vmem:[#allocation2 + $0x3e8] sm:$0xf] %vm2113, %v8235
  %8301 = vst.msk [vmem:[#allocation2 + $0x3f8] sm:$0xf] %vm2113, %v8237
  %s8302 = scalar_lea.vmem %s0, 228
  %v8303 = vld [vmem:[%s8302] sm:$0xf]
  %v8304 = vld [vmem:[%s8302 + $0x4] sm:$0xf]
  %v8305 = vld [vmem:[%s8302 + $0xc] sm:$0xf]
  %v8306 = vld [vmem:[%s8302 + $0x10] sm:$0xf]
  %v8307 = vld [vmem:[%s8302 + $0x18] sm:$0xf]
  %v8308 = vld [vmem:[%s8302 + $0x1c] sm:$0xf]
  %v8309 = vld [vmem:[%s8302 + $0x24] sm:$0xf]
  %v8310 = vld [vmem:[%s8302 + $0x28] sm:$0xf]
  %v8311 = vld [vmem:[%s8302 + $0x30] sm:$0xf]
  %v8312 = vld [vmem:[%s8302 + $0x34] sm:$0xf]
  %v8313 = vld [vmem:[%s8302 + $0x3c] sm:$0xf]
  %v8314 = vld [vmem:[%s8302 + $0x40] sm:$0xf]
  %v8315 = vld [vmem:[%s8302 + $0x48] sm:$0xf]
  %v8316 = vld [vmem:[%s8302 + $0x4c] sm:$0xf]
  %v8317 = vld [vmem:[%s8302 + $0x54] sm:$0xf]
  %v8318 = vld [vmem:[%s8302 + $0x58] sm:$0xf]
  %v8319 = vld [vmem:[%s8302 + $0x60] sm:$0xf]
  %v8320 = vld [vmem:[%s8302 + $0x64] sm:$0xf]
  %v8321 = vld [vmem:[%s8302 + $0x6c] sm:$0xf]
  %v8322 = vld [vmem:[%s8302 + $0x70] sm:$0xf]
  %v8323 = vld [vmem:[%s8302 + $0x78] sm:$0xf]
  %v8324 = vld [vmem:[%s8302 + $0x7c] sm:$0xf]
  %v8325 = vld [vmem:[%s8302 + $0x84] sm:$0xf]
  %v8326 = vld [vmem:[%s8302 + $0x88] sm:$0xf]
  %v8327 = vld [vmem:[%s8302 + $0x90] sm:$0xf]
  %v8328 = vld [vmem:[%s8302 + $0x94] sm:$0xf]
  %v8329 = vld [vmem:[%s8302 + $0x9c] sm:$0xf]
  %v8330 = vld [vmem:[%s8302 + $0xa0] sm:$0xf]
  %v8331 = vld [vmem:[%s8302 + $0xa8] sm:$0xf]
  %v8332 = vld [vmem:[%s8302 + $0xac] sm:$0xf]
  %v8333 = vld [vmem:[%s8302 + $0xb4] sm:$0xf]
  %v8334 = vld [vmem:[%s8302 + $0xb8] sm:$0xf]
  %8367 = vrot.lane.b32.xlu0 %v8303, 96
  %v8368 = vpop.permute.xlu0 %8367
  %8369 = vrot.lane.b32.xlu0 %v8304, 96
  %v8370 = vpop.permute.xlu0 %8369
  %8371 = vrot.lane.b32.xlu0 %v8305, 96
  %v8372 = vpop.permute.xlu0 %8371
  %8373 = vrot.lane.b32.xlu0 %v8306, 96
  %v8374 = vpop.permute.xlu0 %8373
  %8375 = vrot.lane.b32.xlu0 %v8307, 96
  %v8376 = vpop.permute.xlu0 %8375
  %8377 = vrot.lane.b32.xlu0 %v8308, 96
  %v8378 = vpop.permute.xlu0 %8377
  %8379 = vrot.lane.b32.xlu0 %v8309, 96
  %v8380 = vpop.permute.xlu0 %8379
  %8381 = vrot.lane.b32.xlu0 %v8310, 96
  %v8382 = vpop.permute.xlu0 %8381
  %8383 = vrot.lane.b32.xlu0 %v8311, 96
  %v8384 = vpop.permute.xlu0 %8383
  %8385 = vrot.lane.b32.xlu0 %v8312, 96
  %v8386 = vpop.permute.xlu0 %8385
  %8387 = vrot.lane.b32.xlu0 %v8313, 96
  %v8388 = vpop.permute.xlu0 %8387
  %8389 = vrot.lane.b32.xlu0 %v8314, 96
  %v8390 = vpop.permute.xlu0 %8389
  %8391 = vrot.lane.b32.xlu0 %v8315, 96
  %v8392 = vpop.permute.xlu0 %8391
  %8393 = vrot.lane.b32.xlu0 %v8316, 96
  %v8394 = vpop.permute.xlu0 %8393
  %8395 = vrot.lane.b32.xlu0 %v8317, 96
  %v8396 = vpop.permute.xlu0 %8395
  %8397 = vrot.lane.b32.xlu0 %v8318, 96
  %v8398 = vpop.permute.xlu0 %8397
  %8399 = vrot.lane.b32.xlu0 %v8319, 96
  %v8400 = vpop.permute.xlu0 %8399
  %8401 = vrot.lane.b32.xlu0 %v8320, 96
  %v8402 = vpop.permute.xlu0 %8401
  %8403 = vrot.lane.b32.xlu0 %v8321, 96
  %v8404 = vpop.permute.xlu0 %8403
  %8405 = vrot.lane.b32.xlu0 %v8322, 96
  %v8406 = vpop.permute.xlu0 %8405
  %8407 = vrot.lane.b32.xlu0 %v8323, 96
  %v8408 = vpop.permute.xlu0 %8407
  %8409 = vrot.lane.b32.xlu0 %v8324, 96
  %v8410 = vpop.permute.xlu0 %8409
  %8411 = vrot.lane.b32.xlu0 %v8325, 96
  %v8412 = vpop.permute.xlu0 %8411
  %8413 = vrot.lane.b32.xlu0 %v8326, 96
  %v8414 = vpop.permute.xlu0 %8413
  %8415 = vrot.lane.b32.xlu0 %v8327, 96
  %v8416 = vpop.permute.xlu0 %8415
  %8417 = vrot.lane.b32.xlu0 %v8328, 96
  %v8418 = vpop.permute.xlu0 %8417
  %8419 = vrot.lane.b32.xlu0 %v8329, 96
  %v8420 = vpop.permute.xlu0 %8419
  %8421 = vrot.lane.b32.xlu0 %v8330, 96
  %v8422 = vpop.permute.xlu0 %8421
  %8423 = vrot.lane.b32.xlu0 %v8331, 96
  %v8424 = vpop.permute.xlu0 %8423
  %8425 = vrot.lane.b32.xlu0 %v8332, 96
  %v8426 = vpop.permute.xlu0 %8425
  %8427 = vrot.lane.b32.xlu0 %v8333, 96
  %v8428 = vpop.permute.xlu0 %8427
  %8429 = vrot.lane.b32.xlu0 %v8334, 96
  %v8430 = vpop.permute.xlu0 %8429
  %8463 = vst.msk [vmem:[#allocation2 + $0x200] sm:$0xf] %vm2307, %v8368
  %8464 = vst.msk [vmem:[#allocation2 + $0x210] sm:$0xf] %vm2307, %v8370
  %8465 = vst.msk [vmem:[#allocation2 + $0x220] sm:$0xf] %vm2307, %v8372
  %8466 = vst.msk [vmem:[#allocation2 + $0x230] sm:$0xf] %vm2307, %v8374
  %8467 = vst.msk [vmem:[#allocation2 + $0x240] sm:$0xf] %vm2307, %v8376
  %8468 = vst.msk [vmem:[#allocation2 + $0x250] sm:$0xf] %vm2307, %v8378
  %8469 = vst.msk [vmem:[#allocation2 + $0x260] sm:$0xf] %vm2307, %v8380
  %8470 = vst.msk [vmem:[#allocation2 + $0x270] sm:$0xf] %vm2307, %v8382
  %8471 = vst.msk [vmem:[#allocation2 + $0x280] sm:$0xf] %vm2307, %v8384
  %8472 = vst.msk [vmem:[#allocation2 + $0x290] sm:$0xf] %vm2307, %v8386
  %8473 = vst.msk [vmem:[#allocation2 + $0x2a0] sm:$0xf] %vm2307, %v8388
  %8474 = vst.msk [vmem:[#allocation2 + $0x2b0] sm:$0xf] %vm2307, %v8390
  %8475 = vst.msk [vmem:[#allocation2 + $0x2c0] sm:$0xf] %vm2307, %v8392
  %8476 = vst.msk [vmem:[#allocation2 + $0x2d0] sm:$0xf] %vm2307, %v8394
  %8477 = vst.msk [vmem:[#allocation2 + $0x2e0] sm:$0xf] %vm2307, %v8396
  %8478 = vst.msk [vmem:[#allocation2 + $0x2f0] sm:$0xf] %vm2307, %v8398
  %8479 = vst.msk [vmem:[#allocation2 + $0x300] sm:$0xf] %vm2307, %v8400
  %8480 = vst.msk [vmem:[#allocation2 + $0x310] sm:$0xf] %vm2307, %v8402
  %8481 = vst.msk [vmem:[#allocation2 + $0x320] sm:$0xf] %vm2307, %v8404
  %8482 = vst.msk [vmem:[#allocation2 + $0x330] sm:$0xf] %vm2307, %v8406
  %8483 = vst.msk [vmem:[#allocation2 + $0x340] sm:$0xf] %vm2307, %v8408
  %8484 = vst.msk [vmem:[#allocation2 + $0x350] sm:$0xf] %vm2307, %v8410
  %8485 = vst.msk [vmem:[#allocation2 + $0x360] sm:$0xf] %vm2307, %v8412
  %8486 = vst.msk [vmem:[#allocation2 + $0x370] sm:$0xf] %vm2307, %v8414
  %8487 = vst.msk [vmem:[#allocation2 + $0x380] sm:$0xf] %vm2307, %v8416
  %8488 = vst.msk [vmem:[#allocation2 + $0x390] sm:$0xf] %vm2307, %v8418
  %8489 = vst.msk [vmem:[#allocation2 + $0x3a0] sm:$0xf] %vm2307, %v8420
  %8490 = vst.msk [vmem:[#allocation2 + $0x3b0] sm:$0xf] %vm2307, %v8422
  %8491 = vst.msk [vmem:[#allocation2 + $0x3c0] sm:$0xf] %vm2307, %v8424
  %8492 = vst.msk [vmem:[#allocation2 + $0x3d0] sm:$0xf] %vm2307, %v8426
  %8493 = vst.msk [vmem:[#allocation2 + $0x3e0] sm:$0xf] %vm2307, %v8428
  %8494 = vst.msk [vmem:[#allocation2 + $0x3f0] sm:$0xf] %vm2307, %v8430
  %s8495 = scalar_lea.vmem %s1, 228
  %v8496 = vld [vmem:[%s8495] sm:$0xf]
  %v8497 = vld [vmem:[%s8495 + $0x4] sm:$0xf]
  %v8498 = vld [vmem:[%s8495 + $0xc] sm:$0xf]
  %v8499 = vld [vmem:[%s8495 + $0x10] sm:$0xf]
  %v8500 = vld [vmem:[%s8495 + $0x18] sm:$0xf]
  %v8501 = vld [vmem:[%s8495 + $0x1c] sm:$0xf]
  %v8502 = vld [vmem:[%s8495 + $0x24] sm:$0xf]
  %v8503 = vld [vmem:[%s8495 + $0x28] sm:$0xf]
  %v8504 = vld [vmem:[%s8495 + $0x30] sm:$0xf]
  %v8505 = vld [vmem:[%s8495 + $0x34] sm:$0xf]
  %v8506 = vld [vmem:[%s8495 + $0x3c] sm:$0xf]
  %v8507 = vld [vmem:[%s8495 + $0x40] sm:$0xf]
  %v8508 = vld [vmem:[%s8495 + $0x48] sm:$0xf]
  %v8509 = vld [vmem:[%s8495 + $0x4c] sm:$0xf]
  %v8510 = vld [vmem:[%s8495 + $0x54] sm:$0xf]
  %v8511 = vld [vmem:[%s8495 + $0x58] sm:$0xf]
  %v8512 = vld [vmem:[%s8495 + $0x60] sm:$0xf]
  %v8513 = vld [vmem:[%s8495 + $0x64] sm:$0xf]
  %v8514 = vld [vmem:[%s8495 + $0x6c] sm:$0xf]
  %v8515 = vld [vmem:[%s8495 + $0x70] sm:$0xf]
  %v8516 = vld [vmem:[%s8495 + $0x78] sm:$0xf]
  %v8517 = vld [vmem:[%s8495 + $0x7c] sm:$0xf]
  %v8518 = vld [vmem:[%s8495 + $0x84] sm:$0xf]
  %v8519 = vld [vmem:[%s8495 + $0x88] sm:$0xf]
  %v8520 = vld [vmem:[%s8495 + $0x90] sm:$0xf]
  %v8521 = vld [vmem:[%s8495 + $0x94] sm:$0xf]
  %v8522 = vld [vmem:[%s8495 + $0x9c] sm:$0xf]
  %v8523 = vld [vmem:[%s8495 + $0xa0] sm:$0xf]
  %v8524 = vld [vmem:[%s8495 + $0xa8] sm:$0xf]
  %v8525 = vld [vmem:[%s8495 + $0xac] sm:$0xf]
  %v8526 = vld [vmem:[%s8495 + $0xb4] sm:$0xf]
  %v8527 = vld [vmem:[%s8495 + $0xb8] sm:$0xf]
  %8560 = vrot.lane.b32.xlu0 %v8496, 80
  %v8561 = vpop.permute.xlu0 %8560
  %8562 = vrot.lane.b32.xlu0 %v8497, 80
  %v8563 = vpop.permute.xlu0 %8562
  %8564 = vrot.lane.b32.xlu0 %v8498, 80
  %v8565 = vpop.permute.xlu0 %8564
  %8566 = vrot.lane.b32.xlu0 %v8499, 80
  %v8567 = vpop.permute.xlu0 %8566
  %8568 = vrot.lane.b32.xlu0 %v8500, 80
  %v8569 = vpop.permute.xlu0 %8568
  %8570 = vrot.lane.b32.xlu0 %v8501, 80
  %v8571 = vpop.permute.xlu0 %8570
  %8572 = vrot.lane.b32.xlu0 %v8502, 80
  %v8573 = vpop.permute.xlu0 %8572
  %8574 = vrot.lane.b32.xlu0 %v8503, 80
  %v8575 = vpop.permute.xlu0 %8574
  %8576 = vrot.lane.b32.xlu0 %v8504, 80
  %v8577 = vpop.permute.xlu0 %8576
  %8578 = vrot.lane.b32.xlu0 %v8505, 80
  %v8579 = vpop.permute.xlu0 %8578
  %8580 = vrot.lane.b32.xlu0 %v8506, 80
  %v8581 = vpop.permute.xlu0 %8580
  %8582 = vrot.lane.b32.xlu0 %v8507, 80
  %v8583 = vpop.permute.xlu0 %8582
  %8584 = vrot.lane.b32.xlu0 %v8508, 80
  %v8585 = vpop.permute.xlu0 %8584
  %8586 = vrot.lane.b32.xlu0 %v8509, 80
  %v8587 = vpop.permute.xlu0 %8586
  %8588 = vrot.lane.b32.xlu0 %v8510, 80
  %v8589 = vpop.permute.xlu0 %8588
  %8590 = vrot.lane.b32.xlu0 %v8511, 80
  %v8591 = vpop.permute.xlu0 %8590
  %8592 = vrot.lane.b32.xlu0 %v8512, 80
  %v8593 = vpop.permute.xlu0 %8592
  %8594 = vrot.lane.b32.xlu0 %v8513, 80
  %v8595 = vpop.permute.xlu0 %8594
  %8596 = vrot.lane.b32.xlu0 %v8514, 80
  %v8597 = vpop.permute.xlu0 %8596
  %8598 = vrot.lane.b32.xlu0 %v8515, 80
  %v8599 = vpop.permute.xlu0 %8598
  %8600 = vrot.lane.b32.xlu0 %v8516, 80
  %v8601 = vpop.permute.xlu0 %8600
  %8602 = vrot.lane.b32.xlu0 %v8517, 80
  %v8603 = vpop.permute.xlu0 %8602
  %8604 = vrot.lane.b32.xlu0 %v8518, 80
  %v8605 = vpop.permute.xlu0 %8604
  %8606 = vrot.lane.b32.xlu0 %v8519, 80
  %v8607 = vpop.permute.xlu0 %8606
  %8608 = vrot.lane.b32.xlu0 %v8520, 80
  %v8609 = vpop.permute.xlu0 %8608
  %8610 = vrot.lane.b32.xlu0 %v8521, 80
  %v8611 = vpop.permute.xlu0 %8610
  %8612 = vrot.lane.b32.xlu0 %v8522, 80
  %v8613 = vpop.permute.xlu0 %8612
  %8614 = vrot.lane.b32.xlu0 %v8523, 80
  %v8615 = vpop.permute.xlu0 %8614
  %8616 = vrot.lane.b32.xlu0 %v8524, 80
  %v8617 = vpop.permute.xlu0 %8616
  %8618 = vrot.lane.b32.xlu0 %v8525, 80
  %v8619 = vpop.permute.xlu0 %8618
  %8620 = vrot.lane.b32.xlu0 %v8526, 80
  %v8621 = vpop.permute.xlu0 %8620
  %8622 = vrot.lane.b32.xlu0 %v8527, 80
  %v8623 = vpop.permute.xlu0 %8622
  %8656 = vst.msk [vmem:[#allocation2 + $0x208] sm:$0xf] %vm2501, %v8561
  %8657 = vst.msk [vmem:[#allocation2 + $0x218] sm:$0xf] %vm2501, %v8563
  %8658 = vst.msk [vmem:[#allocation2 + $0x228] sm:$0xf] %vm2501, %v8565
  %8659 = vst.msk [vmem:[#allocation2 + $0x238] sm:$0xf] %vm2501, %v8567
  %8660 = vst.msk [vmem:[#allocation2 + $0x248] sm:$0xf] %vm2501, %v8569
  %8661 = vst.msk [vmem:[#allocation2 + $0x258] sm:$0xf] %vm2501, %v8571
  %8662 = vst.msk [vmem:[#allocation2 + $0x268] sm:$0xf] %vm2501, %v8573
  %8663 = vst.msk [vmem:[#allocation2 + $0x278] sm:$0xf] %vm2501, %v8575
  %8664 = vst.msk [vmem:[#allocation2 + $0x288] sm:$0xf] %vm2501, %v8577
  %8665 = vst.msk [vmem:[#allocation2 + $0x298] sm:$0xf] %vm2501, %v8579
  %8666 = vst.msk [vmem:[#allocation2 + $0x2a8] sm:$0xf] %vm2501, %v8581
  %8667 = vst.msk [vmem:[#allocation2 + $0x2b8] sm:$0xf] %vm2501, %v8583
  %8668 = vst.msk [vmem:[#allocation2 + $0x2c8] sm:$0xf] %vm2501, %v8585
  %8669 = vst.msk [vmem:[#allocation2 + $0x2d8] sm:$0xf] %vm2501, %v8587
  %8670 = vst.msk [vmem:[#allocation2 + $0x2e8] sm:$0xf] %vm2501, %v8589
  %8671 = vst.msk [vmem:[#allocation2 + $0x2f8] sm:$0xf] %vm2501, %v8591
  %8672 = vst.msk [vmem:[#allocation2 + $0x308] sm:$0xf] %vm2501, %v8593
  %8673 = vst.msk [vmem:[#allocation2 + $0x318] sm:$0xf] %vm2501, %v8595
  %8674 = vst.msk [vmem:[#allocation2 + $0x328] sm:$0xf] %vm2501, %v8597
  %8675 = vst.msk [vmem:[#allocation2 + $0x338] sm:$0xf] %vm2501, %v8599
  %8676 = vst.msk [vmem:[#allocation2 + $0x348] sm:$0xf] %vm2501, %v8601
  %8677 = vst.msk [vmem:[#allocation2 + $0x358] sm:$0xf] %vm2501, %v8603
  %8678 = vst.msk [vmem:[#allocation2 + $0x368] sm:$0xf] %vm2501, %v8605
  %8679 = vst.msk [vmem:[#allocation2 + $0x378] sm:$0xf] %vm2501, %v8607
  %8680 = vst.msk [vmem:[#allocation2 + $0x388] sm:$0xf] %vm2501, %v8609
  %8681 = vst.msk [vmem:[#allocation2 + $0x398] sm:$0xf] %vm2501, %v8611
  %8682 = vst.msk [vmem:[#allocation2 + $0x3a8] sm:$0xf] %vm2501, %v8613
  %8683 = vst.msk [vmem:[#allocation2 + $0x3b8] sm:$0xf] %vm2501, %v8615
  %8684 = vst.msk [vmem:[#allocation2 + $0x3c8] sm:$0xf] %vm2501, %v8617
  %8685 = vst.msk [vmem:[#allocation2 + $0x3d8] sm:$0xf] %vm2501, %v8619
  %8686 = vst.msk [vmem:[#allocation2 + $0x3e8] sm:$0xf] %vm2501, %v8621
  %8687 = vst.msk [vmem:[#allocation2 + $0x3f8] sm:$0xf] %vm2501, %v8623
  %v8688 = vld [vmem:[%s8302] sm:$0xf]
  %v8689 = vld [vmem:[%s8302 + $0x4] sm:$0xf]
  %v8690 = vld [vmem:[%s8302 + $0x8] sm:$0x1]
  %v8691 = vld [vmem:[%s8302 + $0xc] sm:$0xf]
  %v8692 = vld [vmem:[%s8302 + $0x10] sm:$0xf]
  %v8693 = vld [vmem:[%s8302 + $0x14] sm:$0x1]
  %v8694 = vld [vmem:[%s8302 + $0x18] sm:$0xf]
  %v8695 = vld [vmem:[%s8302 + $0x1c] sm:$0xf]
  %v8696 = vld [vmem:[%s8302 + $0x20] sm:$0x1]
  %v8697 = vld [vmem:[%s8302 + $0x24] sm:$0xf]
  %v8698 = vld [vmem:[%s8302 + $0x28] sm:$0xf]
  %v8699 = vld [vmem:[%s8302 + $0x2c] sm:$0x1]
  %v8700 = vld [vmem:[%s8302 + $0x30] sm:$0xf]
  %v8701 = vld [vmem:[%s8302 + $0x34] sm:$0xf]
  %v8702 = vld [vmem:[%s8302 + $0x38] sm:$0x1]
  %v8703 = vld [vmem:[%s8302 + $0x3c] sm:$0xf]
  %v8704 = vld [vmem:[%s8302 + $0x40] sm:$0xf]
  %v8705 = vld [vmem:[%s8302 + $0x44] sm:$0x1]
  %v8706 = vld [vmem:[%s8302 + $0x48] sm:$0xf]
  %v8707 = vld [vmem:[%s8302 + $0x4c] sm:$0xf]
  %v8708 = vld [vmem:[%s8302 + $0x50] sm:$0x1]
  %v8709 = vld [vmem:[%s8302 + $0x54] sm:$0xf]
  %v8710 = vld [vmem:[%s8302 + $0x58] sm:$0xf]
  %v8711 = vld [vmem:[%s8302 + $0x5c] sm:$0x1]
  %v8712 = vld [vmem:[%s8302 + $0x60] sm:$0xf]
  %v8713 = vld [vmem:[%s8302 + $0x64] sm:$0xf]
  %v8714 = vld [vmem:[%s8302 + $0x68] sm:$0x1]
  %v8715 = vld [vmem:[%s8302 + $0x6c] sm:$0xf]
  %v8716 = vld [vmem:[%s8302 + $0x70] sm:$0xf]
  %v8717 = vld [vmem:[%s8302 + $0x74] sm:$0x1]
  %v8718 = vld [vmem:[%s8302 + $0x78] sm:$0xf]
  %v8719 = vld [vmem:[%s8302 + $0x7c] sm:$0xf]
  %v8720 = vld [vmem:[%s8302 + $0x80] sm:$0x1]
  %v8721 = vld [vmem:[%s8302 + $0x84] sm:$0xf]
  %v8722 = vld [vmem:[%s8302 + $0x88] sm:$0xf]
  %v8723 = vld [vmem:[%s8302 + $0x8c] sm:$0x1]
  %v8724 = vld [vmem:[%s8302 + $0x90] sm:$0xf]
  %v8725 = vld [vmem:[%s8302 + $0x94] sm:$0xf]
  %v8726 = vld [vmem:[%s8302 + $0x98] sm:$0x1]
  %v8727 = vld [vmem:[%s8302 + $0x9c] sm:$0xf]
  %v8728 = vld [vmem:[%s8302 + $0xa0] sm:$0xf]
  %v8729 = vld [vmem:[%s8302 + $0xa4] sm:$0x1]
  %v8730 = vld [vmem:[%s8302 + $0xa8] sm:$0xf]
  %v8731 = vld [vmem:[%s8302 + $0xac] sm:$0xf]
  %v8732 = vld [vmem:[%s8302 + $0xb0] sm:$0x1]
  %v8733 = vld [vmem:[%s8302 + $0xb4] sm:$0xf]
  %v8734 = vld [vmem:[%s8302 + $0xb8] sm:$0xf]
  %v8735 = vld [vmem:[%s8302 + $0xbc] sm:$0x1]
  %v8737 = vshrl.u32 %v8688, 16
  %v8739 = vrot.slane %v8737, 4
  %v8740 = vshll.u32 %v8688, 16
  %v8742 = vrot.slane %v8740, 5
  %v8743 = vor.u32 %v8739, %v8742
  %v8744 = vrot.slane %v8743, 4
  %v8746 = vshll.u32 %v8689, 16
  %v8748 = vrot.slane %v8746, 5
  %v8749 = vsel %vm394, %v8744, %v8748
  %v8750 = vshrl.u32 %v8689, 16
  %v8752 = vrot.slane %v8750, 4
  %v8753 = vor.u32 %v8752, %v8748
  %v8754 = vrot.slane %v8753, 4
  %v8756 = vshll.u32 %v8690, 16
  %v8758 = vrot.slane %v8756, 5
  %v8759 = vsel %vm394, %v8754, %v8758
  %v8761 = vshrl.u32 %v8691, 16
  %v8763 = vrot.slane %v8761, 4
  %v8764 = vshll.u32 %v8691, 16
  %v8766 = vrot.slane %v8764, 5
  %v8767 = vor.u32 %v8763, %v8766
  %v8768 = vrot.slane %v8767, 4
  %v8770 = vshll.u32 %v8692, 16
  %v8772 = vrot.slane %v8770, 5
  %v8773 = vsel %vm394, %v8768, %v8772
  %v8774 = vshrl.u32 %v8692, 16
  %v8776 = vrot.slane %v8774, 4
  %v8777 = vor.u32 %v8776, %v8772
  %v8778 = vrot.slane %v8777, 4
  %v8780 = vshll.u32 %v8693, 16
  %v8782 = vrot.slane %v8780, 5
  %v8783 = vsel %vm394, %v8778, %v8782
  %v8785 = vshrl.u32 %v8694, 16
  %v8787 = vrot.slane %v8785, 4
  %v8788 = vshll.u32 %v8694, 16
  %v8790 = vrot.slane %v8788, 5
  %v8791 = vor.u32 %v8787, %v8790
  %v8792 = vrot.slane %v8791, 4
  %v8794 = vshll.u32 %v8695, 16
  %v8796 = vrot.slane %v8794, 5
  %v8797 = vsel %vm394, %v8792, %v8796
  %v8798 = vshrl.u32 %v8695, 16
  %v8800 = vrot.slane %v8798, 4
  %v8801 = vor.u32 %v8800, %v8796
  %v8802 = vrot.slane %v8801, 4
  %v8804 = vshll.u32 %v8696, 16
  %v8806 = vrot.slane %v8804, 5
  %v8807 = vsel %vm394, %v8802, %v8806
  %v8809 = vshrl.u32 %v8697, 16
  %v8811 = vrot.slane %v8809, 4
  %v8812 = vshll.u32 %v8697, 16
  %v8814 = vrot.slane %v8812, 5
  %v8815 = vor.u32 %v8811, %v8814
  %v8816 = vrot.slane %v8815, 4
  %v8818 = vshll.u32 %v8698, 16
  %v8820 = vrot.slane %v8818, 5
  %v8821 = vsel %vm394, %v8816, %v8820
  %v8822 = vshrl.u32 %v8698, 16
  %v8824 = vrot.slane %v8822, 4
  %v8825 = vor.u32 %v8824, %v8820
  %v8826 = vrot.slane %v8825, 4
  %v8828 = vshll.u32 %v8699, 16
  %v8830 = vrot.slane %v8828, 5
  %v8831 = vsel %vm394, %v8826, %v8830
  %v8833 = vshrl.u32 %v8700, 16
  %v8835 = vrot.slane %v8833, 4
  %v8836 = vshll.u32 %v8700, 16
  %v8838 = vrot.slane %v8836, 5
  %v8839 = vor.u32 %v8835, %v8838
  %v8840 = vrot.slane %v8839, 4
  %v8842 = vshll.u32 %v8701, 16
  %v8844 = vrot.slane %v8842, 5
  %v8845 = vsel %vm394, %v8840, %v8844
  %v8846 = vshrl.u32 %v8701, 16
  %v8848 = vrot.slane %v8846, 4
  %v8849 = vor.u32 %v8848, %v8844
  %v8850 = vrot.slane %v8849, 4
  %v8852 = vshll.u32 %v8702, 16
  %v8854 = vrot.slane %v8852, 5
  %v8855 = vsel %vm394, %v8850, %v8854
  %v8857 = vshrl.u32 %v8703, 16
  %v8859 = vrot.slane %v8857, 4
  %v8860 = vshll.u32 %v8703, 16
  %v8862 = vrot.slane %v8860, 5
  %v8863 = vor.u32 %v8859, %v8862
  %v8864 = vrot.slane %v8863, 4
  %v8866 = vshll.u32 %v8704, 16
  %v8868 = vrot.slane %v8866, 5
  %v8869 = vsel %vm394, %v8864, %v8868
  %v8870 = vshrl.u32 %v8704, 16
  %v8872 = vrot.slane %v8870, 4
  %v8873 = vor.u32 %v8872, %v8868
  %v8874 = vrot.slane %v8873, 4
  %v8876 = vshll.u32 %v8705, 16
  %v8878 = vrot.slane %v8876, 5
  %v8879 = vsel %vm394, %v8874, %v8878
  %v8881 = vshrl.u32 %v8706, 16
  %v8883 = vrot.slane %v8881, 4
  %v8884 = vshll.u32 %v8706, 16
  %v8886 = vrot.slane %v8884, 5
  %v8887 = vor.u32 %v8883, %v8886
  %v8888 = vrot.slane %v8887, 4
  %v8890 = vshll.u32 %v8707, 16
  %v8892 = vrot.slane %v8890, 5
  %v8893 = vsel %vm394, %v8888, %v8892
  %v8894 = vshrl.u32 %v8707, 16
  %v8896 = vrot.slane %v8894, 4
  %v8897 = vor.u32 %v8896, %v8892
  %v8898 = vrot.slane %v8897, 4
  %v8900 = vshll.u32 %v8708, 16
  %v8902 = vrot.slane %v8900, 5
  %v8903 = vsel %vm394, %v8898, %v8902
  %v8905 = vshrl.u32 %v8709, 16
  %v8907 = vrot.slane %v8905, 4
  %v8908 = vshll.u32 %v8709, 16
  %v8910 = vrot.slane %v8908, 5
  %v8911 = vor.u32 %v8907, %v8910
  %v8912 = vrot.slane %v8911, 4
  %v8914 = vshll.u32 %v8710, 16
  %v8916 = vrot.slane %v8914, 5
  %v8917 = vsel %vm394, %v8912, %v8916
  %v8918 = vshrl.u32 %v8710, 16
  %v8920 = vrot.slane %v8918, 4
  %v8921 = vor.u32 %v8920, %v8916
  %v8922 = vrot.slane %v8921, 4
  %v8924 = vshll.u32 %v8711, 16
  %v8926 = vrot.slane %v8924, 5
  %v8927 = vsel %vm394, %v8922, %v8926
  %v8929 = vshrl.u32 %v8712, 16
  %v8931 = vrot.slane %v8929, 4
  %v8932 = vshll.u32 %v8712, 16
  %v8934 = vrot.slane %v8932, 5
  %v8935 = vor.u32 %v8931, %v8934
  %v8936 = vrot.slane %v8935, 4
  %v8938 = vshll.u32 %v8713, 16
  %v8940 = vrot.slane %v8938, 5
  %v8941 = vsel %vm394, %v8936, %v8940
  %v8942 = vshrl.u32 %v8713, 16
  %v8944 = vrot.slane %v8942, 4
  %v8945 = vor.u32 %v8944, %v8940
  %v8946 = vrot.slane %v8945, 4
  %v8948 = vshll.u32 %v8714, 16
  %v8950 = vrot.slane %v8948, 5
  %v8951 = vsel %vm394, %v8946, %v8950
  %v8953 = vshrl.u32 %v8715, 16
  %v8955 = vrot.slane %v8953, 4
  %v8956 = vshll.u32 %v8715, 16
  %v8958 = vrot.slane %v8956, 5
  %v8959 = vor.u32 %v8955, %v8958
  %v8960 = vrot.slane %v8959, 4
  %v8962 = vshll.u32 %v8716, 16
  %v8964 = vrot.slane %v8962, 5
  %v8965 = vsel %vm394, %v8960, %v8964
  %v8966 = vshrl.u32 %v8716, 16
  %v8968 = vrot.slane %v8966, 4
  %v8969 = vor.u32 %v8968, %v8964
  %v8970 = vrot.slane %v8969, 4
  %v8972 = vshll.u32 %v8717, 16
  %v8974 = vrot.slane %v8972, 5
  %v8975 = vsel %vm394, %v8970, %v8974
  %v8977 = vshrl.u32 %v8718, 16
  %v8979 = vrot.slane %v8977, 4
  %v8980 = vshll.u32 %v8718, 16
  %v8982 = vrot.slane %v8980, 5
  %v8983 = vor.u32 %v8979, %v8982
  %v8984 = vrot.slane %v8983, 4
  %v8986 = vshll.u32 %v8719, 16
  %v8988 = vrot.slane %v8986, 5
  %v8989 = vsel %vm394, %v8984, %v8988
  %v8990 = vshrl.u32 %v8719, 16
  %v8992 = vrot.slane %v8990, 4
  %v8993 = vor.u32 %v8992, %v8988
  %v8994 = vrot.slane %v8993, 4
  %v8996 = vshll.u32 %v8720, 16
  %v8998 = vrot.slane %v8996, 5
  %v8999 = vsel %vm394, %v8994, %v8998
  %v9001 = vshrl.u32 %v8721, 16
  %v9003 = vrot.slane %v9001, 4
  %v9004 = vshll.u32 %v8721, 16
  %v9006 = vrot.slane %v9004, 5
  %v9007 = vor.u32 %v9003, %v9006
  %v9008 = vrot.slane %v9007, 4
  %v9010 = vshll.u32 %v8722, 16
  %v9012 = vrot.slane %v9010, 5
  %v9013 = vsel %vm394, %v9008, %v9012
  %v9014 = vshrl.u32 %v8722, 16
  %v9016 = vrot.slane %v9014, 4
  %v9017 = vor.u32 %v9016, %v9012
  %v9018 = vrot.slane %v9017, 4
  %v9020 = vshll.u32 %v8723, 16
  %v9022 = vrot.slane %v9020, 5
  %v9023 = vsel %vm394, %v9018, %v9022
  %v9025 = vshrl.u32 %v8724, 16
  %v9027 = vrot.slane %v9025, 4
  %v9028 = vshll.u32 %v8724, 16
  %v9030 = vrot.slane %v9028, 5
  %v9031 = vor.u32 %v9027, %v9030
  %v9032 = vrot.slane %v9031, 4
  %v9034 = vshll.u32 %v8725, 16
  %v9036 = vrot.slane %v9034, 5
  %v9037 = vsel %vm394, %v9032, %v9036
  %v9038 = vshrl.u32 %v8725, 16
  %v9040 = vrot.slane %v9038, 4
  %v9041 = vor.u32 %v9040, %v9036
  %v9042 = vrot.slane %v9041, 4
  %v9044 = vshll.u32 %v8726, 16
  %v9046 = vrot.slane %v9044, 5
  %v9047 = vsel %vm394, %v9042, %v9046
  %v9049 = vshrl.u32 %v8727, 16
  %v9051 = vrot.slane %v9049, 4
  %v9052 = vshll.u32 %v8727, 16
  %v9054 = vrot.slane %v9052, 5
  %v9055 = vor.u32 %v9051, %v9054
  %v9056 = vrot.slane %v9055, 4
  %v9058 = vshll.u32 %v8728, 16
  %v9060 = vrot.slane %v9058, 5
  %v9061 = vsel %vm394, %v9056, %v9060
  %v9062 = vshrl.u32 %v8728, 16
  %v9064 = vrot.slane %v9062, 4
  %v9065 = vor.u32 %v9064, %v9060
  %v9066 = vrot.slane %v9065, 4
  %v9068 = vshll.u32 %v8729, 16
  %v9070 = vrot.slane %v9068, 5
  %v9071 = vsel %vm394, %v9066, %v9070
  %v9073 = vshrl.u32 %v8730, 16
  %v9075 = vrot.slane %v9073, 4
  %v9076 = vshll.u32 %v8730, 16
  %v9078 = vrot.slane %v9076, 5
  %v9079 = vor.u32 %v9075, %v9078
  %v9080 = vrot.slane %v9079, 4
  %v9082 = vshll.u32 %v8731, 16
  %v9084 = vrot.slane %v9082, 5
  %v9085 = vsel %vm394, %v9080, %v9084
  %v9086 = vshrl.u32 %v8731, 16
  %v9088 = vrot.slane %v9086, 4
  %v9089 = vor.u32 %v9088, %v9084
  %v9090 = vrot.slane %v9089, 4
  %v9092 = vshll.u32 %v8732, 16
  %v9094 = vrot.slane %v9092, 5
  %v9095 = vsel %vm394, %v9090, %v9094
  %v9097 = vshrl.u32 %v8733, 16
  %v9099 = vrot.slane %v9097, 4
  %v9100 = vshll.u32 %v8733, 16
  %v9102 = vrot.slane %v9100, 5
  %v9103 = vor.u32 %v9099, %v9102
  %v9104 = vrot.slane %v9103, 4
  %v9106 = vshll.u32 %v8734, 16
  %v9108 = vrot.slane %v9106, 5
  %v9109 = vsel %vm394, %v9104, %v9108
  %v9110 = vshrl.u32 %v8734, 16
  %v9112 = vrot.slane %v9110, 4
  %v9113 = vor.u32 %v9112, %v9108
  %v9114 = vrot.slane %v9113, 4
  %v9116 = vshll.u32 %v8735, 16
  %v9118 = vrot.slane %v9116, 5
  %v9119 = vsel %vm394, %v9114, %v9118
  %9152 = vst.msk [vmem:[#allocation2 + $0x204] sm:$0xf] %vm118, %v8749
  %9153 = vst.msk [vmem:[#allocation2 + $0x214] sm:$0xf] %vm118, %v8759
  %9154 = vst.msk [vmem:[#allocation2 + $0x224] sm:$0xf] %vm118, %v8773
  %9155 = vst.msk [vmem:[#allocation2 + $0x234] sm:$0xf] %vm118, %v8783
  %9156 = vst.msk [vmem:[#allocation2 + $0x244] sm:$0xf] %vm118, %v8797
  %9157 = vst.msk [vmem:[#allocation2 + $0x254] sm:$0xf] %vm118, %v8807
  %9158 = vst.msk [vmem:[#allocation2 + $0x264] sm:$0xf] %vm118, %v8821
  %9159 = vst.msk [vmem:[#allocation2 + $0x274] sm:$0xf] %vm118, %v8831
  %9160 = vst.msk [vmem:[#allocation2 + $0x284] sm:$0xf] %vm118, %v8845
  %9161 = vst.msk [vmem:[#allocation2 + $0x294] sm:$0xf] %vm118, %v8855
  %9162 = vst.msk [vmem:[#allocation2 + $0x2a4] sm:$0xf] %vm118, %v8869
  %9163 = vst.msk [vmem:[#allocation2 + $0x2b4] sm:$0xf] %vm118, %v8879
  %9164 = vst.msk [vmem:[#allocation2 + $0x2c4] sm:$0xf] %vm118, %v8893
  %9165 = vst.msk [vmem:[#allocation2 + $0x2d4] sm:$0xf] %vm118, %v8903
  %9166 = vst.msk [vmem:[#allocation2 + $0x2e4] sm:$0xf] %vm118, %v8917
  %9167 = vst.msk [vmem:[#allocation2 + $0x2f4] sm:$0xf] %vm118, %v8927
  %9168 = vst.msk [vmem:[#allocation2 + $0x304] sm:$0xf] %vm118, %v8941
  %9169 = vst.msk [vmem:[#allocation2 + $0x314] sm:$0xf] %vm118, %v8951
  %9170 = vst.msk [vmem:[#allocation2 + $0x324] sm:$0xf] %vm118, %v8965
  %9171 = vst.msk [vmem:[#allocation2 + $0x334] sm:$0xf] %vm118, %v8975
  %9172 = vst.msk [vmem:[#allocation2 + $0x344] sm:$0xf] %vm118, %v8989
  %9173 = vst.msk [vmem:[#allocation2 + $0x354] sm:$0xf] %vm118, %v8999
  %9174 = vst.msk [vmem:[#allocation2 + $0x364] sm:$0xf] %vm118, %v9013
  %9175 = vst.msk [vmem:[#allocation2 + $0x374] sm:$0xf] %vm118, %v9023
  %9176 = vst.msk [vmem:[#allocation2 + $0x384] sm:$0xf] %vm118, %v9037
  %9177 = vst.msk [vmem:[#allocation2 + $0x394] sm:$0xf] %vm118, %v9047
  %9178 = vst.msk [vmem:[#allocation2 + $0x3a4] sm:$0xf] %vm118, %v9061
  %9179 = vst.msk [vmem:[#allocation2 + $0x3b4] sm:$0xf] %vm118, %v9071
  %9180 = vst.msk [vmem:[#allocation2 + $0x3c4] sm:$0xf] %vm118, %v9085
  %9181 = vst.msk [vmem:[#allocation2 + $0x3d4] sm:$0xf] %vm118, %v9095
  %9182 = vst.msk [vmem:[#allocation2 + $0x3e4] sm:$0xf] %vm118, %v9109
  %9183 = vst.msk [vmem:[#allocation2 + $0x3f4] sm:$0xf] %vm118, %v9119
  %v9184 = vld [vmem:[%s8495] sm:$0xf]
  %v9185 = vld [vmem:[%s8495 + $0x4] sm:$0xf]
  %v9186 = vld [vmem:[%s8495 + $0x8] sm:$0x1]
  %v9187 = vld [vmem:[%s8495 + $0xc] sm:$0xf]
  %v9188 = vld [vmem:[%s8495 + $0x10] sm:$0xf]
  %v9189 = vld [vmem:[%s8495 + $0x14] sm:$0x1]
  %v9190 = vld [vmem:[%s8495 + $0x18] sm:$0xf]
  %v9191 = vld [vmem:[%s8495 + $0x1c] sm:$0xf]
  %v9192 = vld [vmem:[%s8495 + $0x20] sm:$0x1]
  %v9193 = vld [vmem:[%s8495 + $0x24] sm:$0xf]
  %v9194 = vld [vmem:[%s8495 + $0x28] sm:$0xf]
  %v9195 = vld [vmem:[%s8495 + $0x2c] sm:$0x1]
  %v9196 = vld [vmem:[%s8495 + $0x30] sm:$0xf]
  %v9197 = vld [vmem:[%s8495 + $0x34] sm:$0xf]
  %v9198 = vld [vmem:[%s8495 + $0x38] sm:$0x1]
  %v9199 = vld [vmem:[%s8495 + $0x3c] sm:$0xf]
  %v9200 = vld [vmem:[%s8495 + $0x40] sm:$0xf]
  %v9201 = vld [vmem:[%s8495 + $0x44] sm:$0x1]
  %v9202 = vld [vmem:[%s8495 + $0x48] sm:$0xf]
  %v9203 = vld [vmem:[%s8495 + $0x4c] sm:$0xf]
  %v9204 = vld [vmem:[%s8495 + $0x50] sm:$0x1]
  %v9205 = vld [vmem:[%s8495 + $0x54] sm:$0xf]
  %v9206 = vld [vmem:[%s8495 + $0x58] sm:$0xf]
  %v9207 = vld [vmem:[%s8495 + $0x5c] sm:$0x1]
  %v9208 = vld [vmem:[%s8495 + $0x60] sm:$0xf]
  %v9209 = vld [vmem:[%s8495 + $0x64] sm:$0xf]
  %v9210 = vld [vmem:[%s8495 + $0x68] sm:$0x1]
  %v9211 = vld [vmem:[%s8495 + $0x6c] sm:$0xf]
  %v9212 = vld [vmem:[%s8495 + $0x70] sm:$0xf]
  %v9213 = vld [vmem:[%s8495 + $0x74] sm:$0x1]
  %v9214 = vld [vmem:[%s8495 + $0x78] sm:$0xf]
  %v9215 = vld [vmem:[%s8495 + $0x7c] sm:$0xf]
  %v9216 = vld [vmem:[%s8495 + $0x80] sm:$0x1]
  %v9217 = vld [vmem:[%s8495 + $0x84] sm:$0xf]
  %v9218 = vld [vmem:[%s8495 + $0x88] sm:$0xf]
  %v9219 = vld [vmem:[%s8495 + $0x8c] sm:$0x1]
  %v9220 = vld [vmem:[%s8495 + $0x90] sm:$0xf]
  %v9221 = vld [vmem:[%s8495 + $0x94] sm:$0xf]
  %v9222 = vld [vmem:[%s8495 + $0x98] sm:$0x1]
  %v9223 = vld [vmem:[%s8495 + $0x9c] sm:$0xf]
  %v9224 = vld [vmem:[%s8495 + $0xa0] sm:$0xf]
  %v9225 = vld [vmem:[%s8495 + $0xa4] sm:$0x1]
  %v9226 = vld [vmem:[%s8495 + $0xa8] sm:$0xf]
  %v9227 = vld [vmem:[%s8495 + $0xac] sm:$0xf]
  %v9228 = vld [vmem:[%s8495 + $0xb0] sm:$0x1]
  %v9229 = vld [vmem:[%s8495 + $0xb4] sm:$0xf]
  %v9230 = vld [vmem:[%s8495 + $0xb8] sm:$0xf]
  %v9231 = vld [vmem:[%s8495 + $0xbc] sm:$0x1]
  %v9233 = vshrl.u32 %v9184, 16
  %v9235 = vrot.slane %v9233, 4
  %v9236 = vshll.u32 %v9184, 16
  %v9238 = vrot.slane %v9236, 5
  %v9239 = vor.u32 %v9235, %v9238
  %v9240 = vrot.slane %v9239, 4
  %v9242 = vshll.u32 %v9185, 16
  %v9244 = vrot.slane %v9242, 5
  %v9245 = vsel %vm394, %v9240, %v9244
  %v9246 = vshrl.u32 %v9185, 16
  %v9248 = vrot.slane %v9246, 4
  %v9249 = vor.u32 %v9248, %v9244
  %v9250 = vrot.slane %v9249, 4
  %v9252 = vshll.u32 %v9186, 16
  %v9254 = vrot.slane %v9252, 5
  %v9255 = vsel %vm394, %v9250, %v9254
  %v9257 = vshrl.u32 %v9187, 16
  %v9259 = vrot.slane %v9257, 4
  %v9260 = vshll.u32 %v9187, 16
  %v9262 = vrot.slane %v9260, 5
  %v9263 = vor.u32 %v9259, %v9262
  %v9264 = vrot.slane %v9263, 4
  %v9266 = vshll.u32 %v9188, 16
  %v9268 = vrot.slane %v9266, 5
  %v9269 = vsel %vm394, %v9264, %v9268
  %v9270 = vshrl.u32 %v9188, 16
  %v9272 = vrot.slane %v9270, 4
  %v9273 = vor.u32 %v9272, %v9268
  %v9274 = vrot.slane %v9273, 4
  %v9276 = vshll.u32 %v9189, 16
  %v9278 = vrot.slane %v9276, 5
  %v9279 = vsel %vm394, %v9274, %v9278
  %v9281 = vshrl.u32 %v9190, 16
  %v9283 = vrot.slane %v9281, 4
  %v9284 = vshll.u32 %v9190, 16
  %v9286 = vrot.slane %v9284, 5
  %v9287 = vor.u32 %v9283, %v9286
  %v9288 = vrot.slane %v9287, 4
  %v9290 = vshll.u32 %v9191, 16
  %v9292 = vrot.slane %v9290, 5
  %v9293 = vsel %vm394, %v9288, %v9292
  %v9294 = vshrl.u32 %v9191, 16
  %v9296 = vrot.slane %v9294, 4
  %v9297 = vor.u32 %v9296, %v9292
  %v9298 = vrot.slane %v9297, 4
  %v9300 = vshll.u32 %v9192, 16
  %v9302 = vrot.slane %v9300, 5
  %v9303 = vsel %vm394, %v9298, %v9302
  %v9305 = vshrl.u32 %v9193, 16
  %v9307 = vrot.slane %v9305, 4
  %v9308 = vshll.u32 %v9193, 16
  %v9310 = vrot.slane %v9308, 5
  %v9311 = vor.u32 %v9307, %v9310
  %v9312 = vrot.slane %v9311, 4
  %v9314 = vshll.u32 %v9194, 16
  %v9316 = vrot.slane %v9314, 5
  %v9317 = vsel %vm394, %v9312, %v9316
  %v9318 = vshrl.u32 %v9194, 16
  %v9320 = vrot.slane %v9318, 4
  %v9321 = vor.u32 %v9320, %v9316
  %v9322 = vrot.slane %v9321, 4
  %v9324 = vshll.u32 %v9195, 16
  %v9326 = vrot.slane %v9324, 5
  %v9327 = vsel %vm394, %v9322, %v9326
  %v9329 = vshrl.u32 %v9196, 16
  %v9331 = vrot.slane %v9329, 4
  %v9332 = vshll.u32 %v9196, 16
  %v9334 = vrot.slane %v9332, 5
  %v9335 = vor.u32 %v9331, %v9334
  %v9336 = vrot.slane %v9335, 4
  %v9338 = vshll.u32 %v9197, 16
  %v9340 = vrot.slane %v9338, 5
  %v9341 = vsel %vm394, %v9336, %v9340
  %v9342 = vshrl.u32 %v9197, 16
  %v9344 = vrot.slane %v9342, 4
  %v9345 = vor.u32 %v9344, %v9340
  %v9346 = vrot.slane %v9345, 4
  %v9348 = vshll.u32 %v9198, 16
  %v9350 = vrot.slane %v9348, 5
  %v9351 = vsel %vm394, %v9346, %v9350
  %v9353 = vshrl.u32 %v9199, 16
  %v9355 = vrot.slane %v9353, 4
  %v9356 = vshll.u32 %v9199, 16
  %v9358 = vrot.slane %v9356, 5
  %v9359 = vor.u32 %v9355, %v9358
  %v9360 = vrot.slane %v9359, 4
  %v9362 = vshll.u32 %v9200, 16
  %v9364 = vrot.slane %v9362, 5
  %v9365 = vsel %vm394, %v9360, %v9364
  %v9366 = vshrl.u32 %v9200, 16
  %v9368 = vrot.slane %v9366, 4
  %v9369 = vor.u32 %v9368, %v9364
  %v9370 = vrot.slane %v9369, 4
  %v9372 = vshll.u32 %v9201, 16
  %v9374 = vrot.slane %v9372, 5
  %v9375 = vsel %vm394, %v9370, %v9374
  %v9377 = vshrl.u32 %v9202, 16
  %v9379 = vrot.slane %v9377, 4
  %v9380 = vshll.u32 %v9202, 16
  %v9382 = vrot.slane %v9380, 5
  %v9383 = vor.u32 %v9379, %v9382
  %v9384 = vrot.slane %v9383, 4
  %v9386 = vshll.u32 %v9203, 16
  %v9388 = vrot.slane %v9386, 5
  %v9389 = vsel %vm394, %v9384, %v9388
  %v9390 = vshrl.u32 %v9203, 16
  %v9392 = vrot.slane %v9390, 4
  %v9393 = vor.u32 %v9392, %v9388
  %v9394 = vrot.slane %v9393, 4
  %v9396 = vshll.u32 %v9204, 16
  %v9398 = vrot.slane %v9396, 5
  %v9399 = vsel %vm394, %v9394, %v9398
  %v9401 = vshrl.u32 %v9205, 16
  %v9403 = vrot.slane %v9401, 4
  %v9404 = vshll.u32 %v9205, 16
  %v9406 = vrot.slane %v9404, 5
  %v9407 = vor.u32 %v9403, %v9406
  %v9408 = vrot.slane %v9407, 4
  %v9410 = vshll.u32 %v9206, 16
  %v9412 = vrot.slane %v9410, 5
  %v9413 = vsel %vm394, %v9408, %v9412
  %v9414 = vshrl.u32 %v9206, 16
  %v9416 = vrot.slane %v9414, 4
  %v9417 = vor.u32 %v9416, %v9412
  %v9418 = vrot.slane %v9417, 4
  %v9420 = vshll.u32 %v9207, 16
  %v9422 = vrot.slane %v9420, 5
  %v9423 = vsel %vm394, %v9418, %v9422
  %v9425 = vshrl.u32 %v9208, 16
  %v9427 = vrot.slane %v9425, 4
  %v9428 = vshll.u32 %v9208, 16
  %v9430 = vrot.slane %v9428, 5
  %v9431 = vor.u32 %v9427, %v9430
  %v9432 = vrot.slane %v9431, 4
  %v9434 = vshll.u32 %v9209, 16
  %v9436 = vrot.slane %v9434, 5
  %v9437 = vsel %vm394, %v9432, %v9436
  %v9438 = vshrl.u32 %v9209, 16
  %v9440 = vrot.slane %v9438, 4
  %v9441 = vor.u32 %v9440, %v9436
  %v9442 = vrot.slane %v9441, 4
  %v9444 = vshll.u32 %v9210, 16
  %v9446 = vrot.slane %v9444, 5
  %v9447 = vsel %vm394, %v9442, %v9446
  %v9449 = vshrl.u32 %v9211, 16
  %v9451 = vrot.slane %v9449, 4
  %v9452 = vshll.u32 %v9211, 16
  %v9454 = vrot.slane %v9452, 5
  %v9455 = vor.u32 %v9451, %v9454
  %v9456 = vrot.slane %v9455, 4
  %v9458 = vshll.u32 %v9212, 16
  %v9460 = vrot.slane %v9458, 5
  %v9461 = vsel %vm394, %v9456, %v9460
  %v9462 = vshrl.u32 %v9212, 16
  %v9464 = vrot.slane %v9462, 4
  %v9465 = vor.u32 %v9464, %v9460
  %v9466 = vrot.slane %v9465, 4
  %v9468 = vshll.u32 %v9213, 16
  %v9470 = vrot.slane %v9468, 5
  %v9471 = vsel %vm394, %v9466, %v9470
  %v9473 = vshrl.u32 %v9214, 16
  %v9475 = vrot.slane %v9473, 4
  %v9476 = vshll.u32 %v9214, 16
  %v9478 = vrot.slane %v9476, 5
  %v9479 = vor.u32 %v9475, %v9478
  %v9480 = vrot.slane %v9479, 4
  %v9482 = vshll.u32 %v9215, 16
  %v9484 = vrot.slane %v9482, 5
  %v9485 = vsel %vm394, %v9480, %v9484
  %v9486 = vshrl.u32 %v9215, 16
  %v9488 = vrot.slane %v9486, 4
  %v9489 = vor.u32 %v9488, %v9484
  %v9490 = vrot.slane %v9489, 4
  %v9492 = vshll.u32 %v9216, 16
  %v9494 = vrot.slane %v9492, 5
  %v9495 = vsel %vm394, %v9490, %v9494
  %v9497 = vshrl.u32 %v9217, 16
  %v9499 = vrot.slane %v9497, 4
  %v9500 = vshll.u32 %v9217, 16
  %v9502 = vrot.slane %v9500, 5
  %v9503 = vor.u32 %v9499, %v9502
  %v9504 = vrot.slane %v9503, 4
  %v9506 = vshll.u32 %v9218, 16
  %v9508 = vrot.slane %v9506, 5
  %v9509 = vsel %vm394, %v9504, %v9508
  %v9510 = vshrl.u32 %v9218, 16
  %v9512 = vrot.slane %v9510, 4
  %v9513 = vor.u32 %v9512, %v9508
  %v9514 = vrot.slane %v9513, 4
  %v9516 = vshll.u32 %v9219, 16
  %v9518 = vrot.slane %v9516, 5
  %v9519 = vsel %vm394, %v9514, %v9518
  %v9521 = vshrl.u32 %v9220, 16
  %v9523 = vrot.slane %v9521, 4
  %v9524 = vshll.u32 %v9220, 16
  %v9526 = vrot.slane %v9524, 5
  %v9527 = vor.u32 %v9523, %v9526
  %v9528 = vrot.slane %v9527, 4
  %v9530 = vshll.u32 %v9221, 16
  %v9532 = vrot.slane %v9530, 5
  %v9533 = vsel %vm394, %v9528, %v9532
  %v9534 = vshrl.u32 %v9221, 16
  %v9536 = vrot.slane %v9534, 4
  %v9537 = vor.u32 %v9536, %v9532
  %v9538 = vrot.slane %v9537, 4
  %v9540 = vshll.u32 %v9222, 16
  %v9542 = vrot.slane %v9540, 5
  %v9543 = vsel %vm394, %v9538, %v9542
  %v9545 = vshrl.u32 %v9223, 16
  %v9547 = vrot.slane %v9545, 4
  %v9548 = vshll.u32 %v9223, 16
  %v9550 = vrot.slane %v9548, 5
  %v9551 = vor.u32 %v9547, %v9550
  %v9552 = vrot.slane %v9551, 4
  %v9554 = vshll.u32 %v9224, 16
  %v9556 = vrot.slane %v9554, 5
  %v9557 = vsel %vm394, %v9552, %v9556
  %v9558 = vshrl.u32 %v9224, 16
  %v9560 = vrot.slane %v9558, 4
  %v9561 = vor.u32 %v9560, %v9556
  %v9562 = vrot.slane %v9561, 4
  %v9564 = vshll.u32 %v9225, 16
  %v9566 = vrot.slane %v9564, 5
  %v9567 = vsel %vm394, %v9562, %v9566
  %v9569 = vshrl.u32 %v9226, 16
  %v9571 = vrot.slane %v9569, 4
  %v9572 = vshll.u32 %v9226, 16
  %v9574 = vrot.slane %v9572, 5
  %v9575 = vor.u32 %v9571, %v9574
  %v9576 = vrot.slane %v9575, 4
  %v9578 = vshll.u32 %v9227, 16
  %v9580 = vrot.slane %v9578, 5
  %v9581 = vsel %vm394, %v9576, %v9580
  %v9582 = vshrl.u32 %v9227, 16
  %v9584 = vrot.slane %v9582, 4
  %v9585 = vor.u32 %v9584, %v9580
  %v9586 = vrot.slane %v9585, 4
  %v9588 = vshll.u32 %v9228, 16
  %v9590 = vrot.slane %v9588, 5
  %v9591 = vsel %vm394, %v9586, %v9590
  %v9593 = vshrl.u32 %v9229, 16
  %v9595 = vrot.slane %v9593, 4
  %v9596 = vshll.u32 %v9229, 16
  %v9598 = vrot.slane %v9596, 5
  %v9599 = vor.u32 %v9595, %v9598
  %v9600 = vrot.slane %v9599, 4
  %v9602 = vshll.u32 %v9230, 16
  %v9604 = vrot.slane %v9602, 5
  %v9605 = vsel %vm394, %v9600, %v9604
  %v9606 = vshrl.u32 %v9230, 16
  %v9608 = vrot.slane %v9606, 4
  %v9609 = vor.u32 %v9608, %v9604
  %v9610 = vrot.slane %v9609, 4
  %v9612 = vshll.u32 %v9231, 16
  %v9614 = vrot.slane %v9612, 5
  %v9615 = vsel %vm394, %v9610, %v9614
  %9616 = vrot.lane.b32.xlu0 %v9245, 96
  %v9617 = vpop.permute.xlu0 %9616
  %9618 = vrot.lane.b32.xlu0 %v9255, 96
  %v9619 = vpop.permute.xlu0 %9618
  %9620 = vrot.lane.b32.xlu0 %v9269, 96
  %v9621 = vpop.permute.xlu0 %9620
  %9622 = vrot.lane.b32.xlu0 %v9279, 96
  %v9623 = vpop.permute.xlu0 %9622
  %9624 = vrot.lane.b32.xlu0 %v9293, 96
  %v9625 = vpop.permute.xlu0 %9624
  %9626 = vrot.lane.b32.xlu0 %v9303, 96
  %v9627 = vpop.permute.xlu0 %9626
  %9628 = vrot.lane.b32.xlu0 %v9317, 96
  %v9629 = vpop.permute.xlu0 %9628
  %9630 = vrot.lane.b32.xlu0 %v9327, 96
  %v9631 = vpop.permute.xlu0 %9630
  %9632 = vrot.lane.b32.xlu0 %v9341, 96
  %v9633 = vpop.permute.xlu0 %9632
  %9634 = vrot.lane.b32.xlu0 %v9351, 96
  %v9635 = vpop.permute.xlu0 %9634
  %9636 = vrot.lane.b32.xlu0 %v9365, 96
  %v9637 = vpop.permute.xlu0 %9636
  %9638 = vrot.lane.b32.xlu0 %v9375, 96
  %v9639 = vpop.permute.xlu0 %9638
  %9640 = vrot.lane.b32.xlu0 %v9389, 96
  %v9641 = vpop.permute.xlu0 %9640
  %9642 = vrot.lane.b32.xlu0 %v9399, 96
  %v9643 = vpop.permute.xlu0 %9642
  %9644 = vrot.lane.b32.xlu0 %v9413, 96
  %v9645 = vpop.permute.xlu0 %9644
  %9646 = vrot.lane.b32.xlu0 %v9423, 96
  %v9647 = vpop.permute.xlu0 %9646
  %9648 = vrot.lane.b32.xlu0 %v9437, 96
  %v9649 = vpop.permute.xlu0 %9648
  %9650 = vrot.lane.b32.xlu0 %v9447, 96
  %v9651 = vpop.permute.xlu0 %9650
  %9652 = vrot.lane.b32.xlu0 %v9461, 96
  %v9653 = vpop.permute.xlu0 %9652
  %9654 = vrot.lane.b32.xlu0 %v9471, 96
  %v9655 = vpop.permute.xlu0 %9654
  %9656 = vrot.lane.b32.xlu0 %v9485, 96
  %v9657 = vpop.permute.xlu0 %9656
  %9658 = vrot.lane.b32.xlu0 %v9495, 96
  %v9659 = vpop.permute.xlu0 %9658
  %9660 = vrot.lane.b32.xlu0 %v9509, 96
  %v9661 = vpop.permute.xlu0 %9660
  %9662 = vrot.lane.b32.xlu0 %v9519, 96
  %v9663 = vpop.permute.xlu0 %9662
  %9664 = vrot.lane.b32.xlu0 %v9533, 96
  %v9665 = vpop.permute.xlu0 %9664
  %9666 = vrot.lane.b32.xlu0 %v9543, 96
  %v9667 = vpop.permute.xlu0 %9666
  %9668 = vrot.lane.b32.xlu0 %v9557, 96
  %v9669 = vpop.permute.xlu0 %9668
  %9670 = vrot.lane.b32.xlu0 %v9567, 96
  %v9671 = vpop.permute.xlu0 %9670
  %9672 = vrot.lane.b32.xlu0 %v9581, 96
  %v9673 = vpop.permute.xlu0 %9672
  %9674 = vrot.lane.b32.xlu0 %v9591, 96
  %v9675 = vpop.permute.xlu0 %9674
  %9676 = vrot.lane.b32.xlu0 %v9605, 96
  %v9677 = vpop.permute.xlu0 %9676
  %9678 = vrot.lane.b32.xlu0 %v9615, 96
  %v9679 = vpop.permute.xlu0 %9678
  %9712 = vst.msk [vmem:[#allocation2 + $0x208] sm:$0xf] %vm3558, %v9617
  %9713 = vst.msk [vmem:[#allocation2 + $0x218] sm:$0xf] %vm3558, %v9619
  %9714 = vst.msk [vmem:[#allocation2 + $0x228] sm:$0xf] %vm3558, %v9621
  %9715 = vst.msk [vmem:[#allocation2 + $0x238] sm:$0xf] %vm3558, %v9623
  %9716 = vst.msk [vmem:[#allocation2 + $0x248] sm:$0xf] %vm3558, %v9625
  %9717 = vst.msk [vmem:[#allocation2 + $0x258] sm:$0xf] %vm3558, %v9627
  %9718 = vst.msk [vmem:[#allocation2 + $0x268] sm:$0xf] %vm3558, %v9629
  %9719 = vst.msk [vmem:[#allocation2 + $0x278] sm:$0xf] %vm3558, %v9631
  %9720 = vst.msk [vmem:[#allocation2 + $0x288] sm:$0xf] %vm3558, %v9633
  %9721 = vst.msk [vmem:[#allocation2 + $0x298] sm:$0xf] %vm3558, %v9635
  %9722 = vst.msk [vmem:[#allocation2 + $0x2a8] sm:$0xf] %vm3558, %v9637
  %9723 = vst.msk [vmem:[#allocation2 + $0x2b8] sm:$0xf] %vm3558, %v9639
  %9724 = vst.msk [vmem:[#allocation2 + $0x2c8] sm:$0xf] %vm3558, %v9641
  %9725 = vst.msk [vmem:[#allocation2 + $0x2d8] sm:$0xf] %vm3558, %v9643
  %9726 = vst.msk [vmem:[#allocation2 + $0x2e8] sm:$0xf] %vm3558, %v9645
  %9727 = vst.msk [vmem:[#allocation2 + $0x2f8] sm:$0xf] %vm3558, %v9647
  %9728 = vst.msk [vmem:[#allocation2 + $0x308] sm:$0xf] %vm3558, %v9649
  %9729 = vst.msk [vmem:[#allocation2 + $0x318] sm:$0xf] %vm3558, %v9651
  %9730 = vst.msk [vmem:[#allocation2 + $0x328] sm:$0xf] %vm3558, %v9653
  %9731 = vst.msk [vmem:[#allocation2 + $0x338] sm:$0xf] %vm3558, %v9655
  %9732 = vst.msk [vmem:[#allocation2 + $0x348] sm:$0xf] %vm3558, %v9657
  %9733 = vst.msk [vmem:[#allocation2 + $0x358] sm:$0xf] %vm3558, %v9659
  %9734 = vst.msk [vmem:[#allocation2 + $0x368] sm:$0xf] %vm3558, %v9661
  %9735 = vst.msk [vmem:[#allocation2 + $0x378] sm:$0xf] %vm3558, %v9663
  %9736 = vst.msk [vmem:[#allocation2 + $0x388] sm:$0xf] %vm3558, %v9665
  %9737 = vst.msk [vmem:[#allocation2 + $0x398] sm:$0xf] %vm3558, %v9667
  %9738 = vst.msk [vmem:[#allocation2 + $0x3a8] sm:$0xf] %vm3558, %v9669
  %9739 = vst.msk [vmem:[#allocation2 + $0x3b8] sm:$0xf] %vm3558, %v9671
  %9740 = vst.msk [vmem:[#allocation2 + $0x3c8] sm:$0xf] %vm3558, %v9673
  %9741 = vst.msk [vmem:[#allocation2 + $0x3d8] sm:$0xf] %vm3558, %v9675
  %9742 = vst.msk [vmem:[#allocation2 + $0x3e8] sm:$0xf] %vm3558, %v9677
  %9743 = vst.msk [vmem:[#allocation2 + $0x3f8] sm:$0xf] %vm3558, %v9679
  %v9744 = vld [vmem:[%s8302] sm:$0xe]
  %v9745 = vld [vmem:[%s8302 + $0x4] sm:$0xf]
  %v9746 = vld [vmem:[%s8302 + $0x8] sm:$0x1]
  %v9747 = vld [vmem:[%s8302 + $0xc] sm:$0xe]
  %v9748 = vld [vmem:[%s8302 + $0x10] sm:$0xf]
  %v9749 = vld [vmem:[%s8302 + $0x14] sm:$0x1]
  %v9750 = vld [vmem:[%s8302 + $0x18] sm:$0xe]
  %v9751 = vld [vmem:[%s8302 + $0x1c] sm:$0xf]
  %v9752 = vld [vmem:[%s8302 + $0x20] sm:$0x1]
  %v9753 = vld [vmem:[%s8302 + $0x24] sm:$0xe]
  %v9754 = vld [vmem:[%s8302 + $0x28] sm:$0xf]
  %v9755 = vld [vmem:[%s8302 + $0x2c] sm:$0x1]
  %v9756 = vld [vmem:[%s8302 + $0x30] sm:$0xe]
  %v9757 = vld [vmem:[%s8302 + $0x34] sm:$0xf]
  %v9758 = vld [vmem:[%s8302 + $0x38] sm:$0x1]
  %v9759 = vld [vmem:[%s8302 + $0x3c] sm:$0xe]
  %v9760 = vld [vmem:[%s8302 + $0x40] sm:$0xf]
  %v9761 = vld [vmem:[%s8302 + $0x44] sm:$0x1]
  %v9762 = vld [vmem:[%s8302 + $0x48] sm:$0xe]
  %v9763 = vld [vmem:[%s8302 + $0x4c] sm:$0xf]
  %v9764 = vld [vmem:[%s8302 + $0x50] sm:$0x1]
  %v9765 = vld [vmem:[%s8302 + $0x54] sm:$0xe]
  %v9766 = vld [vmem:[%s8302 + $0x58] sm:$0xf]
  %v9767 = vld [vmem:[%s8302 + $0x5c] sm:$0x1]
  %v9768 = vld [vmem:[%s8302 + $0x60] sm:$0xe]
  %v9769 = vld [vmem:[%s8302 + $0x64] sm:$0xf]
  %v9770 = vld [vmem:[%s8302 + $0x68] sm:$0x1]
  %v9771 = vld [vmem:[%s8302 + $0x6c] sm:$0xe]
  %v9772 = vld [vmem:[%s8302 + $0x70] sm:$0xf]
  %v9773 = vld [vmem:[%s8302 + $0x74] sm:$0x1]
  %v9774 = vld [vmem:[%s8302 + $0x78] sm:$0xe]
  %v9775 = vld [vmem:[%s8302 + $0x7c] sm:$0xf]
  %v9776 = vld [vmem:[%s8302 + $0x80] sm:$0x1]
  %v9777 = vld [vmem:[%s8302 + $0x84] sm:$0xe]
  %v9778 = vld [vmem:[%s8302 + $0x88] sm:$0xf]
  %v9779 = vld [vmem:[%s8302 + $0x8c] sm:$0x1]
  %v9780 = vld [vmem:[%s8302 + $0x90] sm:$0xe]
  %v9781 = vld [vmem:[%s8302 + $0x94] sm:$0xf]
  %v9782 = vld [vmem:[%s8302 + $0x98] sm:$0x1]
  %v9783 = vld [vmem:[%s8302 + $0x9c] sm:$0xe]
  %v9784 = vld [vmem:[%s8302 + $0xa0] sm:$0xf]
  %v9785 = vld [vmem:[%s8302 + $0xa4] sm:$0x1]
  %v9786 = vld [vmem:[%s8302 + $0xa8] sm:$0xe]
  %v9787 = vld [vmem:[%s8302 + $0xac] sm:$0xf]
  %v9788 = vld [vmem:[%s8302 + $0xb0] sm:$0x1]
  %v9789 = vld [vmem:[%s8302 + $0xb4] sm:$0xe]
  %v9790 = vld [vmem:[%s8302 + $0xb8] sm:$0xf]
  %v9791 = vld [vmem:[%s8302 + $0xbc] sm:$0x1]
  %v9840 = vrot.slane %v9744, 5
  %v9841 = vrot.slane %v9840, 4
  %v9842 = vrot.slane %v9745, 5
  %v9843 = vsel %vm1567, %v9841, %v9842
  %v9844 = vrot.slane %v9842, 4
  %v9845 = vrot.slane %v9746, 5
  %v9846 = vsel %vm1567, %v9844, %v9845
  %v9847 = vrot.slane %v9747, 5
  %v9848 = vrot.slane %v9847, 4
  %v9849 = vrot.slane %v9748, 5
  %v9850 = vsel %vm1567, %v9848, %v9849
  %v9851 = vrot.slane %v9849, 4
  %v9852 = vrot.slane %v9749, 5
  %v9853 = vsel %vm1567, %v9851, %v9852
  %v9854 = vrot.slane %v9750, 5
  %v9855 = vrot.slane %v9854, 4
  %v9856 = vrot.slane %v9751, 5
  %v9857 = vsel %vm1567, %v9855, %v9856
  %v9858 = vrot.slane %v9856, 4
  %v9859 = vrot.slane %v9752, 5
  %v9860 = vsel %vm1567, %v9858, %v9859
  %v9861 = vrot.slane %v9753, 5
  %v9862 = vrot.slane %v9861, 4
  %v9863 = vrot.slane %v9754, 5
  %v9864 = vsel %vm1567, %v9862, %v9863
  %v9865 = vrot.slane %v9863, 4
  %v9866 = vrot.slane %v9755, 5
  %v9867 = vsel %vm1567, %v9865, %v9866
  %v9868 = vrot.slane %v9756, 5
  %v9869 = vrot.slane %v9868, 4
  %v9870 = vrot.slane %v9757, 5
  %v9871 = vsel %vm1567, %v9869, %v9870
  %v9872 = vrot.slane %v9870, 4
  %v9873 = vrot.slane %v9758, 5
  %v9874 = vsel %vm1567, %v9872, %v9873
  %v9875 = vrot.slane %v9759, 5
  %v9876 = vrot.slane %v9875, 4
  %v9877 = vrot.slane %v9760, 5
  %v9878 = vsel %vm1567, %v9876, %v9877
  %v9879 = vrot.slane %v9877, 4
  %v9880 = vrot.slane %v9761, 5
  %v9881 = vsel %vm1567, %v9879, %v9880
  %v9882 = vrot.slane %v9762, 5
  %v9883 = vrot.slane %v9882, 4
  %v9884 = vrot.slane %v9763, 5
  %v9885 = vsel %vm1567, %v9883, %v9884
  %v9886 = vrot.slane %v9884, 4
  %v9887 = vrot.slane %v9764, 5
  %v9888 = vsel %vm1567, %v9886, %v9887
  %v9889 = vrot.slane %v9765, 5
  %v9890 = vrot.slane %v9889, 4
  %v9891 = vrot.slane %v9766, 5
  %v9892 = vsel %vm1567, %v9890, %v9891
  %v9893 = vrot.slane %v9891, 4
  %v9894 = vrot.slane %v9767, 5
  %v9895 = vsel %vm1567, %v9893, %v9894
  %v9896 = vrot.slane %v9768, 5
  %v9897 = vrot.slane %v9896, 4
  %v9898 = vrot.slane %v9769, 5
  %v9899 = vsel %vm1567, %v9897, %v9898
  %v9900 = vrot.slane %v9898, 4
  %v9901 = vrot.slane %v9770, 5
  %v9902 = vsel %vm1567, %v9900, %v9901
  %v9903 = vrot.slane %v9771, 5
  %v9904 = vrot.slane %v9903, 4
  %v9905 = vrot.slane %v9772, 5
  %v9906 = vsel %vm1567, %v9904, %v9905
  %v9907 = vrot.slane %v9905, 4
  %v9908 = vrot.slane %v9773, 5
  %v9909 = vsel %vm1567, %v9907, %v9908
  %v9910 = vrot.slane %v9774, 5
  %v9911 = vrot.slane %v9910, 4
  %v9912 = vrot.slane %v9775, 5
  %v9913 = vsel %vm1567, %v9911, %v9912
  %v9914 = vrot.slane %v9912, 4
  %v9915 = vrot.slane %v9776, 5
  %v9916 = vsel %vm1567, %v9914, %v9915
  %v9917 = vrot.slane %v9777, 5
  %v9918 = vrot.slane %v9917, 4
  %v9919 = vrot.slane %v9778, 5
  %v9920 = vsel %vm1567, %v9918, %v9919
  %v9921 = vrot.slane %v9919, 4
  %v9922 = vrot.slane %v9779, 5
  %v9923 = vsel %vm1567, %v9921, %v9922
  %v9924 = vrot.slane %v9780, 5
  %v9925 = vrot.slane %v9924, 4
  %v9926 = vrot.slane %v9781, 5
  %v9927 = vsel %vm1567, %v9925, %v9926
  %v9928 = vrot.slane %v9926, 4
  %v9929 = vrot.slane %v9782, 5
  %v9930 = vsel %vm1567, %v9928, %v9929
  %v9931 = vrot.slane %v9783, 5
  %v9932 = vrot.slane %v9931, 4
  %v9933 = vrot.slane %v9784, 5
  %v9934 = vsel %vm1567, %v9932, %v9933
  %v9935 = vrot.slane %v9933, 4
  %v9936 = vrot.slane %v9785, 5
  %v9937 = vsel %vm1567, %v9935, %v9936
  %v9938 = vrot.slane %v9786, 5
  %v9939 = vrot.slane %v9938, 4
  %v9940 = vrot.slane %v9787, 5
  %v9941 = vsel %vm1567, %v9939, %v9940
  %v9942 = vrot.slane %v9940, 4
  %v9943 = vrot.slane %v9788, 5
  %v9944 = vsel %vm1567, %v9942, %v9943
  %v9945 = vrot.slane %v9789, 5
  %v9946 = vrot.slane %v9945, 4
  %v9947 = vrot.slane %v9790, 5
  %v9948 = vsel %vm1567, %v9946, %v9947
  %v9949 = vrot.slane %v9947, 4
  %v9950 = vrot.slane %v9791, 5
  %v9951 = vsel %vm1567, %v9949, %v9950
  %9952 = vrot.lane.b32.xlu0 %v9843, 32
  %v9953 = vpop.permute.xlu0 %9952
  %9954 = vrot.lane.b32.xlu0 %v9846, 32
  %v9955 = vpop.permute.xlu0 %9954
  %9956 = vrot.lane.b32.xlu0 %v9850, 32
  %v9957 = vpop.permute.xlu0 %9956
  %9958 = vrot.lane.b32.xlu0 %v9853, 32
  %v9959 = vpop.permute.xlu0 %9958
  %9960 = vrot.lane.b32.xlu0 %v9857, 32
  %v9961 = vpop.permute.xlu0 %9960
  %9962 = vrot.lane.b32.xlu0 %v9860, 32
  %v9963 = vpop.permute.xlu0 %9962
  %9964 = vrot.lane.b32.xlu0 %v9864, 32
  %v9965 = vpop.permute.xlu0 %9964
  %9966 = vrot.lane.b32.xlu0 %v9867, 32
  %v9967 = vpop.permute.xlu0 %9966
  %9968 = vrot.lane.b32.xlu0 %v9871, 32
  %v9969 = vpop.permute.xlu0 %9968
  %9970 = vrot.lane.b32.xlu0 %v9874, 32
  %v9971 = vpop.permute.xlu0 %9970
  %9972 = vrot.lane.b32.xlu0 %v9878, 32
  %v9973 = vpop.permute.xlu0 %9972
  %9974 = vrot.lane.b32.xlu0 %v9881, 32
  %v9975 = vpop.permute.xlu0 %9974
  %9976 = vrot.lane.b32.xlu0 %v9885, 32
  %v9977 = vpop.permute.xlu0 %9976
  %9978 = vrot.lane.b32.xlu0 %v9888, 32
  %v9979 = vpop.permute.xlu0 %9978
  %9980 = vrot.lane.b32.xlu0 %v9892, 32
  %v9981 = vpop.permute.xlu0 %9980
  %9982 = vrot.lane.b32.xlu0 %v9895, 32
  %v9983 = vpop.permute.xlu0 %9982
  %9984 = vrot.lane.b32.xlu0 %v9899, 32
  %v9985 = vpop.permute.xlu0 %9984
  %9986 = vrot.lane.b32.xlu0 %v9902, 32
  %v9987 = vpop.permute.xlu0 %9986
  %9988 = vrot.lane.b32.xlu0 %v9906, 32
  %v9989 = vpop.permute.xlu0 %9988
  %9990 = vrot.lane.b32.xlu0 %v9909, 32
  %v9991 = vpop.permute.xlu0 %9990
  %9992 = vrot.lane.b32.xlu0 %v9913, 32
  %v9993 = vpop.permute.xlu0 %9992
  %9994 = vrot.lane.b32.xlu0 %v9916, 32
  %v9995 = vpop.permute.xlu0 %9994
  %9996 = vrot.lane.b32.xlu0 %v9920, 32
  %v9997 = vpop.permute.xlu0 %9996
  %9998 = vrot.lane.b32.xlu0 %v9923, 32
  %v9999 = vpop.permute.xlu0 %9998
  %10000 = vrot.lane.b32.xlu0 %v9927, 32
  %v10001 = vpop.permute.xlu0 %10000
  %10002 = vrot.lane.b32.xlu0 %v9930, 32
  %v10003 = vpop.permute.xlu0 %10002
  %10004 = vrot.lane.b32.xlu0 %v9934, 32
  %v10005 = vpop.permute.xlu0 %10004
  %10006 = vrot.lane.b32.xlu0 %v9937, 32
  %v10007 = vpop.permute.xlu0 %10006
  %10008 = vrot.lane.b32.xlu0 %v9941, 32
  %v10009 = vpop.permute.xlu0 %10008
  %10010 = vrot.lane.b32.xlu0 %v9944, 32
  %v10011 = vpop.permute.xlu0 %10010
  %10012 = vrot.lane.b32.xlu0 %v9948, 32
  %v10013 = vpop.permute.xlu0 %10012
  %10014 = vrot.lane.b32.xlu0 %v9951, 32
  %v10015 = vpop.permute.xlu0 %10014
  %10048 = vst.msk [vmem:[#allocation2 + $0x204] sm:$0xf] %vm875, %v9953
  %10049 = vst.msk [vmem:[#allocation2 + $0x214] sm:$0xf] %vm875, %v9955
  %10050 = vst.msk [vmem:[#allocation2 + $0x224] sm:$0xf] %vm875, %v9957
  %10051 = vst.msk [vmem:[#allocation2 + $0x234] sm:$0xf] %vm875, %v9959
  %10052 = vst.msk [vmem:[#allocation2 + $0x244] sm:$0xf] %vm875, %v9961
  %10053 = vst.msk [vmem:[#allocation2 + $0x254] sm:$0xf] %vm875, %v9963
  %10054 = vst.msk [vmem:[#allocation2 + $0x264] sm:$0xf] %vm875, %v9965
  %10055 = vst.msk [vmem:[#allocation2 + $0x274] sm:$0xf] %vm875, %v9967
  %10056 = vst.msk [vmem:[#allocation2 + $0x284] sm:$0xf] %vm875, %v9969
  %10057 = vst.msk [vmem:[#allocation2 + $0x294] sm:$0xf] %vm875, %v9971
  %10058 = vst.msk [vmem:[#allocation2 + $0x2a4] sm:$0xf] %vm875, %v9973
  %10059 = vst.msk [vmem:[#allocation2 + $0x2b4] sm:$0xf] %vm875, %v9975
  %10060 = vst.msk [vmem:[#allocation2 + $0x2c4] sm:$0xf] %vm875, %v9977
  %10061 = vst.msk [vmem:[#allocation2 + $0x2d4] sm:$0xf] %vm875, %v9979
  %10062 = vst.msk [vmem:[#allocation2 + $0x2e4] sm:$0xf] %vm875, %v9981
  %10063 = vst.msk [vmem:[#allocation2 + $0x2f4] sm:$0xf] %vm875, %v9983
  %10064 = vst.msk [vmem:[#allocation2 + $0x304] sm:$0xf] %vm875, %v9985
  %10065 = vst.msk [vmem:[#allocation2 + $0x314] sm:$0xf] %vm875, %v9987
  %10066 = vst.msk [vmem:[#allocation2 + $0x324] sm:$0xf] %vm875, %v9989
  %10067 = vst.msk [vmem:[#allocation2 + $0x334] sm:$0xf] %vm875, %v9991
  %10068 = vst.msk [vmem:[#allocation2 + $0x344] sm:$0xf] %vm875, %v9993
  %10069 = vst.msk [vmem:[#allocation2 + $0x354] sm:$0xf] %vm875, %v9995
  %10070 = vst.msk [vmem:[#allocation2 + $0x364] sm:$0xf] %vm875, %v9997
  %10071 = vst.msk [vmem:[#allocation2 + $0x374] sm:$0xf] %vm875, %v9999
  %10072 = vst.msk [vmem:[#allocation2 + $0x384] sm:$0xf] %vm875, %v10001
  %10073 = vst.msk [vmem:[#allocation2 + $0x394] sm:$0xf] %vm875, %v10003
  %10074 = vst.msk [vmem:[#allocation2 + $0x3a4] sm:$0xf] %vm875, %v10005
  %10075 = vst.msk [vmem:[#allocation2 + $0x3b4] sm:$0xf] %vm875, %v10007
  %10076 = vst.msk [vmem:[#allocation2 + $0x3c4] sm:$0xf] %vm875, %v10009
  %10077 = vst.msk [vmem:[#allocation2 + $0x3d4] sm:$0xf] %vm875, %v10011
  %10078 = vst.msk [vmem:[#allocation2 + $0x3e4] sm:$0xf] %vm875, %v10013
  %10079 = vst.msk [vmem:[#allocation2 + $0x3f4] sm:$0xf] %vm875, %v10015
  %v10080 = vld [vmem:[%s8495] sm:$0xe]
  %v10081 = vld [vmem:[%s8495 + $0x4] sm:$0xf]
  %v10082 = vld [vmem:[%s8495 + $0x8] sm:$0x1]
  %v10083 = vld [vmem:[%s8495 + $0xc] sm:$0xe]
  %v10084 = vld [vmem:[%s8495 + $0x10] sm:$0xf]
  %v10085 = vld [vmem:[%s8495 + $0x14] sm:$0x1]
  %v10086 = vld [vmem:[%s8495 + $0x18] sm:$0xe]
  %v10087 = vld [vmem:[%s8495 + $0x1c] sm:$0xf]
  %v10088 = vld [vmem:[%s8495 + $0x20] sm:$0x1]
  %v10089 = vld [vmem:[%s8495 + $0x24] sm:$0xe]
  %v10090 = vld [vmem:[%s8495 + $0x28] sm:$0xf]
  %v10091 = vld [vmem:[%s8495 + $0x2c] sm:$0x1]
  %v10092 = vld [vmem:[%s8495 + $0x30] sm:$0xe]
  %v10093 = vld [vmem:[%s8495 + $0x34] sm:$0xf]
  %v10094 = vld [vmem:[%s8495 + $0x38] sm:$0x1]
  %v10095 = vld [vmem:[%s8495 + $0x3c] sm:$0xe]
  %v10096 = vld [vmem:[%s8495 + $0x40] sm:$0xf]
  %v10097 = vld [vmem:[%s8495 + $0x44] sm:$0x1]
  %v10098 = vld [vmem:[%s8495 + $0x48] sm:$0xe]
  %v10099 = vld [vmem:[%s8495 + $0x4c] sm:$0xf]
  %v10100 = vld [vmem:[%s8495 + $0x50] sm:$0x1]
  %v10101 = vld [vmem:[%s8495 + $0x54] sm:$0xe]
  %v10102 = vld [vmem:[%s8495 + $0x58] sm:$0xf]
  %v10103 = vld [vmem:[%s8495 + $0x5c] sm:$0x1]
  %v10104 = vld [vmem:[%s8495 + $0x60] sm:$0xe]
  %v10105 = vld [vmem:[%s8495 + $0x64] sm:$0xf]
  %v10106 = vld [vmem:[%s8495 + $0x68] sm:$0x1]
  %v10107 = vld [vmem:[%s8495 + $0x6c] sm:$0xe]
  %v10108 = vld [vmem:[%s8495 + $0x70] sm:$0xf]
  %v10109 = vld [vmem:[%s8495 + $0x74] sm:$0x1]
  %v10110 = vld [vmem:[%s8495 + $0x78] sm:$0xe]
  %v10111 = vld [vmem:[%s8495 + $0x7c] sm:$0xf]
  %v10112 = vld [vmem:[%s8495 + $0x80] sm:$0x1]
  %v10113 = vld [vmem:[%s8495 + $0x84] sm:$0xe]
  %v10114 = vld [vmem:[%s8495 + $0x88] sm:$0xf]
  %v10115 = vld [vmem:[%s8495 + $0x8c] sm:$0x1]
  %v10116 = vld [vmem:[%s8495 + $0x90] sm:$0xe]
  %v10117 = vld [vmem:[%s8495 + $0x94] sm:$0xf]
  %v10118 = vld [vmem:[%s8495 + $0x98] sm:$0x1]
  %v10119 = vld [vmem:[%s8495 + $0x9c] sm:$0xe]
  %v10120 = vld [vmem:[%s8495 + $0xa0] sm:$0xf]
  %v10121 = vld [vmem:[%s8495 + $0xa4] sm:$0x1]
  %v10122 = vld [vmem:[%s8495 + $0xa8] sm:$0xe]
  %v10123 = vld [vmem:[%s8495 + $0xac] sm:$0xf]
  %v10124 = vld [vmem:[%s8495 + $0xb0] sm:$0x1]
  %v10125 = vld [vmem:[%s8495 + $0xb4] sm:$0xe]
  %v10126 = vld [vmem:[%s8495 + $0xb8] sm:$0xf]
  %v10127 = vld [vmem:[%s8495 + $0xbc] sm:$0x1]
  %v10176 = vrot.slane %v10080, 5
  %v10177 = vrot.slane %v10176, 4
  %v10178 = vrot.slane %v10081, 5
  %v10179 = vsel %vm1567, %v10177, %v10178
  %v10180 = vrot.slane %v10178, 4
  %v10181 = vrot.slane %v10082, 5
  %v10182 = vsel %vm1567, %v10180, %v10181
  %v10183 = vrot.slane %v10083, 5
  %v10184 = vrot.slane %v10183, 4
  %v10185 = vrot.slane %v10084, 5
  %v10186 = vsel %vm1567, %v10184, %v10185
  %v10187 = vrot.slane %v10185, 4
  %v10188 = vrot.slane %v10085, 5
  %v10189 = vsel %vm1567, %v10187, %v10188
  %v10190 = vrot.slane %v10086, 5
  %v10191 = vrot.slane %v10190, 4
  %v10192 = vrot.slane %v10087, 5
  %v10193 = vsel %vm1567, %v10191, %v10192
  %v10194 = vrot.slane %v10192, 4
  %v10195 = vrot.slane %v10088, 5
  %v10196 = vsel %vm1567, %v10194, %v10195
  %v10197 = vrot.slane %v10089, 5
  %v10198 = vrot.slane %v10197, 4
  %v10199 = vrot.slane %v10090, 5
  %v10200 = vsel %vm1567, %v10198, %v10199
  %v10201 = vrot.slane %v10199, 4
  %v10202 = vrot.slane %v10091, 5
  %v10203 = vsel %vm1567, %v10201, %v10202
  %v10204 = vrot.slane %v10092, 5
  %v10205 = vrot.slane %v10204, 4
  %v10206 = vrot.slane %v10093, 5
  %v10207 = vsel %vm1567, %v10205, %v10206
  %v10208 = vrot.slane %v10206, 4
  %v10209 = vrot.slane %v10094, 5
  %v10210 = vsel %vm1567, %v10208, %v10209
  %v10211 = vrot.slane %v10095, 5
  %v10212 = vrot.slane %v10211, 4
  %v10213 = vrot.slane %v10096, 5
  %v10214 = vsel %vm1567, %v10212, %v10213
  %v10215 = vrot.slane %v10213, 4
  %v10216 = vrot.slane %v10097, 5
  %v10217 = vsel %vm1567, %v10215, %v10216
  %v10218 = vrot.slane %v10098, 5
  %v10219 = vrot.slane %v10218, 4
  %v10220 = vrot.slane %v10099, 5
  %v10221 = vsel %vm1567, %v10219, %v10220
  %v10222 = vrot.slane %v10220, 4
  %v10223 = vrot.slane %v10100, 5
  %v10224 = vsel %vm1567, %v10222, %v10223
  %v10225 = vrot.slane %v10101, 5
  %v10226 = vrot.slane %v10225, 4
  %v10227 = vrot.slane %v10102, 5
  %v10228 = vsel %vm1567, %v10226, %v10227
  %v10229 = vrot.slane %v10227, 4
  %v10230 = vrot.slane %v10103, 5
  %v10231 = vsel %vm1567, %v10229, %v10230
  %v10232 = vrot.slane %v10104, 5
  %v10233 = vrot.slane %v10232, 4
  %v10234 = vrot.slane %v10105, 5
  %v10235 = vsel %vm1567, %v10233, %v10234
  %v10236 = vrot.slane %v10234, 4
  %v10237 = vrot.slane %v10106, 5
  %v10238 = vsel %vm1567, %v10236, %v10237
  %v10239 = vrot.slane %v10107, 5
  %v10240 = vrot.slane %v10239, 4
  %v10241 = vrot.slane %v10108, 5
  %v10242 = vsel %vm1567, %v10240, %v10241
  %v10243 = vrot.slane %v10241, 4
  %v10244 = vrot.slane %v10109, 5
  %v10245 = vsel %vm1567, %v10243, %v10244
  %v10246 = vrot.slane %v10110, 5
  %v10247 = vrot.slane %v10246, 4
  %v10248 = vrot.slane %v10111, 5
  %v10249 = vsel %vm1567, %v10247, %v10248
  %v10250 = vrot.slane %v10248, 4
  %v10251 = vrot.slane %v10112, 5
  %v10252 = vsel %vm1567, %v10250, %v10251
  %v10253 = vrot.slane %v10113, 5
  %v10254 = vrot.slane %v10253, 4
  %v10255 = vrot.slane %v10114, 5
  %v10256 = vsel %vm1567, %v10254, %v10255
  %v10257 = vrot.slane %v10255, 4
  %v10258 = vrot.slane %v10115, 5
  %v10259 = vsel %vm1567, %v10257, %v10258
  %v10260 = vrot.slane %v10116, 5
  %v10261 = vrot.slane %v10260, 4
  %v10262 = vrot.slane %v10117, 5
  %v10263 = vsel %vm1567, %v10261, %v10262
  %v10264 = vrot.slane %v10262, 4
  %v10265 = vrot.slane %v10118, 5
  %v10266 = vsel %vm1567, %v10264, %v10265
  %v10267 = vrot.slane %v10119, 5
  %v10268 = vrot.slane %v10267, 4
  %v10269 = vrot.slane %v10120, 5
  %v10270 = vsel %vm1567, %v10268, %v10269
  %v10271 = vrot.slane %v10269, 4
  %v10272 = vrot.slane %v10121, 5
  %v10273 = vsel %vm1567, %v10271, %v10272
  %v10274 = vrot.slane %v10122, 5
  %v10275 = vrot.slane %v10274, 4
  %v10276 = vrot.slane %v10123, 5
  %v10277 = vsel %vm1567, %v10275, %v10276
  %v10278 = vrot.slane %v10276, 4
  %v10279 = vrot.slane %v10124, 5
  %v10280 = vsel %vm1567, %v10278, %v10279
  %v10281 = vrot.slane %v10125, 5
  %v10282 = vrot.slane %v10281, 4
  %v10283 = vrot.slane %v10126, 5
  %v10284 = vsel %vm1567, %v10282, %v10283
  %v10285 = vrot.slane %v10283, 4
  %v10286 = vrot.slane %v10127, 5
  %v10287 = vsel %vm1567, %v10285, %v10286
  %10288 = vrot.lane.b32.xlu0 %v10179, 112
  %v10289 = vpop.permute.xlu0 %10288
  %10290 = vrot.lane.b32.xlu0 %v10182, 112
  %v10291 = vpop.permute.xlu0 %10290
  %10292 = vrot.lane.b32.xlu0 %v10186, 112
  %v10293 = vpop.permute.xlu0 %10292
  %10294 = vrot.lane.b32.xlu0 %v10189, 112
  %v10295 = vpop.permute.xlu0 %10294
  %10296 = vrot.lane.b32.xlu0 %v10193, 112
  %v10297 = vpop.permute.xlu0 %10296
  %10298 = vrot.lane.b32.xlu0 %v10196, 112
  %v10299 = vpop.permute.xlu0 %10298
  %10300 = vrot.lane.b32.xlu0 %v10200, 112
  %v10301 = vpop.permute.xlu0 %10300
  %10302 = vrot.lane.b32.xlu0 %v10203, 112
  %v10303 = vpop.permute.xlu0 %10302
  %10304 = vrot.lane.b32.xlu0 %v10207, 112
  %v10305 = vpop.permute.xlu0 %10304
  %10306 = vrot.lane.b32.xlu0 %v10210, 112
  %v10307 = vpop.permute.xlu0 %10306
  %10308 = vrot.lane.b32.xlu0 %v10214, 112
  %v10309 = vpop.permute.xlu0 %10308
  %10310 = vrot.lane.b32.xlu0 %v10217, 112
  %v10311 = vpop.permute.xlu0 %10310
  %10312 = vrot.lane.b32.xlu0 %v10221, 112
  %v10313 = vpop.permute.xlu0 %10312
  %10314 = vrot.lane.b32.xlu0 %v10224, 112
  %v10315 = vpop.permute.xlu0 %10314
  %10316 = vrot.lane.b32.xlu0 %v10228, 112
  %v10317 = vpop.permute.xlu0 %10316
  %10318 = vrot.lane.b32.xlu0 %v10231, 112
  %v10319 = vpop.permute.xlu0 %10318
  %10320 = vrot.lane.b32.xlu0 %v10235, 112
  %v10321 = vpop.permute.xlu0 %10320
  %10322 = vrot.lane.b32.xlu0 %v10238, 112
  %v10323 = vpop.permute.xlu0 %10322
  %10324 = vrot.lane.b32.xlu0 %v10242, 112
  %v10325 = vpop.permute.xlu0 %10324
  %10326 = vrot.lane.b32.xlu0 %v10245, 112
  %v10327 = vpop.permute.xlu0 %10326
  %10328 = vrot.lane.b32.xlu0 %v10249, 112
  %v10329 = vpop.permute.xlu0 %10328
  %10330 = vrot.lane.b32.xlu0 %v10252, 112
  %v10331 = vpop.permute.xlu0 %10330
  %10332 = vrot.lane.b32.xlu0 %v10256, 112
  %v10333 = vpop.permute.xlu0 %10332
  %10334 = vrot.lane.b32.xlu0 %v10259, 112
  %v10335 = vpop.permute.xlu0 %10334
  %10336 = vrot.lane.b32.xlu0 %v10263, 112
  %v10337 = vpop.permute.xlu0 %10336
  %10338 = vrot.lane.b32.xlu0 %v10266, 112
  %v10339 = vpop.permute.xlu0 %10338
  %10340 = vrot.lane.b32.xlu0 %v10270, 112
  %v10341 = vpop.permute.xlu0 %10340
  %10342 = vrot.lane.b32.xlu0 %v10273, 112
  %v10343 = vpop.permute.xlu0 %10342
  %10344 = vrot.lane.b32.xlu0 %v10277, 112
  %v10345 = vpop.permute.xlu0 %10344
  %10346 = vrot.lane.b32.xlu0 %v10280, 112
  %v10347 = vpop.permute.xlu0 %10346
  %10348 = vrot.lane.b32.xlu0 %v10284, 112
  %v10349 = vpop.permute.xlu0 %10348
  %10350 = vrot.lane.b32.xlu0 %v10287, 112
  %v10351 = vpop.permute.xlu0 %10350
  %10384 = vst.msk [vmem:[#allocation2 + $0x208] sm:$0xf] %vm4231, %v10289
  %10385 = vst.msk [vmem:[#allocation2 + $0x218] sm:$0xf] %vm4231, %v10291
  %10386 = vst.msk [vmem:[#allocation2 + $0x228] sm:$0xf] %vm4231, %v10293
  %10387 = vst.msk [vmem:[#allocation2 + $0x238] sm:$0xf] %vm4231, %v10295
  %10388 = vst.msk [vmem:[#allocation2 + $0x248] sm:$0xf] %vm4231, %v10297
  %10389 = vst.msk [vmem:[#allocation2 + $0x258] sm:$0xf] %vm4231, %v10299
  %10390 = vst.msk [vmem:[#allocation2 + $0x268] sm:$0xf] %vm4231, %v10301
  %10391 = vst.msk [vmem:[#allocation2 + $0x278] sm:$0xf] %vm4231, %v10303
  %10392 = vst.msk [vmem:[#allocation2 + $0x288] sm:$0xf] %vm4231, %v10305
  %10393 = vst.msk [vmem:[#allocation2 + $0x298] sm:$0xf] %vm4231, %v10307
  %10394 = vst.msk [vmem:[#allocation2 + $0x2a8] sm:$0xf] %vm4231, %v10309
  %10395 = vst.msk [vmem:[#allocation2 + $0x2b8] sm:$0xf] %vm4231, %v10311
  %10396 = vst.msk [vmem:[#allocation2 + $0x2c8] sm:$0xf] %vm4231, %v10313
  %10397 = vst.msk [vmem:[#allocation2 + $0x2d8] sm:$0xf] %vm4231, %v10315
  %10398 = vst.msk [vmem:[#allocation2 + $0x2e8] sm:$0xf] %vm4231, %v10317
  %10399 = vst.msk [vmem:[#allocation2 + $0x2f8] sm:$0xf] %vm4231, %v10319
  %10400 = vst.msk [vmem:[#allocation2 + $0x308] sm:$0xf] %vm4231, %v10321
  %10401 = vst.msk [vmem:[#allocation2 + $0x318] sm:$0xf] %vm4231, %v10323
  %10402 = vst.msk [vmem:[#allocation2 + $0x328] sm:$0xf] %vm4231, %v10325
  %10403 = vst.msk [vmem:[#allocation2 + $0x338] sm:$0xf] %vm4231, %v10327
  %10404 = vst.msk [vmem:[#allocation2 + $0x348] sm:$0xf] %vm4231, %v10329
  %10405 = vst.msk [vmem:[#allocation2 + $0x358] sm:$0xf] %vm4231, %v10331
  %10406 = vst.msk [vmem:[#allocation2 + $0x368] sm:$0xf] %vm4231, %v10333
  %10407 = vst.msk [vmem:[#allocation2 + $0x378] sm:$0xf] %vm4231, %v10335
  %10408 = vst.msk [vmem:[#allocation2 + $0x388] sm:$0xf] %vm4231, %v10337
  %10409 = vst.msk [vmem:[#allocation2 + $0x398] sm:$0xf] %vm4231, %v10339
  %10410 = vst.msk [vmem:[#allocation2 + $0x3a8] sm:$0xf] %vm4231, %v10341
  %10411 = vst.msk [vmem:[#allocation2 + $0x3b8] sm:$0xf] %vm4231, %v10343
  %10412 = vst.msk [vmem:[#allocation2 + $0x3c8] sm:$0xf] %vm4231, %v10345
  %10413 = vst.msk [vmem:[#allocation2 + $0x3d8] sm:$0xf] %vm4231, %v10347
  %10414 = vst.msk [vmem:[#allocation2 + $0x3e8] sm:$0xf] %vm4231, %v10349
  %10415 = vst.msk [vmem:[#allocation2 + $0x3f8] sm:$0xf] %vm4231, %v10351
  %s10416 = scalar_lea.vmem %s0, 240
  %v10417 = vld [vmem:[%s10416] sm:$0xf]
  %v10418 = vld [vmem:[%s10416 + $0x4] sm:$0xf]
  %v10419 = vld [vmem:[%s10416 + $0xc] sm:$0xf]
  %v10420 = vld [vmem:[%s10416 + $0x10] sm:$0xf]
  %v10421 = vld [vmem:[%s10416 + $0x18] sm:$0xf]
  %v10422 = vld [vmem:[%s10416 + $0x1c] sm:$0xf]
  %v10423 = vld [vmem:[%s10416 + $0x24] sm:$0xf]
  %v10424 = vld [vmem:[%s10416 + $0x28] sm:$0xf]
  %v10425 = vld [vmem:[%s10416 + $0x30] sm:$0xf]
  %v10426 = vld [vmem:[%s10416 + $0x34] sm:$0xf]
  %v10427 = vld [vmem:[%s10416 + $0x3c] sm:$0xf]
  %v10428 = vld [vmem:[%s10416 + $0x40] sm:$0xf]
  %v10429 = vld [vmem:[%s10416 + $0x48] sm:$0xf]
  %v10430 = vld [vmem:[%s10416 + $0x4c] sm:$0xf]
  %v10431 = vld [vmem:[%s10416 + $0x54] sm:$0xf]
  %v10432 = vld [vmem:[%s10416 + $0x58] sm:$0xf]
  %v10433 = vld [vmem:[%s10416 + $0x60] sm:$0xf]
  %v10434 = vld [vmem:[%s10416 + $0x64] sm:$0xf]
  %v10435 = vld [vmem:[%s10416 + $0x6c] sm:$0xf]
  %v10436 = vld [vmem:[%s10416 + $0x70] sm:$0xf]
  %v10437 = vld [vmem:[%s10416 + $0x78] sm:$0xf]
  %v10438 = vld [vmem:[%s10416 + $0x7c] sm:$0xf]
  %v10439 = vld [vmem:[%s10416 + $0x84] sm:$0xf]
  %v10440 = vld [vmem:[%s10416 + $0x88] sm:$0xf]
  %v10441 = vld [vmem:[%s10416 + $0x90] sm:$0xf]
  %v10442 = vld [vmem:[%s10416 + $0x94] sm:$0xf]
  %v10443 = vld [vmem:[%s10416 + $0x9c] sm:$0xf]
  %v10444 = vld [vmem:[%s10416 + $0xa0] sm:$0xf]
  %v10445 = vld [vmem:[%s10416 + $0xa8] sm:$0xf]
  %v10446 = vld [vmem:[%s10416 + $0xac] sm:$0xf]
  %v10447 = vld [vmem:[%s10416 + $0xb4] sm:$0xf]
  %v10448 = vld [vmem:[%s10416 + $0xb8] sm:$0xf]
  %10481 = vrot.lane.b32.xlu0 %v10417, 64
  %v10482 = vpop.permute.xlu0 %10481
  %10483 = vrot.lane.b32.xlu0 %v10418, 64
  %v10484 = vpop.permute.xlu0 %10483
  %10485 = vrot.lane.b32.xlu0 %v10419, 64
  %v10486 = vpop.permute.xlu0 %10485
  %10487 = vrot.lane.b32.xlu0 %v10420, 64
  %v10488 = vpop.permute.xlu0 %10487
  %10489 = vrot.lane.b32.xlu0 %v10421, 64
  %v10490 = vpop.permute.xlu0 %10489
  %10491 = vrot.lane.b32.xlu0 %v10422, 64
  %v10492 = vpop.permute.xlu0 %10491
  %10493 = vrot.lane.b32.xlu0 %v10423, 64
  %v10494 = vpop.permute.xlu0 %10493
  %10495 = vrot.lane.b32.xlu0 %v10424, 64
  %v10496 = vpop.permute.xlu0 %10495
  %10497 = vrot.lane.b32.xlu0 %v10425, 64
  %v10498 = vpop.permute.xlu0 %10497
  %10499 = vrot.lane.b32.xlu0 %v10426, 64
  %v10500 = vpop.permute.xlu0 %10499
  %10501 = vrot.lane.b32.xlu0 %v10427, 64
  %v10502 = vpop.permute.xlu0 %10501
  %10503 = vrot.lane.b32.xlu0 %v10428, 64
  %v10504 = vpop.permute.xlu0 %10503
  %10505 = vrot.lane.b32.xlu0 %v10429, 64
  %v10506 = vpop.permute.xlu0 %10505
  %10507 = vrot.lane.b32.xlu0 %v10430, 64
  %v10508 = vpop.permute.xlu0 %10507
  %10509 = vrot.lane.b32.xlu0 %v10431, 64
  %v10510 = vpop.permute.xlu0 %10509
  %10511 = vrot.lane.b32.xlu0 %v10432, 64
  %v10512 = vpop.permute.xlu0 %10511
  %10513 = vrot.lane.b32.xlu0 %v10433, 64
  %v10514 = vpop.permute.xlu0 %10513
  %10515 = vrot.lane.b32.xlu0 %v10434, 64
  %v10516 = vpop.permute.xlu0 %10515
  %10517 = vrot.lane.b32.xlu0 %v10435, 64
  %v10518 = vpop.permute.xlu0 %10517
  %10519 = vrot.lane.b32.xlu0 %v10436, 64
  %v10520 = vpop.permute.xlu0 %10519
  %10521 = vrot.lane.b32.xlu0 %v10437, 64
  %v10522 = vpop.permute.xlu0 %10521
  %10523 = vrot.lane.b32.xlu0 %v10438, 64
  %v10524 = vpop.permute.xlu0 %10523
  %10525 = vrot.lane.b32.xlu0 %v10439, 64
  %v10526 = vpop.permute.xlu0 %10525
  %10527 = vrot.lane.b32.xlu0 %v10440, 64
  %v10528 = vpop.permute.xlu0 %10527
  %10529 = vrot.lane.b32.xlu0 %v10441, 64
  %v10530 = vpop.permute.xlu0 %10529
  %10531 = vrot.lane.b32.xlu0 %v10442, 64
  %v10532 = vpop.permute.xlu0 %10531
  %10533 = vrot.lane.b32.xlu0 %v10443, 64
  %v10534 = vpop.permute.xlu0 %10533
  %10535 = vrot.lane.b32.xlu0 %v10444, 64
  %v10536 = vpop.permute.xlu0 %10535
  %10537 = vrot.lane.b32.xlu0 %v10445, 64
  %v10538 = vpop.permute.xlu0 %10537
  %10539 = vrot.lane.b32.xlu0 %v10446, 64
  %v10540 = vpop.permute.xlu0 %10539
  %10541 = vrot.lane.b32.xlu0 %v10447, 64
  %v10542 = vpop.permute.xlu0 %10541
  %10543 = vrot.lane.b32.xlu0 %v10448, 64
  %v10544 = vpop.permute.xlu0 %10543
  %10577 = vst.msk [vmem:[#allocation2 + $0x204] sm:$0xf] %vm1776, %v10482
  %10578 = vst.msk [vmem:[#allocation2 + $0x214] sm:$0xf] %vm1776, %v10484
  %10579 = vst.msk [vmem:[#allocation2 + $0x224] sm:$0xf] %vm1776, %v10486
  %10580 = vst.msk [vmem:[#allocation2 + $0x234] sm:$0xf] %vm1776, %v10488
  %10581 = vst.msk [vmem:[#allocation2 + $0x244] sm:$0xf] %vm1776, %v10490
  %10582 = vst.msk [vmem:[#allocation2 + $0x254] sm:$0xf] %vm1776, %v10492
  %10583 = vst.msk [vmem:[#allocation2 + $0x264] sm:$0xf] %vm1776, %v10494
  %10584 = vst.msk [vmem:[#allocation2 + $0x274] sm:$0xf] %vm1776, %v10496
  %10585 = vst.msk [vmem:[#allocation2 + $0x284] sm:$0xf] %vm1776, %v10498
  %10586 = vst.msk [vmem:[#allocation2 + $0x294] sm:$0xf] %vm1776, %v10500
  %10587 = vst.msk [vmem:[#allocation2 + $0x2a4] sm:$0xf] %vm1776, %v10502
  %10588 = vst.msk [vmem:[#allocation2 + $0x2b4] sm:$0xf] %vm1776, %v10504
  %10589 = vst.msk [vmem:[#allocation2 + $0x2c4] sm:$0xf] %vm1776, %v10506
  %10590 = vst.msk [vmem:[#allocation2 + $0x2d4] sm:$0xf] %vm1776, %v10508
  %10591 = vst.msk [vmem:[#allocation2 + $0x2e4] sm:$0xf] %vm1776, %v10510
  %10592 = vst.msk [vmem:[#allocation2 + $0x2f4] sm:$0xf] %vm1776, %v10512
  %10593 = vst.msk [vmem:[#allocation2 + $0x304] sm:$0xf] %vm1776, %v10514
  %10594 = vst.msk [vmem:[#allocation2 + $0x314] sm:$0xf] %vm1776, %v10516
  %10595 = vst.msk [vmem:[#allocation2 + $0x324] sm:$0xf] %vm1776, %v10518
  %10596 = vst.msk [vmem:[#allocation2 + $0x334] sm:$0xf] %vm1776, %v10520
  %10597 = vst.msk [vmem:[#allocation2 + $0x344] sm:$0xf] %vm1776, %v10522
  %10598 = vst.msk [vmem:[#allocation2 + $0x354] sm:$0xf] %vm1776, %v10524
  %10599 = vst.msk [vmem:[#allocation2 + $0x364] sm:$0xf] %vm1776, %v10526
  %10600 = vst.msk [vmem:[#allocation2 + $0x374] sm:$0xf] %vm1776, %v10528
  %10601 = vst.msk [vmem:[#allocation2 + $0x384] sm:$0xf] %vm1776, %v10530
  %10602 = vst.msk [vmem:[#allocation2 + $0x394] sm:$0xf] %vm1776, %v10532
  %10603 = vst.msk [vmem:[#allocation2 + $0x3a4] sm:$0xf] %vm1776, %v10534
  %10604 = vst.msk [vmem:[#allocation2 + $0x3b4] sm:$0xf] %vm1776, %v10536
  %10605 = vst.msk [vmem:[#allocation2 + $0x3c4] sm:$0xf] %vm1776, %v10538
  %10606 = vst.msk [vmem:[#allocation2 + $0x3d4] sm:$0xf] %vm1776, %v10540
  %10607 = vst.msk [vmem:[#allocation2 + $0x3e4] sm:$0xf] %vm1776, %v10542
  %10608 = vst.msk [vmem:[#allocation2 + $0x3f4] sm:$0xf] %vm1776, %v10544
  %s10609 = scalar_lea.vmem %s1, 240
  %v10610 = vld [vmem:[%s10609] sm:$0xf]
  %v10611 = vld [vmem:[%s10609 + $0x4] sm:$0xf]
  %v10612 = vld [vmem:[%s10609 + $0xc] sm:$0xf]
  %v10613 = vld [vmem:[%s10609 + $0x10] sm:$0xf]
  %v10614 = vld [vmem:[%s10609 + $0x18] sm:$0xf]
  %v10615 = vld [vmem:[%s10609 + $0x1c] sm:$0xf]
  %v10616 = vld [vmem:[%s10609 + $0x24] sm:$0xf]
  %v10617 = vld [vmem:[%s10609 + $0x28] sm:$0xf]
  %v10618 = vld [vmem:[%s10609 + $0x30] sm:$0xf]
  %v10619 = vld [vmem:[%s10609 + $0x34] sm:$0xf]
  %v10620 = vld [vmem:[%s10609 + $0x3c] sm:$0xf]
  %v10621 = vld [vmem:[%s10609 + $0x40] sm:$0xf]
  %v10622 = vld [vmem:[%s10609 + $0x48] sm:$0xf]
  %v10623 = vld [vmem:[%s10609 + $0x4c] sm:$0xf]
  %v10624 = vld [vmem:[%s10609 + $0x54] sm:$0xf]
  %v10625 = vld [vmem:[%s10609 + $0x58] sm:$0xf]
  %v10626 = vld [vmem:[%s10609 + $0x60] sm:$0xf]
  %v10627 = vld [vmem:[%s10609 + $0x64] sm:$0xf]
  %v10628 = vld [vmem:[%s10609 + $0x6c] sm:$0xf]
  %v10629 = vld [vmem:[%s10609 + $0x70] sm:$0xf]
  %v10630 = vld [vmem:[%s10609 + $0x78] sm:$0xf]
  %v10631 = vld [vmem:[%s10609 + $0x7c] sm:$0xf]
  %v10632 = vld [vmem:[%s10609 + $0x84] sm:$0xf]
  %v10633 = vld [vmem:[%s10609 + $0x88] sm:$0xf]
  %v10634 = vld [vmem:[%s10609 + $0x90] sm:$0xf]
  %v10635 = vld [vmem:[%s10609 + $0x94] sm:$0xf]
  %v10636 = vld [vmem:[%s10609 + $0x9c] sm:$0xf]
  %v10637 = vld [vmem:[%s10609 + $0xa0] sm:$0xf]
  %v10638 = vld [vmem:[%s10609 + $0xa8] sm:$0xf]
  %v10639 = vld [vmem:[%s10609 + $0xac] sm:$0xf]
  %v10640 = vld [vmem:[%s10609 + $0xb4] sm:$0xf]
  %v10641 = vld [vmem:[%s10609 + $0xb8] sm:$0xf]
  %10642 = vst.msk [vmem:[#allocation2 + $0x20c] sm:$0xf] %vm4490, %v10610
  %10643 = vst.msk [vmem:[#allocation2 + $0x21c] sm:$0xf] %vm4490, %v10611
  %10644 = vst.msk [vmem:[#allocation2 + $0x22c] sm:$0xf] %vm4490, %v10612
  %10645 = vst.msk [vmem:[#allocation2 + $0x23c] sm:$0xf] %vm4490, %v10613
  %10646 = vst.msk [vmem:[#allocation2 + $0x24c] sm:$0xf] %vm4490, %v10614
  %10647 = vst.msk [vmem:[#allocation2 + $0x25c] sm:$0xf] %vm4490, %v10615
  %10648 = vst.msk [vmem:[#allocation2 + $0x26c] sm:$0xf] %vm4490, %v10616
  %10649 = vst.msk [vmem:[#allocation2 + $0x27c] sm:$0xf] %vm4490, %v10617
  %10650 = vst.msk [vmem:[#allocation2 + $0x28c] sm:$0xf] %vm4490, %v10618
  %10651 = vst.msk [vmem:[#allocation2 + $0x29c] sm:$0xf] %vm4490, %v10619
  %10652 = vst.msk [vmem:[#allocation2 + $0x2ac] sm:$0xf] %vm4490, %v10620
  %10653 = vst.msk [vmem:[#allocation2 + $0x2bc] sm:$0xf] %vm4490, %v10621
  %10654 = vst.msk [vmem:[#allocation2 + $0x2cc] sm:$0xf] %vm4490, %v10622
  %10655 = vst.msk [vmem:[#allocation2 + $0x2dc] sm:$0xf] %vm4490, %v10623
  %10656 = vst.msk [vmem:[#allocation2 + $0x2ec] sm:$0xf] %vm4490, %v10624
  %10657 = vst.msk [vmem:[#allocation2 + $0x2fc] sm:$0xf] %vm4490, %v10625
  %10658 = vst.msk [vmem:[#allocation2 + $0x30c] sm:$0xf] %vm4490, %v10626
  %10659 = vst.msk [vmem:[#allocation2 + $0x31c] sm:$0xf] %vm4490, %v10627
  %10660 = vst.msk [vmem:[#allocation2 + $0x32c] sm:$0xf] %vm4490, %v10628
  %10661 = vst.msk [vmem:[#allocation2 + $0x33c] sm:$0xf] %vm4490, %v10629
  %10662 = vst.msk [vmem:[#allocation2 + $0x34c] sm:$0xf] %vm4490, %v10630
  %10663 = vst.msk [vmem:[#allocation2 + $0x35c] sm:$0xf] %vm4490, %v10631
  %10664 = vst.msk [vmem:[#allocation2 + $0x36c] sm:$0xf] %vm4490, %v10632
  %10665 = vst.msk [vmem:[#allocation2 + $0x37c] sm:$0xf] %vm4490, %v10633
  %10666 = vst.msk [vmem:[#allocation2 + $0x38c] sm:$0xf] %vm4490, %v10634
  %10667 = vst.msk [vmem:[#allocation2 + $0x39c] sm:$0xf] %vm4490, %v10635
  %10668 = vst.msk [vmem:[#allocation2 + $0x3ac] sm:$0xf] %vm4490, %v10636
  %10669 = vst.msk [vmem:[#allocation2 + $0x3bc] sm:$0xf] %vm4490, %v10637
  %10670 = vst.msk [vmem:[#allocation2 + $0x3cc] sm:$0xf] %vm4490, %v10638
  %10671 = vst.msk [vmem:[#allocation2 + $0x3dc] sm:$0xf] %vm4490, %v10639
  %10672 = vst.msk [vmem:[#allocation2 + $0x3ec] sm:$0xf] %vm4490, %v10640
  %10673 = vst.msk [vmem:[#allocation2 + $0x3fc] sm:$0xf] %vm4490, %v10641
  %v10674 = vld [vmem:[%s10416] sm:$0xf]
  %v10675 = vld [vmem:[%s10416 + $0x4] sm:$0xf]
  %v10676 = vld [vmem:[%s10416 + $0x8] sm:$0x1]
  %v10677 = vld [vmem:[%s10416 + $0xc] sm:$0xf]
  %v10678 = vld [vmem:[%s10416 + $0x10] sm:$0xf]
  %v10679 = vld [vmem:[%s10416 + $0x14] sm:$0x1]
  %v10680 = vld [vmem:[%s10416 + $0x18] sm:$0xf]
  %v10681 = vld [vmem:[%s10416 + $0x1c] sm:$0xf]
  %v10682 = vld [vmem:[%s10416 + $0x20] sm:$0x1]
  %v10683 = vld [vmem:[%s10416 + $0x24] sm:$0xf]
  %v10684 = vld [vmem:[%s10416 + $0x28] sm:$0xf]
  %v10685 = vld [vmem:[%s10416 + $0x2c] sm:$0x1]
  %v10686 = vld [vmem:[%s10416 + $0x30] sm:$0xf]
  %v10687 = vld [vmem:[%s10416 + $0x34] sm:$0xf]
  %v10688 = vld [vmem:[%s10416 + $0x38] sm:$0x1]
  %v10689 = vld [vmem:[%s10416 + $0x3c] sm:$0xf]
  %v10690 = vld [vmem:[%s10416 + $0x40] sm:$0xf]
  %v10691 = vld [vmem:[%s10416 + $0x44] sm:$0x1]
  %v10692 = vld [vmem:[%s10416 + $0x48] sm:$0xf]
  %v10693 = vld [vmem:[%s10416 + $0x4c] sm:$0xf]
  %v10694 = vld [vmem:[%s10416 + $0x50] sm:$0x1]
  %v10695 = vld [vmem:[%s10416 + $0x54] sm:$0xf]
  %v10696 = vld [vmem:[%s10416 + $0x58] sm:$0xf]
  %v10697 = vld [vmem:[%s10416 + $0x5c] sm:$0x1]
  %v10698 = vld [vmem:[%s10416 + $0x60] sm:$0xf]
  %v10699 = vld [vmem:[%s10416 + $0x64] sm:$0xf]
  %v10700 = vld [vmem:[%s10416 + $0x68] sm:$0x1]
  %v10701 = vld [vmem:[%s10416 + $0x6c] sm:$0xf]
  %v10702 = vld [vmem:[%s10416 + $0x70] sm:$0xf]
  %v10703 = vld [vmem:[%s10416 + $0x74] sm:$0x1]
  %v10704 = vld [vmem:[%s10416 + $0x78] sm:$0xf]
  %v10705 = vld [vmem:[%s10416 + $0x7c] sm:$0xf]
  %v10706 = vld [vmem:[%s10416 + $0x80] sm:$0x1]
  %v10707 = vld [vmem:[%s10416 + $0x84] sm:$0xf]
  %v10708 = vld [vmem:[%s10416 + $0x88] sm:$0xf]
  %v10709 = vld [vmem:[%s10416 + $0x8c] sm:$0x1]
  %v10710 = vld [vmem:[%s10416 + $0x90] sm:$0xf]
  %v10711 = vld [vmem:[%s10416 + $0x94] sm:$0xf]
  %v10712 = vld [vmem:[%s10416 + $0x98] sm:$0x1]
  %v10713 = vld [vmem:[%s10416 + $0x9c] sm:$0xf]
  %v10714 = vld [vmem:[%s10416 + $0xa0] sm:$0xf]
  %v10715 = vld [vmem:[%s10416 + $0xa4] sm:$0x1]
  %v10716 = vld [vmem:[%s10416 + $0xa8] sm:$0xf]
  %v10717 = vld [vmem:[%s10416 + $0xac] sm:$0xf]
  %v10718 = vld [vmem:[%s10416 + $0xb0] sm:$0x1]
  %v10719 = vld [vmem:[%s10416 + $0xb4] sm:$0xf]
  %v10720 = vld [vmem:[%s10416 + $0xb8] sm:$0xf]
  %v10721 = vld [vmem:[%s10416 + $0xbc] sm:$0x1]
  %v10723 = vshrl.u32 %v10674, 16
  %v10725 = vrot.slane %v10723, 4
  %v10726 = vshll.u32 %v10674, 16
  %v10728 = vrot.slane %v10726, 5
  %v10729 = vor.u32 %v10725, %v10728
  %v10730 = vrot.slane %v10729, 4
  %v10732 = vshll.u32 %v10675, 16
  %v10734 = vrot.slane %v10732, 5
  %v10735 = vsel %vm394, %v10730, %v10734
  %v10736 = vshrl.u32 %v10675, 16
  %v10738 = vrot.slane %v10736, 4
  %v10739 = vor.u32 %v10738, %v10734
  %v10740 = vrot.slane %v10739, 4
  %v10742 = vshll.u32 %v10676, 16
  %v10744 = vrot.slane %v10742, 5
  %v10745 = vsel %vm394, %v10740, %v10744
  %v10747 = vshrl.u32 %v10677, 16
  %v10749 = vrot.slane %v10747, 4
  %v10750 = vshll.u32 %v10677, 16
  %v10752 = vrot.slane %v10750, 5
  %v10753 = vor.u32 %v10749, %v10752
  %v10754 = vrot.slane %v10753, 4
  %v10756 = vshll.u32 %v10678, 16
  %v10758 = vrot.slane %v10756, 5
  %v10759 = vsel %vm394, %v10754, %v10758
  %v10760 = vshrl.u32 %v10678, 16
  %v10762 = vrot.slane %v10760, 4
  %v10763 = vor.u32 %v10762, %v10758
  %v10764 = vrot.slane %v10763, 4
  %v10766 = vshll.u32 %v10679, 16
  %v10768 = vrot.slane %v10766, 5
  %v10769 = vsel %vm394, %v10764, %v10768
  %v10771 = vshrl.u32 %v10680, 16
  %v10773 = vrot.slane %v10771, 4
  %v10774 = vshll.u32 %v10680, 16
  %v10776 = vrot.slane %v10774, 5
  %v10777 = vor.u32 %v10773, %v10776
  %v10778 = vrot.slane %v10777, 4
  %v10780 = vshll.u32 %v10681, 16
  %v10782 = vrot.slane %v10780, 5
  %v10783 = vsel %vm394, %v10778, %v10782
  %v10784 = vshrl.u32 %v10681, 16
  %v10786 = vrot.slane %v10784, 4
  %v10787 = vor.u32 %v10786, %v10782
  %v10788 = vrot.slane %v10787, 4
  %v10790 = vshll.u32 %v10682, 16
  %v10792 = vrot.slane %v10790, 5
  %v10793 = vsel %vm394, %v10788, %v10792
  %v10795 = vshrl.u32 %v10683, 16
  %v10797 = vrot.slane %v10795, 4
  %v10798 = vshll.u32 %v10683, 16
  %v10800 = vrot.slane %v10798, 5
  %v10801 = vor.u32 %v10797, %v10800
  %v10802 = vrot.slane %v10801, 4
  %v10804 = vshll.u32 %v10684, 16
  %v10806 = vrot.slane %v10804, 5
  %v10807 = vsel %vm394, %v10802, %v10806
  %v10808 = vshrl.u32 %v10684, 16
  %v10810 = vrot.slane %v10808, 4
  %v10811 = vor.u32 %v10810, %v10806
  %v10812 = vrot.slane %v10811, 4
  %v10814 = vshll.u32 %v10685, 16
  %v10816 = vrot.slane %v10814, 5
  %v10817 = vsel %vm394, %v10812, %v10816
  %v10819 = vshrl.u32 %v10686, 16
  %v10821 = vrot.slane %v10819, 4
  %v10822 = vshll.u32 %v10686, 16
  %v10824 = vrot.slane %v10822, 5
  %v10825 = vor.u32 %v10821, %v10824
  %v10826 = vrot.slane %v10825, 4
  %v10828 = vshll.u32 %v10687, 16
  %v10830 = vrot.slane %v10828, 5
  %v10831 = vsel %vm394, %v10826, %v10830
  %v10832 = vshrl.u32 %v10687, 16
  %v10834 = vrot.slane %v10832, 4
  %v10835 = vor.u32 %v10834, %v10830
  %v10836 = vrot.slane %v10835, 4
  %v10838 = vshll.u32 %v10688, 16
  %v10840 = vrot.slane %v10838, 5
  %v10841 = vsel %vm394, %v10836, %v10840
  %v10843 = vshrl.u32 %v10689, 16
  %v10845 = vrot.slane %v10843, 4
  %v10846 = vshll.u32 %v10689, 16
  %v10848 = vrot.slane %v10846, 5
  %v10849 = vor.u32 %v10845, %v10848
  %v10850 = vrot.slane %v10849, 4
  %v10852 = vshll.u32 %v10690, 16
  %v10854 = vrot.slane %v10852, 5
  %v10855 = vsel %vm394, %v10850, %v10854
  %v10856 = vshrl.u32 %v10690, 16
  %v10858 = vrot.slane %v10856, 4
  %v10859 = vor.u32 %v10858, %v10854
  %v10860 = vrot.slane %v10859, 4
  %v10862 = vshll.u32 %v10691, 16
  %v10864 = vrot.slane %v10862, 5
  %v10865 = vsel %vm394, %v10860, %v10864
  %v10867 = vshrl.u32 %v10692, 16
  %v10869 = vrot.slane %v10867, 4
  %v10870 = vshll.u32 %v10692, 16
  %v10872 = vrot.slane %v10870, 5
  %v10873 = vor.u32 %v10869, %v10872
  %v10874 = vrot.slane %v10873, 4
  %v10876 = vshll.u32 %v10693, 16
  %v10878 = vrot.slane %v10876, 5
  %v10879 = vsel %vm394, %v10874, %v10878
  %v10880 = vshrl.u32 %v10693, 16
  %v10882 = vrot.slane %v10880, 4
  %v10883 = vor.u32 %v10882, %v10878
  %v10884 = vrot.slane %v10883, 4
  %v10886 = vshll.u32 %v10694, 16
  %v10888 = vrot.slane %v10886, 5
  %v10889 = vsel %vm394, %v10884, %v10888
  %v10891 = vshrl.u32 %v10695, 16
  %v10893 = vrot.slane %v10891, 4
  %v10894 = vshll.u32 %v10695, 16
  %v10896 = vrot.slane %v10894, 5
  %v10897 = vor.u32 %v10893, %v10896
  %v10898 = vrot.slane %v10897, 4
  %v10900 = vshll.u32 %v10696, 16
  %v10902 = vrot.slane %v10900, 5
  %v10903 = vsel %vm394, %v10898, %v10902
  %v10904 = vshrl.u32 %v10696, 16
  %v10906 = vrot.slane %v10904, 4
  %v10907 = vor.u32 %v10906, %v10902
  %v10908 = vrot.slane %v10907, 4
  %v10910 = vshll.u32 %v10697, 16
  %v10912 = vrot.slane %v10910, 5
  %v10913 = vsel %vm394, %v10908, %v10912
  %v10915 = vshrl.u32 %v10698, 16
  %v10917 = vrot.slane %v10915, 4
  %v10918 = vshll.u32 %v10698, 16
  %v10920 = vrot.slane %v10918, 5
  %v10921 = vor.u32 %v10917, %v10920
  %v10922 = vrot.slane %v10921, 4
  %v10924 = vshll.u32 %v10699, 16
  %v10926 = vrot.slane %v10924, 5
  %v10927 = vsel %vm394, %v10922, %v10926
  %v10928 = vshrl.u32 %v10699, 16
  %v10930 = vrot.slane %v10928, 4
  %v10931 = vor.u32 %v10930, %v10926
  %v10932 = vrot.slane %v10931, 4
  %v10934 = vshll.u32 %v10700, 16
  %v10936 = vrot.slane %v10934, 5
  %v10937 = vsel %vm394, %v10932, %v10936
  %v10939 = vshrl.u32 %v10701, 16
  %v10941 = vrot.slane %v10939, 4
  %v10942 = vshll.u32 %v10701, 16
  %v10944 = vrot.slane %v10942, 5
  %v10945 = vor.u32 %v10941, %v10944
  %v10946 = vrot.slane %v10945, 4
  %v10948 = vshll.u32 %v10702, 16
  %v10950 = vrot.slane %v10948, 5
  %v10951 = vsel %vm394, %v10946, %v10950
  %v10952 = vshrl.u32 %v10702, 16
  %v10954 = vrot.slane %v10952, 4
  %v10955 = vor.u32 %v10954, %v10950
  %v10956 = vrot.slane %v10955, 4
  %v10958 = vshll.u32 %v10703, 16
  %v10960 = vrot.slane %v10958, 5
  %v10961 = vsel %vm394, %v10956, %v10960
  %v10963 = vshrl.u32 %v10704, 16
  %v10965 = vrot.slane %v10963, 4
  %v10966 = vshll.u32 %v10704, 16
  %v10968 = vrot.slane %v10966, 5
  %v10969 = vor.u32 %v10965, %v10968
  %v10970 = vrot.slane %v10969, 4
  %v10972 = vshll.u32 %v10705, 16
  %v10974 = vrot.slane %v10972, 5
  %v10975 = vsel %vm394, %v10970, %v10974
  %v10976 = vshrl.u32 %v10705, 16
  %v10978 = vrot.slane %v10976, 4
  %v10979 = vor.u32 %v10978, %v10974
  %v10980 = vrot.slane %v10979, 4
  %v10982 = vshll.u32 %v10706, 16
  %v10984 = vrot.slane %v10982, 5
  %v10985 = vsel %vm394, %v10980, %v10984
  %v10987 = vshrl.u32 %v10707, 16
  %v10989 = vrot.slane %v10987, 4
  %v10990 = vshll.u32 %v10707, 16
  %v10992 = vrot.slane %v10990, 5
  %v10993 = vor.u32 %v10989, %v10992
  %v10994 = vrot.slane %v10993, 4
  %v10996 = vshll.u32 %v10708, 16
  %v10998 = vrot.slane %v10996, 5
  %v10999 = vsel %vm394, %v10994, %v10998
  %v11000 = vshrl.u32 %v10708, 16
  %v11002 = vrot.slane %v11000, 4
  %v11003 = vor.u32 %v11002, %v10998
  %v11004 = vrot.slane %v11003, 4
  %v11006 = vshll.u32 %v10709, 16
  %v11008 = vrot.slane %v11006, 5
  %v11009 = vsel %vm394, %v11004, %v11008
  %v11011 = vshrl.u32 %v10710, 16
  %v11013 = vrot.slane %v11011, 4
  %v11014 = vshll.u32 %v10710, 16
  %v11016 = vrot.slane %v11014, 5
  %v11017 = vor.u32 %v11013, %v11016
  %v11018 = vrot.slane %v11017, 4
  %v11020 = vshll.u32 %v10711, 16
  %v11022 = vrot.slane %v11020, 5
  %v11023 = vsel %vm394, %v11018, %v11022
  %v11024 = vshrl.u32 %v10711, 16
  %v11026 = vrot.slane %v11024, 4
  %v11027 = vor.u32 %v11026, %v11022
  %v11028 = vrot.slane %v11027, 4
  %v11030 = vshll.u32 %v10712, 16
  %v11032 = vrot.slane %v11030, 5
  %v11033 = vsel %vm394, %v11028, %v11032
  %v11035 = vshrl.u32 %v10713, 16
  %v11037 = vrot.slane %v11035, 4
  %v11038 = vshll.u32 %v10713, 16
  %v11040 = vrot.slane %v11038, 5
  %v11041 = vor.u32 %v11037, %v11040
  %v11042 = vrot.slane %v11041, 4
  %v11044 = vshll.u32 %v10714, 16
  %v11046 = vrot.slane %v11044, 5
  %v11047 = vsel %vm394, %v11042, %v11046
  %v11048 = vshrl.u32 %v10714, 16
  %v11050 = vrot.slane %v11048, 4
  %v11051 = vor.u32 %v11050, %v11046
  %v11052 = vrot.slane %v11051, 4
  %v11054 = vshll.u32 %v10715, 16
  %v11056 = vrot.slane %v11054, 5
  %v11057 = vsel %vm394, %v11052, %v11056
  %v11059 = vshrl.u32 %v10716, 16
  %v11061 = vrot.slane %v11059, 4
  %v11062 = vshll.u32 %v10716, 16
  %v11064 = vrot.slane %v11062, 5
  %v11065 = vor.u32 %v11061, %v11064
  %v11066 = vrot.slane %v11065, 4
  %v11068 = vshll.u32 %v10717, 16
  %v11070 = vrot.slane %v11068, 5
  %v11071 = vsel %vm394, %v11066, %v11070
  %v11072 = vshrl.u32 %v10717, 16
  %v11074 = vrot.slane %v11072, 4
  %v11075 = vor.u32 %v11074, %v11070
  %v11076 = vrot.slane %v11075, 4
  %v11078 = vshll.u32 %v10718, 16
  %v11080 = vrot.slane %v11078, 5
  %v11081 = vsel %vm394, %v11076, %v11080
  %v11083 = vshrl.u32 %v10719, 16
  %v11085 = vrot.slane %v11083, 4
  %v11086 = vshll.u32 %v10719, 16
  %v11088 = vrot.slane %v11086, 5
  %v11089 = vor.u32 %v11085, %v11088
  %v11090 = vrot.slane %v11089, 4
  %v11092 = vshll.u32 %v10720, 16
  %v11094 = vrot.slane %v11092, 5
  %v11095 = vsel %vm394, %v11090, %v11094
  %v11096 = vshrl.u32 %v10720, 16
  %v11098 = vrot.slane %v11096, 4
  %v11099 = vor.u32 %v11098, %v11094
  %v11100 = vrot.slane %v11099, 4
  %v11102 = vshll.u32 %v10721, 16
  %v11104 = vrot.slane %v11102, 5
  %v11105 = vsel %vm394, %v11100, %v11104
  %11106 = vrot.lane.b32.xlu0 %v10735, 96
  %v11107 = vpop.permute.xlu0 %11106
  %11108 = vrot.lane.b32.xlu0 %v10745, 96
  %v11109 = vpop.permute.xlu0 %11108
  %11110 = vrot.lane.b32.xlu0 %v10759, 96
  %v11111 = vpop.permute.xlu0 %11110
  %11112 = vrot.lane.b32.xlu0 %v10769, 96
  %v11113 = vpop.permute.xlu0 %11112
  %11114 = vrot.lane.b32.xlu0 %v10783, 96
  %v11115 = vpop.permute.xlu0 %11114
  %11116 = vrot.lane.b32.xlu0 %v10793, 96
  %v11117 = vpop.permute.xlu0 %11116
  %11118 = vrot.lane.b32.xlu0 %v10807, 96
  %v11119 = vpop.permute.xlu0 %11118
  %11120 = vrot.lane.b32.xlu0 %v10817, 96
  %v11121 = vpop.permute.xlu0 %11120
  %11122 = vrot.lane.b32.xlu0 %v10831, 96
  %v11123 = vpop.permute.xlu0 %11122
  %11124 = vrot.lane.b32.xlu0 %v10841, 96
  %v11125 = vpop.permute.xlu0 %11124
  %11126 = vrot.lane.b32.xlu0 %v10855, 96
  %v11127 = vpop.permute.xlu0 %11126
  %11128 = vrot.lane.b32.xlu0 %v10865, 96
  %v11129 = vpop.permute.xlu0 %11128
  %11130 = vrot.lane.b32.xlu0 %v10879, 96
  %v11131 = vpop.permute.xlu0 %11130
  %11132 = vrot.lane.b32.xlu0 %v10889, 96
  %v11133 = vpop.permute.xlu0 %11132
  %11134 = vrot.lane.b32.xlu0 %v10903, 96
  %v11135 = vpop.permute.xlu0 %11134
  %11136 = vrot.lane.b32.xlu0 %v10913, 96
  %v11137 = vpop.permute.xlu0 %11136
  %11138 = vrot.lane.b32.xlu0 %v10927, 96
  %v11139 = vpop.permute.xlu0 %11138
  %11140 = vrot.lane.b32.xlu0 %v10937, 96
  %v11141 = vpop.permute.xlu0 %11140
  %11142 = vrot.lane.b32.xlu0 %v10951, 96
  %v11143 = vpop.permute.xlu0 %11142
  %11144 = vrot.lane.b32.xlu0 %v10961, 96
  %v11145 = vpop.permute.xlu0 %11144
  %11146 = vrot.lane.b32.xlu0 %v10975, 96
  %v11147 = vpop.permute.xlu0 %11146
  %11148 = vrot.lane.b32.xlu0 %v10985, 96
  %v11149 = vpop.permute.xlu0 %11148
  %11150 = vrot.lane.b32.xlu0 %v10999, 96
  %v11151 = vpop.permute.xlu0 %11150
  %11152 = vrot.lane.b32.xlu0 %v11009, 96
  %v11153 = vpop.permute.xlu0 %11152
  %11154 = vrot.lane.b32.xlu0 %v11023, 96
  %v11155 = vpop.permute.xlu0 %11154
  %11156 = vrot.lane.b32.xlu0 %v11033, 96
  %v11157 = vpop.permute.xlu0 %11156
  %11158 = vrot.lane.b32.xlu0 %v11047, 96
  %v11159 = vpop.permute.xlu0 %11158
  %11160 = vrot.lane.b32.xlu0 %v11057, 96
  %v11161 = vpop.permute.xlu0 %11160
  %11162 = vrot.lane.b32.xlu0 %v11071, 96
  %v11163 = vpop.permute.xlu0 %11162
  %11164 = vrot.lane.b32.xlu0 %v11081, 96
  %v11165 = vpop.permute.xlu0 %11164
  %11166 = vrot.lane.b32.xlu0 %v11095, 96
  %v11167 = vpop.permute.xlu0 %11166
  %11168 = vrot.lane.b32.xlu0 %v11105, 96
  %v11169 = vpop.permute.xlu0 %11168
  %11202 = vst.msk [vmem:[#allocation2 + $0x204] sm:$0xf] %vm2307, %v11107
  %11203 = vst.msk [vmem:[#allocation2 + $0x214] sm:$0xf] %vm2307, %v11109
  %11204 = vst.msk [vmem:[#allocation2 + $0x224] sm:$0xf] %vm2307, %v11111
  %11205 = vst.msk [vmem:[#allocation2 + $0x234] sm:$0xf] %vm2307, %v11113
  %11206 = vst.msk [vmem:[#allocation2 + $0x244] sm:$0xf] %vm2307, %v11115
  %11207 = vst.msk [vmem:[#allocation2 + $0x254] sm:$0xf] %vm2307, %v11117
  %11208 = vst.msk [vmem:[#allocation2 + $0x264] sm:$0xf] %vm2307, %v11119
  %11209 = vst.msk [vmem:[#allocation2 + $0x274] sm:$0xf] %vm2307, %v11121
  %11210 = vst.msk [vmem:[#allocation2 + $0x284] sm:$0xf] %vm2307, %v11123
  %11211 = vst.msk [vmem:[#allocation2 + $0x294] sm:$0xf] %vm2307, %v11125
  %11212 = vst.msk [vmem:[#allocation2 + $0x2a4] sm:$0xf] %vm2307, %v11127
  %11213 = vst.msk [vmem:[#allocation2 + $0x2b4] sm:$0xf] %vm2307, %v11129
  %11214 = vst.msk [vmem:[#allocation2 + $0x2c4] sm:$0xf] %vm2307, %v11131
  %11215 = vst.msk [vmem:[#allocation2 + $0x2d4] sm:$0xf] %vm2307, %v11133
  %11216 = vst.msk [vmem:[#allocation2 + $0x2e4] sm:$0xf] %vm2307, %v11135
  %11217 = vst.msk [vmem:[#allocation2 + $0x2f4] sm:$0xf] %vm2307, %v11137
  %11218 = vst.msk [vmem:[#allocation2 + $0x304] sm:$0xf] %vm2307, %v11139
  %11219 = vst.msk [vmem:[#allocation2 + $0x314] sm:$0xf] %vm2307, %v11141
  %11220 = vst.msk [vmem:[#allocation2 + $0x324] sm:$0xf] %vm2307, %v11143
  %11221 = vst.msk [vmem:[#allocation2 + $0x334] sm:$0xf] %vm2307, %v11145
  %11222 = vst.msk [vmem:[#allocation2 + $0x344] sm:$0xf] %vm2307, %v11147
  %11223 = vst.msk [vmem:[#allocation2 + $0x354] sm:$0xf] %vm2307, %v11149
  %11224 = vst.msk [vmem:[#allocation2 + $0x364] sm:$0xf] %vm2307, %v11151
  %11225 = vst.msk [vmem:[#allocation2 + $0x374] sm:$0xf] %vm2307, %v11153
  %11226 = vst.msk [vmem:[#allocation2 + $0x384] sm:$0xf] %vm2307, %v11155
  %11227 = vst.msk [vmem:[#allocation2 + $0x394] sm:$0xf] %vm2307, %v11157
  %11228 = vst.msk [vmem:[#allocation2 + $0x3a4] sm:$0xf] %vm2307, %v11159
  %11229 = vst.msk [vmem:[#allocation2 + $0x3b4] sm:$0xf] %vm2307, %v11161
  %11230 = vst.msk [vmem:[#allocation2 + $0x3c4] sm:$0xf] %vm2307, %v11163
  %11231 = vst.msk [vmem:[#allocation2 + $0x3d4] sm:$0xf] %vm2307, %v11165
  %11232 = vst.msk [vmem:[#allocation2 + $0x3e4] sm:$0xf] %vm2307, %v11167
  %11233 = vst.msk [vmem:[#allocation2 + $0x3f4] sm:$0xf] %vm2307, %v11169
  %v11234 = vld [vmem:[%s10609] sm:$0xf]
  %v11235 = vld [vmem:[%s10609 + $0x4] sm:$0xf]
  %v11236 = vld [vmem:[%s10609 + $0x8] sm:$0x1]
  %v11237 = vld [vmem:[%s10609 + $0xc] sm:$0xf]
  %v11238 = vld [vmem:[%s10609 + $0x10] sm:$0xf]
  %v11239 = vld [vmem:[%s10609 + $0x14] sm:$0x1]
  %v11240 = vld [vmem:[%s10609 + $0x18] sm:$0xf]
  %v11241 = vld [vmem:[%s10609 + $0x1c] sm:$0xf]
  %v11242 = vld [vmem:[%s10609 + $0x20] sm:$0x1]
  %v11243 = vld [vmem:[%s10609 + $0x24] sm:$0xf]
  %v11244 = vld [vmem:[%s10609 + $0x28] sm:$0xf]
  %v11245 = vld [vmem:[%s10609 + $0x2c] sm:$0x1]
  %v11246 = vld [vmem:[%s10609 + $0x30] sm:$0xf]
  %v11247 = vld [vmem:[%s10609 + $0x34] sm:$0xf]
  %v11248 = vld [vmem:[%s10609 + $0x38] sm:$0x1]
  %v11249 = vld [vmem:[%s10609 + $0x3c] sm:$0xf]
  %v11250 = vld [vmem:[%s10609 + $0x40] sm:$0xf]
  %v11251 = vld [vmem:[%s10609 + $0x44] sm:$0x1]
  %v11252 = vld [vmem:[%s10609 + $0x48] sm:$0xf]
  %v11253 = vld [vmem:[%s10609 + $0x4c] sm:$0xf]
  %v11254 = vld [vmem:[%s10609 + $0x50] sm:$0x1]
  %v11255 = vld [vmem:[%s10609 + $0x54] sm:$0xf]
  %v11256 = vld [vmem:[%s10609 + $0x58] sm:$0xf]
  %v11257 = vld [vmem:[%s10609 + $0x5c] sm:$0x1]
  %v11258 = vld [vmem:[%s10609 + $0x60] sm:$0xf]
  %v11259 = vld [vmem:[%s10609 + $0x64] sm:$0xf]
  %v11260 = vld [vmem:[%s10609 + $0x68] sm:$0x1]
  %v11261 = vld [vmem:[%s10609 + $0x6c] sm:$0xf]
  %v11262 = vld [vmem:[%s10609 + $0x70] sm:$0xf]
  %v11263 = vld [vmem:[%s10609 + $0x74] sm:$0x1]
  %v11264 = vld [vmem:[%s10609 + $0x78] sm:$0xf]
  %v11265 = vld [vmem:[%s10609 + $0x7c] sm:$0xf]
  %v11266 = vld [vmem:[%s10609 + $0x80] sm:$0x1]
  %v11267 = vld [vmem:[%s10609 + $0x84] sm:$0xf]
  %v11268 = vld [vmem:[%s10609 + $0x88] sm:$0xf]
  %v11269 = vld [vmem:[%s10609 + $0x8c] sm:$0x1]
  %v11270 = vld [vmem:[%s10609 + $0x90] sm:$0xf]
  %v11271 = vld [vmem:[%s10609 + $0x94] sm:$0xf]
  %v11272 = vld [vmem:[%s10609 + $0x98] sm:$0x1]
  %v11273 = vld [vmem:[%s10609 + $0x9c] sm:$0xf]
  %v11274 = vld [vmem:[%s10609 + $0xa0] sm:$0xf]
  %v11275 = vld [vmem:[%s10609 + $0xa4] sm:$0x1]
  %v11276 = vld [vmem:[%s10609 + $0xa8] sm:$0xf]
  %v11277 = vld [vmem:[%s10609 + $0xac] sm:$0xf]
  %v11278 = vld [vmem:[%s10609 + $0xb0] sm:$0x1]
  %v11279 = vld [vmem:[%s10609 + $0xb4] sm:$0xf]
  %v11280 = vld [vmem:[%s10609 + $0xb8] sm:$0xf]
  %v11281 = vld [vmem:[%s10609 + $0xbc] sm:$0x1]
  %v11283 = vshrl.u32 %v11234, 16
  %v11285 = vrot.slane %v11283, 4
  %v11286 = vshll.u32 %v11234, 16
  %v11288 = vrot.slane %v11286, 5
  %v11289 = vor.u32 %v11285, %v11288
  %v11290 = vrot.slane %v11289, 4
  %v11292 = vshll.u32 %v11235, 16
  %v11294 = vrot.slane %v11292, 5
  %v11295 = vsel %vm394, %v11290, %v11294
  %v11296 = vshrl.u32 %v11235, 16
  %v11298 = vrot.slane %v11296, 4
  %v11299 = vor.u32 %v11298, %v11294
  %v11300 = vrot.slane %v11299, 4
  %v11302 = vshll.u32 %v11236, 16
  %v11304 = vrot.slane %v11302, 5
  %v11305 = vsel %vm394, %v11300, %v11304
  %v11307 = vshrl.u32 %v11237, 16
  %v11309 = vrot.slane %v11307, 4
  %v11310 = vshll.u32 %v11237, 16
  %v11312 = vrot.slane %v11310, 5
  %v11313 = vor.u32 %v11309, %v11312
  %v11314 = vrot.slane %v11313, 4
  %v11316 = vshll.u32 %v11238, 16
  %v11318 = vrot.slane %v11316, 5
  %v11319 = vsel %vm394, %v11314, %v11318
  %v11320 = vshrl.u32 %v11238, 16
  %v11322 = vrot.slane %v11320, 4
  %v11323 = vor.u32 %v11322, %v11318
  %v11324 = vrot.slane %v11323, 4
  %v11326 = vshll.u32 %v11239, 16
  %v11328 = vrot.slane %v11326, 5
  %v11329 = vsel %vm394, %v11324, %v11328
  %v11331 = vshrl.u32 %v11240, 16
  %v11333 = vrot.slane %v11331, 4
  %v11334 = vshll.u32 %v11240, 16
  %v11336 = vrot.slane %v11334, 5
  %v11337 = vor.u32 %v11333, %v11336
  %v11338 = vrot.slane %v11337, 4
  %v11340 = vshll.u32 %v11241, 16
  %v11342 = vrot.slane %v11340, 5
  %v11343 = vsel %vm394, %v11338, %v11342
  %v11344 = vshrl.u32 %v11241, 16
  %v11346 = vrot.slane %v11344, 4
  %v11347 = vor.u32 %v11346, %v11342
  %v11348 = vrot.slane %v11347, 4
  %v11350 = vshll.u32 %v11242, 16
  %v11352 = vrot.slane %v11350, 5
  %v11353 = vsel %vm394, %v11348, %v11352
  %v11355 = vshrl.u32 %v11243, 16
  %v11357 = vrot.slane %v11355, 4
  %v11358 = vshll.u32 %v11243, 16
  %v11360 = vrot.slane %v11358, 5
  %v11361 = vor.u32 %v11357, %v11360
  %v11362 = vrot.slane %v11361, 4
  %v11364 = vshll.u32 %v11244, 16
  %v11366 = vrot.slane %v11364, 5
  %v11367 = vsel %vm394, %v11362, %v11366
  %v11368 = vshrl.u32 %v11244, 16
  %v11370 = vrot.slane %v11368, 4
  %v11371 = vor.u32 %v11370, %v11366
  %v11372 = vrot.slane %v11371, 4
  %v11374 = vshll.u32 %v11245, 16
  %v11376 = vrot.slane %v11374, 5
  %v11377 = vsel %vm394, %v11372, %v11376
  %v11379 = vshrl.u32 %v11246, 16
  %v11381 = vrot.slane %v11379, 4
  %v11382 = vshll.u32 %v11246, 16
  %v11384 = vrot.slane %v11382, 5
  %v11385 = vor.u32 %v11381, %v11384
  %v11386 = vrot.slane %v11385, 4
  %v11388 = vshll.u32 %v11247, 16
  %v11390 = vrot.slane %v11388, 5
  %v11391 = vsel %vm394, %v11386, %v11390
  %v11392 = vshrl.u32 %v11247, 16
  %v11394 = vrot.slane %v11392, 4
  %v11395 = vor.u32 %v11394, %v11390
  %v11396 = vrot.slane %v11395, 4
  %v11398 = vshll.u32 %v11248, 16
  %v11400 = vrot.slane %v11398, 5
  %v11401 = vsel %vm394, %v11396, %v11400
  %v11403 = vshrl.u32 %v11249, 16
  %v11405 = vrot.slane %v11403, 4
  %v11406 = vshll.u32 %v11249, 16
  %v11408 = vrot.slane %v11406, 5
  %v11409 = vor.u32 %v11405, %v11408
  %v11410 = vrot.slane %v11409, 4
  %v11412 = vshll.u32 %v11250, 16
  %v11414 = vrot.slane %v11412, 5
  %v11415 = vsel %vm394, %v11410, %v11414
  %v11416 = vshrl.u32 %v11250, 16
  %v11418 = vrot.slane %v11416, 4
  %v11419 = vor.u32 %v11418, %v11414
  %v11420 = vrot.slane %v11419, 4
  %v11422 = vshll.u32 %v11251, 16
  %v11424 = vrot.slane %v11422, 5
  %v11425 = vsel %vm394, %v11420, %v11424
  %v11427 = vshrl.u32 %v11252, 16
  %v11429 = vrot.slane %v11427, 4
  %v11430 = vshll.u32 %v11252, 16
  %v11432 = vrot.slane %v11430, 5
  %v11433 = vor.u32 %v11429, %v11432
  %v11434 = vrot.slane %v11433, 4
  %v11436 = vshll.u32 %v11253, 16
  %v11438 = vrot.slane %v11436, 5
  %v11439 = vsel %vm394, %v11434, %v11438
  %v11440 = vshrl.u32 %v11253, 16
  %v11442 = vrot.slane %v11440, 4
  %v11443 = vor.u32 %v11442, %v11438
  %v11444 = vrot.slane %v11443, 4
  %v11446 = vshll.u32 %v11254, 16
  %v11448 = vrot.slane %v11446, 5
  %v11449 = vsel %vm394, %v11444, %v11448
  %v11451 = vshrl.u32 %v11255, 16
  %v11453 = vrot.slane %v11451, 4
  %v11454 = vshll.u32 %v11255, 16
  %v11456 = vrot.slane %v11454, 5
  %v11457 = vor.u32 %v11453, %v11456
  %v11458 = vrot.slane %v11457, 4
  %v11460 = vshll.u32 %v11256, 16
  %v11462 = vrot.slane %v11460, 5
  %v11463 = vsel %vm394, %v11458, %v11462
  %v11464 = vshrl.u32 %v11256, 16
  %v11466 = vrot.slane %v11464, 4
  %v11467 = vor.u32 %v11466, %v11462
  %v11468 = vrot.slane %v11467, 4
  %v11470 = vshll.u32 %v11257, 16
  %v11472 = vrot.slane %v11470, 5
  %v11473 = vsel %vm394, %v11468, %v11472
  %v11475 = vshrl.u32 %v11258, 16
  %v11477 = vrot.slane %v11475, 4
  %v11478 = vshll.u32 %v11258, 16
  %v11480 = vrot.slane %v11478, 5
  %v11481 = vor.u32 %v11477, %v11480
  %v11482 = vrot.slane %v11481, 4
  %v11484 = vshll.u32 %v11259, 16
  %v11486 = vrot.slane %v11484, 5
  %v11487 = vsel %vm394, %v11482, %v11486
  %v11488 = vshrl.u32 %v11259, 16
  %v11490 = vrot.slane %v11488, 4
  %v11491 = vor.u32 %v11490, %v11486
  %v11492 = vrot.slane %v11491, 4
  %v11494 = vshll.u32 %v11260, 16
  %v11496 = vrot.slane %v11494, 5
  %v11497 = vsel %vm394, %v11492, %v11496
  %v11499 = vshrl.u32 %v11261, 16
  %v11501 = vrot.slane %v11499, 4
  %v11502 = vshll.u32 %v11261, 16
  %v11504 = vrot.slane %v11502, 5
  %v11505 = vor.u32 %v11501, %v11504
  %v11506 = vrot.slane %v11505, 4
  %v11508 = vshll.u32 %v11262, 16
  %v11510 = vrot.slane %v11508, 5
  %v11511 = vsel %vm394, %v11506, %v11510
  %v11512 = vshrl.u32 %v11262, 16
  %v11514 = vrot.slane %v11512, 4
  %v11515 = vor.u32 %v11514, %v11510
  %v11516 = vrot.slane %v11515, 4
  %v11518 = vshll.u32 %v11263, 16
  %v11520 = vrot.slane %v11518, 5
  %v11521 = vsel %vm394, %v11516, %v11520
  %v11523 = vshrl.u32 %v11264, 16
  %v11525 = vrot.slane %v11523, 4
  %v11526 = vshll.u32 %v11264, 16
  %v11528 = vrot.slane %v11526, 5
  %v11529 = vor.u32 %v11525, %v11528
  %v11530 = vrot.slane %v11529, 4
  %v11532 = vshll.u32 %v11265, 16
  %v11534 = vrot.slane %v11532, 5
  %v11535 = vsel %vm394, %v11530, %v11534
  %v11536 = vshrl.u32 %v11265, 16
  %v11538 = vrot.slane %v11536, 4
  %v11539 = vor.u32 %v11538, %v11534
  %v11540 = vrot.slane %v11539, 4
  %v11542 = vshll.u32 %v11266, 16
  %v11544 = vrot.slane %v11542, 5
  %v11545 = vsel %vm394, %v11540, %v11544
  %v11547 = vshrl.u32 %v11267, 16
  %v11549 = vrot.slane %v11547, 4
  %v11550 = vshll.u32 %v11267, 16
  %v11552 = vrot.slane %v11550, 5
  %v11553 = vor.u32 %v11549, %v11552
  %v11554 = vrot.slane %v11553, 4
  %v11556 = vshll.u32 %v11268, 16
  %v11558 = vrot.slane %v11556, 5
  %v11559 = vsel %vm394, %v11554, %v11558
  %v11560 = vshrl.u32 %v11268, 16
  %v11562 = vrot.slane %v11560, 4
  %v11563 = vor.u32 %v11562, %v11558
  %v11564 = vrot.slane %v11563, 4
  %v11566 = vshll.u32 %v11269, 16
  %v11568 = vrot.slane %v11566, 5
  %v11569 = vsel %vm394, %v11564, %v11568
  %v11571 = vshrl.u32 %v11270, 16
  %v11573 = vrot.slane %v11571, 4
  %v11574 = vshll.u32 %v11270, 16
  %v11576 = vrot.slane %v11574, 5
  %v11577 = vor.u32 %v11573, %v11576
  %v11578 = vrot.slane %v11577, 4
  %v11580 = vshll.u32 %v11271, 16
  %v11582 = vrot.slane %v11580, 5
  %v11583 = vsel %vm394, %v11578, %v11582
  %v11584 = vshrl.u32 %v11271, 16
  %v11586 = vrot.slane %v11584, 4
  %v11587 = vor.u32 %v11586, %v11582
  %v11588 = vrot.slane %v11587, 4
  %v11590 = vshll.u32 %v11272, 16
  %v11592 = vrot.slane %v11590, 5
  %v11593 = vsel %vm394, %v11588, %v11592
  %v11595 = vshrl.u32 %v11273, 16
  %v11597 = vrot.slane %v11595, 4
  %v11598 = vshll.u32 %v11273, 16
  %v11600 = vrot.slane %v11598, 5
  %v11601 = vor.u32 %v11597, %v11600
  %v11602 = vrot.slane %v11601, 4
  %v11604 = vshll.u32 %v11274, 16
  %v11606 = vrot.slane %v11604, 5
  %v11607 = vsel %vm394, %v11602, %v11606
  %v11608 = vshrl.u32 %v11274, 16
  %v11610 = vrot.slane %v11608, 4
  %v11611 = vor.u32 %v11610, %v11606
  %v11612 = vrot.slane %v11611, 4
  %v11614 = vshll.u32 %v11275, 16
  %v11616 = vrot.slane %v11614, 5
  %v11617 = vsel %vm394, %v11612, %v11616
  %v11619 = vshrl.u32 %v11276, 16
  %v11621 = vrot.slane %v11619, 4
  %v11622 = vshll.u32 %v11276, 16
  %v11624 = vrot.slane %v11622, 5
  %v11625 = vor.u32 %v11621, %v11624
  %v11626 = vrot.slane %v11625, 4
  %v11628 = vshll.u32 %v11277, 16
  %v11630 = vrot.slane %v11628, 5
  %v11631 = vsel %vm394, %v11626, %v11630
  %v11632 = vshrl.u32 %v11277, 16
  %v11634 = vrot.slane %v11632, 4
  %v11635 = vor.u32 %v11634, %v11630
  %v11636 = vrot.slane %v11635, 4
  %v11638 = vshll.u32 %v11278, 16
  %v11640 = vrot.slane %v11638, 5
  %v11641 = vsel %vm394, %v11636, %v11640
  %v11643 = vshrl.u32 %v11279, 16
  %v11645 = vrot.slane %v11643, 4
  %v11646 = vshll.u32 %v11279, 16
  %v11648 = vrot.slane %v11646, 5
  %v11649 = vor.u32 %v11645, %v11648
  %v11650 = vrot.slane %v11649, 4
  %v11652 = vshll.u32 %v11280, 16
  %v11654 = vrot.slane %v11652, 5
  %v11655 = vsel %vm394, %v11650, %v11654
  %v11656 = vshrl.u32 %v11280, 16
  %v11658 = vrot.slane %v11656, 4
  %v11659 = vor.u32 %v11658, %v11654
  %v11660 = vrot.slane %v11659, 4
  %v11662 = vshll.u32 %v11281, 16
  %v11664 = vrot.slane %v11662, 5
  %v11665 = vsel %vm394, %v11660, %v11664
  %11666 = vrot.lane.b32.xlu0 %v11295, 16
  %v11667 = vpop.permute.xlu0 %11666
  %11668 = vrot.lane.b32.xlu0 %v11305, 16
  %v11669 = vpop.permute.xlu0 %11668
  %11670 = vrot.lane.b32.xlu0 %v11319, 16
  %v11671 = vpop.permute.xlu0 %11670
  %11672 = vrot.lane.b32.xlu0 %v11329, 16
  %v11673 = vpop.permute.xlu0 %11672
  %11674 = vrot.lane.b32.xlu0 %v11343, 16
  %v11675 = vpop.permute.xlu0 %11674
  %11676 = vrot.lane.b32.xlu0 %v11353, 16
  %v11677 = vpop.permute.xlu0 %11676
  %11678 = vrot.lane.b32.xlu0 %v11367, 16
  %v11679 = vpop.permute.xlu0 %11678
  %11680 = vrot.lane.b32.xlu0 %v11377, 16
  %v11681 = vpop.permute.xlu0 %11680
  %11682 = vrot.lane.b32.xlu0 %v11391, 16
  %v11683 = vpop.permute.xlu0 %11682
  %11684 = vrot.lane.b32.xlu0 %v11401, 16
  %v11685 = vpop.permute.xlu0 %11684
  %11686 = vrot.lane.b32.xlu0 %v11415, 16
  %v11687 = vpop.permute.xlu0 %11686
  %11688 = vrot.lane.b32.xlu0 %v11425, 16
  %v11689 = vpop.permute.xlu0 %11688
  %11690 = vrot.lane.b32.xlu0 %v11439, 16
  %v11691 = vpop.permute.xlu0 %11690
  %11692 = vrot.lane.b32.xlu0 %v11449, 16
  %v11693 = vpop.permute.xlu0 %11692
  %11694 = vrot.lane.b32.xlu0 %v11463, 16
  %v11695 = vpop.permute.xlu0 %11694
  %11696 = vrot.lane.b32.xlu0 %v11473, 16
  %v11697 = vpop.permute.xlu0 %11696
  %11698 = vrot.lane.b32.xlu0 %v11487, 16
  %v11699 = vpop.permute.xlu0 %11698
  %11700 = vrot.lane.b32.xlu0 %v11497, 16
  %v11701 = vpop.permute.xlu0 %11700
  %11702 = vrot.lane.b32.xlu0 %v11511, 16
  %v11703 = vpop.permute.xlu0 %11702
  %11704 = vrot.lane.b32.xlu0 %v11521, 16
  %v11705 = vpop.permute.xlu0 %11704
  %11706 = vrot.lane.b32.xlu0 %v11535, 16
  %v11707 = vpop.permute.xlu0 %11706
  %11708 = vrot.lane.b32.xlu0 %v11545, 16
  %v11709 = vpop.permute.xlu0 %11708
  %11710 = vrot.lane.b32.xlu0 %v11559, 16
  %v11711 = vpop.permute.xlu0 %11710
  %11712 = vrot.lane.b32.xlu0 %v11569, 16
  %v11713 = vpop.permute.xlu0 %11712
  %11714 = vrot.lane.b32.xlu0 %v11583, 16
  %v11715 = vpop.permute.xlu0 %11714
  %11716 = vrot.lane.b32.xlu0 %v11593, 16
  %v11717 = vpop.permute.xlu0 %11716
  %11718 = vrot.lane.b32.xlu0 %v11607, 16
  %v11719 = vpop.permute.xlu0 %11718
  %11720 = vrot.lane.b32.xlu0 %v11617, 16
  %v11721 = vpop.permute.xlu0 %11720
  %11722 = vrot.lane.b32.xlu0 %v11631, 16
  %v11723 = vpop.permute.xlu0 %11722
  %11724 = vrot.lane.b32.xlu0 %v11641, 16
  %v11725 = vpop.permute.xlu0 %11724
  %11726 = vrot.lane.b32.xlu0 %v11655, 16
  %v11727 = vpop.permute.xlu0 %11726
  %11728 = vrot.lane.b32.xlu0 %v11665, 16
  %v11729 = vpop.permute.xlu0 %11728
  %11762 = vst.msk [vmem:[#allocation2 + $0x20c] sm:$0xf] %vm5611, %v11667
  %11763 = vst.msk [vmem:[#allocation2 + $0x21c] sm:$0xf] %vm5611, %v11669
  %11764 = vst.msk [vmem:[#allocation2 + $0x22c] sm:$0xf] %vm5611, %v11671
  %11765 = vst.msk [vmem:[#allocation2 + $0x23c] sm:$0xf] %vm5611, %v11673
  %11766 = vst.msk [vmem:[#allocation2 + $0x24c] sm:$0xf] %vm5611, %v11675
  %11767 = vst.msk [vmem:[#allocation2 + $0x25c] sm:$0xf] %vm5611, %v11677
  %11768 = vst.msk [vmem:[#allocation2 + $0x26c] sm:$0xf] %vm5611, %v11679
  %11769 = vst.msk [vmem:[#allocation2 + $0x27c] sm:$0xf] %vm5611, %v11681
  %11770 = vst.msk [vmem:[#allocation2 + $0x28c] sm:$0xf] %vm5611, %v11683
  %11771 = vst.msk [vmem:[#allocation2 + $0x29c] sm:$0xf] %vm5611, %v11685
  %11772 = vst.msk [vmem:[#allocation2 + $0x2ac] sm:$0xf] %vm5611, %v11687
  %11773 = vst.msk [vmem:[#allocation2 + $0x2bc] sm:$0xf] %vm5611, %v11689
  %11774 = vst.msk [vmem:[#allocation2 + $0x2cc] sm:$0xf] %vm5611, %v11691
  %11775 = vst.msk [vmem:[#allocation2 + $0x2dc] sm:$0xf] %vm5611, %v11693
  %11776 = vst.msk [vmem:[#allocation2 + $0x2ec] sm:$0xf] %vm5611, %v11695
  %11777 = vst.msk [vmem:[#allocation2 + $0x2fc] sm:$0xf] %vm5611, %v11697
  %11778 = vst.msk [vmem:[#allocation2 + $0x30c] sm:$0xf] %vm5611, %v11699
  %11779 = vst.msk [vmem:[#allocation2 + $0x31c] sm:$0xf] %vm5611, %v11701
  %11780 = vst.msk [vmem:[#allocation2 + $0x32c] sm:$0xf] %vm5611, %v11703
  %11781 = vst.msk [vmem:[#allocation2 + $0x33c] sm:$0xf] %vm5611, %v11705
  %11782 = vst.msk [vmem:[#allocation2 + $0x34c] sm:$0xf] %vm5611, %v11707
  %11783 = vst.msk [vmem:[#allocation2 + $0x35c] sm:$0xf] %vm5611, %v11709
  %11784 = vst.msk [vmem:[#allocation2 + $0x36c] sm:$0xf] %vm5611, %v11711
  %11785 = vst.msk [vmem:[#allocation2 + $0x37c] sm:$0xf] %vm5611, %v11713
  %11786 = vst.msk [vmem:[#allocation2 + $0x38c] sm:$0xf] %vm5611, %v11715
  %11787 = vst.msk [vmem:[#allocation2 + $0x39c] sm:$0xf] %vm5611, %v11717
  %11788 = vst.msk [vmem:[#allocation2 + $0x3ac] sm:$0xf] %vm5611, %v11719
  %11789 = vst.msk [vmem:[#allocation2 + $0x3bc] sm:$0xf] %vm5611, %v11721
  %11790 = vst.msk [vmem:[#allocation2 + $0x3cc] sm:$0xf] %vm5611, %v11723
  %11791 = vst.msk [vmem:[#allocation2 + $0x3dc] sm:$0xf] %vm5611, %v11725
  %11792 = vst.msk [vmem:[#allocation2 + $0x3ec] sm:$0xf] %vm5611, %v11727
  %11793 = vst.msk [vmem:[#allocation2 + $0x3fc] sm:$0xf] %vm5611, %v11729
  %v11794 = vld [vmem:[%s10416] sm:$0xe]
  %v11795 = vld [vmem:[%s10416 + $0x4] sm:$0xf]
  %v11796 = vld [vmem:[%s10416 + $0x8] sm:$0x1]
  %v11797 = vld [vmem:[%s10416 + $0xc] sm:$0xe]
  %v11798 = vld [vmem:[%s10416 + $0x10] sm:$0xf]
  %v11799 = vld [vmem:[%s10416 + $0x14] sm:$0x1]
  %v11800 = vld [vmem:[%s10416 + $0x18] sm:$0xe]
  %v11801 = vld [vmem:[%s10416 + $0x1c] sm:$0xf]
  %v11802 = vld [vmem:[%s10416 + $0x20] sm:$0x1]
  %v11803 = vld [vmem:[%s10416 + $0x24] sm:$0xe]
  %v11804 = vld [vmem:[%s10416 + $0x28] sm:$0xf]
  %v11805 = vld [vmem:[%s10416 + $0x2c] sm:$0x1]
  %v11806 = vld [vmem:[%s10416 + $0x30] sm:$0xe]
  %v11807 = vld [vmem:[%s10416 + $0x34] sm:$0xf]
  %v11808 = vld [vmem:[%s10416 + $0x38] sm:$0x1]
  %v11809 = vld [vmem:[%s10416 + $0x3c] sm:$0xe]
  %v11810 = vld [vmem:[%s10416 + $0x40] sm:$0xf]
  %v11811 = vld [vmem:[%s10416 + $0x44] sm:$0x1]
  %v11812 = vld [vmem:[%s10416 + $0x48] sm:$0xe]
  %v11813 = vld [vmem:[%s10416 + $0x4c] sm:$0xf]
  %v11814 = vld [vmem:[%s10416 + $0x50] sm:$0x1]
  %v11815 = vld [vmem:[%s10416 + $0x54] sm:$0xe]
  %v11816 = vld [vmem:[%s10416 + $0x58] sm:$0xf]
  %v11817 = vld [vmem:[%s10416 + $0x5c] sm:$0x1]
  %v11818 = vld [vmem:[%s10416 + $0x60] sm:$0xe]
  %v11819 = vld [vmem:[%s10416 + $0x64] sm:$0xf]
  %v11820 = vld [vmem:[%s10416 + $0x68] sm:$0x1]
  %v11821 = vld [vmem:[%s10416 + $0x6c] sm:$0xe]
  %v11822 = vld [vmem:[%s10416 + $0x70] sm:$0xf]
  %v11823 = vld [vmem:[%s10416 + $0x74] sm:$0x1]
  %v11824 = vld [vmem:[%s10416 + $0x78] sm:$0xe]
  %v11825 = vld [vmem:[%s10416 + $0x7c] sm:$0xf]
  %v11826 = vld [vmem:[%s10416 + $0x80] sm:$0x1]
  %v11827 = vld [vmem:[%s10416 + $0x84] sm:$0xe]
  %v11828 = vld [vmem:[%s10416 + $0x88] sm:$0xf]
  %v11829 = vld [vmem:[%s10416 + $0x8c] sm:$0x1]
  %v11830 = vld [vmem:[%s10416 + $0x90] sm:$0xe]
  %v11831 = vld [vmem:[%s10416 + $0x94] sm:$0xf]
  %v11832 = vld [vmem:[%s10416 + $0x98] sm:$0x1]
  %v11833 = vld [vmem:[%s10416 + $0x9c] sm:$0xe]
  %v11834 = vld [vmem:[%s10416 + $0xa0] sm:$0xf]
  %v11835 = vld [vmem:[%s10416 + $0xa4] sm:$0x1]
  %v11836 = vld [vmem:[%s10416 + $0xa8] sm:$0xe]
  %v11837 = vld [vmem:[%s10416 + $0xac] sm:$0xf]
  %v11838 = vld [vmem:[%s10416 + $0xb0] sm:$0x1]
  %v11839 = vld [vmem:[%s10416 + $0xb4] sm:$0xe]
  %v11840 = vld [vmem:[%s10416 + $0xb8] sm:$0xf]
  %v11841 = vld [vmem:[%s10416 + $0xbc] sm:$0x1]
  %v11890 = vrot.slane %v11794, 5
  %v11891 = vrot.slane %v11890, 4
  %v11892 = vrot.slane %v11795, 5
  %v11893 = vsel %vm1567, %v11891, %v11892
  %v11894 = vrot.slane %v11892, 4
  %v11895 = vrot.slane %v11796, 5
  %v11896 = vsel %vm1567, %v11894, %v11895
  %v11897 = vrot.slane %v11797, 5
  %v11898 = vrot.slane %v11897, 4
  %v11899 = vrot.slane %v11798, 5
  %v11900 = vsel %vm1567, %v11898, %v11899
  %v11901 = vrot.slane %v11899, 4
  %v11902 = vrot.slane %v11799, 5
  %v11903 = vsel %vm1567, %v11901, %v11902
  %v11904 = vrot.slane %v11800, 5
  %v11905 = vrot.slane %v11904, 4
  %v11906 = vrot.slane %v11801, 5
  %v11907 = vsel %vm1567, %v11905, %v11906
  %v11908 = vrot.slane %v11906, 4
  %v11909 = vrot.slane %v11802, 5
  %v11910 = vsel %vm1567, %v11908, %v11909
  %v11911 = vrot.slane %v11803, 5
  %v11912 = vrot.slane %v11911, 4
  %v11913 = vrot.slane %v11804, 5
  %v11914 = vsel %vm1567, %v11912, %v11913
  %v11915 = vrot.slane %v11913, 4
  %v11916 = vrot.slane %v11805, 5
  %v11917 = vsel %vm1567, %v11915, %v11916
  %v11918 = vrot.slane %v11806, 5
  %v11919 = vrot.slane %v11918, 4
  %v11920 = vrot.slane %v11807, 5
  %v11921 = vsel %vm1567, %v11919, %v11920
  %v11922 = vrot.slane %v11920, 4
  %v11923 = vrot.slane %v11808, 5
  %v11924 = vsel %vm1567, %v11922, %v11923
  %v11925 = vrot.slane %v11809, 5
  %v11926 = vrot.slane %v11925, 4
  %v11927 = vrot.slane %v11810, 5
  %v11928 = vsel %vm1567, %v11926, %v11927
  %v11929 = vrot.slane %v11927, 4
  %v11930 = vrot.slane %v11811, 5
  %v11931 = vsel %vm1567, %v11929, %v11930
  %v11932 = vrot.slane %v11812, 5
  %v11933 = vrot.slane %v11932, 4
  %v11934 = vrot.slane %v11813, 5
  %v11935 = vsel %vm1567, %v11933, %v11934
  %v11936 = vrot.slane %v11934, 4
  %v11937 = vrot.slane %v11814, 5
  %v11938 = vsel %vm1567, %v11936, %v11937
  %v11939 = vrot.slane %v11815, 5
  %v11940 = vrot.slane %v11939, 4
  %v11941 = vrot.slane %v11816, 5
  %v11942 = vsel %vm1567, %v11940, %v11941
  %v11943 = vrot.slane %v11941, 4
  %v11944 = vrot.slane %v11817, 5
  %v11945 = vsel %vm1567, %v11943, %v11944
  %v11946 = vrot.slane %v11818, 5
  %v11947 = vrot.slane %v11946, 4
  %v11948 = vrot.slane %v11819, 5
  %v11949 = vsel %vm1567, %v11947, %v11948
  %v11950 = vrot.slane %v11948, 4
  %v11951 = vrot.slane %v11820, 5
  %v11952 = vsel %vm1567, %v11950, %v11951
  %v11953 = vrot.slane %v11821, 5
  %v11954 = vrot.slane %v11953, 4
  %v11955 = vrot.slane %v11822, 5
  %v11956 = vsel %vm1567, %v11954, %v11955
  %v11957 = vrot.slane %v11955, 4
  %v11958 = vrot.slane %v11823, 5
  %v11959 = vsel %vm1567, %v11957, %v11958
  %v11960 = vrot.slane %v11824, 5
  %v11961 = vrot.slane %v11960, 4
  %v11962 = vrot.slane %v11825, 5
  %v11963 = vsel %vm1567, %v11961, %v11962
  %v11964 = vrot.slane %v11962, 4
  %v11965 = vrot.slane %v11826, 5
  %v11966 = vsel %vm1567, %v11964, %v11965
  %v11967 = vrot.slane %v11827, 5
  %v11968 = vrot.slane %v11967, 4
  %v11969 = vrot.slane %v11828, 5
  %v11970 = vsel %vm1567, %v11968, %v11969
  %v11971 = vrot.slane %v11969, 4
  %v11972 = vrot.slane %v11829, 5
  %v11973 = vsel %vm1567, %v11971, %v11972
  %v11974 = vrot.slane %v11830, 5
  %v11975 = vrot.slane %v11974, 4
  %v11976 = vrot.slane %v11831, 5
  %v11977 = vsel %vm1567, %v11975, %v11976
  %v11978 = vrot.slane %v11976, 4
  %v11979 = vrot.slane %v11832, 5
  %v11980 = vsel %vm1567, %v11978, %v11979
  %v11981 = vrot.slane %v11833, 5
  %v11982 = vrot.slane %v11981, 4
  %v11983 = vrot.slane %v11834, 5
  %v11984 = vsel %vm1567, %v11982, %v11983
  %v11985 = vrot.slane %v11983, 4
  %v11986 = vrot.slane %v11835, 5
  %v11987 = vsel %vm1567, %v11985, %v11986
  %v11988 = vrot.slane %v11836, 5
  %v11989 = vrot.slane %v11988, 4
  %v11990 = vrot.slane %v11837, 5
  %v11991 = vsel %vm1567, %v11989, %v11990
  %v11992 = vrot.slane %v11990, 4
  %v11993 = vrot.slane %v11838, 5
  %v11994 = vsel %vm1567, %v11992, %v11993
  %v11995 = vrot.slane %v11839, 5
  %v11996 = vrot.slane %v11995, 4
  %v11997 = vrot.slane %v11840, 5
  %v11998 = vsel %vm1567, %v11996, %v11997
  %v11999 = vrot.slane %v11997, 4
  %v12000 = vrot.slane %v11841, 5
  %v12001 = vsel %vm1567, %v11999, %v12000
  %12034 = vst.msk [vmem:[#allocation2 + $0x208] sm:$0xf] %vm118, %v11893
  %12035 = vst.msk [vmem:[#allocation2 + $0x218] sm:$0xf] %vm118, %v11896
  %12036 = vst.msk [vmem:[#allocation2 + $0x228] sm:$0xf] %vm118, %v11900
  %12037 = vst.msk [vmem:[#allocation2 + $0x238] sm:$0xf] %vm118, %v11903
  %12038 = vst.msk [vmem:[#allocation2 + $0x248] sm:$0xf] %vm118, %v11907
  %12039 = vst.msk [vmem:[#allocation2 + $0x258] sm:$0xf] %vm118, %v11910
  %12040 = vst.msk [vmem:[#allocation2 + $0x268] sm:$0xf] %vm118, %v11914
  %12041 = vst.msk [vmem:[#allocation2 + $0x278] sm:$0xf] %vm118, %v11917
  %12042 = vst.msk [vmem:[#allocation2 + $0x288] sm:$0xf] %vm118, %v11921
  %12043 = vst.msk [vmem:[#allocation2 + $0x298] sm:$0xf] %vm118, %v11924
  %12044 = vst.msk [vmem:[#allocation2 + $0x2a8] sm:$0xf] %vm118, %v11928
  %12045 = vst.msk [vmem:[#allocation2 + $0x2b8] sm:$0xf] %vm118, %v11931
  %12046 = vst.msk [vmem:[#allocation2 + $0x2c8] sm:$0xf] %vm118, %v11935
  %12047 = vst.msk [vmem:[#allocation2 + $0x2d8] sm:$0xf] %vm118, %v11938
  %12048 = vst.msk [vmem:[#allocation2 + $0x2e8] sm:$0xf] %vm118, %v11942
  %12049 = vst.msk [vmem:[#allocation2 + $0x2f8] sm:$0xf] %vm118, %v11945
  %12050 = vst.msk [vmem:[#allocation2 + $0x308] sm:$0xf] %vm118, %v11949
  %12051 = vst.msk [vmem:[#allocation2 + $0x318] sm:$0xf] %vm118, %v11952
  %12052 = vst.msk [vmem:[#allocation2 + $0x328] sm:$0xf] %vm118, %v11956
  %12053 = vst.msk [vmem:[#allocation2 + $0x338] sm:$0xf] %vm118, %v11959
  %12054 = vst.msk [vmem:[#allocation2 + $0x348] sm:$0xf] %vm118, %v11963
  %12055 = vst.msk [vmem:[#allocation2 + $0x358] sm:$0xf] %vm118, %v11966
  %12056 = vst.msk [vmem:[#allocation2 + $0x368] sm:$0xf] %vm118, %v11970
  %12057 = vst.msk [vmem:[#allocation2 + $0x378] sm:$0xf] %vm118, %v11973
  %12058 = vst.msk [vmem:[#allocation2 + $0x388] sm:$0xf] %vm118, %v11977
  %12059 = vst.msk [vmem:[#allocation2 + $0x398] sm:$0xf] %vm118, %v11980
  %12060 = vst.msk [vmem:[#allocation2 + $0x3a8] sm:$0xf] %vm118, %v11984
  %12061 = vst.msk [vmem:[#allocation2 + $0x3b8] sm:$0xf] %vm118, %v11987
  %12062 = vst.msk [vmem:[#allocation2 + $0x3c8] sm:$0xf] %vm118, %v11991
  %12063 = vst.msk [vmem:[#allocation2 + $0x3d8] sm:$0xf] %vm118, %v11994
  %12064 = vst.msk [vmem:[#allocation2 + $0x3e8] sm:$0xf] %vm118, %v11998
  %12065 = vst.msk [vmem:[#allocation2 + $0x3f8] sm:$0xf] %vm118, %v12001
  %v12066 = vld [vmem:[%s10609] sm:$0xe]
  %v12067 = vld [vmem:[%s10609 + $0x4] sm:$0xf]
  %v12068 = vld [vmem:[%s10609 + $0x8] sm:$0x1]
  %v12069 = vld [vmem:[%s10609 + $0xc] sm:$0xe]
  %v12070 = vld [vmem:[%s10609 + $0x10] sm:$0xf]
  %v12071 = vld [vmem:[%s10609 + $0x14] sm:$0x1]
  %v12072 = vld [vmem:[%s10609 + $0x18] sm:$0xe]
  %v12073 = vld [vmem:[%s10609 + $0x1c] sm:$0xf]
  %v12074 = vld [vmem:[%s10609 + $0x20] sm:$0x1]
  %v12075 = vld [vmem:[%s10609 + $0x24] sm:$0xe]
  %v12076 = vld [vmem:[%s10609 + $0x28] sm:$0xf]
  %v12077 = vld [vmem:[%s10609 + $0x2c] sm:$0x1]
  %v12078 = vld [vmem:[%s10609 + $0x30] sm:$0xe]
  %v12079 = vld [vmem:[%s10609 + $0x34] sm:$0xf]
  %v12080 = vld [vmem:[%s10609 + $0x38] sm:$0x1]
  %v12081 = vld [vmem:[%s10609 + $0x3c] sm:$0xe]
  %v12082 = vld [vmem:[%s10609 + $0x40] sm:$0xf]
  %v12083 = vld [vmem:[%s10609 + $0x44] sm:$0x1]
  %v12084 = vld [vmem:[%s10609 + $0x48] sm:$0xe]
  %v12085 = vld [vmem:[%s10609 + $0x4c] sm:$0xf]
  %v12086 = vld [vmem:[%s10609 + $0x50] sm:$0x1]
  %v12087 = vld [vmem:[%s10609 + $0x54] sm:$0xe]
  %v12088 = vld [vmem:[%s10609 + $0x58] sm:$0xf]
  %v12089 = vld [vmem:[%s10609 + $0x5c] sm:$0x1]
  %v12090 = vld [vmem:[%s10609 + $0x60] sm:$0xe]
  %v12091 = vld [vmem:[%s10609 + $0x64] sm:$0xf]
  %v12092 = vld [vmem:[%s10609 + $0x68] sm:$0x1]
  %v12093 = vld [vmem:[%s10609 + $0x6c] sm:$0xe]
  %v12094 = vld [vmem:[%s10609 + $0x70] sm:$0xf]
  %v12095 = vld [vmem:[%s10609 + $0x74] sm:$0x1]
  %v12096 = vld [vmem:[%s10609 + $0x78] sm:$0xe]
  %v12097 = vld [vmem:[%s10609 + $0x7c] sm:$0xf]
  %v12098 = vld [vmem:[%s10609 + $0x80] sm:$0x1]
  %v12099 = vld [vmem:[%s10609 + $0x84] sm:$0xe]
  %v12100 = vld [vmem:[%s10609 + $0x88] sm:$0xf]
  %v12101 = vld [vmem:[%s10609 + $0x8c] sm:$0x1]
  %v12102 = vld [vmem:[%s10609 + $0x90] sm:$0xe]
  %v12103 = vld [vmem:[%s10609 + $0x94] sm:$0xf]
  %v12104 = vld [vmem:[%s10609 + $0x98] sm:$0x1]
  %v12105 = vld [vmem:[%s10609 + $0x9c] sm:$0xe]
  %v12106 = vld [vmem:[%s10609 + $0xa0] sm:$0xf]
  %v12107 = vld [vmem:[%s10609 + $0xa4] sm:$0x1]
  %v12108 = vld [vmem:[%s10609 + $0xa8] sm:$0xe]
  %v12109 = vld [vmem:[%s10609 + $0xac] sm:$0xf]
  %v12110 = vld [vmem:[%s10609 + $0xb0] sm:$0x1]
  %v12111 = vld [vmem:[%s10609 + $0xb4] sm:$0xe]
  %v12112 = vld [vmem:[%s10609 + $0xb8] sm:$0xf]
  %v12113 = vld [vmem:[%s10609 + $0xbc] sm:$0x1]
  %v12162 = vrot.slane %v12066, 5
  %v12163 = vrot.slane %v12162, 4
  %v12164 = vrot.slane %v12067, 5
  %v12165 = vsel %vm1567, %v12163, %v12164
  %v12166 = vrot.slane %v12164, 4
  %v12167 = vrot.slane %v12068, 5
  %v12168 = vsel %vm1567, %v12166, %v12167
  %v12169 = vrot.slane %v12069, 5
  %v12170 = vrot.slane %v12169, 4
  %v12171 = vrot.slane %v12070, 5
  %v12172 = vsel %vm1567, %v12170, %v12171
  %v12173 = vrot.slane %v12171, 4
  %v12174 = vrot.slane %v12071, 5
  %v12175 = vsel %vm1567, %v12173, %v12174
  %v12176 = vrot.slane %v12072, 5
  %v12177 = vrot.slane %v12176, 4
  %v12178 = vrot.slane %v12073, 5
  %v12179 = vsel %vm1567, %v12177, %v12178
  %v12180 = vrot.slane %v12178, 4
  %v12181 = vrot.slane %v12074, 5
  %v12182 = vsel %vm1567, %v12180, %v12181
  %v12183 = vrot.slane %v12075, 5
  %v12184 = vrot.slane %v12183, 4
  %v12185 = vrot.slane %v12076, 5
  %v12186 = vsel %vm1567, %v12184, %v12185
  %v12187 = vrot.slane %v12185, 4
  %v12188 = vrot.slane %v12077, 5
  %v12189 = vsel %vm1567, %v12187, %v12188
  %v12190 = vrot.slane %v12078, 5
  %v12191 = vrot.slane %v12190, 4
  %v12192 = vrot.slane %v12079, 5
  %v12193 = vsel %vm1567, %v12191, %v12192
  %v12194 = vrot.slane %v12192, 4
  %v12195 = vrot.slane %v12080, 5
  %v12196 = vsel %vm1567, %v12194, %v12195
  %v12197 = vrot.slane %v12081, 5
  %v12198 = vrot.slane %v12197, 4
  %v12199 = vrot.slane %v12082, 5
  %v12200 = vsel %vm1567, %v12198, %v12199
  %v12201 = vrot.slane %v12199, 4
  %v12202 = vrot.slane %v12083, 5
  %v12203 = vsel %vm1567, %v12201, %v12202
  %v12204 = vrot.slane %v12084, 5
  %v12205 = vrot.slane %v12204, 4
  %v12206 = vrot.slane %v12085, 5
  %v12207 = vsel %vm1567, %v12205, %v12206
  %v12208 = vrot.slane %v12206, 4
  %v12209 = vrot.slane %v12086, 5
  %v12210 = vsel %vm1567, %v12208, %v12209
  %v12211 = vrot.slane %v12087, 5
  %v12212 = vrot.slane %v12211, 4
  %v12213 = vrot.slane %v12088, 5
  %v12214 = vsel %vm1567, %v12212, %v12213
  %v12215 = vrot.slane %v12213, 4
  %v12216 = vrot.slane %v12089, 5
  %v12217 = vsel %vm1567, %v12215, %v12216
  %v12218 = vrot.slane %v12090, 5
  %v12219 = vrot.slane %v12218, 4
  %v12220 = vrot.slane %v12091, 5
  %v12221 = vsel %vm1567, %v12219, %v12220
  %v12222 = vrot.slane %v12220, 4
  %v12223 = vrot.slane %v12092, 5
  %v12224 = vsel %vm1567, %v12222, %v12223
  %v12225 = vrot.slane %v12093, 5
  %v12226 = vrot.slane %v12225, 4
  %v12227 = vrot.slane %v12094, 5
  %v12228 = vsel %vm1567, %v12226, %v12227
  %v12229 = vrot.slane %v12227, 4
  %v12230 = vrot.slane %v12095, 5
  %v12231 = vsel %vm1567, %v12229, %v12230
  %v12232 = vrot.slane %v12096, 5
  %v12233 = vrot.slane %v12232, 4
  %v12234 = vrot.slane %v12097, 5
  %v12235 = vsel %vm1567, %v12233, %v12234
  %v12236 = vrot.slane %v12234, 4
  %v12237 = vrot.slane %v12098, 5
  %v12238 = vsel %vm1567, %v12236, %v12237
  %v12239 = vrot.slane %v12099, 5
  %v12240 = vrot.slane %v12239, 4
  %v12241 = vrot.slane %v12100, 5
  %v12242 = vsel %vm1567, %v12240, %v12241
  %v12243 = vrot.slane %v12241, 4
  %v12244 = vrot.slane %v12101, 5
  %v12245 = vsel %vm1567, %v12243, %v12244
  %v12246 = vrot.slane %v12102, 5
  %v12247 = vrot.slane %v12246, 4
  %v12248 = vrot.slane %v12103, 5
  %v12249 = vsel %vm1567, %v12247, %v12248
  %v12250 = vrot.slane %v12248, 4
  %v12251 = vrot.slane %v12104, 5
  %v12252 = vsel %vm1567, %v12250, %v12251
  %v12253 = vrot.slane %v12105, 5
  %v12254 = vrot.slane %v12253, 4
  %v12255 = vrot.slane %v12106, 5
  %v12256 = vsel %vm1567, %v12254, %v12255
  %v12257 = vrot.slane %v12255, 4
  %v12258 = vrot.slane %v12107, 5
  %v12259 = vsel %vm1567, %v12257, %v12258
  %v12260 = vrot.slane %v12108, 5
  %v12261 = vrot.slane %v12260, 4
  %v12262 = vrot.slane %v12109, 5
  %v12263 = vsel %vm1567, %v12261, %v12262
  %v12264 = vrot.slane %v12262, 4
  %v12265 = vrot.slane %v12110, 5
  %v12266 = vsel %vm1567, %v12264, %v12265
  %v12267 = vrot.slane %v12111, 5
  %v12268 = vrot.slane %v12267, 4
  %v12269 = vrot.slane %v12112, 5
  %v12270 = vsel %vm1567, %v12268, %v12269
  %v12271 = vrot.slane %v12269, 4
  %v12272 = vrot.slane %v12113, 5
  %v12273 = vsel %vm1567, %v12271, %v12272
  %12274 = vrot.lane.b32.xlu0 %v12165, 32
  %v12275 = vpop.permute.xlu0 %12274
  %12276 = vrot.lane.b32.xlu0 %v12168, 32
  %v12277 = vpop.permute.xlu0 %12276
  %12278 = vrot.lane.b32.xlu0 %v12172, 32
  %v12279 = vpop.permute.xlu0 %12278
  %12280 = vrot.lane.b32.xlu0 %v12175, 32
  %v12281 = vpop.permute.xlu0 %12280
  %12282 = vrot.lane.b32.xlu0 %v12179, 32
  %v12283 = vpop.permute.xlu0 %12282
  %12284 = vrot.lane.b32.xlu0 %v12182, 32
  %v12285 = vpop.permute.xlu0 %12284
  %12286 = vrot.lane.b32.xlu0 %v12186, 32
  %v12287 = vpop.permute.xlu0 %12286
  %12288 = vrot.lane.b32.xlu0 %v12189, 32
  %v12289 = vpop.permute.xlu0 %12288
  %12290 = vrot.lane.b32.xlu0 %v12193, 32
  %v12291 = vpop.permute.xlu0 %12290
  %12292 = vrot.lane.b32.xlu0 %v12196, 32
  %v12293 = vpop.permute.xlu0 %12292
  %12294 = vrot.lane.b32.xlu0 %v12200, 32
  %v12295 = vpop.permute.xlu0 %12294
  %12296 = vrot.lane.b32.xlu0 %v12203, 32
  %v12297 = vpop.permute.xlu0 %12296
  %12298 = vrot.lane.b32.xlu0 %v12207, 32
  %v12299 = vpop.permute.xlu0 %12298
  %12300 = vrot.lane.b32.xlu0 %v12210, 32
  %v12301 = vpop.permute.xlu0 %12300
  %12302 = vrot.lane.b32.xlu0 %v12214, 32
  %v12303 = vpop.permute.xlu0 %12302
  %12304 = vrot.lane.b32.xlu0 %v12217, 32
  %v12305 = vpop.permute.xlu0 %12304
  %12306 = vrot.lane.b32.xlu0 %v12221, 32
  %v12307 = vpop.permute.xlu0 %12306
  %12308 = vrot.lane.b32.xlu0 %v12224, 32
  %v12309 = vpop.permute.xlu0 %12308
  %12310 = vrot.lane.b32.xlu0 %v12228, 32
  %v12311 = vpop.permute.xlu0 %12310
  %12312 = vrot.lane.b32.xlu0 %v12231, 32
  %v12313 = vpop.permute.xlu0 %12312
  %12314 = vrot.lane.b32.xlu0 %v12235, 32
  %v12315 = vpop.permute.xlu0 %12314
  %12316 = vrot.lane.b32.xlu0 %v12238, 32
  %v12317 = vpop.permute.xlu0 %12316
  %12318 = vrot.lane.b32.xlu0 %v12242, 32
  %v12319 = vpop.permute.xlu0 %12318
  %12320 = vrot.lane.b32.xlu0 %v12245, 32
  %v12321 = vpop.permute.xlu0 %12320
  %12322 = vrot.lane.b32.xlu0 %v12249, 32
  %v12323 = vpop.permute.xlu0 %12322
  %12324 = vrot.lane.b32.xlu0 %v12252, 32
  %v12325 = vpop.permute.xlu0 %12324
  %12326 = vrot.lane.b32.xlu0 %v12256, 32
  %v12327 = vpop.permute.xlu0 %12326
  %12328 = vrot.lane.b32.xlu0 %v12259, 32
  %v12329 = vpop.permute.xlu0 %12328
  %12330 = vrot.lane.b32.xlu0 %v12263, 32
  %v12331 = vpop.permute.xlu0 %12330
  %12332 = vrot.lane.b32.xlu0 %v12266, 32
  %v12333 = vpop.permute.xlu0 %12332
  %12334 = vrot.lane.b32.xlu0 %v12270, 32
  %v12335 = vpop.permute.xlu0 %12334
  %12336 = vrot.lane.b32.xlu0 %v12273, 32
  %v12337 = vpop.permute.xlu0 %12336
  %12370 = vst.msk [vmem:[#allocation2 + $0x20c] sm:$0xf] %vm311, %v12275
  %12371 = vst.msk [vmem:[#allocation2 + $0x21c] sm:$0xf] %vm311, %v12277
  %12372 = vst.msk [vmem:[#allocation2 + $0x22c] sm:$0xf] %vm311, %v12279
  %12373 = vst.msk [vmem:[#allocation2 + $0x23c] sm:$0xf] %vm311, %v12281
  %12374 = vst.msk [vmem:[#allocation2 + $0x24c] sm:$0xf] %vm311, %v12283
  %12375 = vst.msk [vmem:[#allocation2 + $0x25c] sm:$0xf] %vm311, %v12285
  %12376 = vst.msk [vmem:[#allocation2 + $0x26c] sm:$0xf] %vm311, %v12287
  %12377 = vst.msk [vmem:[#allocation2 + $0x27c] sm:$0xf] %vm311, %v12289
  %12378 = vst.msk [vmem:[#allocation2 + $0x28c] sm:$0xf] %vm311, %v12291
  %12379 = vst.msk [vmem:[#allocation2 + $0x29c] sm:$0xf] %vm311, %v12293
  %12380 = vst.msk [vmem:[#allocation2 + $0x2ac] sm:$0xf] %vm311, %v12295
  %12381 = vst.msk [vmem:[#allocation2 + $0x2bc] sm:$0xf] %vm311, %v12297
  %12382 = vst.msk [vmem:[#allocation2 + $0x2cc] sm:$0xf] %vm311, %v12299
  %12383 = vst.msk [vmem:[#allocation2 + $0x2dc] sm:$0xf] %vm311, %v12301
  %12384 = vst.msk [vmem:[#allocation2 + $0x2ec] sm:$0xf] %vm311, %v12303
  %12385 = vst.msk [vmem:[#allocation2 + $0x2fc] sm:$0xf] %vm311, %v12305
  %12386 = vst.msk [vmem:[#allocation2 + $0x30c] sm:$0xf] %vm311, %v12307
  %12387 = vst.msk [vmem:[#allocation2 + $0x31c] sm:$0xf] %vm311, %v12309
  %12388 = vst.msk [vmem:[#allocation2 + $0x32c] sm:$0xf] %vm311, %v12311
  %12389 = vst.msk [vmem:[#allocation2 + $0x33c] sm:$0xf] %vm311, %v12313
  %12390 = vst.msk [vmem:[#allocation2 + $0x34c] sm:$0xf] %vm311, %v12315
  %12391 = vst.msk [vmem:[#allocation2 + $0x35c] sm:$0xf] %vm311, %v12317
  %12392 = vst.msk [vmem:[#allocation2 + $0x36c] sm:$0xf] %vm311, %v12319
  %12393 = vst.msk [vmem:[#allocation2 + $0x37c] sm:$0xf] %vm311, %v12321
  %12394 = vst.msk [vmem:[#allocation2 + $0x38c] sm:$0xf] %vm311, %v12323
  %12395 = vst.msk [vmem:[#allocation2 + $0x39c] sm:$0xf] %vm311, %v12325
  %12396 = vst.msk [vmem:[#allocation2 + $0x3ac] sm:$0xf] %vm311, %v12327
  %12397 = vst.msk [vmem:[#allocation2 + $0x3bc] sm:$0xf] %vm311, %v12329
  %12398 = vst.msk [vmem:[#allocation2 + $0x3cc] sm:$0xf] %vm311, %v12331
  %12399 = vst.msk [vmem:[#allocation2 + $0x3dc] sm:$0xf] %vm311, %v12333
  %12400 = vst.msk [vmem:[#allocation2 + $0x3ec] sm:$0xf] %vm311, %v12335
  %12401 = vst.msk [vmem:[#allocation2 + $0x3fc] sm:$0xf] %vm311, %v12337
  %v12402 = vld [vmem:[%s2] sm:$0xff]
  %v12403 = vld [vmem:[%s2 + $0x8] sm:$0xff]
  %v12404 = vld [vmem:[%s2 + $0x10] sm:$0xff]
  %v12405 = vld [vmem:[%s2 + $0x18] sm:$0xff]
  %v12406 = vld [vmem:[#allocation2] sm:$0xff]
  %v12407 = vld [vmem:[#allocation2 + $0x8] sm:$0xff]
  %v12408 = vld [vmem:[#allocation2 + $0x10] sm:$0xff]
  %v12409 = vld [vmem:[#allocation2 + $0x18] sm:$0xff]
  %v12410 = vld [vmem:[#allocation2 + $0x20] sm:$0xff]
  %v12411 = vld [vmem:[#allocation2 + $0x28] sm:$0xff]
  %v12412 = vld [vmem:[#allocation2 + $0x30] sm:$0xff]
  %v12413 = vld [vmem:[#allocation2 + $0x38] sm:$0xff]
  %v12414 = vld [vmem:[#allocation2 + $0x40] sm:$0xff]
  %v12415 = vld [vmem:[#allocation2 + $0x48] sm:$0xff]
  %v12416 = vld [vmem:[#allocation2 + $0x50] sm:$0xff]
  %v12417 = vld [vmem:[#allocation2 + $0x58] sm:$0xff]
  %v12418 = vld [vmem:[#allocation2 + $0x60] sm:$0xff]
  %v12419 = vld [vmem:[#allocation2 + $0x68] sm:$0xff]
  %v12420 = vld [vmem:[#allocation2 + $0x70] sm:$0xff]
  %v12421 = vld [vmem:[#allocation2 + $0x78] sm:$0xff]
  %v12422 = vld [vmem:[#allocation2 + $0x80] sm:$0xff]
  %v12423 = vld [vmem:[#allocation2 + $0x88] sm:$0xff]
  %v12424 = vld [vmem:[#allocation2 + $0x90] sm:$0xff]
  %v12425 = vld [vmem:[#allocation2 + $0x98] sm:$0xff]
  %v12426 = vld [vmem:[#allocation2 + $0xa0] sm:$0xff]
  %v12427 = vld [vmem:[#allocation2 + $0xa8] sm:$0xff]
  %v12428 = vld [vmem:[#allocation2 + $0xb0] sm:$0xff]
  %v12429 = vld [vmem:[#allocation2 + $0xb8] sm:$0xff]
  %v12430 = vld [vmem:[#allocation2 + $0xc0] sm:$0xff]
  %v12431 = vld [vmem:[#allocation2 + $0xc8] sm:$0xff]
  %v12432 = vld [vmem:[#allocation2 + $0xd0] sm:$0xff]
  %v12433 = vld [vmem:[#allocation2 + $0xd8] sm:$0xff]
  %v12434 = vld [vmem:[#allocation2 + $0xe0] sm:$0xff]
  %v12435 = vld [vmem:[#allocation2 + $0xe8] sm:$0xff]
  %v12436 = vld [vmem:[#allocation2 + $0xf0] sm:$0xff]
  %v12437 = vld [vmem:[#allocation2 + $0xf8] sm:$0xff]
  %v12438 = vld [vmem:[#allocation2 + $0x100] sm:$0xff]
  %v12439 = vld [vmem:[#allocation2 + $0x108] sm:$0xff]
  %v12440 = vld [vmem:[#allocation2 + $0x110] sm:$0xff]
  %v12441 = vld [vmem:[#allocation2 + $0x118] sm:$0xff]
  %v12442 = vld [vmem:[#allocation2 + $0x120] sm:$0xff]
  %v12443 = vld [vmem:[#allocation2 + $0x128] sm:$0xff]
  %v12444 = vld [vmem:[#allocation2 + $0x130] sm:$0xff]
  %v12445 = vld [vmem:[#allocation2 + $0x138] sm:$0xff]
  %v12446 = vld [vmem:[#allocation2 + $0x140] sm:$0xff]
  %v12447 = vld [vmem:[#allocation2 + $0x148] sm:$0xff]
  %v12448 = vld [vmem:[#allocation2 + $0x150] sm:$0xff]
  %v12449 = vld [vmem:[#allocation2 + $0x158] sm:$0xff]
  %v12450 = vld [vmem:[#allocation2 + $0x160] sm:$0xff]
  %v12451 = vld [vmem:[#allocation2 + $0x168] sm:$0xff]
  %v12452 = vld [vmem:[#allocation2 + $0x170] sm:$0xff]
  %v12453 = vld [vmem:[#allocation2 + $0x178] sm:$0xff]
  %v12454 = vld [vmem:[#allocation2 + $0x180] sm:$0xff]
  %v12455 = vld [vmem:[#allocation2 + $0x188] sm:$0xff]
  %v12456 = vld [vmem:[#allocation2 + $0x190] sm:$0xff]
  %v12457 = vld [vmem:[#allocation2 + $0x198] sm:$0xff]
  %v12458 = vld [vmem:[#allocation2 + $0x1a0] sm:$0xff]
  %v12459 = vld [vmem:[#allocation2 + $0x1a8] sm:$0xff]
  %v12460 = vld [vmem:[#allocation2 + $0x1b0] sm:$0xff]
  %v12461 = vld [vmem:[#allocation2 + $0x1b8] sm:$0xff]
  %v12462 = vld [vmem:[#allocation2 + $0x1c0] sm:$0xff]
  %v12463 = vld [vmem:[#allocation2 + $0x1c8] sm:$0xff]
  %v12464 = vld [vmem:[#allocation2 + $0x1d0] sm:$0xff]
  %v12465 = vld [vmem:[#allocation2 + $0x1d8] sm:$0xff]
  %v12466 = vld [vmem:[#allocation2 + $0x1e0] sm:$0xff]
  %v12467 = vld [vmem:[#allocation2 + $0x1e8] sm:$0xff]
  %v12468 = vld [vmem:[#allocation2 + $0x1f0] sm:$0xff]
  %v12469 = vld [vmem:[#allocation2 + $0x1f8] sm:$0xff]
  %v12470 = vld [vmem:[#allocation2 + $0x200] sm:$0xff]
  %v12471 = vld [vmem:[#allocation2 + $0x208] sm:$0xff]
  %v12472 = vld [vmem:[#allocation2 + $0x210] sm:$0xff]
  %v12473 = vld [vmem:[#allocation2 + $0x218] sm:$0xff]
  %v12474 = vld [vmem:[#allocation2 + $0x220] sm:$0xff]
  %v12475 = vld [vmem:[#allocation2 + $0x228] sm:$0xff]
  %v12476 = vld [vmem:[#allocation2 + $0x230] sm:$0xff]
  %v12477 = vld [vmem:[#allocation2 + $0x238] sm:$0xff]
  %v12478 = vld [vmem:[#allocation2 + $0x240] sm:$0xff]
  %v12479 = vld [vmem:[#allocation2 + $0x248] sm:$0xff]
  %v12480 = vld [vmem:[#allocation2 + $0x250] sm:$0xff]
  %v12481 = vld [vmem:[#allocation2 + $0x258] sm:$0xff]
  %v12482 = vld [vmem:[#allocation2 + $0x260] sm:$0xff]
  %v12483 = vld [vmem:[#allocation2 + $0x268] sm:$0xff]
  %v12484 = vld [vmem:[#allocation2 + $0x270] sm:$0xff]
  %v12485 = vld [vmem:[#allocation2 + $0x278] sm:$0xff]
  %v12486 = vld [vmem:[#allocation2 + $0x280] sm:$0xff]
  %v12487 = vld [vmem:[#allocation2 + $0x288] sm:$0xff]
  %v12488 = vld [vmem:[#allocation2 + $0x290] sm:$0xff]
  %v12489 = vld [vmem:[#allocation2 + $0x298] sm:$0xff]
  %v12490 = vld [vmem:[#allocation2 + $0x2a0] sm:$0xff]
  %v12491 = vld [vmem:[#allocation2 + $0x2a8] sm:$0xff]
  %v12492 = vld [vmem:[#allocation2 + $0x2b0] sm:$0xff]
  %v12493 = vld [vmem:[#allocation2 + $0x2b8] sm:$0xff]
  %v12494 = vld [vmem:[#allocation2 + $0x2c0] sm:$0xff]
  %v12495 = vld [vmem:[#allocation2 + $0x2c8] sm:$0xff]
  %v12496 = vld [vmem:[#allocation2 + $0x2d0] sm:$0xff]
  %v12497 = vld [vmem:[#allocation2 + $0x2d8] sm:$0xff]
  %v12498 = vld [vmem:[#allocation2 + $0x2e0] sm:$0xff]
  %v12499 = vld [vmem:[#allocation2 + $0x2e8] sm:$0xff]
  %v12500 = vld [vmem:[#allocation2 + $0x2f0] sm:$0xff]
  %v12501 = vld [vmem:[#allocation2 + $0x2f8] sm:$0xff]
  %v12502 = vld [vmem:[#allocation2 + $0x300] sm:$0xff]
  %v12503 = vld [vmem:[#allocation2 + $0x308] sm:$0xff]
  %v12504 = vld [vmem:[#allocation2 + $0x310] sm:$0xff]
  %v12505 = vld [vmem:[#allocation2 + $0x318] sm:$0xff]
  %v12506 = vld [vmem:[#allocation2 + $0x320] sm:$0xff]
  %v12507 = vld [vmem:[#allocation2 + $0x328] sm:$0xff]
  %v12508 = vld [vmem:[#allocation2 + $0x330] sm:$0xff]
  %v12509 = vld [vmem:[#allocation2 + $0x338] sm:$0xff]
  %v12510 = vld [vmem:[#allocation2 + $0x340] sm:$0xff]
  %v12511 = vld [vmem:[#allocation2 + $0x348] sm:$0xff]
  %v12512 = vld [vmem:[#allocation2 + $0x350] sm:$0xff]
  %v12513 = vld [vmem:[#allocation2 + $0x358] sm:$0xff]
  %v12514 = vld [vmem:[#allocation2 + $0x360] sm:$0xff]
  %v12515 = vld [vmem:[#allocation2 + $0x368] sm:$0xff]
  %v12516 = vld [vmem:[#allocation2 + $0x370] sm:$0xff]
  %v12517 = vld [vmem:[#allocation2 + $0x378] sm:$0xff]
  %v12518 = vld [vmem:[#allocation2 + $0x380] sm:$0xff]
  %v12519 = vld [vmem:[#allocation2 + $0x388] sm:$0xff]
  %v12520 = vld [vmem:[#allocation2 + $0x390] sm:$0xff]
  %v12521 = vld [vmem:[#allocation2 + $0x398] sm:$0xff]
  %v12522 = vld [vmem:[#allocation2 + $0x3a0] sm:$0xff]
  %v12523 = vld [vmem:[#allocation2 + $0x3a8] sm:$0xff]
  %v12524 = vld [vmem:[#allocation2 + $0x3b0] sm:$0xff]
  %v12525 = vld [vmem:[#allocation2 + $0x3b8] sm:$0xff]
  %v12526 = vld [vmem:[#allocation2 + $0x3c0] sm:$0xff]
  %v12527 = vld [vmem:[#allocation2 + $0x3c8] sm:$0xff]
  %v12528 = vld [vmem:[#allocation2 + $0x3d0] sm:$0xff]
  %v12529 = vld [vmem:[#allocation2 + $0x3d8] sm:$0xff]
  %v12530 = vld [vmem:[#allocation2 + $0x3e0] sm:$0xff]
  %v12531 = vld [vmem:[#allocation2 + $0x3e8] sm:$0xff]
  %v12532 = vld [vmem:[#allocation2 + $0x3f0] sm:$0xff]
  %v12533 = vld [vmem:[#allocation2 + $0x3f8] sm:$0xff]
  %v12538 = vunpack.c.l.b16 %v12402
  %v12539 = vunpack.c.h.b16 %v12402
  %v12540 = vunpack.c.l.b16 %v12403
  %v12541 = vunpack.c.h.b16 %v12403
  %v12542 = vunpack.c.l.b16 %v12404
  %v12543 = vunpack.c.h.b16 %v12404
  %v12544 = vunpack.c.l.b16 %v12405
  %v12545 = vunpack.c.h.b16 %v12405
  %v12546 = vpack.c.b16 %v12542, %v12538
  %v12547 = vpack.c.b16 %v12543, %v12539
  %v12548 = vpack.c.b16 %v12544, %v12540
  %v12549 = vpack.c.b16 %v12545, %v12541
  %v12682 = vunpack.c.l.b16 %v12406
  %v12683 = vunpack.c.h.b16 %v12406
  %v12684 = vunpack.c.l.b16 %v12407
  %v12685 = vunpack.c.h.b16 %v12407
  %v12686 = vunpack.c.l.b16 %v12408
  %v12687 = vunpack.c.h.b16 %v12408
  %v12688 = vunpack.c.l.b16 %v12409
  %v12689 = vunpack.c.h.b16 %v12409
  %v12690 = vunpack.c.l.b16 %v12410
  %v12691 = vunpack.c.h.b16 %v12410
  %v12692 = vunpack.c.l.b16 %v12411
  %v12693 = vunpack.c.h.b16 %v12411
  %v12694 = vunpack.c.l.b16 %v12412
  %v12695 = vunpack.c.h.b16 %v12412
  %v12696 = vunpack.c.l.b16 %v12413
  %v12697 = vunpack.c.h.b16 %v12413
  %v12698 = vunpack.c.l.b16 %v12414
  %v12699 = vunpack.c.h.b16 %v12414
  %v12700 = vunpack.c.l.b16 %v12415
  %v12701 = vunpack.c.h.b16 %v12415
  %v12702 = vunpack.c.l.b16 %v12416
  %v12703 = vunpack.c.h.b16 %v12416
  %v12704 = vunpack.c.l.b16 %v12417
  %v12705 = vunpack.c.h.b16 %v12417
  %v12706 = vunpack.c.l.b16 %v12418
  %v12707 = vunpack.c.h.b16 %v12418
  %v12708 = vunpack.c.l.b16 %v12419
  %v12709 = vunpack.c.h.b16 %v12419
  %v12710 = vunpack.c.l.b16 %v12420
  %v12711 = vunpack.c.h.b16 %v12420
  %v12712 = vunpack.c.l.b16 %v12421
  %v12713 = vunpack.c.h.b16 %v12421
  %v12714 = vunpack.c.l.b16 %v12422
  %v12715 = vunpack.c.h.b16 %v12422
  %v12716 = vunpack.c.l.b16 %v12423
  %v12717 = vunpack.c.h.b16 %v12423
  %v12718 = vunpack.c.l.b16 %v12424
  %v12719 = vunpack.c.h.b16 %v12424
  %v12720 = vunpack.c.l.b16 %v12425
  %v12721 = vunpack.c.h.b16 %v12425
  %v12722 = vunpack.c.l.b16 %v12426
  %v12723 = vunpack.c.h.b16 %v12426
  %v12724 = vunpack.c.l.b16 %v12427
  %v12725 = vunpack.c.h.b16 %v12427
  %v12726 = vunpack.c.l.b16 %v12428
  %v12727 = vunpack.c.h.b16 %v12428
  %v12728 = vunpack.c.l.b16 %v12429
  %v12729 = vunpack.c.h.b16 %v12429
  %v12730 = vunpack.c.l.b16 %v12430
  %v12731 = vunpack.c.h.b16 %v12430
  %v12732 = vunpack.c.l.b16 %v12431
  %v12733 = vunpack.c.h.b16 %v12431
  %v12734 = vunpack.c.l.b16 %v12432
  %v12735 = vunpack.c.h.b16 %v12432
  %v12736 = vunpack.c.l.b16 %v12433
  %v12737 = vunpack.c.h.b16 %v12433
  %v12738 = vunpack.c.l.b16 %v12434
  %v12739 = vunpack.c.h.b16 %v12434
  %v12740 = vunpack.c.l.b16 %v12435
  %v12741 = vunpack.c.h.b16 %v12435
  %v12742 = vunpack.c.l.b16 %v12436
  %v12743 = vunpack.c.h.b16 %v12436
  %v12744 = vunpack.c.l.b16 %v12437
  %v12745 = vunpack.c.h.b16 %v12437
  %v12746 = vunpack.c.l.b16 %v12438
  %v12747 = vunpack.c.h.b16 %v12438
  %v12748 = vunpack.c.l.b16 %v12439
  %v12749 = vunpack.c.h.b16 %v12439
  %v12750 = vunpack.c.l.b16 %v12440
  %v12751 = vunpack.c.h.b16 %v12440
  %v12752 = vunpack.c.l.b16 %v12441
  %v12753 = vunpack.c.h.b16 %v12441
  %v12754 = vunpack.c.l.b16 %v12442
  %v12755 = vunpack.c.h.b16 %v12442
  %v12756 = vunpack.c.l.b16 %v12443
  %v12757 = vunpack.c.h.b16 %v12443
  %v12758 = vunpack.c.l.b16 %v12444
  %v12759 = vunpack.c.h.b16 %v12444
  %v12760 = vunpack.c.l.b16 %v12445
  %v12761 = vunpack.c.h.b16 %v12445
  %v12762 = vunpack.c.l.b16 %v12446
  %v12763 = vunpack.c.h.b16 %v12446
  %v12764 = vunpack.c.l.b16 %v12447
  %v12765 = vunpack.c.h.b16 %v12447
  %v12766 = vunpack.c.l.b16 %v12448
  %v12767 = vunpack.c.h.b16 %v12448
  %v12768 = vunpack.c.l.b16 %v12449
  %v12769 = vunpack.c.h.b16 %v12449
  %v12770 = vunpack.c.l.b16 %v12450
  %v12771 = vunpack.c.h.b16 %v12450
  %v12772 = vunpack.c.l.b16 %v12451
  %v12773 = vunpack.c.h.b16 %v12451
  %v12774 = vunpack.c.l.b16 %v12452
  %v12775 = vunpack.c.h.b16 %v12452
  %v12776 = vunpack.c.l.b16 %v12453
  %v12777 = vunpack.c.h.b16 %v12453
  %v12778 = vunpack.c.l.b16 %v12454
  %v12779 = vunpack.c.h.b16 %v12454
  %v12780 = vunpack.c.l.b16 %v12455
  %v12781 = vunpack.c.h.b16 %v12455
  %v12782 = vunpack.c.l.b16 %v12456
  %v12783 = vunpack.c.h.b16 %v12456
  %v12784 = vunpack.c.l.b16 %v12457
  %v12785 = vunpack.c.h.b16 %v12457
  %v12786 = vunpack.c.l.b16 %v12458
  %v12787 = vunpack.c.h.b16 %v12458
  %v12788 = vunpack.c.l.b16 %v12459
  %v12789 = vunpack.c.h.b16 %v12459
  %v12790 = vunpack.c.l.b16 %v12460
  %v12791 = vunpack.c.h.b16 %v12460
  %v12792 = vunpack.c.l.b16 %v12461
  %v12793 = vunpack.c.h.b16 %v12461
  %v12794 = vunpack.c.l.b16 %v12462
  %v12795 = vunpack.c.h.b16 %v12462
  %v12796 = vunpack.c.l.b16 %v12463
  %v12797 = vunpack.c.h.b16 %v12463
  %v12798 = vunpack.c.l.b16 %v12464
  %v12799 = vunpack.c.h.b16 %v12464
  %v12800 = vunpack.c.l.b16 %v12465
  %v12801 = vunpack.c.h.b16 %v12465
  %v12802 = vunpack.c.l.b16 %v12466
  %v12803 = vunpack.c.h.b16 %v12466
  %v12804 = vunpack.c.l.b16 %v12467
  %v12805 = vunpack.c.h.b16 %v12467
  %v12806 = vunpack.c.l.b16 %v12468
  %v12807 = vunpack.c.h.b16 %v12468
  %v12808 = vunpack.c.l.b16 %v12469
  %v12809 = vunpack.c.h.b16 %v12469
  %v12810 = vunpack.c.l.b16 %v12470
  %v12811 = vunpack.c.h.b16 %v12470
  %v12812 = vunpack.c.l.b16 %v12471
  %v12813 = vunpack.c.h.b16 %v12471
  %v12814 = vunpack.c.l.b16 %v12472
  %v12815 = vunpack.c.h.b16 %v12472
  %v12816 = vunpack.c.l.b16 %v12473
  %v12817 = vunpack.c.h.b16 %v12473
  %v12818 = vunpack.c.l.b16 %v12474
  %v12819 = vunpack.c.h.b16 %v12474
  %v12820 = vunpack.c.l.b16 %v12475
  %v12821 = vunpack.c.h.b16 %v12475
  %v12822 = vunpack.c.l.b16 %v12476
  %v12823 = vunpack.c.h.b16 %v12476
  %v12824 = vunpack.c.l.b16 %v12477
  %v12825 = vunpack.c.h.b16 %v12477
  %v12826 = vunpack.c.l.b16 %v12478
  %v12827 = vunpack.c.h.b16 %v12478
  %v12828 = vunpack.c.l.b16 %v12479
  %v12829 = vunpack.c.h.b16 %v12479
  %v12830 = vunpack.c.l.b16 %v12480
  %v12831 = vunpack.c.h.b16 %v12480
  %v12832 = vunpack.c.l.b16 %v12481
  %v12833 = vunpack.c.h.b16 %v12481
  %v12834 = vunpack.c.l.b16 %v12482
  %v12835 = vunpack.c.h.b16 %v12482
  %v12836 = vunpack.c.l.b16 %v12483
  %v12837 = vunpack.c.h.b16 %v12483
  %v12838 = vunpack.c.l.b16 %v12484
  %v12839 = vunpack.c.h.b16 %v12484
  %v12840 = vunpack.c.l.b16 %v12485
  %v12841 = vunpack.c.h.b16 %v12485
  %v12842 = vunpack.c.l.b16 %v12486
  %v12843 = vunpack.c.h.b16 %v12486
  %v12844 = vunpack.c.l.b16 %v12487
  %v12845 = vunpack.c.h.b16 %v12487
  %v12846 = vunpack.c.l.b16 %v12488
  %v12847 = vunpack.c.h.b16 %v12488
  %v12848 = vunpack.c.l.b16 %v12489
  %v12849 = vunpack.c.h.b16 %v12489
  %v12850 = vunpack.c.l.b16 %v12490
  %v12851 = vunpack.c.h.b16 %v12490
  %v12852 = vunpack.c.l.b16 %v12491
  %v12853 = vunpack.c.h.b16 %v12491
  %v12854 = vunpack.c.l.b16 %v12492
  %v12855 = vunpack.c.h.b16 %v12492
  %v12856 = vunpack.c.l.b16 %v12493
  %v12857 = vunpack.c.h.b16 %v12493
  %v12858 = vunpack.c.l.b16 %v12494
  %v12859 = vunpack.c.h.b16 %v12494
  %v12860 = vunpack.c.l.b16 %v12495
  %v12861 = vunpack.c.h.b16 %v12495
  %v12862 = vunpack.c.l.b16 %v12496
  %v12863 = vunpack.c.h.b16 %v12496
  %v12864 = vunpack.c.l.b16 %v12497
  %v12865 = vunpack.c.h.b16 %v12497
  %v12866 = vunpack.c.l.b16 %v12498
  %v12867 = vunpack.c.h.b16 %v12498
  %v12868 = vunpack.c.l.b16 %v12499
  %v12869 = vunpack.c.h.b16 %v12499
  %v12870 = vunpack.c.l.b16 %v12500
  %v12871 = vunpack.c.h.b16 %v12500
  %v12872 = vunpack.c.l.b16 %v12501
  %v12873 = vunpack.c.h.b16 %v12501
  %v12874 = vunpack.c.l.b16 %v12502
  %v12875 = vunpack.c.h.b16 %v12502
  %v12876 = vunpack.c.l.b16 %v12503
  %v12877 = vunpack.c.h.b16 %v12503
  %v12878 = vunpack.c.l.b16 %v12504
  %v12879 = vunpack.c.h.b16 %v12504
  %v12880 = vunpack.c.l.b16 %v12505
  %v12881 = vunpack.c.h.b16 %v12505
  %v12882 = vunpack.c.l.b16 %v12506
  %v12883 = vunpack.c.h.b16 %v12506
  %v12884 = vunpack.c.l.b16 %v12507
  %v12885 = vunpack.c.h.b16 %v12507
  %v12886 = vunpack.c.l.b16 %v12508
  %v12887 = vunpack.c.h.b16 %v12508
  %v12888 = vunpack.c.l.b16 %v12509
  %v12889 = vunpack.c.h.b16 %v12509
  %v12890 = vunpack.c.l.b16 %v12510
  %v12891 = vunpack.c.h.b16 %v12510
  %v12892 = vunpack.c.l.b16 %v12511
  %v12893 = vunpack.c.h.b16 %v12511
  %v12894 = vunpack.c.l.b16 %v12512
  %v12895 = vunpack.c.h.b16 %v12512
  %v12896 = vunpack.c.l.b16 %v12513
  %v12897 = vunpack.c.h.b16 %v12513
  %v12898 = vunpack.c.l.b16 %v12514
  %v12899 = vunpack.c.h.b16 %v12514
  %v12900 = vunpack.c.l.b16 %v12515
  %v12901 = vunpack.c.h.b16 %v12515
  %v12902 = vunpack.c.l.b16 %v12516
  %v12903 = vunpack.c.h.b16 %v12516
  %v12904 = vunpack.c.l.b16 %v12517
  %v12905 = vunpack.c.h.b16 %v12517
  %v12906 = vunpack.c.l.b16 %v12518
  %v12907 = vunpack.c.h.b16 %v12518
  %v12908 = vunpack.c.l.b16 %v12519
  %v12909 = vunpack.c.h.b16 %v12519
  %v12910 = vunpack.c.l.b16 %v12520
  %v12911 = vunpack.c.h.b16 %v12520
  %v12912 = vunpack.c.l.b16 %v12521
  %v12913 = vunpack.c.h.b16 %v12521
  %v12914 = vunpack.c.l.b16 %v12522
  %v12915 = vunpack.c.h.b16 %v12522
  %v12916 = vunpack.c.l.b16 %v12523
  %v12917 = vunpack.c.h.b16 %v12523
  %v12918 = vunpack.c.l.b16 %v12524
  %v12919 = vunpack.c.h.b16 %v12524
  %v12920 = vunpack.c.l.b16 %v12525
  %v12921 = vunpack.c.h.b16 %v12525
  %v12922 = vunpack.c.l.b16 %v12526
  %v12923 = vunpack.c.h.b16 %v12526
  %v12924 = vunpack.c.l.b16 %v12527
  %v12925 = vunpack.c.h.b16 %v12527
  %v12926 = vunpack.c.l.b16 %v12528
  %v12927 = vunpack.c.h.b16 %v12528
  %v12928 = vunpack.c.l.b16 %v12529
  %v12929 = vunpack.c.h.b16 %v12529
  %v12930 = vunpack.c.l.b16 %v12530
  %v12931 = vunpack.c.h.b16 %v12530
  %v12932 = vunpack.c.l.b16 %v12531
  %v12933 = vunpack.c.h.b16 %v12531
  %v12934 = vunpack.c.l.b16 %v12532
  %v12935 = vunpack.c.h.b16 %v12532
  %v12936 = vunpack.c.l.b16 %v12533
  %v12937 = vunpack.c.h.b16 %v12533
  %v12938 = vpack.c.b16 %v12686, %v12682
  %v12939 = vpack.c.b16 %v12687, %v12683
  %v12940 = vpack.c.b16 %v12688, %v12684
  %v12941 = vpack.c.b16 %v12689, %v12685
  %v12942 = vpack.c.b16 %v12694, %v12690
  %v12943 = vpack.c.b16 %v12695, %v12691
  %v12944 = vpack.c.b16 %v12696, %v12692
  %v12945 = vpack.c.b16 %v12697, %v12693
  %v12946 = vpack.c.b16 %v12702, %v12698
  %v12947 = vpack.c.b16 %v12703, %v12699
  %v12948 = vpack.c.b16 %v12704, %v12700
  %v12949 = vpack.c.b16 %v12705, %v12701
  %v12950 = vpack.c.b16 %v12710, %v12706
  %v12951 = vpack.c.b16 %v12711, %v12707
  %v12952 = vpack.c.b16 %v12712, %v12708
  %v12953 = vpack.c.b16 %v12713, %v12709
  %v12954 = vpack.c.b16 %v12718, %v12714
  %v12955 = vpack.c.b16 %v12719, %v12715
  %v12956 = vpack.c.b16 %v12720, %v12716
  %v12957 = vpack.c.b16 %v12721, %v12717
  %v12958 = vpack.c.b16 %v12726, %v12722
  %v12959 = vpack.c.b16 %v12727, %v12723
  %v12960 = vpack.c.b16 %v12728, %v12724
  %v12961 = vpack.c.b16 %v12729, %v12725
  %v12962 = vpack.c.b16 %v12734, %v12730
  %v12963 = vpack.c.b16 %v12735, %v12731
  %v12964 = vpack.c.b16 %v12736, %v12732
  %v12965 = vpack.c.b16 %v12737, %v12733
  %v12966 = vpack.c.b16 %v12742, %v12738
  %v12967 = vpack.c.b16 %v12743, %v12739
  %v12968 = vpack.c.b16 %v12744, %v12740
  %v12969 = vpack.c.b16 %v12745, %v12741
  %v12970 = vpack.c.b16 %v12750, %v12746
  %v12971 = vpack.c.b16 %v12751, %v12747
  %v12972 = vpack.c.b16 %v12752, %v12748
  %v12973 = vpack.c.b16 %v12753, %v12749
  %v12974 = vpack.c.b16 %v12758, %v12754
  %v12975 = vpack.c.b16 %v12759, %v12755
  %v12976 = vpack.c.b16 %v12760, %v12756
  %v12977 = vpack.c.b16 %v12761, %v12757
  %v12978 = vpack.c.b16 %v12766, %v12762
  %v12979 = vpack.c.b16 %v12767, %v12763
  %v12980 = vpack.c.b16 %v12768, %v12764
  %v12981 = vpack.c.b16 %v12769, %v12765
  %v12982 = vpack.c.b16 %v12774, %v12770
  %v12983 = vpack.c.b16 %v12775, %v12771
  %v12984 = vpack.c.b16 %v12776, %v12772
  %v12985 = vpack.c.b16 %v12777, %v12773
  %v12986 = vpack.c.b16 %v12782, %v12778
  %v12987 = vpack.c.b16 %v12783, %v12779
  %v12988 = vpack.c.b16 %v12784, %v12780
  %v12989 = vpack.c.b16 %v12785, %v12781
  %v12990 = vpack.c.b16 %v12790, %v12786
  %v12991 = vpack.c.b16 %v12791, %v12787
  %v12992 = vpack.c.b16 %v12792, %v12788
  %v12993 = vpack.c.b16 %v12793, %v12789
  %v12994 = vpack.c.b16 %v12798, %v12794
  %v12995 = vpack.c.b16 %v12799, %v12795
  %v12996 = vpack.c.b16 %v12800, %v12796
  %v12997 = vpack.c.b16 %v12801, %v12797
  %v12998 = vpack.c.b16 %v12806, %v12802
  %v12999 = vpack.c.b16 %v12807, %v12803
  %v13000 = vpack.c.b16 %v12808, %v12804
  %v13001 = vpack.c.b16 %v12809, %v12805
  %v13002 = vpack.c.b16 %v12814, %v12810
  %v13003 = vpack.c.b16 %v12815, %v12811
  %v13004 = vpack.c.b16 %v12816, %v12812
  %v13005 = vpack.c.b16 %v12817, %v12813
  %v13006 = vpack.c.b16 %v12822, %v12818
  %v13007 = vpack.c.b16 %v12823, %v12819
  %v13008 = vpack.c.b16 %v12824, %v12820
  %v13009 = vpack.c.b16 %v12825, %v12821
  %v13010 = vpack.c.b16 %v12830, %v12826
  %v13011 = vpack.c.b16 %v12831, %v12827
  %v13012 = vpack.c.b16 %v12832, %v12828
  %v13013 = vpack.c.b16 %v12833, %v12829
  %v13014 = vpack.c.b16 %v12838, %v12834
  %v13015 = vpack.c.b16 %v12839, %v12835
  %v13016 = vpack.c.b16 %v12840, %v12836
  %v13017 = vpack.c.b16 %v12841, %v12837
  %v13018 = vpack.c.b16 %v12846, %v12842
  %v13019 = vpack.c.b16 %v12847, %v12843
  %v13020 = vpack.c.b16 %v12848, %v12844
  %v13021 = vpack.c.b16 %v12849, %v12845
  %v13022 = vpack.c.b16 %v12854, %v12850
  %v13023 = vpack.c.b16 %v12855, %v12851
  %v13024 = vpack.c.b16 %v12856, %v12852
  %v13025 = vpack.c.b16 %v12857, %v12853
  %v13026 = vpack.c.b16 %v12862, %v12858
  %v13027 = vpack.c.b16 %v12863, %v12859
  %v13028 = vpack.c.b16 %v12864, %v12860
  %v13029 = vpack.c.b16 %v12865, %v12861
  %v13030 = vpack.c.b16 %v12870, %v12866
  %v13031 = vpack.c.b16 %v12871, %v12867
  %v13032 = vpack.c.b16 %v12872, %v12868
  %v13033 = vpack.c.b16 %v12873, %v12869
  %v13034 = vpack.c.b16 %v12878, %v12874
  %v13035 = vpack.c.b16 %v12879, %v12875
  %v13036 = vpack.c.b16 %v12880, %v12876
  %v13037 = vpack.c.b16 %v12881, %v12877
  %v13038 = vpack.c.b16 %v12886, %v12882
  %v13039 = vpack.c.b16 %v12887, %v12883
  %v13040 = vpack.c.b16 %v12888, %v12884
  %v13041 = vpack.c.b16 %v12889, %v12885
  %v13042 = vpack.c.b16 %v12894, %v12890
  %v13043 = vpack.c.b16 %v12895, %v12891
  %v13044 = vpack.c.b16 %v12896, %v12892
  %v13045 = vpack.c.b16 %v12897, %v12893
  %v13046 = vpack.c.b16 %v12902, %v12898
  %v13047 = vpack.c.b16 %v12903, %v12899
  %v13048 = vpack.c.b16 %v12904, %v12900
  %v13049 = vpack.c.b16 %v12905, %v12901
  %v13050 = vpack.c.b16 %v12910, %v12906
  %v13051 = vpack.c.b16 %v12911, %v12907
  %v13052 = vpack.c.b16 %v12912, %v12908
  %v13053 = vpack.c.b16 %v12913, %v12909
  %v13054 = vpack.c.b16 %v12918, %v12914
  %v13055 = vpack.c.b16 %v12919, %v12915
  %v13056 = vpack.c.b16 %v12920, %v12916
  %v13057 = vpack.c.b16 %v12921, %v12917
  %v13058 = vpack.c.b16 %v12926, %v12922
  %v13059 = vpack.c.b16 %v12927, %v12923
  %v13060 = vpack.c.b16 %v12928, %v12924
  %v13061 = vpack.c.b16 %v12929, %v12925
  %v13062 = vpack.c.b16 %v12934, %v12930
  %v13063 = vpack.c.b16 %v12935, %v12931
  %v13064 = vpack.c.b16 %v12936, %v12932
  %v13065 = vpack.c.b16 %v12937, %v12933
  %13194 = vmatprep.subr.bf16.mxu0 %v12967
  %13195 = vmatpush1.bf16.xpose.msra.mxu0 %v12966
  %13196 = vmatprep.subr.bf16.mxu0 %v12963
  %13197 = vmatpush1.bf16.xpose.msra.mxu0 %v12962
  %13198 = vmatprep.subr.bf16.mxu0 %v12959
  %13199 = vmatpush1.bf16.xpose.msra.mxu0 %v12958
  %13200 = vmatprep.subr.bf16.mxu0 %v12955
  %13201 = vmatpush1.bf16.xpose.msra.mxu0 %v12954
  %13202 = vmatprep.subr.bf16.mxu0 %v12951
  %13203 = vmatpush1.bf16.xpose.msra.mxu0 %v12950
  %13204 = vmatprep.subr.bf16.mxu0 %v12947
  %13205 = vmatpush1.bf16.xpose.msra.mxu0 %v12946
  %13206 = vmatprep.subr.bf16.mxu0 %v12943
  %13207 = vmatpush1.bf16.xpose.msra.mxu0 %v12942
  %13208 = vmatprep.subr.bf16.mxu0 %v12939
  %13209 = vmatpush1.bf16.xpose.msra.mxu0 %v12938
  %13210 = vmatprep.subr.bf16.mxu0 %v12999
  %13211 = vmatpush2.bf16.xpose.msra.mxu0 %v12998
  %13212 = vmatprep.subr.bf16.mxu0 %v12995
  %13213 = vmatpush2.bf16.xpose.msra.mxu0 %v12994
  %13214 = vmatprep.subr.bf16.mxu0 %v12991
  %13215 = vmatpush2.bf16.xpose.msra.mxu0 %v12990
  %13216 = vmatprep.subr.bf16.mxu0 %v12987
  %13217 = vmatpush2.bf16.xpose.msra.mxu0 %v12986
  %13218 = vmatprep.subr.bf16.mxu0 %v12983
  %13219 = vmatpush2.bf16.xpose.msra.mxu0 %v12982
  %13220 = vmatprep.subr.bf16.mxu0 %v12979
  %13221 = vmatpush2.bf16.xpose.msra.mxu0 %v12978
  %13222 = vmatprep.subr.bf16.mxu0 %v12975
  %13223 = vmatpush2.bf16.xpose.msra.mxu0 %v12974
  %13224 = vmatprep.subr.bf16.mxu0 %v12971
  %13225 = vmatpush2.bf16.xpose.msra.mxu0 %v12970
  %13226 = vmatprep.mubr.bf16.mxu0 %v12547
  %13227 = vmatmul.mubr.bf16.gmra.mxu0 %v12546
  %v13228 = vpop.f32.mrf.mxu0
  %v13229 = vadd.f32 0.0, %v13228
  %v13230 = vpop.f32.mrf.mxu0
  %v13231 = vadd.f32 0.0, %v13230
  %v13232 = vpop.f32.mrf.mxu0
  %v13233 = vadd.f32 0.0, %v13232
  %v13234 = vpop.f32.mrf.mxu0
  %v13235 = vadd.f32 0.0, %v13234
  %13236 = vdwg.mxu0
  %13237 = vmatprep.subr.bf16.mxu0 %v12969
  %13238 = vmatpush1.bf16.xpose.msra.mxu0 %v12968
  %13239 = vmatprep.subr.bf16.mxu0 %v12965
  %13240 = vmatpush1.bf16.xpose.msra.mxu0 %v12964
  %13241 = vmatprep.subr.bf16.mxu0 %v12961
  %13242 = vmatpush1.bf16.xpose.msra.mxu0 %v12960
  %13243 = vmatprep.subr.bf16.mxu0 %v12957
  %13244 = vmatpush1.bf16.xpose.msra.mxu0 %v12956
  %13245 = vmatprep.subr.bf16.mxu0 %v12953
  %13246 = vmatpush1.bf16.xpose.msra.mxu0 %v12952
  %13247 = vmatprep.subr.bf16.mxu0 %v12949
  %13248 = vmatpush1.bf16.xpose.msra.mxu0 %v12948
  %13249 = vmatprep.subr.bf16.mxu0 %v12945
  %13250 = vmatpush1.bf16.xpose.msra.mxu0 %v12944
  %13251 = vmatprep.subr.bf16.mxu0 %v12941
  %13252 = vmatpush1.bf16.xpose.msra.mxu0 %v12940
  %13253 = vmatprep.subr.bf16.mxu0 %v13001
  %13254 = vmatpush2.bf16.xpose.msra.mxu0 %v13000
  %13255 = vmatprep.subr.bf16.mxu0 %v12997
  %13256 = vmatpush2.bf16.xpose.msra.mxu0 %v12996
  %13257 = vmatprep.subr.bf16.mxu0 %v12993
  %13258 = vmatpush2.bf16.xpose.msra.mxu0 %v12992
  %13259 = vmatprep.subr.bf16.mxu0 %v12989
  %13260 = vmatpush2.bf16.xpose.msra.mxu0 %v12988
  %13261 = vmatprep.subr.bf16.mxu0 %v12985
  %13262 = vmatpush2.bf16.xpose.msra.mxu0 %v12984
  %13263 = vmatprep.subr.bf16.mxu0 %v12981
  %13264 = vmatpush2.bf16.xpose.msra.mxu0 %v12980
  %13265 = vmatprep.subr.bf16.mxu0 %v12977
  %13266 = vmatpush2.bf16.xpose.msra.mxu0 %v12976
  %13267 = vmatprep.subr.bf16.mxu0 %v12973
  %13268 = vmatpush2.bf16.xpose.msra.mxu0 %v12972
  %13269 = vmatprep.mubr.bf16.mxu0 %v12549
  %13270 = vmatmul.mubr.bf16.gmra.mxu0 %v12548
  %v13271 = vpop.f32.mrf.mxu0
  %v13272 = vadd.f32 %v13229, %v13271
  %v13273 = vpop.f32.mrf.mxu0
  %v13274 = vadd.f32 %v13231, %v13273
  %v13275 = vpop.f32.mrf.mxu0
  %v13276 = vadd.f32 %v13233, %v13275
  %v13277 = vpop.f32.mrf.mxu0
  %v13278 = vadd.f32 %v13235, %v13277
  %13279 = vdwg.mxu0
  %13280 = vmatprep.subr.bf16.mxu0 %v13031
  %13281 = vmatpush1.bf16.xpose.msra.mxu0 %v13030
  %13282 = vmatprep.subr.bf16.mxu0 %v13027
  %13283 = vmatpush1.bf16.xpose.msra.mxu0 %v13026
  %13284 = vmatprep.subr.bf16.mxu0 %v13023
  %13285 = vmatpush1.bf16.xpose.msra.mxu0 %v13022
  %13286 = vmatprep.subr.bf16.mxu0 %v13019
  %13287 = vmatpush1.bf16.xpose.msra.mxu0 %v13018
  %13288 = vmatprep.subr.bf16.mxu0 %v13015
  %13289 = vmatpush1.bf16.xpose.msra.mxu0 %v13014
  %13290 = vmatprep.subr.bf16.mxu0 %v13011
  %13291 = vmatpush1.bf16.xpose.msra.mxu0 %v13010
  %13292 = vmatprep.subr.bf16.mxu0 %v13007
  %13293 = vmatpush1.bf16.xpose.msra.mxu0 %v13006
  %13294 = vmatprep.subr.bf16.mxu0 %v13003
  %13295 = vmatpush1.bf16.xpose.msra.mxu0 %v13002
  %13296 = vmatprep.subr.bf16.mxu0 %v13063
  %13297 = vmatpush2.bf16.xpose.msra.mxu0 %v13062
  %13298 = vmatprep.subr.bf16.mxu0 %v13059
  %13299 = vmatpush2.bf16.xpose.msra.mxu0 %v13058
  %13300 = vmatprep.subr.bf16.mxu0 %v13055
  %13301 = vmatpush2.bf16.xpose.msra.mxu0 %v13054
  %13302 = vmatprep.subr.bf16.mxu0 %v13051
  %13303 = vmatpush2.bf16.xpose.msra.mxu0 %v13050
  %13304 = vmatprep.subr.bf16.mxu0 %v13047
  %13305 = vmatpush2.bf16.xpose.msra.mxu0 %v13046
  %13306 = vmatprep.subr.bf16.mxu0 %v13043
  %13307 = vmatpush2.bf16.xpose.msra.mxu0 %v13042
  %13308 = vmatprep.subr.bf16.mxu0 %v13039
  %13309 = vmatpush2.bf16.xpose.msra.mxu0 %v13038
  %13310 = vmatprep.subr.bf16.mxu0 %v13035
  %13311 = vmatpush2.bf16.xpose.msra.mxu0 %v13034
  %13312 = vmatprep.mubr.bf16.mxu0 %v12547
  %13313 = vmatmul.mubr.bf16.gmra.mxu0 %v12546
  %v13314 = vpop.f32.mrf.mxu0
  %v13315 = vadd.f32 0.0, %v13314
  %v13316 = vpop.f32.mrf.mxu0
  %v13317 = vadd.f32 0.0, %v13316
  %v13318 = vpop.f32.mrf.mxu0
  %v13319 = vadd.f32 0.0, %v13318
  %v13320 = vpop.f32.mrf.mxu0
  %v13321 = vadd.f32 0.0, %v13320
  %13322 = vdwg.mxu0
  %13323 = vmatprep.subr.bf16.mxu0 %v13033
  %13324 = vmatpush1.bf16.xpose.msra.mxu0 %v13032
  %13325 = vmatprep.subr.bf16.mxu0 %v13029
  %13326 = vmatpush1.bf16.xpose.msra.mxu0 %v13028
  %13327 = vmatprep.subr.bf16.mxu0 %v13025
  %13328 = vmatpush1.bf16.xpose.msra.mxu0 %v13024
  %13329 = vmatprep.subr.bf16.mxu0 %v13021
  %13330 = vmatpush1.bf16.xpose.msra.mxu0 %v13020
  %13331 = vmatprep.subr.bf16.mxu0 %v13017
  %13332 = vmatpush1.bf16.xpose.msra.mxu0 %v13016
  %13333 = vmatprep.subr.bf16.mxu0 %v13013
  %13334 = vmatpush1.bf16.xpose.msra.mxu0 %v13012
  %13335 = vmatprep.subr.bf16.mxu0 %v13009
  %13336 = vmatpush1.bf16.xpose.msra.mxu0 %v13008
  %13337 = vmatprep.subr.bf16.mxu0 %v13005
  %13338 = vmatpush1.bf16.xpose.msra.mxu0 %v13004
  %13339 = vmatprep.subr.bf16.mxu0 %v13065
  %13340 = vmatpush2.bf16.xpose.msra.mxu0 %v13064
  %13341 = vmatprep.subr.bf16.mxu0 %v13061
  %13342 = vmatpush2.bf16.xpose.msra.mxu0 %v13060
  %13343 = vmatprep.subr.bf16.mxu0 %v13057
  %13344 = vmatpush2.bf16.xpose.msra.mxu0 %v13056
  %13345 = vmatprep.subr.bf16.mxu0 %v13053
  %13346 = vmatpush2.bf16.xpose.msra.mxu0 %v13052
  %13347 = vmatprep.subr.bf16.mxu0 %v13049
  %13348 = vmatpush2.bf16.xpose.msra.mxu0 %v13048
  %13349 = vmatprep.subr.bf16.mxu0 %v13045
  %13350 = vmatpush2.bf16.xpose.msra.mxu0 %v13044
  %13351 = vmatprep.subr.bf16.mxu0 %v13041
  %13352 = vmatpush2.bf16.xpose.msra.mxu0 %v13040
  %13353 = vmatprep.subr.bf16.mxu0 %v13037
  %13354 = vmatpush2.bf16.xpose.msra.mxu0 %v13036
  %13355 = vmatprep.mubr.bf16.mxu0 %v12549
  %13356 = vmatmul.mubr.bf16.gmra.mxu0 %v12548
  %v13357 = vpop.f32.mrf.mxu0
  %v13358 = vadd.f32 %v13315, %v13357
  %v13359 = vpop.f32.mrf.mxu0
  %v13360 = vadd.f32 %v13317, %v13359
  %v13361 = vpop.f32.mrf.mxu0
  %v13362 = vadd.f32 %v13319, %v13361
  %v13363 = vpop.f32.mrf.mxu0
  %v13364 = vadd.f32 %v13321, %v13363
  %13365 = vdwg.mxu0
  %v13366 = vadd.f32 %v13272, %v13274
  %v13367 = vadd.f32 %v13366, %v13358
  %v13368 = vadd.f32 %v13367, %v13360
  %13369 = vadd.xlane.f32.xlu0 %v13368
  %v13370 = vpop.xlane.xlu0 %13369
  %v13371 = vadd.f32 %v13276, %v13278
  %v13372 = vadd.f32 %v13371, %v13362
  %v13373 = vadd.f32 %v13372, %v13364
  %13374 = vadd.xlane.f32.xlu0 %v13373
  %v13375 = vpop.xlane.xlu0 %13374
  %v13376 = vmul.f32 %v13370, 0.001953125
  %v13377 = vmul.f32 %v13375, 0.001953125
  %v13378 = vsub.f32 %v13272, %v13376
  %v13379 = vsub.f32 %v13274, %v13376
  %v13380 = vsub.f32 %v13358, %v13376
  %v13381 = vsub.f32 %v13360, %v13376
  %v13382 = vsub.f32 %v13276, %v13377
  %v13383 = vsub.f32 %v13278, %v13377
  %v13384 = vsub.f32 %v13362, %v13377
  %v13385 = vsub.f32 %v13364, %v13377
  %v13386 = vmul.f32 %v13378, %v13378
  %v13387 = vmul.f32 %v13379, %v13379
  %v13388 = vmul.f32 %v13380, %v13380
  %v13389 = vmul.f32 %v13381, %v13381
  %v13390 = vmul.f32 %v13382, %v13382
  %v13391 = vmul.f32 %v13383, %v13383
  %v13392 = vmul.f32 %v13384, %v13384
  %v13393 = vmul.f32 %v13385, %v13385
  %v13394 = vadd.f32 %v13386, %v13387
  %v13395 = vadd.f32 %v13394, %v13388
  %v13396 = vadd.f32 %v13395, %v13389
  %13397 = vadd.xlane.f32.xlu0 %v13396
  %v13398 = vpop.xlane.xlu0 %13397
  %v13399 = vadd.f32 %v13390, %v13391
  %v13400 = vadd.f32 %v13399, %v13392
  %v13401 = vadd.f32 %v13400, %v13393
  %13402 = vadd.xlane.f32.xlu0 %v13401
  %v13403 = vpop.xlane.xlu0 %13402
  %v13404 = vmul.f32 %v13398, 0.001953125
  %v13405 = vmul.f32 %v13403, 0.001953125
  %v13406 = vmax.f32 %v13404, 0.0
  %v13407 = vmax.f32 %v13405, 0.0
  %v13408 = vld [vmem:[%s3] sm:$0xff]
  %v13409 = vld [vmem:[%s3 + $0x8] sm:$0xff]
  %v13410 = vadd.f32 %v13406, 1e-05
  %v13411 = vadd.f32 %v13407, 1e-05
  %v13412 = vrsqrt.pop %v13410
  %v13413 = vrsqrt.pop %v13411
  %v13414 = vmul.f32 %v13408, %v13412
  %v13415 = vmul.f32 %v13409, %v13413
  %v13416 = vld [vmem:[%s4] sm:$0xff]
  %v13417 = vld [vmem:[%s4 + $0x8] sm:$0xff]
  %v13418 = vmul.f32 %v13376, %v13414
  %v13419 = vmul.f32 %v13377, %v13415
  %v13420 = vsub.f32 %v13416, %v13418
  %v13421 = vsub.f32 %v13417, %v13419
  %13423 = vset.pattern.permute.xlu0 0
  %13424 = vperm.xlu0 %13423, %v13414
  %v13425 = vpop.permute.xlu0 %13424
  %13428 = vset.pattern.permute.xlu0 0
  %13429 = vperm.xlu0 %13428, %v13415
  %v13430 = vpop.permute.xlu0 %13429
  %v13432 = vmul.f32 %v13272, %v13425
  %v13433 = vmul.f32 %v13274, %v13425
  %v13434 = vmul.f32 %v13358, %v13425
  %v13435 = vmul.f32 %v13360, %v13425
  %v13436 = vmul.f32 %v13276, %v13430
  %v13437 = vmul.f32 %v13278, %v13430
  %v13438 = vmul.f32 %v13362, %v13430
  %v13439 = vmul.f32 %v13364, %v13430
  %13441 = vset.pattern.permute.xlu0 0
  %13442 = vperm.xlu0 %13441, %v13420
  %v13443 = vpop.permute.xlu0 %13442
  %13446 = vset.pattern.permute.xlu0 0
  %13447 = vperm.xlu0 %13446, %v13421
  %v13448 = vpop.permute.xlu0 %13447
  %v13450 = vadd.f32 %v13432, %v13443
  %v13451 = vadd.f32 %v13433, %v13443
  %v13452 = vadd.f32 %v13434, %v13443
  %v13453 = vadd.f32 %v13435, %v13443
  %v13454 = vadd.f32 %v13436, %v13448
  %v13455 = vadd.f32 %v13437, %v13448
  %v13456 = vadd.f32 %v13438, %v13448
  %v13457 = vadd.f32 %v13439, %v13448
  %v13458 = vmax.f32 %v13450, 0.0
  %v13459 = vmax.f32 %v13451, 0.0
  %v13460 = vmax.f32 %v13452, 0.0
  %v13461 = vmax.f32 %v13453, 0.0
  %v13462 = vmax.f32 %v13454, 0.0
  %v13463 = vmax.f32 %v13455, 0.0
  %v13464 = vmax.f32 %v13456, 0.0
  %v13465 = vmax.f32 %v13457, 0.0
  %13466 = vst [vmem:[%s5] sm:$0xff] %v13458
  %13467 = vst [vmem:[%s5 + $0x8] sm:$0xff] %v13459
  %13468 = vst [vmem:[%s5 + $0x10] sm:$0xff] %v13462
  %13469 = vst [vmem:[%s5 + $0x18] sm:$0xff] %v13463
  %s13470 = scalar_lea.vmem %s5, 32
  %13471 = vst [vmem:[%s13470] sm:$0xff] %v13460
  %13472 = vst [vmem:[%s13470 + $0x8] sm:$0xff] %v13461
  %13473 = vst [vmem:[%s13470 + $0x10] sm:$0xff] %v13464
  %13474 = vst [vmem:[%s13470 + $0x18] sm:$0xff] %v13465
  // Predicated region
  $region22: #{decoder_block_forward.1} parent=0 // pred_check
    _
  $region23: #{decoder_block_forward.1} parent=0 // pred_check_branch
    %13476 = sbr.rel (0) target = $region25
  $region24: #{decoder_block_forward.1} parent=0 // pred_region
    _
  $region25: #{decoder_block_forward.1} parent=0 // pred_fallthru
    _
  // Predicated region
  $region26: #{decoder_block_forward.1} parent=0 // pred_check
    _
  $region27: #{decoder_block_forward.1} parent=0 // pred_check_branch
    %13478 = sbr.rel (0) target = $region29
  $region28: #{decoder_block_forward.1} parent=0 // pred_region
    _
  $region29: #{decoder_block_forward.1} parent=0 // pred_fallthru
    _

</llo_original>
